<compile_context>
chip_gen: v7x
topology: tpu7x:2x2x1
jax: 0.10.0
libtpu: 0.0.40
codegen_flags: <defaults>
</compile_context>

<pallas_src>
import functools

import jax
import jax.numpy as jnp
from jax.experimental import pallas as pl
from jax.experimental.pallas import tpu as pltpu

LANE = 128  # lane width; padded output-channel dim for lane-dense stores


def _round_up(x, m):
    return (x + m - 1) // m * m


# ----------------------------------------------------------------------------
# Pallas kernel: cat([x2, up(x1)]) + (conv3x3 -> folded BN -> ReLU) x 2
# One batch element per grid step.
# ----------------------------------------------------------------------------
def _up_double_conv_kernel(x2_ref, x1_ref, w1_ref, b1_ref, w2_ref, b2_ref,
                           o_ref, xp_ref, ms_ref):
    H, W, CP = o_ref.shape[1], o_ref.shape[2], o_ref.shape[3]
    C2 = x2_ref.shape[3]
    CIN = xp_ref.shape[2]          # C1 + C2 (merged concat channels)
    adt = xp_ref.dtype             # bf16 activation scratch dtype

    # --- per-step zero of the 1-pixel halo borders ---------------------------
    # The batch grid axis is "parallel" (v7x megacore), so a one-time
    # program_id==0 init would be invalid; zeroing only the borders each step
    # is a handful of tiny stores (all interiors are fully overwritten below).
    xp_ref[0:1, :, :] = jnp.zeros((1, W + 2, CIN), adt)
    xp_ref[H + 1:H + 2, :, :] = jnp.zeros((1, W + 2, CIN), adt)
    xp_ref[:, 0:1, :] = jnp.zeros((H + 2, 1, CIN), adt)
    xp_ref[:, W + 1:W + 2, :] = jnp.zeros((H + 2, 1, CIN), adt)
    ms_ref[0:1, :, :] = jnp.zeros((1, W, 3 * CP), adt)
    ms_ref[H + 1:H + 2, :, :] = jnp.zeros((1, W, 3 * CP), adt)

    # --- fused torch.cat([x2, up(x1)], dim=1) + conv1 zero padding -----------
    # Both inputs land in ONE zero-haloed bf16 scratch; w1 stays unsplit, so
    # each conv1 tap contracts over K = C1 + C2 in a single dot.
    xp_ref[1:1 + H, 1:1 + W, :C2] = x2_ref[0]
    xp_ref[1:1 + H, 1:1 + W, C2:] = x1_ref[0]

    # --- conv1 (3x3, pad 1) + BN(scale folded into w) + ReLU -----------------
    # dx hoisted out of the tap loop: 3 sublane-shifted reads instead of 9;
    # the dy slice along the leading axis is layout-aligned (~free).
    acc = None
    for dx in range(3):
        xs = xp_ref[:, dx:dx + W, :]                       # (H+2, W, CIN) bf16
        for dy in range(3):
            p = xs[dy:dy + H].reshape(H * W, CIN)
            d = jnp.dot(p, w1_ref[dy, dx],
                        preferred_element_type=jnp.float32)
            acc = d if acc is None else acc + d
    yb = (jnp.maximum(acc + b1_ref[...], 0.0)              # (H*W, CP) f32
          .astype(adt).reshape(H, W, CP))                  # single bf16 cast

    # --- stage conv2's input directly in dx-stacked (im2col-along-x) form ----
    # ms[h, w, dx*CP + c] = padded_conv1_out[h, w + dx, c].  All three slots
    # are lane-aligned (offsets 0 / CP / 2*CP); padded lanes stay exactly zero
    # (padded weight cols / bias entries are zero by construction).
    ms_ref[1:1 + H, :, CP:2 * CP] = yb                                # dx = 1
    ms_ref[1:1 + H, 0:1, 0:CP] = jnp.zeros((H, 1, CP), adt)           # dx = 0
    ms_ref[1:1 + H, 1:W, 0:CP] = yb[:, 0:W - 1, :]
    ms_ref[1:1 + H, 0:W - 1, 2 * CP:3 * CP] = yb[:, 1:W, :]           # dx = 2
    ms_ref[1:1 + H, W - 1:W, 2 * CP:3 * CP] = jnp.zeros((H, 1, CP), adt)

    # --- conv2 (3x3, pad 1) + BN(scale folded into w) + ReLU -----------------
    # 3 dots of K = 3*CP (=384) instead of 9 dots of K = CP: fewer MXU push
    # sequences and a deeper contraction for the 256-deep v6e/v7x MXU.
    acc2 = None
    for dy in range(3):
        p = ms_ref[dy:dy + H, :, :].reshape(H * W, 3 * CP)
        d = jnp.dot(p, w2_ref[dy], preferred_element_type=jnp.float32)
        acc2 = d if acc2 is None else acc2 + d
    z = jnp.maximum(acc2 + b2_ref[...], 0.0)
    # Lane-dense (CP = 128) bf16 output block: unmasked full-lane stores.
    o_ref[0] = z.reshape(H, W, CP).astype(o_ref.dtype)


def double_conv_pallas(x2_nhwc, x1u_nhwc, w1, b1, w2r, b2):
    N, H, W, C2 = x2_nhwc.shape
    C1 = x1u_nhwc.shape[3]
    CIN = C1 + C2
    CP = w1.shape[3]                      # lane-padded output channels (128)
    return pl.pallas_call(
        _up_double_conv_kernel,
        out_shape=jax.ShapeDtypeStruct((N, H, W, CP), jnp.bfloat16),
        grid_spec=pltpu.PrefetchScalarGridSpec(
            num_scalar_prefetch=0,
            grid=(N,),
            in_specs=[
                pl.BlockSpec((1, H, W, C2), lambda n: (n, 0, 0, 0)),
                pl.BlockSpec((1, H, W, C1), lambda n: (n, 0, 0, 0)),
                pl.BlockSpec((3, 3, CIN, CP), lambda n: (0, 0, 0, 0)),
                pl.BlockSpec((1, CP), lambda n: (0, 0)),
                pl.BlockSpec((3, 3 * CP, CP), lambda n: (0, 0, 0)),
                pl.BlockSpec((1, CP), lambda n: (0, 0)),
            ],
            out_specs=pl.BlockSpec((1, H, W, CP), lambda n: (n, 0, 0, 0)),
            scratch_shapes=[
                pltpu.VMEM((H + 2, W + 2, CIN), jnp.bfloat16),  # concat + pad
                pltpu.VMEM((H + 2, W, 3 * CP), jnp.bfloat16),   # dx-stacked mid
            ],
        ),
        # Batch steps are independent (halos re-zeroed every step), so the
        # grid axis can be sharded across v7x's two TensorCores.
        compiler_params=pltpu.CompilerParams(
            dimension_semantics=("parallel",)),
    )(x2_nhwc, x1u_nhwc, w1, b1, w2r, b2)


# ----------------------------------------------------------------------------
# XLA glue: bilinear x2 upsample (align_corners=True, matches nn.Upsample),
# F.pad to x2's spatial size, NCHW <-> NHWC at the module boundary.
# ----------------------------------------------------------------------------
def upsample_bilinear_x2_align_corners_nhwc(x):
    N, H, W, C = x.shape
    Ho, Wo = 2 * H, 2 * W

    def coords(n_in, n_out):
        if n_in == 1:
            src = jnp.zeros((n_out,), jnp.float32)
        else:
            src = jnp.arange(n_out, dtype=jnp.float32) * (n_in - 1) / (n_out - 1)
        i0 = jnp.clip(jnp.floor(src).astype(jnp.int32), 0, n_in - 1)
        i1 = jnp.minimum(i0 + 1, n_in - 1)
        w = src - i0.astype(jnp.float32)
        return i0, i1, w

    y0, y1, wy = coords(H, Ho)
    x0, x1, wx = coords(W, Wo)
    top = jnp.take(x, y0, axis=1)
    bot = jnp.take(x, y1, axis=1)
    rows = top * (1.0 - wy)[None, :, None, None] + bot * wy[None, :, None, None]
    left = jnp.take(rows, x0, axis=2)
    right = jnp.take(rows, x1, axis=2)
    return left * (1.0 - wx)[None, None, :, None] + right * wx[None, None, :, None]


@functools.partial(jax.jit, static_argnames=("out_ch",))
def up_forward(x1_nchw, x2_nchw, params, *, out_ch):
    w1, b1, w2r, b2 = params
    # NCHW -> NHWC once at the boundary (module interface is NCHW).
    x1 = jnp.transpose(x1_nchw, (0, 2, 3, 1))   # transpose small pre-upsample map
    x2 = jnp.transpose(x2_nchw, (0, 2, 3, 1))
    x1u = upsample_bilinear_x2_align_corners_nhwc(x1)
    diffY = x2.shape[1] - x1u.shape[1]
    diffX = x2.shape[2] - x1u.shape[2]
    if diffY or diffX:
        x1u = jnp.pad(x1u, ((0, 0), (diffY // 2, diffY - diffY // 2),
                            (diffX // 2, diffX - diffX // 2), (0, 0)))
    # bf16 activations into the kernel: halves DMA bytes and VMEM footprint.
    out_p = double_conv_pallas(x2.astype(jnp.bfloat16),
                               x1u.astype(jnp.bfloat16),
                               w1, b1, w2r, b2)            # (N,H,W,128) bf16
    # Drop zero padding lanes (on the small bf16 array) and return NCHW f32
    # like the torch module.
    return jnp.transpose(out_p[..., :out_ch], (0, 3, 1, 2)).astype(jnp.float32)


# ----------------------------------------------------------------------------
# Deterministic parameters: conv weight/bias + eval-mode BN folded; the BN
# scale is folded straight into the (bf16) conv weights, so the kernel
# epilogue is bias-add + ReLU only.  Output channels zero-padded to 128.
# ----------------------------------------------------------------------------
def make_params(key, in_ch, out_ch):
    ks = jax.random.split(key, 12)
    eps = 1e-5
    cp = _round_up(out_ch, LANE)

    def conv_bn(kw, kb, kg, kbt, km, kv, cin, cin_pad, cout):
        w = 0.1 * jax.random.normal(kw, (3, 3, cin, cout), jnp.float32)   # HWIO
        b = 0.1 * jax.random.normal(kb, (cout,), jnp.float32)
        gamma = 1.0 + 0.1 * jax.random.normal(kg, (cout,), jnp.float32)
        beta = 0.1 * jax.random.normal(kbt, (cout,), jnp.float32)
        mean = 0.1 * jax.random.normal(km, (cout,), jnp.float32)
        var = jnp.abs(jax.random.normal(kv, (cout,), jnp.float32)) + 0.5
        scale = gamma / jnp.sqrt(var + eps)               # eval-mode BN fold
        bias = (b - mean) * scale + beta
        w_f = w * scale[None, None, None, :]              # fold scale into w
        # Padded weight rows/cols and bias entries are zero so padded output
        # lanes stay exactly zero through the bias/ReLU epilogue.
        w_p = jnp.zeros((3, 3, cin_pad, cp), jnp.float32)
        w_p = w_p.at[:, :, :cin, :cout].set(w_f)
        b_p = jnp.zeros((1, cp), jnp.float32).at[:, :cout].set(bias)
        return w_p.astype(jnp.bfloat16), b_p

    w1, b1 = conv_bn(*ks[0:6], in_ch, in_ch, out_ch)       # (3, 3, in_ch, 128)
    w2, b2 = conv_bn(*ks[6:12], out_ch, cp, out_ch)        # (3, 3, 128, 128)
    # conv2 weights pre-reshaped to (dy, dx*cin, cout) to match the kernel's
    # dx-stacked K = 3*CP contraction.
    w2r = w2.reshape(3, 3 * cp, cp)
    return (w1, b1, w2r, b2)


if __name__ == "__main__":
    key = jax.random.PRNGKey(0)
    k1, k2, kp = jax.random.split(key, 3)

    # up(in_ch=8, out_ch=8): x1 is the low-res feature map, x2 the skip.
    N, C1, H1, W1 = 2, 4, 8, 8
    C2, H2, W2 = 4, 16, 16
    in_ch, out_ch = C1 + C2, 8

    x1 = jax.random.normal(k1, (N, C1, H1, W1), jnp.float32)
    x2 = jax.random.normal(k2, (N, C2, H2, W2), jnp.float32)
    params = make_params(kp, in_ch, out_ch)

    out = up_forward(x1, x2, params, out_ch=out_ch)
    jax.block_until_ready(out)
    assert out.shape == (N, out_ch, H2, W2)
    assert bool(jnp.isfinite(out).all())
    print("KERNEL_OK")
</pallas_src>

<mosaic_0001>
module attributes {stable_mosaic.version = 11 : i64} {
  func.func @_up_double_conv_kernel(%arg0: i32, %arg1: memref<1x16x16x4xbf16, #tpu.memory_space<vmem>>, %arg2: memref<1x16x16x4xbf16, #tpu.memory_space<vmem>>, %arg3: memref<3x3x8x128xbf16, #tpu.memory_space<vmem>>, %arg4: memref<1x128xf32, #tpu.memory_space<vmem>>, %arg5: memref<3x384x128xbf16, #tpu.memory_space<vmem>>, %arg6: memref<1x128xf32, #tpu.memory_space<vmem>>, %arg7: memref<1x16x16x128xbf16, #tpu.memory_space<vmem>>, %arg8: memref<18x18x8xbf16, #tpu.memory_space<vmem>>, %arg9: memref<18x16x384xbf16, #tpu.memory_space<vmem>>) attributes {dimension_semantics = [#tpu.dimension_semantics<parallel>], iteration_bounds = array<i64: 2>, scalar_prefetch = 0 : i64, scratch_operands = 2 : i64, tpu.core_type = #tpu.core_type<tc>, window_params = [{transform_indices = @transform_0, window_bounds = array<i64: 1, 16, 16, 4>}, {transform_indices = @transform_1, window_bounds = array<i64: 1, 16, 16, 4>}, {pipeline_mode = #tpu.pipeline_mode<synchronous>, transform_indices = @transform_2, window_bounds = array<i64: 3, 3, 8, 128>}, {pipeline_mode = #tpu.pipeline_mode<synchronous>, transform_indices = @transform_3, window_bounds = array<i64: 1, 128>}, {pipeline_mode = #tpu.pipeline_mode<synchronous>, transform_indices = @transform_4, window_bounds = array<i64: 3, 384, 128>}, {pipeline_mode = #tpu.pipeline_mode<synchronous>, transform_indices = @transform_5, window_bounds = array<i64: 1, 128>}, {transform_indices = @transform_6, window_bounds = array<i64: 1, 16, 16, 128>}]} {
    %cst = arith.constant 0.000000e+00 : bf16
    %0 = vector.broadcast %cst : bf16 to vector<1x18x8xbf16>
    %c0 = arith.constant 0 : index
    %c0_0 = arith.constant 0 : index
    %c0_1 = arith.constant 0 : index
    %1 = vector.load %arg8[%c0, %c0_0, %c0_1] : memref<18x18x8xbf16, #tpu.memory_space<vmem>>, vector<1x18x8xbf16>
    tpu.vector_store %arg8[%c0, %c0_0, %c0_1], %0 {strides = array<i32>} : memref<18x18x8xbf16, #tpu.memory_space<vmem>>, vector<1x18x8xbf16>,
    %cst_2 = arith.constant 0.000000e+00 : bf16
    %2 = vector.broadcast %cst_2 : bf16 to vector<1x18x8xbf16>
    %c17 = arith.constant 17 : index
    %c0_3 = arith.constant 0 : index
    %c0_4 = arith.constant 0 : index
    %3 = vector.load %arg8[%c17, %c0_3, %c0_4] : memref<18x18x8xbf16, #tpu.memory_space<vmem>>, vector<1x18x8xbf16>
    tpu.vector_store %arg8[%c17, %c0_3, %c0_4], %2 {strides = array<i32>} : memref<18x18x8xbf16, #tpu.memory_space<vmem>>, vector<1x18x8xbf16>,
    %cst_5 = arith.constant 0.000000e+00 : bf16
    %4 = vector.broadcast %cst_5 : bf16 to vector<18x1x8xbf16>
    %c0_6 = arith.constant 0 : index
    %c0_7 = arith.constant 0 : index
    %c0_8 = arith.constant 0 : index
    %5 = vector.load %arg8[%c0_6, %c0_7, %c0_8] : memref<18x18x8xbf16, #tpu.memory_space<vmem>>, vector<18x1x8xbf16>
    tpu.vector_store %arg8[%c0_6, %c0_7, %c0_8], %4 {strides = array<i32>} : memref<18x18x8xbf16, #tpu.memory_space<vmem>>, vector<18x1x8xbf16>,
    %cst_9 = arith.constant 0.000000e+00 : bf16
    %6 = vector.broadcast %cst_9 : bf16 to vector<18x1x8xbf16>
    %c0_10 = arith.constant 0 : index
    %c17_11 = arith.constant 17 : index
    %c0_12 = arith.constant 0 : index
    %7 = vector.load %arg8[%c0_10, %c17_11, %c0_12] : memref<18x18x8xbf16, #tpu.memory_space<vmem>>, vector<18x1x8xbf16>
    tpu.vector_store %arg8[%c0_10, %c17_11, %c0_12], %6 {strides = array<i32>} : memref<18x18x8xbf16, #tpu.memory_space<vmem>>, vector<18x1x8xbf16>,
    %cst_13 = arith.constant 0.000000e+00 : bf16
    %8 = vector.broadcast %cst_13 : bf16 to vector<1x16x384xbf16>
    %c0_14 = arith.constant 0 : index
    %c0_15 = arith.constant 0 : index
    %c0_16 = arith.constant 0 : index
    %9 = vector.load %arg9[%c0_14, %c0_15, %c0_16] : memref<18x16x384xbf16, #tpu.memory_space<vmem>>, vector<1x16x384xbf16>
    tpu.vector_store %arg9[%c0_14, %c0_15, %c0_16], %8 {strides = array<i32>} : memref<18x16x384xbf16, #tpu.memory_space<vmem>>, vector<1x16x384xbf16>,
    %cst_17 = arith.constant 0.000000e+00 : bf16
    %10 = vector.broadcast %cst_17 : bf16 to vector<1x16x384xbf16>
    %c17_18 = arith.constant 17 : index
    %c0_19 = arith.constant 0 : index
    %c0_20 = arith.constant 0 : index
    %11 = vector.load %arg9[%c17_18, %c0_19, %c0_20] : memref<18x16x384xbf16, #tpu.memory_space<vmem>>, vector<1x16x384xbf16>
    tpu.vector_store %arg9[%c17_18, %c0_19, %c0_20], %10 {strides = array<i32>} : memref<18x16x384xbf16, #tpu.memory_space<vmem>>, vector<1x16x384xbf16>,
    %c0_21 = arith.constant 0 : index
    %c0_22 = arith.constant 0 : index
    %c0_23 = arith.constant 0 : index
    %c0_24 = arith.constant 0 : index
    %12 = vector.load %arg1[%c0_21, %c0_22, %c0_23, %c0_24] : memref<1x16x16x4xbf16, #tpu.memory_space<vmem>>, vector<1x16x16x4xbf16>
    %13 = vector.shape_cast %12 : vector<1x16x16x4xbf16> to vector<16x16x4xbf16>
    %c1 = arith.constant 1 : index
    %c1_25 = arith.constant 1 : index
    %c0_26 = arith.constant 0 : index
    %14 = vector.load %arg8[%c1, %c1_25, %c0_26] : memref<18x18x8xbf16, #tpu.memory_space<vmem>>, vector<16x16x4xbf16>
    tpu.vector_store %arg8[%c1, %c1_25, %c0_26], %13 {strides = array<i32>} : memref<18x18x8xbf16, #tpu.memory_space<vmem>>, vector<16x16x4xbf16>,
    %c0_27 = arith.constant 0 : index
    %c0_28 = arith.constant 0 : index
    %c0_29 = arith.constant 0 : index
    %c0_30 = arith.constant 0 : index
    %15 = vector.load %arg2[%c0_27, %c0_28, %c0_29, %c0_30] : memref<1x16x16x4xbf16, #tpu.memory_space<vmem>>, vector<1x16x16x4xbf16>
    %16 = vector.shape_cast %15 : vector<1x16x16x4xbf16> to vector<16x16x4xbf16>
    %c1_31 = arith.constant 1 : index
    %c1_32 = arith.constant 1 : index
    %c4 = arith.constant 4 : index
    %17 = vector.load %arg8[%c1_31, %c1_32, %c4] : memref<18x18x8xbf16, #tpu.memory_space<vmem>>, vector<16x16x4xbf16>
    tpu.vector_store %arg8[%c1_31, %c1_32, %c4], %16 {strides = array<i32>} : memref<18x18x8xbf16, #tpu.memory_space<vmem>>, vector<16x16x4xbf16>,
    %c0_33 = arith.constant 0 : index
    %c0_34 = arith.constant 0 : index
    %c0_35 = arith.constant 0 : index
    %18 = vector.load %arg8[%c0_33, %c0_34, %c0_35] : memref<18x18x8xbf16, #tpu.memory_space<vmem>>, vector<18x16x8xbf16>
    %19 = vector.extract_strided_slice %18 {offsets = [0, 0, 0], sizes = [16, 16, 8], strides = [1, 1, 1]} : vector<18x16x8xbf16> to vector<16x16x8xbf16>
    %20 = vector.shape_cast %19 : vector<16x16x8xbf16> to vector<256x8xbf16>
    %c0_36 = arith.constant 0 : index
    %c0_37 = arith.constant 0 : index
    %c0_38 = arith.constant 0 : index
    %c0_39 = arith.constant 0 : index
    %21 = vector.load %arg3[%c0_36, %c0_37, %c0_38, %c0_39] : memref<3x3x8x128xbf16, #tpu.memory_space<vmem>>, vector<1x1x8x128xbf16>
    %22 = vector.shape_cast %21 : vector<1x1x8x128xbf16> to vector<8x128xbf16>
    %cst_40 = arith.constant dense<0.000000e+00> : vector<256x128xf32>
    %23 = tpu.matmul %20, %22, %cst_40 {dimension_numbers = #tpu.dot_dimension_numbers<[1], [0], [0], [1], [0, 0, 1, 1], [], []>} : vector<256x8xbf16>, vector<8x128xbf16>, vector<256x128xf32> -> vector<256x128xf32>
    %24 = vector.extract_strided_slice %18 {offsets = [1, 0, 0], sizes = [16, 16, 8], strides = [1, 1, 1]} : vector<18x16x8xbf16> to vector<16x16x8xbf16>
    %25 = vector.shape_cast %24 : vector<16x16x8xbf16> to vector<256x8xbf16>
    %c1_41 = arith.constant 1 : index
    %c0_42 = arith.constant 0 : index
    %c0_43 = arith.constant 0 : index
    %c0_44 = arith.constant 0 : index
    %26 = vector.load %arg3[%c1_41, %c0_42, %c0_43, %c0_44] : memref<3x3x8x128xbf16, #tpu.memory_space<vmem>>, vector<1x1x8x128xbf16>
    %27 = vector.shape_cast %26 : vector<1x1x8x128xbf16> to vector<8x128xbf16>
    %cst_45 = arith.constant dense<0.000000e+00> : vector<256x128xf32>
    %28 = tpu.matmul %25, %27, %cst_45 {dimension_numbers = #tpu.dot_dimension_numbers<[1], [0], [0], [1], [0, 0, 1, 1], [], []>} : vector<256x8xbf16>, vector<8x128xbf16>, vector<256x128xf32> -> vector<256x128xf32>
    %29 = arith.addf %23, %28 : vector<256x128xf32>
    %30 = vector.extract_strided_slice %18 {offsets = [2, 0, 0], sizes = [16, 16, 8], strides = [1, 1, 1]} : vector<18x16x8xbf16> to vector<16x16x8xbf16>
    %31 = vector.shape_cast %30 : vector<16x16x8xbf16> to vector<256x8xbf16>
    %c2 = arith.constant 2 : index
    %c0_46 = arith.constant 0 : index
    %c0_47 = arith.constant 0 : index
    %c0_48 = arith.constant 0 : index
    %32 = vector.load %arg3[%c2, %c0_46, %c0_47, %c0_48] : memref<3x3x8x128xbf16, #tpu.memory_space<vmem>>, vector<1x1x8x128xbf16>
    %33 = vector.shape_cast %32 : vector<1x1x8x128xbf16> to vector<8x128xbf16>
    %cst_49 = arith.constant dense<0.000000e+00> : vector<256x128xf32>
    %34 = tpu.matmul %31, %33, %cst_49 {dimension_numbers = #tpu.dot_dimension_numbers<[1], [0], [0], [1], [0, 0, 1, 1], [], []>} : vector<256x8xbf16>, vector<8x128xbf16>, vector<256x128xf32> -> vector<256x128xf32>
    %35 = arith.addf %29, %34 : vector<256x128xf32>
    %c0_50 = arith.constant 0 : index
    %c1_51 = arith.constant 1 : index
    %c0_52 = arith.constant 0 : index
    %36 = vector.load %arg8[%c0_50, %c1_51, %c0_52] : memref<18x18x8xbf16, #tpu.memory_space<vmem>>, vector<18x16x8xbf16>
    %37 = vector.extract_strided_slice %36 {offsets = [0, 0, 0], sizes = [16, 16, 8], strides = [1, 1, 1]} : vector<18x16x8xbf16> to vector<16x16x8xbf16>
    %38 = vector.shape_cast %37 : vector<16x16x8xbf16> to vector<256x8xbf16>
    %c0_53 = arith.constant 0 : index
    %c1_54 = arith.constant 1 : index
    %c0_55 = arith.constant 0 : index
    %c0_56 = arith.constant 0 : index
    %39 = vector.load %arg3[%c0_53, %c1_54, %c0_55, %c0_56] : memref<3x3x8x128xbf16, #tpu.memory_space<vmem>>, vector<1x1x8x128xbf16>
    %40 = vector.shape_cast %39 : vector<1x1x8x128xbf16> to vector<8x128xbf16>
    %cst_57 = arith.constant dense<0.000000e+00> : vector<256x128xf32>
    %41 = tpu.matmul %38, %40, %cst_57 {dimension_numbers = #tpu.dot_dimension_numbers<[1], [0], [0], [1], [0, 0, 1, 1], [], []>} : vector<256x8xbf16>, vector<8x128xbf16>, vector<256x128xf32> -> vector<256x128xf32>
    %42 = arith.addf %35, %41 : vector<256x128xf32>
    %43 = vector.extract_strided_slice %36 {offsets = [1, 0, 0], sizes = [16, 16, 8], strides = [1, 1, 1]} : vector<18x16x8xbf16> to vector<16x16x8xbf16>
    %44 = vector.shape_cast %43 : vector<16x16x8xbf16> to vector<256x8xbf16>
    %c1_58 = arith.constant 1 : index
    %c1_59 = arith.constant 1 : index
    %c0_60 = arith.constant 0 : index
    %c0_61 = arith.constant 0 : index
    %45 = vector.load %arg3[%c1_58, %c1_59, %c0_60, %c0_61] : memref<3x3x8x128xbf16, #tpu.memory_space<vmem>>, vector<1x1x8x128xbf16>
    %46 = vector.shape_cast %45 : vector<1x1x8x128xbf16> to vector<8x128xbf16>
    %cst_62 = arith.constant dense<0.000000e+00> : vector<256x128xf32>
    %47 = tpu.matmul %44, %46, %cst_62 {dimension_numbers = #tpu.dot_dimension_numbers<[1], [0], [0], [1], [0, 0, 1, 1], [], []>} : vector<256x8xbf16>, vector<8x128xbf16>, vector<256x128xf32> -> vector<256x128xf32>
    %48 = arith.addf %42, %47 : vector<256x128xf32>
    %49 = vector.extract_strided_slice %36 {offsets = [2, 0, 0], sizes = [16, 16, 8], strides = [1, 1, 1]} : vector<18x16x8xbf16> to vector<16x16x8xbf16>
    %50 = vector.shape_cast %49 : vector<16x16x8xbf16> to vector<256x8xbf16>
    %c2_63 = arith.constant 2 : index
    %c1_64 = arith.constant 1 : index
    %c0_65 = arith.constant 0 : index
    %c0_66 = arith.constant 0 : index
    %51 = vector.load %arg3[%c2_63, %c1_64, %c0_65, %c0_66] : memref<3x3x8x128xbf16, #tpu.memory_space<vmem>>, vector<1x1x8x128xbf16>
    %52 = vector.shape_cast %51 : vector<1x1x8x128xbf16> to vector<8x128xbf16>
    %cst_67 = arith.constant dense<0.000000e+00> : vector<256x128xf32>
    %53 = tpu.matmul %50, %52, %cst_67 {dimension_numbers = #tpu.dot_dimension_numbers<[1], [0], [0], [1], [0, 0, 1, 1], [], []>} : vector<256x8xbf16>, vector<8x128xbf16>, vector<256x128xf32> -> vector<256x128xf32>
    %54 = arith.addf %48, %53 : vector<256x128xf32>
    %c0_68 = arith.constant 0 : index
    %c2_69 = arith.constant 2 : index
    %c0_70 = arith.constant 0 : index
    %55 = vector.load %arg8[%c0_68, %c2_69, %c0_70] : memref<18x18x8xbf16, #tpu.memory_space<vmem>>, vector<18x16x8xbf16>
    %56 = vector.extract_strided_slice %55 {offsets = [0, 0, 0], sizes = [16, 16, 8], strides = [1, 1, 1]} : vector<18x16x8xbf16> to vector<16x16x8xbf16>
    %57 = vector.shape_cast %56 : vector<16x16x8xbf16> to vector<256x8xbf16>
    %c0_71 = arith.constant 0 : index
    %c2_72 = arith.constant 2 : index
    %c0_73 = arith.constant 0 : index
    %c0_74 = arith.constant 0 : index
    %58 = vector.load %arg3[%c0_71, %c2_72, %c0_73, %c0_74] : memref<3x3x8x128xbf16, #tpu.memory_space<vmem>>, vector<1x1x8x128xbf16>
    %59 = vector.shape_cast %58 : vector<1x1x8x128xbf16> to vector<8x128xbf16>
    %cst_75 = arith.constant dense<0.000000e+00> : vector<256x128xf32>
    %60 = tpu.matmul %57, %59, %cst_75 {dimension_numbers = #tpu.dot_dimension_numbers<[1], [0], [0], [1], [0, 0, 1, 1], [], []>} : vector<256x8xbf16>, vector<8x128xbf16>, vector<256x128xf32> -> vector<256x128xf32>
    %61 = arith.addf %54, %60 : vector<256x128xf32>
    %62 = vector.extract_strided_slice %55 {offsets = [1, 0, 0], sizes = [16, 16, 8], strides = [1, 1, 1]} : vector<18x16x8xbf16> to vector<16x16x8xbf16>
    %63 = vector.shape_cast %62 : vector<16x16x8xbf16> to vector<256x8xbf16>
    %c1_76 = arith.constant 1 : index
    %c2_77 = arith.constant 2 : index
    %c0_78 = arith.constant 0 : index
    %c0_79 = arith.constant 0 : index
    %64 = vector.load %arg3[%c1_76, %c2_77, %c0_78, %c0_79] : memref<3x3x8x128xbf16, #tpu.memory_space<vmem>>, vector<1x1x8x128xbf16>
    %65 = vector.shape_cast %64 : vector<1x1x8x128xbf16> to vector<8x128xbf16>
    %cst_80 = arith.constant dense<0.000000e+00> : vector<256x128xf32>
    %66 = tpu.matmul %63, %65, %cst_80 {dimension_numbers = #tpu.dot_dimension_numbers<[1], [0], [0], [1], [0, 0, 1, 1], [], []>} : vector<256x8xbf16>, vector<8x128xbf16>, vector<256x128xf32> -> vector<256x128xf32>
    %67 = arith.addf %61, %66 : vector<256x128xf32>
    %68 = vector.extract_strided_slice %55 {offsets = [2, 0, 0], sizes = [16, 16, 8], strides = [1, 1, 1]} : vector<18x16x8xbf16> to vector<16x16x8xbf16>
    %69 = vector.shape_cast %68 : vector<16x16x8xbf16> to vector<256x8xbf16>
    %c2_81 = arith.constant 2 : index
    %c2_82 = arith.constant 2 : index
    %c0_83 = arith.constant 0 : index
    %c0_84 = arith.constant 0 : index
    %70 = vector.load %arg3[%c2_81, %c2_82, %c0_83, %c0_84] : memref<3x3x8x128xbf16, #tpu.memory_space<vmem>>, vector<1x1x8x128xbf16>
    %71 = vector.shape_cast %70 : vector<1x1x8x128xbf16> to vector<8x128xbf16>
    %cst_85 = arith.constant dense<0.000000e+00> : vector<256x128xf32>
    %72 = tpu.matmul %69, %71, %cst_85 {dimension_numbers = #tpu.dot_dimension_numbers<[1], [0], [0], [1], [0, 0, 1, 1], [], []>} : vector<256x8xbf16>, vector<8x128xbf16>, vector<256x128xf32> -> vector<256x128xf32>
    %73 = arith.addf %67, %72 : vector<256x128xf32>
    %c0_86 = arith.constant 0 : index
    %c0_87 = arith.constant 0 : index
    %74 = vector.load %arg4[%c0_86, %c0_87] : memref<1x128xf32, #tpu.memory_space<vmem>>, vector<1x128xf32>
    %75 = vector.broadcast %74 : vector<1x128xf32> to vector<256x128xf32>
    %76 = arith.addf %73, %75 : vector<256x128xf32>
    %cst_88 = arith.constant 0.000000e+00 : f32
    %77 = vector.broadcast %cst_88 : f32 to vector<256x128xf32>
    %78 = arith.maximumf %76, %77 : vector<256x128xf32>
    %79 = arith.truncf %78 : vector<256x128xf32> to vector<256x128xbf16>
    %80 = vector.shape_cast %79 : vector<256x128xbf16> to vector<16x16x128xbf16>
    %c1_89 = arith.constant 1 : index
    %c0_90 = arith.constant 0 : index
    %c128 = arith.constant 128 : index
    %81 = vector.load %arg9[%c1_89, %c0_90, %c128] : memref<18x16x384xbf16, #tpu.memory_space<vmem>>, vector<16x16x128xbf16>
    tpu.vector_store %arg9[%c1_89, %c0_90, %c128], %80 {strides = array<i32>} : memref<18x16x384xbf16, #tpu.memory_space<vmem>>, vector<16x16x128xbf16>,
    %cst_91 = arith.constant 0.000000e+00 : bf16
    %82 = vector.broadcast %cst_91 : bf16 to vector<16x1x128xbf16>
    %c1_92 = arith.constant 1 : index
    %c0_93 = arith.constant 0 : index
    %c0_94 = arith.constant 0 : index
    %83 = vector.load %arg9[%c1_92, %c0_93, %c0_94] : memref<18x16x384xbf16, #tpu.memory_space<vmem>>, vector<16x1x128xbf16>
    tpu.vector_store %arg9[%c1_92, %c0_93, %c0_94], %82 {strides = array<i32>} : memref<18x16x384xbf16, #tpu.memory_space<vmem>>, vector<16x1x128xbf16>,
    %84 = vector.extract_strided_slice %80 {offsets = [0, 0, 0], sizes = [16, 15, 128], strides = [1, 1, 1]} : vector<16x16x128xbf16> to vector<16x15x128xbf16>
    %c1_95 = arith.constant 1 : index
    %c1_96 = arith.constant 1 : index
    %c0_97 = arith.constant 0 : index
    %85 = vector.load %arg9[%c1_95, %c1_96, %c0_97] : memref<18x16x384xbf16, #tpu.memory_space<vmem>>, vector<16x15x128xbf16>
    tpu.vector_store %arg9[%c1_95, %c1_96, %c0_97], %84 {strides = array<i32>} : memref<18x16x384xbf16, #tpu.memory_space<vmem>>, vector<16x15x128xbf16>,
    %86 = vector.extract_strided_slice %80 {offsets = [0, 1, 0], sizes = [16, 15, 128], strides = [1, 1, 1]} : vector<16x16x128xbf16> to vector<16x15x128xbf16>
    %c1_98 = arith.constant 1 : index
    %c0_99 = arith.constant 0 : index
    %c256 = arith.constant 256 : index
    %87 = vector.load %arg9[%c1_98, %c0_99, %c256] : memref<18x16x384xbf16, #tpu.memory_space<vmem>>, vector<16x15x128xbf16>
    tpu.vector_store %arg9[%c1_98, %c0_99, %c256], %86 {strides = array<i32>} : memref<18x16x384xbf16, #tpu.memory_space<vmem>>, vector<16x15x128xbf16>,
    %cst_100 = arith.constant 0.000000e+00 : bf16
    %88 = vector.broadcast %cst_100 : bf16 to vector<16x1x128xbf16>
    %c1_101 = arith.constant 1 : index
    %c15 = arith.constant 15 : index
    %c256_102 = arith.constant 256 : index
    %89 = vector.load %arg9[%c1_101, %c15, %c256_102] : memref<18x16x384xbf16, #tpu.memory_space<vmem>>, vector<16x1x128xbf16>
    tpu.vector_store %arg9[%c1_101, %c15, %c256_102], %88 {strides = array<i32>} : memref<18x16x384xbf16, #tpu.memory_space<vmem>>, vector<16x1x128xbf16>,
    %c0_103 = arith.constant 0 : index
    %c0_104 = arith.constant 0 : index
    %c0_105 = arith.constant 0 : index
    %90 = vector.load %arg9[%c0_103, %c0_104, %c0_105] : memref<18x16x384xbf16, #tpu.memory_space<vmem>>, vector<16x16x384xbf16>
    %91 = vector.shape_cast %90 : vector<16x16x384xbf16> to vector<256x384xbf16>
    %c0_106 = arith.constant 0 : index
    %c0_107 = arith.constant 0 : index
    %c0_108 = arith.constant 0 : index
    %92 = vector.load %arg5[%c0_106, %c0_107, %c0_108] : memref<3x384x128xbf16, #tpu.memory_space<vmem>>, vector<1x384x128xbf16>
    %93 = vector.shape_cast %92 : vector<1x384x128xbf16> to vector<384x128xbf16>
    %cst_109 = arith.constant dense<0.000000e+00> : vector<256x128xf32>
    %94 = tpu.matmul %91, %93, %cst_109 {dimension_numbers = #tpu.dot_dimension_numbers<[1], [0], [0], [1], [0, 0, 1, 1], [], []>} : vector<256x384xbf16>, vector<384x128xbf16>, vector<256x128xf32> -> vector<256x128xf32>
    %c1_110 = arith.constant 1 : index
    %c0_111 = arith.constant 0 : index
    %c0_112 = arith.constant 0 : index
    %95 = vector.load %arg9[%c1_110, %c0_111, %c0_112] : memref<18x16x384xbf16, #tpu.memory_space<vmem>>, vector<16x16x384xbf16>
    %96 = vector.shape_cast %95 : vector<16x16x384xbf16> to vector<256x384xbf16>
    %c1_113 = arith.constant 1 : index
    %c0_114 = arith.constant 0 : index
    %c0_115 = arith.constant 0 : index
    %97 = vector.load %arg5[%c1_113, %c0_114, %c0_115] : memref<3x384x128xbf16, #tpu.memory_space<vmem>>, vector<1x384x128xbf16>
    %98 = vector.shape_cast %97 : vector<1x384x128xbf16> to vector<384x128xbf16>
    %cst_116 = arith.constant dense<0.000000e+00> : vector<256x128xf32>
    %99 = tpu.matmul %96, %98, %cst_116 {dimension_numbers = #tpu.dot_dimension_numbers<[1], [0], [0], [1], [0, 0, 1, 1], [], []>} : vector<256x384xbf16>, vector<384x128xbf16>, vector<256x128xf32> -> vector<256x128xf32>
    %100 = arith.addf %94, %99 : vector<256x128xf32>
    %c2_117 = arith.constant 2 : index
    %c0_118 = arith.constant 0 : index
    %c0_119 = arith.constant 0 : index
    %101 = vector.load %arg9[%c2_117, %c0_118, %c0_119] : memref<18x16x384xbf16, #tpu.memory_space<vmem>>, vector<16x16x384xbf16>
    %102 = vector.shape_cast %101 : vector<16x16x384xbf16> to vector<256x384xbf16>
    %c2_120 = arith.constant 2 : index
    %c0_121 = arith.constant 0 : index
    %c0_122 = arith.constant 0 : index
    %103 = vector.load %arg5[%c2_120, %c0_121, %c0_122] : memref<3x384x128xbf16, #tpu.memory_space<vmem>>, vector<1x384x128xbf16>
    %104 = vector.shape_cast %103 : vector<1x384x128xbf16> to vector<384x128xbf16>
    %cst_123 = arith.constant dense<0.000000e+00> : vector<256x128xf32>
    %105 = tpu.matmul %102, %104, %cst_123 {dimension_numbers = #tpu.dot_dimension_numbers<[1], [0], [0], [1], [0, 0, 1, 1], [], []>} : vector<256x384xbf16>, vector<384x128xbf16>, vector<256x128xf32> -> vector<256x128xf32>
    %106 = arith.addf %100, %105 : vector<256x128xf32>
    %c0_124 = arith.constant 0 : index
    %c0_125 = arith.constant 0 : index
    %107 = vector.load %arg6[%c0_124, %c0_125] : memref<1x128xf32, #tpu.memory_space<vmem>>, vector<1x128xf32>
    %108 = vector.broadcast %107 : vector<1x128xf32> to vector<256x128xf32>
    %109 = arith.addf %106, %108 : vector<256x128xf32>
    %cst_126 = arith.constant 0.000000e+00 : f32
    %110 = vector.broadcast %cst_126 : f32 to vector<256x128xf32>
    %111 = arith.maximumf %109, %110 : vector<256x128xf32>
    %112 = vector.shape_cast %111 : vector<256x128xf32> to vector<16x16x128xf32>
    %113 = arith.truncf %112 : vector<16x16x128xf32> to vector<16x16x128xbf16>
    %c0_127 = arith.constant 0 : index
    %c0_128 = arith.constant 0 : index
    %c0_129 = arith.constant 0 : index
    %c0_130 = arith.constant 0 : index
    %114 = vector.load %arg7[%c0_127, %c0_128, %c0_129, %c0_130] : memref<1x16x16x128xbf16, #tpu.memory_space<vmem>>, vector<1x16x16x128xbf16>
    %115 = vector.shape_cast %114 : vector<1x16x16x128xbf16> to vector<16x16x128xbf16>
    %116 = vector.shape_cast %113 : vector<16x16x128xbf16> to vector<1x16x16x128xbf16>
    tpu.vector_store %arg7[%c0_127, %c0_128, %c0_129, %c0_130], %116 {strides = array<i32>} : memref<1x16x16x128xbf16, #tpu.memory_space<vmem>>, vector<1x16x16x128xbf16>,
    return
  }
  func.func @transform_0(%arg0: i32) -> (i32, i32, i32, i32) {
    %c0_i32 = arith.constant 0 : i32
    %c0_i32_0 = arith.constant 0 : i32
    %c0_i32_1 = arith.constant 0 : i32
    %c0_i32_2 = arith.constant 0 : i32
    return %arg0, %c0_i32, %c0_i32_0, %c0_i32_1 : i32, i32, i32, i32
  }
  func.func @transform_1(%arg0: i32) -> (i32, i32, i32, i32) {
    %c0_i32 = arith.constant 0 : i32
    %c0_i32_0 = arith.constant 0 : i32
    %c0_i32_1 = arith.constant 0 : i32
    %c0_i32_2 = arith.constant 0 : i32
    return %arg0, %c0_i32, %c0_i32_0, %c0_i32_1 : i32, i32, i32, i32
  }
  func.func @transform_2(%arg0: i32) -> (i32, i32, i32, i32) {
    %c0_i32 = arith.constant 0 : i32
    %c0_i32_0 = arith.constant 0 : i32
    %c0_i32_1 = arith.constant 0 : i32
    %c0_i32_2 = arith.constant 0 : i32
    %c0_i32_3 = arith.constant 0 : i32
    return %c0_i32, %c0_i32_0, %c0_i32_1, %c0_i32_2 : i32, i32, i32, i32
  }
  func.func @transform_3(%arg0: i32) -> (i32, i32) {
    %c0_i32 = arith.constant 0 : i32
    %c0_i32_0 = arith.constant 0 : i32
    %c0_i32_1 = arith.constant 0 : i32
    return %c0_i32, %c0_i32_0 : i32, i32
  }
  func.func @transform_4(%arg0: i32) -> (i32, i32, i32) {
    %c0_i32 = arith.constant 0 : i32
    %c0_i32_0 = arith.constant 0 : i32
    %c0_i32_1 = arith.constant 0 : i32
    %c0_i32_2 = arith.constant 0 : i32
    return %c0_i32, %c0_i32_0, %c0_i32_1 : i32, i32, i32
  }
  func.func @transform_5(%arg0: i32) -> (i32, i32) {
    %c0_i32 = arith.constant 0 : i32
    %c0_i32_0 = arith.constant 0 : i32
    %c0_i32_1 = arith.constant 0 : i32
    return %c0_i32, %c0_i32_0 : i32, i32
  }
  func.func @transform_6(%arg0: i32) -> (i32, i32, i32, i32) {
    %c0_i32 = arith.constant 0 : i32
    %c0_i32_0 = arith.constant 0 : i32
    %c0_i32_1 = arith.constant 0 : i32
    %c0_i32_2 = arith.constant 0 : i32
    return %arg0, %c0_i32, %c0_i32_0, %c0_i32_1 : i32, i32, i32, i32
  }
}

</mosaic_0001>

<llo_original>
// kernel: up_forward.1
$region0: #{up_forward.1}
  #allocation0 [shape = 'u32[]', space=smem, size = 0x4, offset = 0x4, fixed_abs, tag = 'smem constant byte address 0x4 - core index']
  #allocation1 [shape = 'u32[144,128]{1,0:T(1,128)}', space=vmem, size = 0x12000, scoped, tag = 'internal scratch']
  #allocation2 [shape = 'bf16[18,18,8]{2,1,0:T(8,128)(2,1)}', space=vmem, size = 0x1b000, scoped, tag = 'scratch operand']
  #allocation3 [shape = 'bf16[18,16,384]{2,1,0:T(16,128)(2,1)}', space=vmem, size = 0x36000, scoped, tag = 'scratch operand']
  %s0 = inlined_call_operand.vmem [shape: bf16[2,16,16,4], index: 0, kind: input, shape index: {}]
  %s1 = inlined_call_operand.vmem [shape: bf16[2,16,16,4], index: 1, kind: input, shape index: {}]
  %s2 = inlined_call_operand.vmem [shape: bf16[3,3,8,128], index: 2, kind: input, shape index: {}]
  %s3 = inlined_call_operand.vmem [shape: f32[1,128], index: 3, kind: input, shape index: {}]
  %s4 = inlined_call_operand.vmem [shape: bf16[3,384,128], index: 4, kind: input, shape index: {}]
  %s5 = inlined_call_operand.vmem [shape: f32[1,128], index: 5, kind: input, shape index: {}]
  %s6 = inlined_call_operand.vmem [shape: bf16[2,16,16,128], index: 6, kind: output, shape index: {}]
  %s7 = sld [smem:[#allocation0]]
  $region57: #{up_forward.1} parent=0
    _
  %s9 = ssub.s32 1, %s7
  %s10 = scalar_select 0, %s9, %s7
  loop: start=0, step=1, limit=4
  $region2: #{up_forward.1} parent=0 // loop_pre_header
    _
  $region3: #{up_forward.1} parent=0 // loop_header
    %s12 = sphi 0, %s16
    %p13 = scmp.ge.s32.totalorder %s12, 4
    %s22 = sphi 0, %s24
    %s25 = sphi 0, %s22
    %s26 = sphi 0, %s25
    %s42 = sphi 0, %s26
    %s48 = sphi 0, %s50
    %s51 = sphi 0, %s48
    %s52 = sphi 0, %s51
    %s68 = sphi 0, %s52
    %s72 = sphi 0, %s72
    %s74 = sphi 0, %s72
    %s75 = sphi 0, %s74
    %s89 = sphi 0, %s75
    %s93 = sphi 0, %s93
    %s95 = sphi 0, %s93
    %s96 = sphi 0, %s95
    %s110 = sphi 0, %s96
    %s114 = sphi 0, %s114
    %s116 = sphi 0, %s114
    %s117 = sphi 0, %s116
    %s131 = sphi 0, %s117
    %s135 = sphi 0, %s135
    %s137 = sphi 0, %s135
    %s138 = sphi 0, %s137
    %s152 = sphi 0, %s138
    %s158 = sphi 0, %s160
    %s161 = sphi 0, %s158
    %s162 = sphi 0, %s161
    %s178 = sphi 0, %s162
  $region4: #{up_forward.1} parent=0 // loop_header_branch
    %15 = sbr.rel (%p13) target = $region8
  $region5: #{up_forward.1} parent=0 // loop_body
    %s17 = ssub.s32 %s12, 1
    %s18 = ssub.s32 %s12, 2
    %s19 = sadd.s32 %s12, 1
    %s20 = ssub.s32 %s12, %s19
    %p21 = scmp.eq.s32.totalorder %s20, 0
    %s23 = sadd.s32 %s22, 1
    %s24 = scalar_select %p21, %s22, %s23
    %p27 = pneg %p21
    %p28 = scmp.eq.s32.totalorder %s12, 1
    %p29 = por %p27, %p28
    %p30 = scmp.ne.s32.totalorder %s22, %s25
    %p31 = scmp.eq.s32.totalorder %s12, 0
    %p32 = por %p30, %p31
    %p33 = scmp.ne.s32.totalorder %s22, %s25
    %p34 = scmp.eq.s32.totalorder %s17, 1
    %p35 = por %p33, %p34
    %p36 = scmp.ne.s32.totalorder %s25, %s26
    %p37 = scmp.eq.s32.totalorder %s17, 0
    %p38 = por %p36, %p37
    %p39 = scmp.ne.s32.totalorder %s25, %s26
    %p40 = scmp.eq.s32.totalorder %s18, 1
    %p41 = por %p39, %p40
    %p43 = scmp.ne.s32.totalorder %s26, %s42
    %p44 = scmp.eq.s32.totalorder %s18, 0
    %p45 = por %p43, %p44
    %s46 = ssub.s32 %s12, %s19
    %p47 = scmp.eq.s32.totalorder %s46, 0
    %s49 = sadd.s32 %s48, 1
    %s50 = scalar_select %p47, %s48, %s49
    %p53 = pneg %p47
    %p54 = scmp.eq.s32.totalorder %s12, 1
    %p55 = por %p53, %p54
    %p56 = scmp.ne.s32.totalorder %s48, %s51
    %p57 = scmp.eq.s32.totalorder %s12, 0
    %p58 = por %p56, %p57
    %p59 = scmp.ne.s32.totalorder %s48, %s51
    %p60 = scmp.eq.s32.totalorder %s17, 1
    %p61 = por %p59, %p60
    %p62 = scmp.ne.s32.totalorder %s51, %s52
    %p63 = scmp.eq.s32.totalorder %s17, 0
    %p64 = por %p62, %p63
    %p65 = scmp.ne.s32.totalorder %s51, %s52
    %p66 = scmp.eq.s32.totalorder %s18, 1
    %p67 = por %p65, %p66
    %p69 = scmp.ne.s32.totalorder %s52, %s68
    %p70 = scmp.eq.s32.totalorder %s18, 0
    %p71 = por %p69, %p70
    %s73 = sadd.s32 %s72, 1
    %p76 = scmp.eq.s32.totalorder %s12, 1
    %p77 = scmp.ne.s32.totalorder %s72, %s74
    %p78 = scmp.eq.s32.totalorder %s12, 0
    %p79 = por %p77, %p78
    %p80 = scmp.ne.s32.totalorder %s72, %s74
    %p81 = scmp.eq.s32.totalorder %s17, 1
    %p82 = por %p80, %p81
    %p83 = scmp.ne.s32.totalorder %s74, %s75
    %p84 = scmp.eq.s32.totalorder %s17, 0
    %p85 = por %p83, %p84
    %p86 = scmp.ne.s32.totalorder %s74, %s75
    %p87 = scmp.eq.s32.totalorder %s18, 1
    %p88 = por %p86, %p87
    %p90 = scmp.ne.s32.totalorder %s75, %s89
    %p91 = scmp.eq.s32.totalorder %s18, 0
    %p92 = por %p90, %p91
    %s94 = sadd.s32 %s93, 1
    %p97 = scmp.eq.s32.totalorder %s12, 1
    %p98 = scmp.ne.s32.totalorder %s93, %s95
    %p99 = scmp.eq.s32.totalorder %s12, 0
    %p100 = por %p98, %p99
    %p101 = scmp.ne.s32.totalorder %s93, %s95
    %p102 = scmp.eq.s32.totalorder %s17, 1
    %p103 = por %p101, %p102
    %p104 = scmp.ne.s32.totalorder %s95, %s96
    %p105 = scmp.eq.s32.totalorder %s17, 0
    %p106 = por %p104, %p105
    %p107 = scmp.ne.s32.totalorder %s95, %s96
    %p108 = scmp.eq.s32.totalorder %s18, 1
    %p109 = por %p107, %p108
    %p111 = scmp.ne.s32.totalorder %s96, %s110
    %p112 = scmp.eq.s32.totalorder %s18, 0
    %p113 = por %p111, %p112
    %s115 = sadd.s32 %s114, 1
    %p118 = scmp.eq.s32.totalorder %s12, 1
    %p119 = scmp.ne.s32.totalorder %s114, %s116
    %p120 = scmp.eq.s32.totalorder %s12, 0
    %p121 = por %p119, %p120
    %p122 = scmp.ne.s32.totalorder %s114, %s116
    %p123 = scmp.eq.s32.totalorder %s17, 1
    %p124 = por %p122, %p123
    %p125 = scmp.ne.s32.totalorder %s116, %s117
    %p126 = scmp.eq.s32.totalorder %s17, 0
    %p127 = por %p125, %p126
    %p128 = scmp.ne.s32.totalorder %s116, %s117
    %p129 = scmp.eq.s32.totalorder %s18, 1
    %p130 = por %p128, %p129
    %p132 = scmp.ne.s32.totalorder %s117, %s131
    %p133 = scmp.eq.s32.totalorder %s18, 0
    %p134 = por %p132, %p133
    %s136 = sadd.s32 %s135, 1
    %p139 = scmp.eq.s32.totalorder %s12, 1
    %p140 = scmp.ne.s32.totalorder %s135, %s137
    %p141 = scmp.eq.s32.totalorder %s12, 0
    %p142 = por %p140, %p141
    %p143 = scmp.ne.s32.totalorder %s135, %s137
    %p144 = scmp.eq.s32.totalorder %s17, 1
    %p145 = por %p143, %p144
    %p146 = scmp.ne.s32.totalorder %s137, %s138
    %p147 = scmp.eq.s32.totalorder %s17, 0
    %p148 = por %p146, %p147
    %p149 = scmp.ne.s32.totalorder %s137, %s138
    %p150 = scmp.eq.s32.totalorder %s18, 1
    %p151 = por %p149, %p150
    %p153 = scmp.ne.s32.totalorder %s138, %s152
    %p154 = scmp.eq.s32.totalorder %s18, 0
    %p155 = por %p153, %p154
    %s156 = ssub.s32 %s12, %s19
    %p157 = scmp.eq.s32.totalorder %s156, 0
    %s159 = sadd.s32 %s158, 1
    %s160 = scalar_select %p157, %s158, %s159
    %p163 = pneg %p157
    %p164 = scmp.eq.s32.totalorder %s12, 1
    %p165 = por %p163, %p164
    %p166 = scmp.ne.s32.totalorder %s158, %s161
    %p167 = scmp.eq.s32.totalorder %s12, 0
    %p168 = por %p166, %p167
    %p169 = scmp.ne.s32.totalorder %s158, %s161
    %p170 = scmp.eq.s32.totalorder %s17, 1
    %p171 = por %p169, %p170
    %p172 = scmp.ne.s32.totalorder %s161, %s162
    %p173 = scmp.eq.s32.totalorder %s17, 0
    %p174 = por %p172, %p173
    %p175 = scmp.ne.s32.totalorder %s161, %s162
    %p176 = scmp.eq.s32.totalorder %s18, 1
    %p177 = por %p175, %p176
    %p179 = scmp.ne.s32.totalorder %s162, %s178
    %p180 = scmp.eq.s32.totalorder %s18, 0
    %p181 = por %p179, %p180
    %p182 = scmp.le.s32.totalorder 1, %s12
    %p183 = scmp.lt.s32.totalorder %s12, 3
    %p184 = pnand %p182, %p183
    %p185 = pneg %p184
    // Predicated region
    $region9: #{up_forward.1} parent=5 // pred_check
      _
    $region10: #{up_forward.1} parent=5 // pred_check_branch
      %187 = sbr.rel (%p184) target = $region12
    $region11: #{up_forward.1} parent=5 // pred_region
      %s188 = ssub.s32 %s12, 1
      // Predicated region
      $region13: #{up_forward.1} parent=11 // pred_check
        %p189 = pneg %p85
      $region14: #{up_forward.1} parent=11 // pred_check_branch
        %191 = sbr.rel (%p189) target = $region16
      $region15: #{up_forward.1} parent=11 // pred_region
        _
      $region16: #{up_forward.1} parent=11 // pred_fallthru
        _
      // Predicated region
      $region17: #{up_forward.1} parent=11 // pred_check
        %p192 = pneg %p106
      $region18: #{up_forward.1} parent=11 // pred_check_branch
        %194 = sbr.rel (%p192) target = $region20
      $region19: #{up_forward.1} parent=11 // pred_region
        _
      $region20: #{up_forward.1} parent=11 // pred_fallthru
        _
      // Predicated region
      $region21: #{up_forward.1} parent=11 // pred_check
        %p195 = pneg %p127
      $region22: #{up_forward.1} parent=11 // pred_check_branch
        %197 = sbr.rel (%p195) target = $region24
      $region23: #{up_forward.1} parent=11 // pred_region
        _
      $region24: #{up_forward.1} parent=11 // pred_fallthru
        _
      // Predicated region
      $region25: #{up_forward.1} parent=11 // pred_check
        %p198 = pneg %p148
      $region26: #{up_forward.1} parent=11 // pred_check_branch
        %200 = sbr.rel (%p198) target = $region28
      $region27: #{up_forward.1} parent=11 // pred_region
        _
      $region28: #{up_forward.1} parent=11 // pred_fallthru
        _
    $region12: #{up_forward.1} parent=5 // pred_fallthru
      _
    %p201 = scmp.lt.s32.totalorder %s12, 2
    // Predicated region
    $region29: #{up_forward.1} parent=5 // pred_check
      %p202 = pneg %p201
    $region30: #{up_forward.1} parent=5 // pred_check_branch
      %204 = sbr.rel (%p202) target = $region32
    $region31: #{up_forward.1} parent=5 // pred_region
      // Predicated region
      $region33: #{up_forward.1} parent=31 // pred_check
        %p205 = pneg %p32
      $region34: #{up_forward.1} parent=31 // pred_check_branch
        %207 = sbr.rel (%p205) target = $region36
      $region35: #{up_forward.1} parent=31 // pred_region
        %p208 = scmp.lt.s32.totalorder %s12, 1
        %s209 = scalar_select %p208, %s12, 1
        %s210 = smul.addr %s209, 32
        %s211 = smul.addr %s210, 4
        %s212 = scalar_lea.vmem %s0, %s211
      $region36: #{up_forward.1} parent=31 // pred_fallthru
        _
      // Predicated region
      $region37: #{up_forward.1} parent=31 // pred_check
        %p213 = pneg %p58
      $region38: #{up_forward.1} parent=31 // pred_check_branch
        %215 = sbr.rel (%p213) target = $region40
      $region39: #{up_forward.1} parent=31 // pred_region
        %p216 = scmp.lt.s32.totalorder %s12, 1
        %s217 = scalar_select %p216, %s12, 1
        %s218 = smul.addr %s217, 32
        %s219 = smul.addr %s218, 4
        %s220 = scalar_lea.vmem %s1, %s219
      $region40: #{up_forward.1} parent=31 // pred_fallthru
        _
    $region32: #{up_forward.1} parent=5 // pred_fallthru
      _
    %p221 = scmp.le.s32.totalorder 1, %s12
    %p222 = scmp.lt.s32.totalorder %s12, 3
    %p223 = pnand %p221, %p222
    %p224 = pneg %p223
    // Predicated region
    $region41: #{up_forward.1} parent=5 // pred_check
      _
    $region42: #{up_forward.1} parent=5 // pred_check_branch
      %226 = sbr.rel (%p223) target = $region44
    $region43: #{up_forward.1} parent=5 // pred_region
      %s227 = ssub.s32 %s12, 1
      %p228 = scmp.lt.s32.totalorder %s17, 1
      %s229 = scalar_select %p228, %s17, 1
      %s230 = smul.addr %s229, 32
      %s231 = smul.addr %s230, 4
      %s232 = scalar_lea.vmem %s0, %s231
      %p233 = pneg %p38
      %p234 = pneg %p35
      %p235 = scmp.lt.s32.totalorder %s17, 1
      %s236 = scalar_select %p235, %s17, 1
      %s237 = smul.addr %s236, 32
      %s238 = smul.addr %s237, 4
      %s239 = scalar_lea.vmem %s1, %s238
      %p240 = pneg %p64
      %p241 = pneg %p61
      %p242 = pneg %p85
      %p243 = pneg %p82
      %p244 = pneg %p106
      %p245 = pneg %p103
      %p246 = pneg %p127
      %p247 = pneg %p124
      %p248 = pneg %p148
      %p249 = pneg %p145
      %p250 = pneg %p174
      %p251 = pneg %p171
      %p252 = scmp.lt.s32.totalorder %s17, 1
      %s253 = scalar_select %p252, %s17, 1
      %s254 = smul.addr %s253, 32
      %s255 = smul.addr %s254, 4
      %s256 = scalar_lea.vmem %s6, %s255
      %p257 = scmp.lt.s32.totalorder %s17, 1
      %s258 = scalar_select %p257, %s17, 1
      %s259 = smul.addr %s258, 32
      %s260 = smul.addr %s259, 4
      %s261 = scalar_lea.vmem %s0, %s260
      %p262 = scmp.lt.s32.totalorder %s17, 1
      %s263 = scalar_select %p262, %s17, 1
      %s264 = smul.addr %s263, 32
      %s265 = smul.addr %s264, 4
      %s266 = scalar_lea.vmem %s1, %s265
      %p267 = scmp.lt.s32.totalorder %s17, 1
      %s268 = scalar_select %p267, %s17, 1
      %s269 = smul.addr %s268, 32
      %s270 = smul.addr %s269, 4
      %s271 = scalar_lea.vmem %s6, %s270
      %vm273 = vcmask 60416
      %274 = vst.msk [vmem:[#allocation2] sm:$0xf] %vm273, 0
      %275 = vst.msk [vmem:[#allocation2 + $0x4] sm:$0xf] %vm273, 0
      %vm276 = vcmask 57344
      %277 = vst.msk [vmem:[#allocation2 + $0x8] sm:$0x1] %vm276, 0
      %s278 = scalar_lea.vmem [#allocation2], 204
      %279 = vst.msk [vmem:[%s278] sm:$0xf] %vm273, 0
      %280 = vst.msk [vmem:[%s278 + $0x4] sm:$0xf] %vm273, 0
      %281 = vst.msk [vmem:[%s278 + $0x8] sm:$0x1] %vm276, 0
      %vm282 = vcmask 57344
      %vm283 = vsmask.f32 256
      %vm284 = vmand %vm282, %vm283
      %v285 = vld [vmem:[#allocation2] sm:$0x1]
      %v286 = vsel %vm284, 0, %v285
      %287 = vst [vmem:[#allocation2] sm:$0x1] %v286
      %v288 = vld [vmem:[#allocation2 + $0xc] sm:$0x1]
      %v289 = vsel %vm284, 0, %v288
      %290 = vst [vmem:[#allocation2 + $0xc] sm:$0x1] %v289
      %v291 = vld [vmem:[#allocation2 + $0x18] sm:$0x1]
      %v292 = vsel %vm284, 0, %v291
      %293 = vst [vmem:[#allocation2 + $0x18] sm:$0x1] %v292
      %v294 = vld [vmem:[#allocation2 + $0x24] sm:$0x1]
      %v295 = vsel %vm284, 0, %v294
      %296 = vst [vmem:[#allocation2 + $0x24] sm:$0x1] %v295
      %v297 = vld [vmem:[#allocation2 + $0x30] sm:$0x1]
      %v298 = vsel %vm284, 0, %v297
      %299 = vst [vmem:[#allocation2 + $0x30] sm:$0x1] %v298
      %v300 = vld [vmem:[#allocation2 + $0x3c] sm:$0x1]
      %v301 = vsel %vm284, 0, %v300
      %302 = vst [vmem:[#allocation2 + $0x3c] sm:$0x1] %v301
      %v303 = vld [vmem:[#allocation2 + $0x48] sm:$0x1]
      %v304 = vsel %vm284, 0, %v303
      %305 = vst [vmem:[#allocation2 + $0x48] sm:$0x1] %v304
      %v306 = vld [vmem:[#allocation2 + $0x54] sm:$0x1]
      %v307 = vsel %vm284, 0, %v306
      %308 = vst [vmem:[#allocation2 + $0x54] sm:$0x1] %v307
      %v309 = vld [vmem:[#allocation2 + $0x60] sm:$0x1]
      %v310 = vsel %vm284, 0, %v309
      %311 = vst [vmem:[#allocation2 + $0x60] sm:$0x1] %v310
      %v312 = vld [vmem:[#allocation2 + $0x6c] sm:$0x1]
      %v313 = vsel %vm284, 0, %v312
      %314 = vst [vmem:[#allocation2 + $0x6c] sm:$0x1] %v313
      %v315 = vld [vmem:[#allocation2 + $0x78] sm:$0x1]
      %v316 = vsel %vm284, 0, %v315
      %317 = vst [vmem:[#allocation2 + $0x78] sm:$0x1] %v316
      %v318 = vld [vmem:[#allocation2 + $0x84] sm:$0x1]
      %v319 = vsel %vm284, 0, %v318
      %320 = vst [vmem:[#allocation2 + $0x84] sm:$0x1] %v319
      %v321 = vld [vmem:[#allocation2 + $0x90] sm:$0x1]
      %v322 = vsel %vm284, 0, %v321
      %323 = vst [vmem:[#allocation2 + $0x90] sm:$0x1] %v322
      %v324 = vld [vmem:[#allocation2 + $0x9c] sm:$0x1]
      %v325 = vsel %vm284, 0, %v324
      %326 = vst [vmem:[#allocation2 + $0x9c] sm:$0x1] %v325
      %v327 = vld [vmem:[#allocation2 + $0xa8] sm:$0x1]
      %v328 = vsel %vm284, 0, %v327
      %329 = vst [vmem:[#allocation2 + $0xa8] sm:$0x1] %v328
      %v330 = vld [vmem:[#allocation2 + $0xb4] sm:$0x1]
      %v331 = vsel %vm284, 0, %v330
      %332 = vst [vmem:[#allocation2 + $0xb4] sm:$0x1] %v331
      %v333 = vld [vmem:[#allocation2 + $0xc0] sm:$0x1]
      %v334 = vsel %vm284, 0, %v333
      %335 = vst [vmem:[#allocation2 + $0xc0] sm:$0x1] %v334
      %v336 = vld [vmem:[#allocation2 + $0xcc] sm:$0x1]
      %v337 = vsel %vm284, 0, %v336
      %338 = vst [vmem:[#allocation2 + $0xcc] sm:$0x1] %v337
      %vm339 = vsmask.f32 7938
      %vm340 = vmand %vm282, %vm339
      %v341 = vld [vmem:[#allocation2 + $0x8] sm:$0x1]
      %v342 = vsel %vm340, 0, %v341
      %343 = vst [vmem:[#allocation2 + $0x8] sm:$0x1] %v342
      %v344 = vld [vmem:[#allocation2 + $0x14] sm:$0x1]
      %v345 = vsel %vm340, 0, %v344
      %346 = vst [vmem:[#allocation2 + $0x14] sm:$0x1] %v345
      %v347 = vld [vmem:[#allocation2 + $0x20] sm:$0x1]
      %v348 = vsel %vm340, 0, %v347
      %349 = vst [vmem:[#allocation2 + $0x20] sm:$0x1] %v348
      %v350 = vld [vmem:[#allocation2 + $0x2c] sm:$0x1]
      %v351 = vsel %vm340, 0, %v350
      %352 = vst [vmem:[#allocation2 + $0x2c] sm:$0x1] %v351
      %v353 = vld [vmem:[#allocation2 + $0x38] sm:$0x1]
      %v354 = vsel %vm340, 0, %v353
      %355 = vst [vmem:[#allocation2 + $0x38] sm:$0x1] %v354
      %v356 = vld [vmem:[#allocation2 + $0x44] sm:$0x1]
      %v357 = vsel %vm340, 0, %v356
      %358 = vst [vmem:[#allocation2 + $0x44] sm:$0x1] %v357
      %v359 = vld [vmem:[#allocation2 + $0x50] sm:$0x1]
      %v360 = vsel %vm340, 0, %v359
      %361 = vst [vmem:[#allocation2 + $0x50] sm:$0x1] %v360
      %v362 = vld [vmem:[#allocation2 + $0x5c] sm:$0x1]
      %v363 = vsel %vm340, 0, %v362
      %364 = vst [vmem:[#allocation2 + $0x5c] sm:$0x1] %v363
      %v365 = vld [vmem:[#allocation2 + $0x68] sm:$0x1]
      %v366 = vsel %vm340, 0, %v365
      %367 = vst [vmem:[#allocation2 + $0x68] sm:$0x1] %v366
      %v368 = vld [vmem:[#allocation2 + $0x74] sm:$0x1]
      %v369 = vsel %vm340, 0, %v368
      %370 = vst [vmem:[#allocation2 + $0x74] sm:$0x1] %v369
      %v371 = vld [vmem:[#allocation2 + $0x80] sm:$0x1]
      %v372 = vsel %vm340, 0, %v371
      %373 = vst [vmem:[#allocation2 + $0x80] sm:$0x1] %v372
      %v374 = vld [vmem:[#allocation2 + $0x8c] sm:$0x1]
      %v375 = vsel %vm340, 0, %v374
      %376 = vst [vmem:[#allocation2 + $0x8c] sm:$0x1] %v375
      %v377 = vld [vmem:[#allocation2 + $0x98] sm:$0x1]
      %v378 = vsel %vm340, 0, %v377
      %379 = vst [vmem:[#allocation2 + $0x98] sm:$0x1] %v378
      %v380 = vld [vmem:[#allocation2 + $0xa4] sm:$0x1]
      %v381 = vsel %vm340, 0, %v380
      %382 = vst [vmem:[#allocation2 + $0xa4] sm:$0x1] %v381
      %v383 = vld [vmem:[#allocation2 + $0xb0] sm:$0x1]
      %v384 = vsel %vm340, 0, %v383
      %385 = vst [vmem:[#allocation2 + $0xb0] sm:$0x1] %v384
      %v386 = vld [vmem:[#allocation2 + $0xbc] sm:$0x1]
      %v387 = vsel %vm340, 0, %v386
      %388 = vst [vmem:[#allocation2 + $0xbc] sm:$0x1] %v387
      %v389 = vld [vmem:[#allocation2 + $0xc8] sm:$0x1]
      %v390 = vsel %vm340, 0, %v389
      %391 = vst [vmem:[#allocation2 + $0xc8] sm:$0x1] %v390
      %v392 = vld [vmem:[#allocation2 + $0xd4] sm:$0x1]
      %v393 = vsel %vm340, 0, %v392
      %394 = vst [vmem:[#allocation2 + $0xd4] sm:$0x1] %v393
      %395 = vst [vmem:[#allocation3] sm:$0xff] 0
      %396 = vst [vmem:[#allocation3 + $0x8] sm:$0xff] 0
      %397 = vst [vmem:[#allocation3 + $0x10] sm:$0xff] 0
      %s398 = scalar_lea.vmem [#allocation3], 408
      %399 = vst [vmem:[%s398] sm:$0xff] 0
      %400 = vst [vmem:[%s398 + $0x8] sm:$0xff] 0
      %401 = vst [vmem:[%s398 + $0x10] sm:$0xff] 0
      %v402 = vld [vmem:[%s261] sm:$0xf]
      %v403 = vld [vmem:[%s261 + $0x4] sm:$0xf]
      %v404 = vld [vmem:[%s261 + $0x8] sm:$0xf]
      %v405 = vld [vmem:[%s261 + $0xc] sm:$0xf]
      %v406 = vld [vmem:[%s261 + $0x10] sm:$0xf]
      %v407 = vld [vmem:[%s261 + $0x14] sm:$0xf]
      %v408 = vld [vmem:[%s261 + $0x18] sm:$0xf]
      %v409 = vld [vmem:[%s261 + $0x1c] sm:$0xf]
      %v410 = vld [vmem:[%s261 + $0x20] sm:$0xf]
      %v411 = vld [vmem:[%s261 + $0x24] sm:$0xf]
      %v412 = vld [vmem:[%s261 + $0x28] sm:$0xf]
      %v413 = vld [vmem:[%s261 + $0x2c] sm:$0xf]
      %v414 = vld [vmem:[%s261 + $0x30] sm:$0xf]
      %v415 = vld [vmem:[%s261 + $0x34] sm:$0xf]
      %v416 = vld [vmem:[%s261 + $0x38] sm:$0xf]
      %v417 = vld [vmem:[%s261 + $0x3c] sm:$0xf]
      %v418 = vld [vmem:[%s261 + $0x40] sm:$0xf]
      %v419 = vld [vmem:[%s261 + $0x44] sm:$0xf]
      %v420 = vld [vmem:[%s261 + $0x48] sm:$0xf]
      %v421 = vld [vmem:[%s261 + $0x4c] sm:$0xf]
      %v422 = vld [vmem:[%s261 + $0x50] sm:$0xf]
      %v423 = vld [vmem:[%s261 + $0x54] sm:$0xf]
      %v424 = vld [vmem:[%s261 + $0x58] sm:$0xf]
      %v425 = vld [vmem:[%s261 + $0x5c] sm:$0xf]
      %v426 = vld [vmem:[%s261 + $0x60] sm:$0xf]
      %v427 = vld [vmem:[%s261 + $0x64] sm:$0xf]
      %v428 = vld [vmem:[%s261 + $0x68] sm:$0xf]
      %v429 = vld [vmem:[%s261 + $0x6c] sm:$0xf]
      %v430 = vld [vmem:[%s261 + $0x70] sm:$0xf]
      %v431 = vld [vmem:[%s261 + $0x74] sm:$0xf]
      %v432 = vld [vmem:[%s261 + $0x78] sm:$0xf]
      %v433 = vld [vmem:[%s261 + $0x7c] sm:$0xf]
      %vm434 = vsmask.f32 4368
      %vm435 = vmor %vm283, %vm434
      %v437 = vshrl.u32 %v402, 16
      %v439 = vrot.slane %v437, 7
      %v440 = vshll.u32 %v402, 16
      %v442 = vor.u32 %v439, %v440
      %v443 = vrot.slane %v439, 4
      %v445 = vshrl.u32 %v403, 16
      %v447 = vrot.slane %v445, 7
      %v448 = vshll.u32 %v403, 16
      %v450 = vor.u32 %v447, %v448
      %v451 = vsel %vm435, %v443, %v450
      %v452 = vrot.slane %v447, 4
      %v454 = vshrl.u32 %v404, 16
      %v456 = vrot.slane %v454, 7
      %v457 = vshll.u32 %v404, 16
      %v459 = vor.u32 %v456, %v457
      %v460 = vrot.slane %v456, 4
      %v462 = vshrl.u32 %v405, 16
      %v464 = vrot.slane %v462, 7
      %v465 = vshll.u32 %v405, 16
      %v467 = vor.u32 %v464, %v465
      %v468 = vsel %vm435, %v460, %v467
      %v469 = vrot.slane %v464, 4
      %v471 = vshrl.u32 %v406, 16
      %v473 = vrot.slane %v471, 7
      %v474 = vshll.u32 %v406, 16
      %v476 = vor.u32 %v473, %v474
      %v477 = vrot.slane %v473, 4
      %v479 = vshrl.u32 %v407, 16
      %v481 = vrot.slane %v479, 7
      %v482 = vshll.u32 %v407, 16
      %v484 = vor.u32 %v481, %v482
      %v485 = vsel %vm435, %v477, %v484
      %v486 = vrot.slane %v481, 4
      %v488 = vshrl.u32 %v408, 16
      %v490 = vrot.slane %v488, 7
      %v491 = vshll.u32 %v408, 16
      %v493 = vor.u32 %v490, %v491
      %v494 = vrot.slane %v490, 4
      %v496 = vshrl.u32 %v409, 16
      %v498 = vrot.slane %v496, 7
      %v499 = vshll.u32 %v409, 16
      %v501 = vor.u32 %v498, %v499
      %v502 = vsel %vm435, %v494, %v501
      %v503 = vrot.slane %v498, 4
      %v505 = vshrl.u32 %v410, 16
      %v507 = vrot.slane %v505, 7
      %v508 = vshll.u32 %v410, 16
      %v510 = vor.u32 %v507, %v508
      %v511 = vrot.slane %v507, 4
      %v513 = vshrl.u32 %v411, 16
      %v515 = vrot.slane %v513, 7
      %v516 = vshll.u32 %v411, 16
      %v518 = vor.u32 %v515, %v516
      %v519 = vsel %vm435, %v511, %v518
      %v520 = vrot.slane %v515, 4
      %v522 = vshrl.u32 %v412, 16
      %v524 = vrot.slane %v522, 7
      %v525 = vshll.u32 %v412, 16
      %v527 = vor.u32 %v524, %v525
      %v528 = vrot.slane %v524, 4
      %v530 = vshrl.u32 %v413, 16
      %v532 = vrot.slane %v530, 7
      %v533 = vshll.u32 %v413, 16
      %v535 = vor.u32 %v532, %v533
      %v536 = vsel %vm435, %v528, %v535
      %v537 = vrot.slane %v532, 4
      %v539 = vshrl.u32 %v414, 16
      %v541 = vrot.slane %v539, 7
      %v542 = vshll.u32 %v414, 16
      %v544 = vor.u32 %v541, %v542
      %v545 = vrot.slane %v541, 4
      %v547 = vshrl.u32 %v415, 16
      %v549 = vrot.slane %v547, 7
      %v550 = vshll.u32 %v415, 16
      %v552 = vor.u32 %v549, %v550
      %v553 = vsel %vm435, %v545, %v552
      %v554 = vrot.slane %v549, 4
      %v556 = vshrl.u32 %v416, 16
      %v558 = vrot.slane %v556, 7
      %v559 = vshll.u32 %v416, 16
      %v561 = vor.u32 %v558, %v559
      %v562 = vrot.slane %v558, 4
      %v564 = vshrl.u32 %v417, 16
      %v566 = vrot.slane %v564, 7
      %v567 = vshll.u32 %v417, 16
      %v569 = vor.u32 %v566, %v567
      %v570 = vsel %vm435, %v562, %v569
      %v571 = vrot.slane %v566, 4
      %v573 = vshrl.u32 %v418, 16
      %v575 = vrot.slane %v573, 7
      %v576 = vshll.u32 %v418, 16
      %v578 = vor.u32 %v575, %v576
      %v579 = vrot.slane %v575, 4
      %v581 = vshrl.u32 %v419, 16
      %v583 = vrot.slane %v581, 7
      %v584 = vshll.u32 %v419, 16
      %v586 = vor.u32 %v583, %v584
      %v587 = vsel %vm435, %v579, %v586
      %v588 = vrot.slane %v583, 4
      %v590 = vshrl.u32 %v420, 16
      %v592 = vrot.slane %v590, 7
      %v593 = vshll.u32 %v420, 16
      %v595 = vor.u32 %v592, %v593
      %v596 = vrot.slane %v592, 4
      %v598 = vshrl.u32 %v421, 16
      %v600 = vrot.slane %v598, 7
      %v601 = vshll.u32 %v421, 16
      %v603 = vor.u32 %v600, %v601
      %v604 = vsel %vm435, %v596, %v603
      %v605 = vrot.slane %v600, 4
      %v607 = vshrl.u32 %v422, 16
      %v609 = vrot.slane %v607, 7
      %v610 = vshll.u32 %v422, 16
      %v612 = vor.u32 %v609, %v610
      %v613 = vrot.slane %v609, 4
      %v615 = vshrl.u32 %v423, 16
      %v617 = vrot.slane %v615, 7
      %v618 = vshll.u32 %v423, 16
      %v620 = vor.u32 %v617, %v618
      %v621 = vsel %vm435, %v613, %v620
      %v622 = vrot.slane %v617, 4
      %v624 = vshrl.u32 %v424, 16
      %v626 = vrot.slane %v624, 7
      %v627 = vshll.u32 %v424, 16
      %v629 = vor.u32 %v626, %v627
      %v630 = vrot.slane %v626, 4
      %v632 = vshrl.u32 %v425, 16
      %v634 = vrot.slane %v632, 7
      %v635 = vshll.u32 %v425, 16
      %v637 = vor.u32 %v634, %v635
      %v638 = vsel %vm435, %v630, %v637
      %v639 = vrot.slane %v634, 4
      %v641 = vshrl.u32 %v426, 16
      %v643 = vrot.slane %v641, 7
      %v644 = vshll.u32 %v426, 16
      %v646 = vor.u32 %v643, %v644
      %v647 = vrot.slane %v643, 4
      %v649 = vshrl.u32 %v427, 16
      %v651 = vrot.slane %v649, 7
      %v652 = vshll.u32 %v427, 16
      %v654 = vor.u32 %v651, %v652
      %v655 = vsel %vm435, %v647, %v654
      %v656 = vrot.slane %v651, 4
      %v658 = vshrl.u32 %v428, 16
      %v660 = vrot.slane %v658, 7
      %v661 = vshll.u32 %v428, 16
      %v663 = vor.u32 %v660, %v661
      %v664 = vrot.slane %v660, 4
      %v666 = vshrl.u32 %v429, 16
      %v668 = vrot.slane %v666, 7
      %v669 = vshll.u32 %v429, 16
      %v671 = vor.u32 %v668, %v669
      %v672 = vsel %vm435, %v664, %v671
      %v673 = vrot.slane %v668, 4
      %v675 = vshrl.u32 %v430, 16
      %v677 = vrot.slane %v675, 7
      %v678 = vshll.u32 %v430, 16
      %v680 = vor.u32 %v677, %v678
      %v681 = vrot.slane %v677, 4
      %v683 = vshrl.u32 %v431, 16
      %v685 = vrot.slane %v683, 7
      %v686 = vshll.u32 %v431, 16
      %v688 = vor.u32 %v685, %v686
      %v689 = vsel %vm435, %v681, %v688
      %v690 = vrot.slane %v685, 4
      %v692 = vshrl.u32 %v432, 16
      %v694 = vrot.slane %v692, 7
      %v695 = vshll.u32 %v432, 16
      %v697 = vor.u32 %v694, %v695
      %v698 = vrot.slane %v694, 4
      %v700 = vshrl.u32 %v433, 16
      %v702 = vrot.slane %v700, 7
      %v703 = vshll.u32 %v433, 16
      %v705 = vor.u32 %v702, %v703
      %v706 = vsel %vm435, %v698, %v705
      %v707 = vrot.slane %v702, 4
      %s756 = scalar_lea.vmem [#allocation2], 12
      %vm757 = vcmask 27648
      %vm758 = vmand %vm757, %vm339
      %v759 = vld [vmem:[%s756] sm:$0xf]
      %v760 = vsel %vm758, %v442, %v759
      %761 = vst [vmem:[%s756] sm:$0xf] %v760
      %vm762 = vcmask 27648
      %763 = vst.msk [vmem:[%s756 + $0x4] sm:$0xf] %vm762, %v451
      %vm764 = vcmask 24576
      %vm765 = vmand %vm764, %vm283
      %v766 = vld [vmem:[%s756 + $0x8] sm:$0x1]
      %v767 = vsel %vm765, %v452, %v766
      %768 = vst [vmem:[%s756 + $0x8] sm:$0x1] %v767
      %v769 = vld [vmem:[%s756 + $0xc] sm:$0xf]
      %v770 = vsel %vm758, %v459, %v769
      %771 = vst [vmem:[%s756 + $0xc] sm:$0xf] %v770
      %772 = vst.msk [vmem:[%s756 + $0x10] sm:$0xf] %vm762, %v468
      %v773 = vld [vmem:[%s756 + $0x14] sm:$0x1]
      %v774 = vsel %vm765, %v469, %v773
      %775 = vst [vmem:[%s756 + $0x14] sm:$0x1] %v774
      %v776 = vld [vmem:[%s756 + $0x18] sm:$0xf]
      %v777 = vsel %vm758, %v476, %v776
      %778 = vst [vmem:[%s756 + $0x18] sm:$0xf] %v777
      %779 = vst.msk [vmem:[%s756 + $0x1c] sm:$0xf] %vm762, %v485
      %v780 = vld [vmem:[%s756 + $0x20] sm:$0x1]
      %v781 = vsel %vm765, %v486, %v780
      %782 = vst [vmem:[%s756 + $0x20] sm:$0x1] %v781
      %v783 = vld [vmem:[%s756 + $0x24] sm:$0xf]
      %v784 = vsel %vm758, %v493, %v783
      %785 = vst [vmem:[%s756 + $0x24] sm:$0xf] %v784
      %786 = vst.msk [vmem:[%s756 + $0x28] sm:$0xf] %vm762, %v502
      %v787 = vld [vmem:[%s756 + $0x2c] sm:$0x1]
      %v788 = vsel %vm765, %v503, %v787
      %789 = vst [vmem:[%s756 + $0x2c] sm:$0x1] %v788
      %v790 = vld [vmem:[%s756 + $0x30] sm:$0xf]
      %v791 = vsel %vm758, %v510, %v790
      %792 = vst [vmem:[%s756 + $0x30] sm:$0xf] %v791
      %793 = vst.msk [vmem:[%s756 + $0x34] sm:$0xf] %vm762, %v519
      %v794 = vld [vmem:[%s756 + $0x38] sm:$0x1]
      %v795 = vsel %vm765, %v520, %v794
      %796 = vst [vmem:[%s756 + $0x38] sm:$0x1] %v795
      %v797 = vld [vmem:[%s756 + $0x3c] sm:$0xf]
      %v798 = vsel %vm758, %v527, %v797
      %799 = vst [vmem:[%s756 + $0x3c] sm:$0xf] %v798
      %800 = vst.msk [vmem:[%s756 + $0x40] sm:$0xf] %vm762, %v536
      %v801 = vld [vmem:[%s756 + $0x44] sm:$0x1]
      %v802 = vsel %vm765, %v537, %v801
      %803 = vst [vmem:[%s756 + $0x44] sm:$0x1] %v802
      %v804 = vld [vmem:[%s756 + $0x48] sm:$0xf]
      %v805 = vsel %vm758, %v544, %v804
      %806 = vst [vmem:[%s756 + $0x48] sm:$0xf] %v805
      %807 = vst.msk [vmem:[%s756 + $0x4c] sm:$0xf] %vm762, %v553
      %v808 = vld [vmem:[%s756 + $0x50] sm:$0x1]
      %v809 = vsel %vm765, %v554, %v808
      %810 = vst [vmem:[%s756 + $0x50] sm:$0x1] %v809
      %v811 = vld [vmem:[%s756 + $0x54] sm:$0xf]
      %v812 = vsel %vm758, %v561, %v811
      %813 = vst [vmem:[%s756 + $0x54] sm:$0xf] %v812
      %814 = vst.msk [vmem:[%s756 + $0x58] sm:$0xf] %vm762, %v570
      %v815 = vld [vmem:[%s756 + $0x5c] sm:$0x1]
      %v816 = vsel %vm765, %v571, %v815
      %817 = vst [vmem:[%s756 + $0x5c] sm:$0x1] %v816
      %v818 = vld [vmem:[%s756 + $0x60] sm:$0xf]
      %v819 = vsel %vm758, %v578, %v818
      %820 = vst [vmem:[%s756 + $0x60] sm:$0xf] %v819
      %821 = vst.msk [vmem:[%s756 + $0x64] sm:$0xf] %vm762, %v587
      %v822 = vld [vmem:[%s756 + $0x68] sm:$0x1]
      %v823 = vsel %vm765, %v588, %v822
      %824 = vst [vmem:[%s756 + $0x68] sm:$0x1] %v823
      %v825 = vld [vmem:[%s756 + $0x6c] sm:$0xf]
      %v826 = vsel %vm758, %v595, %v825
      %827 = vst [vmem:[%s756 + $0x6c] sm:$0xf] %v826
      %828 = vst.msk [vmem:[%s756 + $0x70] sm:$0xf] %vm762, %v604
      %v829 = vld [vmem:[%s756 + $0x74] sm:$0x1]
      %v830 = vsel %vm765, %v605, %v829
      %831 = vst [vmem:[%s756 + $0x74] sm:$0x1] %v830
      %v832 = vld [vmem:[%s756 + $0x78] sm:$0xf]
      %v833 = vsel %vm758, %v612, %v832
      %834 = vst [vmem:[%s756 + $0x78] sm:$0xf] %v833
      %835 = vst.msk [vmem:[%s756 + $0x7c] sm:$0xf] %vm762, %v621
      %v836 = vld [vmem:[%s756 + $0x80] sm:$0x1]
      %v837 = vsel %vm765, %v622, %v836
      %838 = vst [vmem:[%s756 + $0x80] sm:$0x1] %v837
      %v839 = vld [vmem:[%s756 + $0x84] sm:$0xf]
      %v840 = vsel %vm758, %v629, %v839
      %841 = vst [vmem:[%s756 + $0x84] sm:$0xf] %v840
      %842 = vst.msk [vmem:[%s756 + $0x88] sm:$0xf] %vm762, %v638
      %v843 = vld [vmem:[%s756 + $0x8c] sm:$0x1]
      %v844 = vsel %vm765, %v639, %v843
      %845 = vst [vmem:[%s756 + $0x8c] sm:$0x1] %v844
      %v846 = vld [vmem:[%s756 + $0x90] sm:$0xf]
      %v847 = vsel %vm758, %v646, %v846
      %848 = vst [vmem:[%s756 + $0x90] sm:$0xf] %v847
      %849 = vst.msk [vmem:[%s756 + $0x94] sm:$0xf] %vm762, %v655
      %v850 = vld [vmem:[%s756 + $0x98] sm:$0x1]
      %v851 = vsel %vm765, %v656, %v850
      %852 = vst [vmem:[%s756 + $0x98] sm:$0x1] %v851
      %v853 = vld [vmem:[%s756 + $0x9c] sm:$0xf]
      %v854 = vsel %vm758, %v663, %v853
      %855 = vst [vmem:[%s756 + $0x9c] sm:$0xf] %v854
      %856 = vst.msk [vmem:[%s756 + $0xa0] sm:$0xf] %vm762, %v672
      %v857 = vld [vmem:[%s756 + $0xa4] sm:$0x1]
      %v858 = vsel %vm765, %v673, %v857
      %859 = vst [vmem:[%s756 + $0xa4] sm:$0x1] %v858
      %v860 = vld [vmem:[%s756 + $0xa8] sm:$0xf]
      %v861 = vsel %vm758, %v680, %v860
      %862 = vst [vmem:[%s756 + $0xa8] sm:$0xf] %v861
      %863 = vst.msk [vmem:[%s756 + $0xac] sm:$0xf] %vm762, %v689
      %v864 = vld [vmem:[%s756 + $0xb0] sm:$0x1]
      %v865 = vsel %vm765, %v690, %v864
      %866 = vst [vmem:[%s756 + $0xb0] sm:$0x1] %v865
      %v867 = vld [vmem:[%s756 + $0xb4] sm:$0xf]
      %v868 = vsel %vm758, %v697, %v867
      %869 = vst [vmem:[%s756 + $0xb4] sm:$0xf] %v868
      %870 = vst.msk [vmem:[%s756 + $0xb8] sm:$0xf] %vm762, %v706
      %v871 = vld [vmem:[%s756 + $0xbc] sm:$0x1]
      %v872 = vsel %vm765, %v707, %v871
      %873 = vst [vmem:[%s756 + $0xbc] sm:$0x1] %v872
      %v874 = vld [vmem:[%s266] sm:$0xf]
      %v875 = vld [vmem:[%s266 + $0x4] sm:$0xf]
      %v876 = vld [vmem:[%s266 + $0x8] sm:$0xf]
      %v877 = vld [vmem:[%s266 + $0xc] sm:$0xf]
      %v878 = vld [vmem:[%s266 + $0x10] sm:$0xf]
      %v879 = vld [vmem:[%s266 + $0x14] sm:$0xf]
      %v880 = vld [vmem:[%s266 + $0x18] sm:$0xf]
      %v881 = vld [vmem:[%s266 + $0x1c] sm:$0xf]
      %v882 = vld [vmem:[%s266 + $0x20] sm:$0xf]
      %v883 = vld [vmem:[%s266 + $0x24] sm:$0xf]
      %v884 = vld [vmem:[%s266 + $0x28] sm:$0xf]
      %v885 = vld [vmem:[%s266 + $0x2c] sm:$0xf]
      %v886 = vld [vmem:[%s266 + $0x30] sm:$0xf]
      %v887 = vld [vmem:[%s266 + $0x34] sm:$0xf]
      %v888 = vld [vmem:[%s266 + $0x38] sm:$0xf]
      %v889 = vld [vmem:[%s266 + $0x3c] sm:$0xf]
      %v890 = vld [vmem:[%s266 + $0x40] sm:$0xf]
      %v891 = vld [vmem:[%s266 + $0x44] sm:$0xf]
      %v892 = vld [vmem:[%s266 + $0x48] sm:$0xf]
      %v893 = vld [vmem:[%s266 + $0x4c] sm:$0xf]
      %v894 = vld [vmem:[%s266 + $0x50] sm:$0xf]
      %v895 = vld [vmem:[%s266 + $0x54] sm:$0xf]
      %v896 = vld [vmem:[%s266 + $0x58] sm:$0xf]
      %v897 = vld [vmem:[%s266 + $0x5c] sm:$0xf]
      %v898 = vld [vmem:[%s266 + $0x60] sm:$0xf]
      %v899 = vld [vmem:[%s266 + $0x64] sm:$0xf]
      %v900 = vld [vmem:[%s266 + $0x68] sm:$0xf]
      %v901 = vld [vmem:[%s266 + $0x6c] sm:$0xf]
      %v902 = vld [vmem:[%s266 + $0x70] sm:$0xf]
      %v903 = vld [vmem:[%s266 + $0x74] sm:$0xf]
      %v904 = vld [vmem:[%s266 + $0x78] sm:$0xf]
      %v905 = vld [vmem:[%s266 + $0x7c] sm:$0xf]
      %v907 = vshrl.u32 %v874, 16
      %v909 = vrot.slane %v907, 7
      %v910 = vshll.u32 %v874, 16
      %v912 = vor.u32 %v909, %v910
      %v913 = vrot.slane %v909, 4
      %v915 = vshrl.u32 %v875, 16
      %v917 = vrot.slane %v915, 7
      %v918 = vshll.u32 %v875, 16
      %v920 = vor.u32 %v917, %v918
      %v921 = vsel %vm435, %v913, %v920
      %v922 = vrot.slane %v917, 4
      %v924 = vshrl.u32 %v876, 16
      %v926 = vrot.slane %v924, 7
      %v927 = vshll.u32 %v876, 16
      %v929 = vor.u32 %v926, %v927
      %v930 = vrot.slane %v926, 4
      %v932 = vshrl.u32 %v877, 16
      %v934 = vrot.slane %v932, 7
      %v935 = vshll.u32 %v877, 16
      %v937 = vor.u32 %v934, %v935
      %v938 = vsel %vm435, %v930, %v937
      %v939 = vrot.slane %v934, 4
      %v941 = vshrl.u32 %v878, 16
      %v943 = vrot.slane %v941, 7
      %v944 = vshll.u32 %v878, 16
      %v946 = vor.u32 %v943, %v944
      %v947 = vrot.slane %v943, 4
      %v949 = vshrl.u32 %v879, 16
      %v951 = vrot.slane %v949, 7
      %v952 = vshll.u32 %v879, 16
      %v954 = vor.u32 %v951, %v952
      %v955 = vsel %vm435, %v947, %v954
      %v956 = vrot.slane %v951, 4
      %v958 = vshrl.u32 %v880, 16
      %v960 = vrot.slane %v958, 7
      %v961 = vshll.u32 %v880, 16
      %v963 = vor.u32 %v960, %v961
      %v964 = vrot.slane %v960, 4
      %v966 = vshrl.u32 %v881, 16
      %v968 = vrot.slane %v966, 7
      %v969 = vshll.u32 %v881, 16
      %v971 = vor.u32 %v968, %v969
      %v972 = vsel %vm435, %v964, %v971
      %v973 = vrot.slane %v968, 4
      %v975 = vshrl.u32 %v882, 16
      %v977 = vrot.slane %v975, 7
      %v978 = vshll.u32 %v882, 16
      %v980 = vor.u32 %v977, %v978
      %v981 = vrot.slane %v977, 4
      %v983 = vshrl.u32 %v883, 16
      %v985 = vrot.slane %v983, 7
      %v986 = vshll.u32 %v883, 16
      %v988 = vor.u32 %v985, %v986
      %v989 = vsel %vm435, %v981, %v988
      %v990 = vrot.slane %v985, 4
      %v992 = vshrl.u32 %v884, 16
      %v994 = vrot.slane %v992, 7
      %v995 = vshll.u32 %v884, 16
      %v997 = vor.u32 %v994, %v995
      %v998 = vrot.slane %v994, 4
      %v1000 = vshrl.u32 %v885, 16
      %v1002 = vrot.slane %v1000, 7
      %v1003 = vshll.u32 %v885, 16
      %v1005 = vor.u32 %v1002, %v1003
      %v1006 = vsel %vm435, %v998, %v1005
      %v1007 = vrot.slane %v1002, 4
      %v1009 = vshrl.u32 %v886, 16
      %v1011 = vrot.slane %v1009, 7
      %v1012 = vshll.u32 %v886, 16
      %v1014 = vor.u32 %v1011, %v1012
      %v1015 = vrot.slane %v1011, 4
      %v1017 = vshrl.u32 %v887, 16
      %v1019 = vrot.slane %v1017, 7
      %v1020 = vshll.u32 %v887, 16
      %v1022 = vor.u32 %v1019, %v1020
      %v1023 = vsel %vm435, %v1015, %v1022
      %v1024 = vrot.slane %v1019, 4
      %v1026 = vshrl.u32 %v888, 16
      %v1028 = vrot.slane %v1026, 7
      %v1029 = vshll.u32 %v888, 16
      %v1031 = vor.u32 %v1028, %v1029
      %v1032 = vrot.slane %v1028, 4
      %v1034 = vshrl.u32 %v889, 16
      %v1036 = vrot.slane %v1034, 7
      %v1037 = vshll.u32 %v889, 16
      %v1039 = vor.u32 %v1036, %v1037
      %v1040 = vsel %vm435, %v1032, %v1039
      %v1041 = vrot.slane %v1036, 4
      %v1043 = vshrl.u32 %v890, 16
      %v1045 = vrot.slane %v1043, 7
      %v1046 = vshll.u32 %v890, 16
      %v1048 = vor.u32 %v1045, %v1046
      %v1049 = vrot.slane %v1045, 4
      %v1051 = vshrl.u32 %v891, 16
      %v1053 = vrot.slane %v1051, 7
      %v1054 = vshll.u32 %v891, 16
      %v1056 = vor.u32 %v1053, %v1054
      %v1057 = vsel %vm435, %v1049, %v1056
      %v1058 = vrot.slane %v1053, 4
      %v1060 = vshrl.u32 %v892, 16
      %v1062 = vrot.slane %v1060, 7
      %v1063 = vshll.u32 %v892, 16
      %v1065 = vor.u32 %v1062, %v1063
      %v1066 = vrot.slane %v1062, 4
      %v1068 = vshrl.u32 %v893, 16
      %v1070 = vrot.slane %v1068, 7
      %v1071 = vshll.u32 %v893, 16
      %v1073 = vor.u32 %v1070, %v1071
      %v1074 = vsel %vm435, %v1066, %v1073
      %v1075 = vrot.slane %v1070, 4
      %v1077 = vshrl.u32 %v894, 16
      %v1079 = vrot.slane %v1077, 7
      %v1080 = vshll.u32 %v894, 16
      %v1082 = vor.u32 %v1079, %v1080
      %v1083 = vrot.slane %v1079, 4
      %v1085 = vshrl.u32 %v895, 16
      %v1087 = vrot.slane %v1085, 7
      %v1088 = vshll.u32 %v895, 16
      %v1090 = vor.u32 %v1087, %v1088
      %v1091 = vsel %vm435, %v1083, %v1090
      %v1092 = vrot.slane %v1087, 4
      %v1094 = vshrl.u32 %v896, 16
      %v1096 = vrot.slane %v1094, 7
      %v1097 = vshll.u32 %v896, 16
      %v1099 = vor.u32 %v1096, %v1097
      %v1100 = vrot.slane %v1096, 4
      %v1102 = vshrl.u32 %v897, 16
      %v1104 = vrot.slane %v1102, 7
      %v1105 = vshll.u32 %v897, 16
      %v1107 = vor.u32 %v1104, %v1105
      %v1108 = vsel %vm435, %v1100, %v1107
      %v1109 = vrot.slane %v1104, 4
      %v1111 = vshrl.u32 %v898, 16
      %v1113 = vrot.slane %v1111, 7
      %v1114 = vshll.u32 %v898, 16
      %v1116 = vor.u32 %v1113, %v1114
      %v1117 = vrot.slane %v1113, 4
      %v1119 = vshrl.u32 %v899, 16
      %v1121 = vrot.slane %v1119, 7
      %v1122 = vshll.u32 %v899, 16
      %v1124 = vor.u32 %v1121, %v1122
      %v1125 = vsel %vm435, %v1117, %v1124
      %v1126 = vrot.slane %v1121, 4
      %v1128 = vshrl.u32 %v900, 16
      %v1130 = vrot.slane %v1128, 7
      %v1131 = vshll.u32 %v900, 16
      %v1133 = vor.u32 %v1130, %v1131
      %v1134 = vrot.slane %v1130, 4
      %v1136 = vshrl.u32 %v901, 16
      %v1138 = vrot.slane %v1136, 7
      %v1139 = vshll.u32 %v901, 16
      %v1141 = vor.u32 %v1138, %v1139
      %v1142 = vsel %vm435, %v1134, %v1141
      %v1143 = vrot.slane %v1138, 4
      %v1145 = vshrl.u32 %v902, 16
      %v1147 = vrot.slane %v1145, 7
      %v1148 = vshll.u32 %v902, 16
      %v1150 = vor.u32 %v1147, %v1148
      %v1151 = vrot.slane %v1147, 4
      %v1153 = vshrl.u32 %v903, 16
      %v1155 = vrot.slane %v1153, 7
      %v1156 = vshll.u32 %v903, 16
      %v1158 = vor.u32 %v1155, %v1156
      %v1159 = vsel %vm435, %v1151, %v1158
      %v1160 = vrot.slane %v1155, 4
      %v1162 = vshrl.u32 %v904, 16
      %v1164 = vrot.slane %v1162, 7
      %v1165 = vshll.u32 %v904, 16
      %v1167 = vor.u32 %v1164, %v1165
      %v1168 = vrot.slane %v1164, 4
      %v1170 = vshrl.u32 %v905, 16
      %v1172 = vrot.slane %v1170, 7
      %v1173 = vshll.u32 %v905, 16
      %v1175 = vor.u32 %v1172, %v1173
      %v1176 = vsel %vm435, %v1168, %v1175
      %v1177 = vrot.slane %v1172, 4
      %1178 = vrot.lane.b32.xlu0 %v912, 4
      %v1179 = vpop.permute.xlu0 %1178
      %1180 = vrot.lane.b32.xlu0 %v921, 4
      %v1181 = vpop.permute.xlu0 %1180
      %1182 = vrot.lane.b32.xlu0 %v922, 4
      %v1183 = vpop.permute.xlu0 %1182
      %1184 = vrot.lane.b32.xlu0 %v929, 4
      %v1185 = vpop.permute.xlu0 %1184
      %1186 = vrot.lane.b32.xlu0 %v938, 4
      %v1187 = vpop.permute.xlu0 %1186
      %1188 = vrot.lane.b32.xlu0 %v939, 4
      %v1189 = vpop.permute.xlu0 %1188
      %1190 = vrot.lane.b32.xlu0 %v946, 4
      %v1191 = vpop.permute.xlu0 %1190
      %1192 = vrot.lane.b32.xlu0 %v955, 4
      %v1193 = vpop.permute.xlu0 %1192
      %1194 = vrot.lane.b32.xlu0 %v956, 4
      %v1195 = vpop.permute.xlu0 %1194
      %1196 = vrot.lane.b32.xlu0 %v963, 4
      %v1197 = vpop.permute.xlu0 %1196
      %1198 = vrot.lane.b32.xlu0 %v972, 4
      %v1199 = vpop.permute.xlu0 %1198
      %1200 = vrot.lane.b32.xlu0 %v973, 4
      %v1201 = vpop.permute.xlu0 %1200
      %1202 = vrot.lane.b32.xlu0 %v980, 4
      %v1203 = vpop.permute.xlu0 %1202
      %1204 = vrot.lane.b32.xlu0 %v989, 4
      %v1205 = vpop.permute.xlu0 %1204
      %1206 = vrot.lane.b32.xlu0 %v990, 4
      %v1207 = vpop.permute.xlu0 %1206
      %1208 = vrot.lane.b32.xlu0 %v997, 4
      %v1209 = vpop.permute.xlu0 %1208
      %1210 = vrot.lane.b32.xlu0 %v1006, 4
      %v1211 = vpop.permute.xlu0 %1210
      %1212 = vrot.lane.b32.xlu0 %v1007, 4
      %v1213 = vpop.permute.xlu0 %1212
      %1214 = vrot.lane.b32.xlu0 %v1014, 4
      %v1215 = vpop.permute.xlu0 %1214
      %1216 = vrot.lane.b32.xlu0 %v1023, 4
      %v1217 = vpop.permute.xlu0 %1216
      %1218 = vrot.lane.b32.xlu0 %v1024, 4
      %v1219 = vpop.permute.xlu0 %1218
      %1220 = vrot.lane.b32.xlu0 %v1031, 4
      %v1221 = vpop.permute.xlu0 %1220
      %1222 = vrot.lane.b32.xlu0 %v1040, 4
      %v1223 = vpop.permute.xlu0 %1222
      %1224 = vrot.lane.b32.xlu0 %v1041, 4
      %v1225 = vpop.permute.xlu0 %1224
      %1226 = vrot.lane.b32.xlu0 %v1048, 4
      %v1227 = vpop.permute.xlu0 %1226
      %1228 = vrot.lane.b32.xlu0 %v1057, 4
      %v1229 = vpop.permute.xlu0 %1228
      %1230 = vrot.lane.b32.xlu0 %v1058, 4
      %v1231 = vpop.permute.xlu0 %1230
      %1232 = vrot.lane.b32.xlu0 %v1065, 4
      %v1233 = vpop.permute.xlu0 %1232
      %1234 = vrot.lane.b32.xlu0 %v1074, 4
      %v1235 = vpop.permute.xlu0 %1234
      %1236 = vrot.lane.b32.xlu0 %v1075, 4
      %v1237 = vpop.permute.xlu0 %1236
      %1238 = vrot.lane.b32.xlu0 %v1082, 4
      %v1239 = vpop.permute.xlu0 %1238
      %1240 = vrot.lane.b32.xlu0 %v1091, 4
      %v1241 = vpop.permute.xlu0 %1240
      %1242 = vrot.lane.b32.xlu0 %v1092, 4
      %v1243 = vpop.permute.xlu0 %1242
      %1244 = vrot.lane.b32.xlu0 %v1099, 4
      %v1245 = vpop.permute.xlu0 %1244
      %1246 = vrot.lane.b32.xlu0 %v1108, 4
      %v1247 = vpop.permute.xlu0 %1246
      %1248 = vrot.lane.b32.xlu0 %v1109, 4
      %v1249 = vpop.permute.xlu0 %1248
      %1250 = vrot.lane.b32.xlu0 %v1116, 4
      %v1251 = vpop.permute.xlu0 %1250
      %1252 = vrot.lane.b32.xlu0 %v1125, 4
      %v1253 = vpop.permute.xlu0 %1252
      %1254 = vrot.lane.b32.xlu0 %v1126, 4
      %v1255 = vpop.permute.xlu0 %1254
      %1256 = vrot.lane.b32.xlu0 %v1133, 4
      %v1257 = vpop.permute.xlu0 %1256
      %1258 = vrot.lane.b32.xlu0 %v1142, 4
      %v1259 = vpop.permute.xlu0 %1258
      %1260 = vrot.lane.b32.xlu0 %v1143, 4
      %v1261 = vpop.permute.xlu0 %1260
      %1262 = vrot.lane.b32.xlu0 %v1150, 4
      %v1263 = vpop.permute.xlu0 %1262
      %1264 = vrot.lane.b32.xlu0 %v1159, 4
      %v1265 = vpop.permute.xlu0 %1264
      %1266 = vrot.lane.b32.xlu0 %v1160, 4
      %v1267 = vpop.permute.xlu0 %1266
      %1268 = vrot.lane.b32.xlu0 %v1167, 4
      %v1269 = vpop.permute.xlu0 %1268
      %1270 = vrot.lane.b32.xlu0 %v1176, 4
      %v1271 = vpop.permute.xlu0 %1270
      %1272 = vrot.lane.b32.xlu0 %v1177, 4
      %v1273 = vpop.permute.xlu0 %1272
      %vm1322 = vcmask 60448
      %vm1323 = vmand %vm1322, %vm339
      %v1324 = vld [vmem:[%s756] sm:$0xf]
      %v1325 = vsel %vm1323, %v1179, %v1324
      %1326 = vst [vmem:[%s756] sm:$0xf] %v1325
      %vm1327 = vcmask 60448
      %1328 = vst.msk [vmem:[%s756 + $0x4] sm:$0xf] %vm1327, %v1181
      %vm1329 = vcmask 57376
      %vm1330 = vmand %vm1329, %vm283
      %v1331 = vld [vmem:[%s756 + $0x8] sm:$0x1]
      %v1332 = vsel %vm1330, %v1183, %v1331
      %1333 = vst [vmem:[%s756 + $0x8] sm:$0x1] %v1332
      %v1334 = vld [vmem:[%s756 + $0xc] sm:$0xf]
      %v1335 = vsel %vm1323, %v1185, %v1334
      %1336 = vst [vmem:[%s756 + $0xc] sm:$0xf] %v1335
      %1337 = vst.msk [vmem:[%s756 + $0x10] sm:$0xf] %vm1327, %v1187
      %v1338 = vld [vmem:[%s756 + $0x14] sm:$0x1]
      %v1339 = vsel %vm1330, %v1189, %v1338
      %1340 = vst [vmem:[%s756 + $0x14] sm:$0x1] %v1339
      %v1341 = vld [vmem:[%s756 + $0x18] sm:$0xf]
      %v1342 = vsel %vm1323, %v1191, %v1341
      %1343 = vst [vmem:[%s756 + $0x18] sm:$0xf] %v1342
      %1344 = vst.msk [vmem:[%s756 + $0x1c] sm:$0xf] %vm1327, %v1193
      %v1345 = vld [vmem:[%s756 + $0x20] sm:$0x1]
      %v1346 = vsel %vm1330, %v1195, %v1345
      %1347 = vst [vmem:[%s756 + $0x20] sm:$0x1] %v1346
      %v1348 = vld [vmem:[%s756 + $0x24] sm:$0xf]
      %v1349 = vsel %vm1323, %v1197, %v1348
      %1350 = vst [vmem:[%s756 + $0x24] sm:$0xf] %v1349
      %1351 = vst.msk [vmem:[%s756 + $0x28] sm:$0xf] %vm1327, %v1199
      %v1352 = vld [vmem:[%s756 + $0x2c] sm:$0x1]
      %v1353 = vsel %vm1330, %v1201, %v1352
      %1354 = vst [vmem:[%s756 + $0x2c] sm:$0x1] %v1353
      %v1355 = vld [vmem:[%s756 + $0x30] sm:$0xf]
      %v1356 = vsel %vm1323, %v1203, %v1355
      %1357 = vst [vmem:[%s756 + $0x30] sm:$0xf] %v1356
      %1358 = vst.msk [vmem:[%s756 + $0x34] sm:$0xf] %vm1327, %v1205
      %v1359 = vld [vmem:[%s756 + $0x38] sm:$0x1]
      %v1360 = vsel %vm1330, %v1207, %v1359
      %1361 = vst [vmem:[%s756 + $0x38] sm:$0x1] %v1360
      %v1362 = vld [vmem:[%s756 + $0x3c] sm:$0xf]
      %v1363 = vsel %vm1323, %v1209, %v1362
      %1364 = vst [vmem:[%s756 + $0x3c] sm:$0xf] %v1363
      %1365 = vst.msk [vmem:[%s756 + $0x40] sm:$0xf] %vm1327, %v1211
      %v1366 = vld [vmem:[%s756 + $0x44] sm:$0x1]
      %v1367 = vsel %vm1330, %v1213, %v1366
      %1368 = vst [vmem:[%s756 + $0x44] sm:$0x1] %v1367
      %v1369 = vld [vmem:[%s756 + $0x48] sm:$0xf]
      %v1370 = vsel %vm1323, %v1215, %v1369
      %1371 = vst [vmem:[%s756 + $0x48] sm:$0xf] %v1370
      %1372 = vst.msk [vmem:[%s756 + $0x4c] sm:$0xf] %vm1327, %v1217
      %v1373 = vld [vmem:[%s756 + $0x50] sm:$0x1]
      %v1374 = vsel %vm1330, %v1219, %v1373
      %1375 = vst [vmem:[%s756 + $0x50] sm:$0x1] %v1374
      %v1376 = vld [vmem:[%s756 + $0x54] sm:$0xf]
      %v1377 = vsel %vm1323, %v1221, %v1376
      %1378 = vst [vmem:[%s756 + $0x54] sm:$0xf] %v1377
      %1379 = vst.msk [vmem:[%s756 + $0x58] sm:$0xf] %vm1327, %v1223
      %v1380 = vld [vmem:[%s756 + $0x5c] sm:$0x1]
      %v1381 = vsel %vm1330, %v1225, %v1380
      %1382 = vst [vmem:[%s756 + $0x5c] sm:$0x1] %v1381
      %v1383 = vld [vmem:[%s756 + $0x60] sm:$0xf]
      %v1384 = vsel %vm1323, %v1227, %v1383
      %1385 = vst [vmem:[%s756 + $0x60] sm:$0xf] %v1384
      %1386 = vst.msk [vmem:[%s756 + $0x64] sm:$0xf] %vm1327, %v1229
      %v1387 = vld [vmem:[%s756 + $0x68] sm:$0x1]
      %v1388 = vsel %vm1330, %v1231, %v1387
      %1389 = vst [vmem:[%s756 + $0x68] sm:$0x1] %v1388
      %v1390 = vld [vmem:[%s756 + $0x6c] sm:$0xf]
      %v1391 = vsel %vm1323, %v1233, %v1390
      %1392 = vst [vmem:[%s756 + $0x6c] sm:$0xf] %v1391
      %1393 = vst.msk [vmem:[%s756 + $0x70] sm:$0xf] %vm1327, %v1235
      %v1394 = vld [vmem:[%s756 + $0x74] sm:$0x1]
      %v1395 = vsel %vm1330, %v1237, %v1394
      %1396 = vst [vmem:[%s756 + $0x74] sm:$0x1] %v1395
      %v1397 = vld [vmem:[%s756 + $0x78] sm:$0xf]
      %v1398 = vsel %vm1323, %v1239, %v1397
      %1399 = vst [vmem:[%s756 + $0x78] sm:$0xf] %v1398
      %1400 = vst.msk [vmem:[%s756 + $0x7c] sm:$0xf] %vm1327, %v1241
      %v1401 = vld [vmem:[%s756 + $0x80] sm:$0x1]
      %v1402 = vsel %vm1330, %v1243, %v1401
      %1403 = vst [vmem:[%s756 + $0x80] sm:$0x1] %v1402
      %v1404 = vld [vmem:[%s756 + $0x84] sm:$0xf]
      %v1405 = vsel %vm1323, %v1245, %v1404
      %1406 = vst [vmem:[%s756 + $0x84] sm:$0xf] %v1405
      %1407 = vst.msk [vmem:[%s756 + $0x88] sm:$0xf] %vm1327, %v1247
      %v1408 = vld [vmem:[%s756 + $0x8c] sm:$0x1]
      %v1409 = vsel %vm1330, %v1249, %v1408
      %1410 = vst [vmem:[%s756 + $0x8c] sm:$0x1] %v1409
      %v1411 = vld [vmem:[%s756 + $0x90] sm:$0xf]
      %v1412 = vsel %vm1323, %v1251, %v1411
      %1413 = vst [vmem:[%s756 + $0x90] sm:$0xf] %v1412
      %1414 = vst.msk [vmem:[%s756 + $0x94] sm:$0xf] %vm1327, %v1253
      %v1415 = vld [vmem:[%s756 + $0x98] sm:$0x1]
      %v1416 = vsel %vm1330, %v1255, %v1415
      %1417 = vst [vmem:[%s756 + $0x98] sm:$0x1] %v1416
      %v1418 = vld [vmem:[%s756 + $0x9c] sm:$0xf]
      %v1419 = vsel %vm1323, %v1257, %v1418
      %1420 = vst [vmem:[%s756 + $0x9c] sm:$0xf] %v1419
      %1421 = vst.msk [vmem:[%s756 + $0xa0] sm:$0xf] %vm1327, %v1259
      %v1422 = vld [vmem:[%s756 + $0xa4] sm:$0x1]
      %v1423 = vsel %vm1330, %v1261, %v1422
      %1424 = vst [vmem:[%s756 + $0xa4] sm:$0x1] %v1423
      %v1425 = vld [vmem:[%s756 + $0xa8] sm:$0xf]
      %v1426 = vsel %vm1323, %v1263, %v1425
      %1427 = vst [vmem:[%s756 + $0xa8] sm:$0xf] %v1426
      %1428 = vst.msk [vmem:[%s756 + $0xac] sm:$0xf] %vm1327, %v1265
      %v1429 = vld [vmem:[%s756 + $0xb0] sm:$0x1]
      %v1430 = vsel %vm1330, %v1267, %v1429
      %1431 = vst [vmem:[%s756 + $0xb0] sm:$0x1] %v1430
      %v1432 = vld [vmem:[%s756 + $0xb4] sm:$0xf]
      %v1433 = vsel %vm1323, %v1269, %v1432
      %1434 = vst [vmem:[%s756 + $0xb4] sm:$0xf] %v1433
      %1435 = vst.msk [vmem:[%s756 + $0xb8] sm:$0xf] %vm1327, %v1271
      %v1436 = vld [vmem:[%s756 + $0xbc] sm:$0x1]
      %v1437 = vsel %vm1330, %v1273, %v1436
      %1438 = vst [vmem:[%s756 + $0xbc] sm:$0x1] %v1437
      %v1439 = vld [vmem:[#allocation2] sm:$0xf]
      %v1440 = vld [vmem:[#allocation2 + $0x4] sm:$0xf]
      %v1441 = vld [vmem:[#allocation2 + $0xc] sm:$0xf]
      %v1442 = vld [vmem:[#allocation2 + $0x10] sm:$0xf]
      %v1443 = vld [vmem:[#allocation2 + $0x18] sm:$0xf]
      %v1444 = vld [vmem:[#allocation2 + $0x1c] sm:$0xf]
      %v1445 = vld [vmem:[#allocation2 + $0x24] sm:$0xf]
      %v1446 = vld [vmem:[#allocation2 + $0x28] sm:$0xf]
      %v1447 = vld [vmem:[#allocation2 + $0x30] sm:$0xf]
      %v1448 = vld [vmem:[#allocation2 + $0x34] sm:$0xf]
      %v1449 = vld [vmem:[#allocation2 + $0x3c] sm:$0xf]
      %v1450 = vld [vmem:[#allocation2 + $0x40] sm:$0xf]
      %v1451 = vld [vmem:[#allocation2 + $0x48] sm:$0xf]
      %v1452 = vld [vmem:[#allocation2 + $0x4c] sm:$0xf]
      %v1453 = vld [vmem:[#allocation2 + $0x54] sm:$0xf]
      %v1454 = vld [vmem:[#allocation2 + $0x58] sm:$0xf]
      %v1455 = vld [vmem:[#allocation2 + $0x60] sm:$0xf]
      %v1456 = vld [vmem:[#allocation2 + $0x64] sm:$0xf]
      %v1457 = vld [vmem:[#allocation2 + $0x6c] sm:$0xf]
      %v1458 = vld [vmem:[#allocation2 + $0x70] sm:$0xf]
      %v1459 = vld [vmem:[#allocation2 + $0x78] sm:$0xf]
      %v1460 = vld [vmem:[#allocation2 + $0x7c] sm:$0xf]
      %v1461 = vld [vmem:[#allocation2 + $0x84] sm:$0xf]
      %v1462 = vld [vmem:[#allocation2 + $0x88] sm:$0xf]
      %v1463 = vld [vmem:[#allocation2 + $0x90] sm:$0xf]
      %v1464 = vld [vmem:[#allocation2 + $0x94] sm:$0xf]
      %v1465 = vld [vmem:[#allocation2 + $0x9c] sm:$0xf]
      %v1466 = vld [vmem:[#allocation2 + $0xa0] sm:$0xf]
      %v1467 = vld [vmem:[#allocation2 + $0xa8] sm:$0xf]
      %v1468 = vld [vmem:[#allocation2 + $0xac] sm:$0xf]
      %v1469 = vld [vmem:[#allocation2 + $0xb4] sm:$0xf]
      %v1470 = vld [vmem:[#allocation2 + $0xb8] sm:$0xf]
      %v1471 = vld [vmem:[#allocation2 + $0xc0] sm:$0xf]
      %v1472 = vld [vmem:[#allocation2 + $0xc4] sm:$0xf]
      %v1473 = vld [vmem:[#allocation2 + $0xcc] sm:$0xf]
      %v1474 = vld [vmem:[#allocation2 + $0xd0] sm:$0xf]
      %v1475 = vld [vmem:[%s2] sm:$0xf]
      %s1476 = scalar_lea.vmem %s2, 12
      %v1477 = vld [vmem:[%s1476] sm:$0xf]
      %v1510 = vunpack.c.l.b16 %v1441
      %v1511 = vunpack.c.l.b16 %v1442
      %v1512 = vunpack.c.l.b16 %v1443
      %v1513 = vunpack.c.l.b16 %v1444
      %v1514 = vunpack.c.l.b16 %v1445
      %v1515 = vunpack.c.l.b16 %v1446
      %v1516 = vunpack.c.l.b16 %v1447
      %v1517 = vunpack.c.l.b16 %v1448
      %v1518 = vunpack.c.l.b16 %v1449
      %v1519 = vunpack.c.l.b16 %v1450
      %v1520 = vunpack.c.l.b16 %v1451
      %v1521 = vunpack.c.l.b16 %v1452
      %v1522 = vunpack.c.l.b16 %v1453
      %v1523 = vunpack.c.l.b16 %v1454
      %v1524 = vunpack.c.l.b16 %v1455
      %v1525 = vunpack.c.l.b16 %v1456
      %v1526 = vunpack.c.l.b16 %v1457
      %v1527 = vunpack.c.l.b16 %v1458
      %v1528 = vunpack.c.l.b16 %v1459
      %v1529 = vunpack.c.l.b16 %v1460
      %v1530 = vunpack.c.l.b16 %v1461
      %v1531 = vunpack.c.l.b16 %v1462
      %v1532 = vunpack.c.l.b16 %v1463
      %v1533 = vunpack.c.l.b16 %v1464
      %v1534 = vunpack.c.l.b16 %v1465
      %v1535 = vunpack.c.l.b16 %v1466
      %v1536 = vunpack.c.l.b16 %v1467
      %v1537 = vunpack.c.l.b16 %v1468
      %v1538 = vunpack.c.l.b16 %v1469
      %v1539 = vunpack.c.l.b16 %v1470
      %v1540 = vunpack.c.l.b16 %v1471
      %v1541 = vunpack.c.l.b16 %v1472
      %v1542 = vpack.c.b16 %v1511, %v1510
      %v1543 = vpack.c.b16 %v1513, %v1512
      %v1544 = vpack.c.b16 %v1515, %v1514
      %v1545 = vpack.c.b16 %v1517, %v1516
      %v1546 = vpack.c.b16 %v1519, %v1518
      %v1547 = vpack.c.b16 %v1521, %v1520
      %v1548 = vpack.c.b16 %v1523, %v1522
      %v1549 = vpack.c.b16 %v1525, %v1524
      %v1550 = vpack.c.b16 %v1527, %v1526
      %v1551 = vpack.c.b16 %v1529, %v1528
      %v1552 = vpack.c.b16 %v1531, %v1530
      %v1553 = vpack.c.b16 %v1533, %v1532
      %v1554 = vpack.c.b16 %v1535, %v1534
      %v1555 = vpack.c.b16 %v1537, %v1536
      %v1556 = vpack.c.b16 %v1539, %v1538
      %v1557 = vpack.c.b16 %v1541, %v1540
      %vm1558 = vcmask 64512
      %v1560 = vsel %vm1558, %v1542, 0
      %v1563 = vsel %vm1558, %v1543, 0
      %v1566 = vsel %vm1558, %v1544, 0
      %v1569 = vsel %vm1558, %v1545, 0
      %v1572 = vsel %vm1558, %v1546, 0
      %v1575 = vsel %vm1558, %v1547, 0
      %v1578 = vsel %vm1558, %v1548, 0
      %v1581 = vsel %vm1558, %v1549, 0
      %v1584 = vsel %vm1558, %v1550, 0
      %v1587 = vsel %vm1558, %v1551, 0
      %v1590 = vsel %vm1558, %v1552, 0
      %v1593 = vsel %vm1558, %v1553, 0
      %v1596 = vsel %vm1558, %v1554, 0
      %v1599 = vsel %vm1558, %v1555, 0
      %v1602 = vsel %vm1558, %v1556, 0
      %v1605 = vsel %vm1558, %v1557, 0
      %vm1607 = vcmask 1043456
      %v1609 = vsel %vm1607, %v1477, 0
      %1611 = vmatprep.subr.bf16.mxu0 0
      %1612 = vmatpush1.bf16.msra.mxu0 %v1609
      %1613 = vmatprep.subr.bf16.mxu0 0
      %1614 = vmatpush1.bf16.msra.mxu0 0
      %1615 = vmatprep.subr.bf16.mxu0 0
      %1616 = vmatpush1.bf16.msra.mxu0 0
      %1617 = vmatprep.subr.bf16.mxu0 0
      %1618 = vmatpush1.bf16.msra.mxu0 0
      %1619 = vmatprep.subr.bf16.mxu0 0
      %1620 = vmatpush1.bf16.msra.mxu0 0
      %1621 = vmatprep.subr.bf16.mxu0 0
      %1622 = vmatpush1.bf16.msra.mxu0 0
      %1623 = vmatprep.subr.bf16.mxu0 0
      %1624 = vmatpush1.bf16.msra.mxu0 0
      %1625 = vmatprep.subr.bf16.mxu0 0
      %1626 = vmatpush1.bf16.msra.mxu0 0
      %1627 = vmatprep.subr.bf16.mxu0 0
      %1628 = vmatpush1.bf16.msra.mxu0 0
      %1629 = vmatprep.subr.bf16.mxu0 0
      %1630 = vmatpush1.bf16.msra.mxu0 0
      %1631 = vmatprep.subr.bf16.mxu0 0
      %1632 = vmatpush1.bf16.msra.mxu0 0
      %1633 = vmatprep.subr.bf16.mxu0 0
      %1634 = vmatpush1.bf16.msra.mxu0 0
      %1635 = vmatprep.subr.bf16.mxu0 0
      %1636 = vmatpush1.bf16.msra.mxu0 0
      %1637 = vmatprep.subr.bf16.mxu0 0
      %1638 = vmatpush1.bf16.msra.mxu0 0
      %1639 = vmatprep.subr.bf16.mxu0 0
      %1640 = vmatpush1.bf16.msra.mxu0 0
      %1641 = vmatprep.subr.bf16.mxu0 0
      %1642 = vmatpush1.bf16.msra.mxu0 0
      %1643 = vmatprep.mubr.bf16.mxu0 0
      %1644 = vmatmul.mubr.bf16.gmra.mrb[0].mxu0 %v1560
      %v1645 = vpop.f32.mrb[0].mxu0
      %v1646 = vadd.f32 0.0, %v1645
      %v1647 = vpop.f32.mrb[0].mxu0
      %v1648 = vpop.f32.mrb[0].mxu0
      %v1649 = vadd.f32 0.0, %v1648
      %v1650 = vpop.f32.mrb[0].mxu0
      %1651 = vmatprep.mubr.bf16.mxu0 0
      %1652 = vmatmul.mubr.bf16.gmra.mrb[0].mxu0 %v1563
      %v1653 = vpop.f32.mrb[0].mxu0
      %v1654 = vadd.f32 0.0, %v1653
      %v1655 = vpop.f32.mrb[0].mxu0
      %v1656 = vpop.f32.mrb[0].mxu0
      %v1657 = vadd.f32 0.0, %v1656
      %v1658 = vpop.f32.mrb[0].mxu0
      %1659 = vmatprep.mubr.bf16.mxu0 0
      %1660 = vmatmul.mubr.bf16.gmra.mrb[0].mxu0 %v1566
      %v1661 = vpop.f32.mrb[0].mxu0
      %v1662 = vadd.f32 0.0, %v1661
      %v1663 = vpop.f32.mrb[0].mxu0
      %v1664 = vpop.f32.mrb[0].mxu0
      %v1665 = vadd.f32 0.0, %v1664
      %v1666 = vpop.f32.mrb[0].mxu0
      %1667 = vmatprep.mubr.bf16.mxu0 0
      %1668 = vmatmul.mubr.bf16.gmra.mrb[0].mxu0 %v1569
      %v1669 = vpop.f32.mrb[0].mxu0
      %v1670 = vadd.f32 0.0, %v1669
      %v1671 = vpop.f32.mrb[0].mxu0
      %v1672 = vpop.f32.mrb[0].mxu0
      %v1673 = vadd.f32 0.0, %v1672
      %v1674 = vpop.f32.mrb[0].mxu0
      %1675 = vmatprep.mubr.bf16.mxu0 0
      %1676 = vmatmul.mubr.bf16.gmra.mrb[0].mxu0 %v1572
      %v1677 = vpop.f32.mrb[0].mxu0
      %v1678 = vadd.f32 0.0, %v1677
      %v1679 = vpop.f32.mrb[0].mxu0
      %v1680 = vpop.f32.mrb[0].mxu0
      %v1681 = vadd.f32 0.0, %v1680
      %v1682 = vpop.f32.mrb[0].mxu0
      %1683 = vmatprep.mubr.bf16.mxu0 0
      %1684 = vmatmul.mubr.bf16.gmra.mrb[0].mxu0 %v1575
      %v1685 = vpop.f32.mrb[0].mxu0
      %v1686 = vadd.f32 0.0, %v1685
      %v1687 = vpop.f32.mrb[0].mxu0
      %v1688 = vpop.f32.mrb[0].mxu0
      %v1689 = vadd.f32 0.0, %v1688
      %v1690 = vpop.f32.mrb[0].mxu0
      %1691 = vmatprep.mubr.bf16.mxu0 0
      %1692 = vmatmul.mubr.bf16.gmra.mrb[0].mxu0 %v1578
      %v1693 = vpop.f32.mrb[0].mxu0
      %v1694 = vadd.f32 0.0, %v1693
      %v1695 = vpop.f32.mrb[0].mxu0
      %v1696 = vpop.f32.mrb[0].mxu0
      %v1697 = vadd.f32 0.0, %v1696
      %v1698 = vpop.f32.mrb[0].mxu0
      %1699 = vmatprep.mubr.bf16.mxu0 0
      %1700 = vmatmul.mubr.bf16.gmra.mrb[0].mxu0 %v1581
      %v1701 = vpop.f32.mrb[0].mxu0
      %v1702 = vadd.f32 0.0, %v1701
      %v1703 = vpop.f32.mrb[0].mxu0
      %v1704 = vpop.f32.mrb[0].mxu0
      %v1705 = vadd.f32 0.0, %v1704
      %v1706 = vpop.f32.mrb[0].mxu0
      %1707 = vmatprep.mubr.bf16.mxu0 0
      %1708 = vmatmul.mubr.bf16.gmra.mrb[0].mxu0 %v1584
      %v1709 = vpop.f32.mrb[0].mxu0
      %v1710 = vadd.f32 0.0, %v1709
      %v1711 = vpop.f32.mrb[0].mxu0
      %v1712 = vpop.f32.mrb[0].mxu0
      %v1713 = vadd.f32 0.0, %v1712
      %v1714 = vpop.f32.mrb[0].mxu0
      %1715 = vmatprep.mubr.bf16.mxu0 0
      %1716 = vmatmul.mubr.bf16.gmra.mrb[0].mxu0 %v1587
      %v1717 = vpop.f32.mrb[0].mxu0
      %v1718 = vadd.f32 0.0, %v1717
      %v1719 = vpop.f32.mrb[0].mxu0
      %v1720 = vpop.f32.mrb[0].mxu0
      %v1721 = vadd.f32 0.0, %v1720
      %v1722 = vpop.f32.mrb[0].mxu0
      %1723 = vmatprep.mubr.bf16.mxu0 0
      %1724 = vmatmul.mubr.bf16.gmra.mrb[0].mxu0 %v1590
      %v1725 = vpop.f32.mrb[0].mxu0
      %v1726 = vadd.f32 0.0, %v1725
      %v1727 = vpop.f32.mrb[0].mxu0
      %v1728 = vpop.f32.mrb[0].mxu0
      %v1729 = vadd.f32 0.0, %v1728
      %v1730 = vpop.f32.mrb[0].mxu0
      %1731 = vmatprep.mubr.bf16.mxu0 0
      %1732 = vmatmul.mubr.bf16.gmra.mrb[0].mxu0 %v1593
      %v1733 = vpop.f32.mrb[0].mxu0
      %v1734 = vadd.f32 0.0, %v1733
      %v1735 = vpop.f32.mrb[0].mxu0
      %v1736 = vpop.f32.mrb[0].mxu0
      %v1737 = vadd.f32 0.0, %v1736
      %v1738 = vpop.f32.mrb[0].mxu0
      %1739 = vmatprep.mubr.bf16.mxu0 0
      %1740 = vmatmul.mubr.bf16.gmra.mrb[0].mxu0 %v1596
      %v1741 = vpop.f32.mrb[0].mxu0
      %v1742 = vadd.f32 0.0, %v1741
      %v1743 = vpop.f32.mrb[0].mxu0
      %v1744 = vpop.f32.mrb[0].mxu0
      %v1745 = vadd.f32 0.0, %v1744
      %v1746 = vpop.f32.mrb[0].mxu0
      %1747 = vmatprep.mubr.bf16.mxu0 0
      %1748 = vmatmul.mubr.bf16.gmra.mrb[0].mxu0 %v1599
      %v1749 = vpop.f32.mrb[0].mxu0
      %v1750 = vadd.f32 0.0, %v1749
      %v1751 = vpop.f32.mrb[0].mxu0
      %v1752 = vpop.f32.mrb[0].mxu0
      %v1753 = vadd.f32 0.0, %v1752
      %v1754 = vpop.f32.mrb[0].mxu0
      %1755 = vmatprep.mubr.bf16.mxu0 0
      %1756 = vmatmul.mubr.bf16.gmra.mrb[0].mxu0 %v1602
      %v1757 = vpop.f32.mrb[0].mxu0
      %v1758 = vadd.f32 0.0, %v1757
      %v1759 = vpop.f32.mrb[0].mxu0
      %v1760 = vpop.f32.mrb[0].mxu0
      %v1761 = vadd.f32 0.0, %v1760
      %v1762 = vpop.f32.mrb[0].mxu0
      %1763 = vmatprep.mubr.bf16.mxu0 0
      %1764 = vmatmul.mubr.bf16.gmra.mrb[0].mxu0 %v1605
      %v1765 = vpop.f32.mrb[0].mxu0
      %v1766 = vadd.f32 0.0, %v1765
      %v1767 = vpop.f32.mrb[0].mxu0
      %v1768 = vpop.f32.mrb[0].mxu0
      %v1769 = vadd.f32 0.0, %v1768
      %v1770 = vpop.f32.mrb[0].mxu0
      %1771 = vdwg.mxu0
      %v1774 = vunpack.c.l.b16 %v1439
      %v1775 = vunpack.c.l.b16 %v1440
      %v1776 = vpack.c.b16 %v1775, %v1774
      %v1778 = vsel %vm1558, %v1776, 0
      %v1781 = vsel %vm1607, %v1475, 0
      %1783 = vmatprep.subr.bf16.mxu0 0
      %1784 = vmatpush1.bf16.msra.mxu0 %v1781
      %1785 = vmatprep.subr.bf16.mxu0 0
      %1786 = vmatpush1.bf16.msra.mxu0 0
      %1787 = vmatprep.subr.bf16.mxu0 0
      %1788 = vmatpush1.bf16.msra.mxu0 0
      %1789 = vmatprep.subr.bf16.mxu0 0
      %1790 = vmatpush1.bf16.msra.mxu0 0
      %1791 = vmatprep.subr.bf16.mxu0 0
      %1792 = vmatpush1.bf16.msra.mxu0 0
      %1793 = vmatprep.subr.bf16.mxu0 0
      %1794 = vmatpush1.bf16.msra.mxu0 0
      %1795 = vmatprep.subr.bf16.mxu0 0
      %1796 = vmatpush1.bf16.msra.mxu0 0
      %1797 = vmatprep.subr.bf16.mxu0 0
      %1798 = vmatpush1.bf16.msra.mxu0 0
      %1799 = vmatprep.subr.bf16.mxu0 0
      %1800 = vmatpush1.bf16.msra.mxu0 0
      %1801 = vmatprep.subr.bf16.mxu0 0
      %1802 = vmatpush1.bf16.msra.mxu0 0
      %1803 = vmatprep.subr.bf16.mxu0 0
      %1804 = vmatpush1.bf16.msra.mxu0 0
      %1805 = vmatprep.subr.bf16.mxu0 0
      %1806 = vmatpush1.bf16.msra.mxu0 0
      %1807 = vmatprep.subr.bf16.mxu0 0
      %1808 = vmatpush1.bf16.msra.mxu0 0
      %1809 = vmatprep.subr.bf16.mxu0 0
      %1810 = vmatpush1.bf16.msra.mxu0 0
      %1811 = vmatprep.subr.bf16.mxu0 0
      %1812 = vmatpush1.bf16.msra.mxu0 0
      %1813 = vmatprep.subr.bf16.mxu0 0
      %1814 = vmatpush1.bf16.msra.mxu0 0
      %1815 = vmatprep.mubr.bf16.mxu0 0
      %1816 = vmatmul.mubr.bf16.gmra.mrb[0].mxu0 %v1778
      %v1817 = vpop.f32.mrb[0].mxu0
      %v1818 = vadd.f32 %v1646, %v1817
      %v1819 = vpop.f32.mrb[0].mxu0
      %v1820 = vpop.f32.mrb[0].mxu0
      %v1821 = vadd.f32 %v1649, %v1820
      %v1822 = vpop.f32.mrb[0].mxu0
      %1823 = vmatprep.mubr.bf16.mxu0 0
      %1824 = vmatmul.mubr.bf16.gmra.mrb[0].mxu0 %v1560
      %v1825 = vpop.f32.mrb[0].mxu0
      %v1826 = vadd.f32 %v1654, %v1825
      %v1827 = vpop.f32.mrb[0].mxu0
      %v1828 = vpop.f32.mrb[0].mxu0
      %v1829 = vadd.f32 %v1657, %v1828
      %v1830 = vpop.f32.mrb[0].mxu0
      %1831 = vmatprep.mubr.bf16.mxu0 0
      %1832 = vmatmul.mubr.bf16.gmra.mrb[0].mxu0 %v1563
      %v1833 = vpop.f32.mrb[0].mxu0
      %v1834 = vadd.f32 %v1662, %v1833
      %v1835 = vpop.f32.mrb[0].mxu0
      %v1836 = vpop.f32.mrb[0].mxu0
      %v1837 = vadd.f32 %v1665, %v1836
      %v1838 = vpop.f32.mrb[0].mxu0
      %1839 = vmatprep.mubr.bf16.mxu0 0
      %1840 = vmatmul.mubr.bf16.gmra.mrb[0].mxu0 %v1566
      %v1841 = vpop.f32.mrb[0].mxu0
      %v1842 = vadd.f32 %v1670, %v1841
      %v1843 = vpop.f32.mrb[0].mxu0
      %v1844 = vpop.f32.mrb[0].mxu0
      %v1845 = vadd.f32 %v1673, %v1844
      %v1846 = vpop.f32.mrb[0].mxu0
      %1847 = vmatprep.mubr.bf16.mxu0 0
      %1848 = vmatmul.mubr.bf16.gmra.mrb[0].mxu0 %v1569
      %v1849 = vpop.f32.mrb[0].mxu0
      %v1850 = vadd.f32 %v1678, %v1849
      %v1851 = vpop.f32.mrb[0].mxu0
      %v1852 = vpop.f32.mrb[0].mxu0
      %v1853 = vadd.f32 %v1681, %v1852
      %v1854 = vpop.f32.mrb[0].mxu0
      %1855 = vmatprep.mubr.bf16.mxu0 0
      %1856 = vmatmul.mubr.bf16.gmra.mrb[0].mxu0 %v1572
      %v1857 = vpop.f32.mrb[0].mxu0
      %v1858 = vadd.f32 %v1686, %v1857
      %v1859 = vpop.f32.mrb[0].mxu0
      %v1860 = vpop.f32.mrb[0].mxu0
      %v1861 = vadd.f32 %v1689, %v1860
      %v1862 = vpop.f32.mrb[0].mxu0
      %1863 = vmatprep.mubr.bf16.mxu0 0
      %1864 = vmatmul.mubr.bf16.gmra.mrb[0].mxu0 %v1575
      %v1865 = vpop.f32.mrb[0].mxu0
      %v1866 = vadd.f32 %v1694, %v1865
      %v1867 = vpop.f32.mrb[0].mxu0
      %v1868 = vpop.f32.mrb[0].mxu0
      %v1869 = vadd.f32 %v1697, %v1868
      %v1870 = vpop.f32.mrb[0].mxu0
      %1871 = vmatprep.mubr.bf16.mxu0 0
      %1872 = vmatmul.mubr.bf16.gmra.mrb[0].mxu0 %v1578
      %v1873 = vpop.f32.mrb[0].mxu0
      %v1874 = vadd.f32 %v1702, %v1873
      %v1875 = vpop.f32.mrb[0].mxu0
      %v1876 = vpop.f32.mrb[0].mxu0
      %v1877 = vadd.f32 %v1705, %v1876
      %v1878 = vpop.f32.mrb[0].mxu0
      %1879 = vmatprep.mubr.bf16.mxu0 0
      %1880 = vmatmul.mubr.bf16.gmra.mrb[0].mxu0 %v1581
      %v1881 = vpop.f32.mrb[0].mxu0
      %v1882 = vadd.f32 %v1710, %v1881
      %v1883 = vpop.f32.mrb[0].mxu0
      %v1884 = vpop.f32.mrb[0].mxu0
      %v1885 = vadd.f32 %v1713, %v1884
      %v1886 = vpop.f32.mrb[0].mxu0
      %1887 = vmatprep.mubr.bf16.mxu0 0
      %1888 = vmatmul.mubr.bf16.gmra.mrb[0].mxu0 %v1584
      %v1889 = vpop.f32.mrb[0].mxu0
      %v1890 = vadd.f32 %v1718, %v1889
      %v1891 = vpop.f32.mrb[0].mxu0
      %v1892 = vpop.f32.mrb[0].mxu0
      %v1893 = vadd.f32 %v1721, %v1892
      %v1894 = vpop.f32.mrb[0].mxu0
      %1895 = vmatprep.mubr.bf16.mxu0 0
      %1896 = vmatmul.mubr.bf16.gmra.mrb[0].mxu0 %v1587
      %v1897 = vpop.f32.mrb[0].mxu0
      %v1898 = vadd.f32 %v1726, %v1897
      %v1899 = vpop.f32.mrb[0].mxu0
      %v1900 = vpop.f32.mrb[0].mxu0
      %v1901 = vadd.f32 %v1729, %v1900
      %v1902 = vpop.f32.mrb[0].mxu0
      %1903 = vmatprep.mubr.bf16.mxu0 0
      %1904 = vmatmul.mubr.bf16.gmra.mrb[0].mxu0 %v1590
      %v1905 = vpop.f32.mrb[0].mxu0
      %v1906 = vadd.f32 %v1734, %v1905
      %v1907 = vpop.f32.mrb[0].mxu0
      %v1908 = vpop.f32.mrb[0].mxu0
      %v1909 = vadd.f32 %v1737, %v1908
      %v1910 = vpop.f32.mrb[0].mxu0
      %1911 = vmatprep.mubr.bf16.mxu0 0
      %1912 = vmatmul.mubr.bf16.gmra.mrb[0].mxu0 %v1593
      %v1913 = vpop.f32.mrb[0].mxu0
      %v1914 = vadd.f32 %v1742, %v1913
      %v1915 = vpop.f32.mrb[0].mxu0
      %v1916 = vpop.f32.mrb[0].mxu0
      %v1917 = vadd.f32 %v1745, %v1916
      %v1918 = vpop.f32.mrb[0].mxu0
      %1919 = vmatprep.mubr.bf16.mxu0 0
      %1920 = vmatmul.mubr.bf16.gmra.mrb[0].mxu0 %v1596
      %v1921 = vpop.f32.mrb[0].mxu0
      %v1922 = vadd.f32 %v1750, %v1921
      %v1923 = vpop.f32.mrb[0].mxu0
      %v1924 = vpop.f32.mrb[0].mxu0
      %v1925 = vadd.f32 %v1753, %v1924
      %v1926 = vpop.f32.mrb[0].mxu0
      %1927 = vmatprep.mubr.bf16.mxu0 0
      %1928 = vmatmul.mubr.bf16.gmra.mrb[0].mxu0 %v1599
      %v1929 = vpop.f32.mrb[0].mxu0
      %v1930 = vadd.f32 %v1758, %v1929
      %v1931 = vpop.f32.mrb[0].mxu0
      %v1932 = vpop.f32.mrb[0].mxu0
      %v1933 = vadd.f32 %v1761, %v1932
      %v1934 = vpop.f32.mrb[0].mxu0
      %1935 = vmatprep.mubr.bf16.mxu0 0
      %1936 = vmatmul.mubr.bf16.gmra.mrb[0].mxu0 %v1602
      %v1937 = vpop.f32.mrb[0].mxu0
      %v1938 = vadd.f32 %v1766, %v1937
      %v1939 = vpop.f32.mrb[0].mxu0
      %v1940 = vpop.f32.mrb[0].mxu0
      %v1941 = vadd.f32 %v1769, %v1940
      %v1942 = vpop.f32.mrb[0].mxu0
      %1943 = vdwg.mxu0
      %s1944 = scalar_lea.vmem %s2, 24
      %v1945 = vld [vmem:[%s1944] sm:$0xf]
      %v1948 = vunpack.c.l.b16 %v1473
      %v1949 = vunpack.c.l.b16 %v1474
      %v1950 = vpack.c.b16 %v1949, %v1948
      %v1952 = vsel %vm1558, %v1950, 0
      %v1955 = vsel %vm1607, %v1945, 0
      %1957 = vmatprep.subr.bf16.mxu0 0
      %1958 = vmatpush1.bf16.msra.mxu0 %v1955
      %1959 = vmatprep.subr.bf16.mxu0 0
      %1960 = vmatpush1.bf16.msra.mxu0 0
      %1961 = vmatprep.subr.bf16.mxu0 0
      %1962 = vmatpush1.bf16.msra.mxu0 0
      %1963 = vmatprep.subr.bf16.mxu0 0
      %1964 = vmatpush1.bf16.msra.mxu0 0
      %1965 = vmatprep.subr.bf16.mxu0 0
      %1966 = vmatpush1.bf16.msra.mxu0 0
      %1967 = vmatprep.subr.bf16.mxu0 0
      %1968 = vmatpush1.bf16.msra.mxu0 0
      %1969 = vmatprep.subr.bf16.mxu0 0
      %1970 = vmatpush1.bf16.msra.mxu0 0
      %1971 = vmatprep.subr.bf16.mxu0 0
      %1972 = vmatpush1.bf16.msra.mxu0 0
      %1973 = vmatprep.subr.bf16.mxu0 0
      %1974 = vmatpush1.bf16.msra.mxu0 0
      %1975 = vmatprep.subr.bf16.mxu0 0
      %1976 = vmatpush1.bf16.msra.mxu0 0
      %1977 = vmatprep.subr.bf16.mxu0 0
      %1978 = vmatpush1.bf16.msra.mxu0 0
      %1979 = vmatprep.subr.bf16.mxu0 0
      %1980 = vmatpush1.bf16.msra.mxu0 0
      %1981 = vmatprep.subr.bf16.mxu0 0
      %1982 = vmatpush1.bf16.msra.mxu0 0
      %1983 = vmatprep.subr.bf16.mxu0 0
      %1984 = vmatpush1.bf16.msra.mxu0 0
      %1985 = vmatprep.subr.bf16.mxu0 0
      %1986 = vmatpush1.bf16.msra.mxu0 0
      %1987 = vmatprep.subr.bf16.mxu0 0
      %1988 = vmatpush1.bf16.msra.mxu0 0
      %1989 = vmatprep.mubr.bf16.mxu0 0
      %1990 = vmatmul.mubr.bf16.gmra.mrb[0].mxu0 %v1563
      %v1991 = vpop.f32.mrb[0].mxu0
      %v1992 = vadd.f32 0.0, %v1991
      %v1993 = vpop.f32.mrb[0].mxu0
      %v1994 = vpop.f32.mrb[0].mxu0
      %v1995 = vadd.f32 0.0, %v1994
      %v1996 = vpop.f32.mrb[0].mxu0
      %1997 = vmatprep.mubr.bf16.mxu0 0
      %1998 = vmatmul.mubr.bf16.gmra.mrb[0].mxu0 %v1566
      %v1999 = vpop.f32.mrb[0].mxu0
      %v2000 = vadd.f32 0.0, %v1999
      %v2001 = vpop.f32.mrb[0].mxu0
      %v2002 = vpop.f32.mrb[0].mxu0
      %v2003 = vadd.f32 0.0, %v2002
      %v2004 = vpop.f32.mrb[0].mxu0
      %2005 = vmatprep.mubr.bf16.mxu0 0
      %2006 = vmatmul.mubr.bf16.gmra.mrb[0].mxu0 %v1569
      %v2007 = vpop.f32.mrb[0].mxu0
      %v2008 = vadd.f32 0.0, %v2007
      %v2009 = vpop.f32.mrb[0].mxu0
      %v2010 = vpop.f32.mrb[0].mxu0
      %v2011 = vadd.f32 0.0, %v2010
      %v2012 = vpop.f32.mrb[0].mxu0
      %2013 = vmatprep.mubr.bf16.mxu0 0
      %2014 = vmatmul.mubr.bf16.gmra.mrb[0].mxu0 %v1572
      %v2015 = vpop.f32.mrb[0].mxu0
      %v2016 = vadd.f32 0.0, %v2015
      %v2017 = vpop.f32.mrb[0].mxu0
      %v2018 = vpop.f32.mrb[0].mxu0
      %v2019 = vadd.f32 0.0, %v2018
      %v2020 = vpop.f32.mrb[0].mxu0
      %2021 = vmatprep.mubr.bf16.mxu0 0
      %2022 = vmatmul.mubr.bf16.gmra.mrb[0].mxu0 %v1575
      %v2023 = vpop.f32.mrb[0].mxu0
      %v2024 = vadd.f32 0.0, %v2023
      %v2025 = vpop.f32.mrb[0].mxu0
      %v2026 = vpop.f32.mrb[0].mxu0
      %v2027 = vadd.f32 0.0, %v2026
      %v2028 = vpop.f32.mrb[0].mxu0
      %2029 = vmatprep.mubr.bf16.mxu0 0
      %2030 = vmatmul.mubr.bf16.gmra.mrb[0].mxu0 %v1578
      %v2031 = vpop.f32.mrb[0].mxu0
      %v2032 = vadd.f32 0.0, %v2031
      %v2033 = vpop.f32.mrb[0].mxu0
      %v2034 = vpop.f32.mrb[0].mxu0
      %v2035 = vadd.f32 0.0, %v2034
      %v2036 = vpop.f32.mrb[0].mxu0
      %2037 = vmatprep.mubr.bf16.mxu0 0
      %2038 = vmatmul.mubr.bf16.gmra.mrb[0].mxu0 %v1581
      %v2039 = vpop.f32.mrb[0].mxu0
      %v2040 = vadd.f32 0.0, %v2039
      %v2041 = vpop.f32.mrb[0].mxu0
      %v2042 = vpop.f32.mrb[0].mxu0
      %v2043 = vadd.f32 0.0, %v2042
      %v2044 = vpop.f32.mrb[0].mxu0
      %2045 = vmatprep.mubr.bf16.mxu0 0
      %2046 = vmatmul.mubr.bf16.gmra.mrb[0].mxu0 %v1584
      %v2047 = vpop.f32.mrb[0].mxu0
      %v2048 = vadd.f32 0.0, %v2047
      %v2049 = vpop.f32.mrb[0].mxu0
      %v2050 = vpop.f32.mrb[0].mxu0
      %v2051 = vadd.f32 0.0, %v2050
      %v2052 = vpop.f32.mrb[0].mxu0
      %2053 = vmatprep.mubr.bf16.mxu0 0
      %2054 = vmatmul.mubr.bf16.gmra.mrb[0].mxu0 %v1587
      %v2055 = vpop.f32.mrb[0].mxu0
      %v2056 = vadd.f32 0.0, %v2055
      %v2057 = vpop.f32.mrb[0].mxu0
      %v2058 = vpop.f32.mrb[0].mxu0
      %v2059 = vadd.f32 0.0, %v2058
      %v2060 = vpop.f32.mrb[0].mxu0
      %2061 = vmatprep.mubr.bf16.mxu0 0
      %2062 = vmatmul.mubr.bf16.gmra.mrb[0].mxu0 %v1590
      %v2063 = vpop.f32.mrb[0].mxu0
      %v2064 = vadd.f32 0.0, %v2063
      %v2065 = vpop.f32.mrb[0].mxu0
      %v2066 = vpop.f32.mrb[0].mxu0
      %v2067 = vadd.f32 0.0, %v2066
      %v2068 = vpop.f32.mrb[0].mxu0
      %2069 = vmatprep.mubr.bf16.mxu0 0
      %2070 = vmatmul.mubr.bf16.gmra.mrb[0].mxu0 %v1593
      %v2071 = vpop.f32.mrb[0].mxu0
      %v2072 = vadd.f32 0.0, %v2071
      %v2073 = vpop.f32.mrb[0].mxu0
      %v2074 = vpop.f32.mrb[0].mxu0
      %v2075 = vadd.f32 0.0, %v2074
      %v2076 = vpop.f32.mrb[0].mxu0
      %2077 = vmatprep.mubr.bf16.mxu0 0
      %2078 = vmatmul.mubr.bf16.gmra.mrb[0].mxu0 %v1596
      %v2079 = vpop.f32.mrb[0].mxu0
      %v2080 = vadd.f32 0.0, %v2079
      %v2081 = vpop.f32.mrb[0].mxu0
      %v2082 = vpop.f32.mrb[0].mxu0
      %v2083 = vadd.f32 0.0, %v2082
      %v2084 = vpop.f32.mrb[0].mxu0
      %2085 = vmatprep.mubr.bf16.mxu0 0
      %2086 = vmatmul.mubr.bf16.gmra.mrb[0].mxu0 %v1599
      %v2087 = vpop.f32.mrb[0].mxu0
      %v2088 = vadd.f32 0.0, %v2087
      %v2089 = vpop.f32.mrb[0].mxu0
      %v2090 = vpop.f32.mrb[0].mxu0
      %v2091 = vadd.f32 0.0, %v2090
      %v2092 = vpop.f32.mrb[0].mxu0
      %2093 = vmatprep.mubr.bf16.mxu0 0
      %2094 = vmatmul.mubr.bf16.gmra.mrb[0].mxu0 %v1602
      %v2095 = vpop.f32.mrb[0].mxu0
      %v2096 = vadd.f32 0.0, %v2095
      %v2097 = vpop.f32.mrb[0].mxu0
      %v2098 = vpop.f32.mrb[0].mxu0
      %v2099 = vadd.f32 0.0, %v2098
      %v2100 = vpop.f32.mrb[0].mxu0
      %2101 = vmatprep.mubr.bf16.mxu0 0
      %2102 = vmatmul.mubr.bf16.gmra.mrb[0].mxu0 %v1605
      %v2103 = vpop.f32.mrb[0].mxu0
      %v2104 = vadd.f32 0.0, %v2103
      %v2105 = vpop.f32.mrb[0].mxu0
      %v2106 = vpop.f32.mrb[0].mxu0
      %v2107 = vadd.f32 0.0, %v2106
      %v2108 = vpop.f32.mrb[0].mxu0
      %2109 = vmatprep.mubr.bf16.mxu0 0
      %2110 = vmatmul.mubr.bf16.gmra.mrb[0].mxu0 %v1952
      %v2111 = vpop.f32.mrb[0].mxu0
      %v2112 = vadd.f32 0.0, %v2111
      %v2113 = vpop.f32.mrb[0].mxu0
      %v2114 = vpop.f32.mrb[0].mxu0
      %v2115 = vadd.f32 0.0, %v2114
      %v2116 = vpop.f32.mrb[0].mxu0
      %2117 = vdwg.mxu0
      %v2118 = vadd.f32 %v1818, %v1992
      %v2119 = vadd.f32 %v1821, %v1995
      %v2120 = vadd.f32 %v1826, %v2000
      %v2121 = vadd.f32 %v1829, %v2003
      %v2122 = vadd.f32 %v1834, %v2008
      %v2123 = vadd.f32 %v1837, %v2011
      %v2124 = vadd.f32 %v1842, %v2016
      %v2125 = vadd.f32 %v1845, %v2019
      %v2126 = vadd.f32 %v1850, %v2024
      %v2127 = vadd.f32 %v1853, %v2027
      %v2128 = vadd.f32 %v1858, %v2032
      %v2129 = vadd.f32 %v1861, %v2035
      %v2130 = vadd.f32 %v1866, %v2040
      %v2131 = vadd.f32 %v1869, %v2043
      %v2132 = vadd.f32 %v1874, %v2048
      %v2133 = vadd.f32 %v1877, %v2051
      %v2134 = vadd.f32 %v1882, %v2056
      %v2135 = vadd.f32 %v1885, %v2059
      %v2136 = vadd.f32 %v1890, %v2064
      %v2137 = vadd.f32 %v1893, %v2067
      %v2138 = vadd.f32 %v1898, %v2072
      %v2139 = vadd.f32 %v1901, %v2075
      %v2140 = vadd.f32 %v1906, %v2080
      %v2141 = vadd.f32 %v1909, %v2083
      %v2142 = vadd.f32 %v1914, %v2088
      %v2143 = vadd.f32 %v1917, %v2091
      %v2144 = vadd.f32 %v1922, %v2096
      %v2145 = vadd.f32 %v1925, %v2099
      %v2146 = vadd.f32 %v1930, %v2104
      %v2147 = vadd.f32 %v1933, %v2107
      %v2148 = vadd.f32 %v1938, %v2112
      %v2149 = vadd.f32 %v1941, %v2115
      %v2150 = vld [vmem:[#allocation2] sm:$0xf]
      %v2151 = vld [vmem:[#allocation2 + $0x4] sm:$0xf]
      %v2152 = vld [vmem:[#allocation2 + $0x8] sm:$0x1]
      %v2153 = vld [vmem:[#allocation2 + $0xc] sm:$0xf]
      %v2154 = vld [vmem:[#allocation2 + $0x10] sm:$0xf]
      %v2155 = vld [vmem:[#allocation2 + $0x14] sm:$0x1]
      %v2156 = vld [vmem:[#allocation2 + $0x18] sm:$0xf]
      %v2157 = vld [vmem:[#allocation2 + $0x1c] sm:$0xf]
      %v2158 = vld [vmem:[#allocation2 + $0x20] sm:$0x1]
      %v2159 = vld [vmem:[#allocation2 + $0x24] sm:$0xf]
      %v2160 = vld [vmem:[#allocation2 + $0x28] sm:$0xf]
      %v2161 = vld [vmem:[#allocation2 + $0x2c] sm:$0x1]
      %v2162 = vld [vmem:[#allocation2 + $0x30] sm:$0xf]
      %v2163 = vld [vmem:[#allocation2 + $0x34] sm:$0xf]
      %v2164 = vld [vmem:[#allocation2 + $0x38] sm:$0x1]
      %v2165 = vld [vmem:[#allocation2 + $0x3c] sm:$0xf]
      %v2166 = vld [vmem:[#allocation2 + $0x40] sm:$0xf]
      %v2167 = vld [vmem:[#allocation2 + $0x44] sm:$0x1]
      %v2168 = vld [vmem:[#allocation2 + $0x48] sm:$0xf]
      %v2169 = vld [vmem:[#allocation2 + $0x4c] sm:$0xf]
      %v2170 = vld [vmem:[#allocation2 + $0x50] sm:$0x1]
      %v2171 = vld [vmem:[#allocation2 + $0x54] sm:$0xf]
      %v2172 = vld [vmem:[#allocation2 + $0x58] sm:$0xf]
      %v2173 = vld [vmem:[#allocation2 + $0x5c] sm:$0x1]
      %v2174 = vld [vmem:[#allocation2 + $0x60] sm:$0xf]
      %v2175 = vld [vmem:[#allocation2 + $0x64] sm:$0xf]
      %v2176 = vld [vmem:[#allocation2 + $0x68] sm:$0x1]
      %v2177 = vld [vmem:[#allocation2 + $0x6c] sm:$0xf]
      %v2178 = vld [vmem:[#allocation2 + $0x70] sm:$0xf]
      %v2179 = vld [vmem:[#allocation2 + $0x74] sm:$0x1]
      %v2180 = vld [vmem:[#allocation2 + $0x78] sm:$0xf]
      %v2181 = vld [vmem:[#allocation2 + $0x7c] sm:$0xf]
      %v2182 = vld [vmem:[#allocation2 + $0x80] sm:$0x1]
      %v2183 = vld [vmem:[#allocation2 + $0x84] sm:$0xf]
      %v2184 = vld [vmem:[#allocation2 + $0x88] sm:$0xf]
      %v2185 = vld [vmem:[#allocation2 + $0x8c] sm:$0x1]
      %v2186 = vld [vmem:[#allocation2 + $0x90] sm:$0xf]
      %v2187 = vld [vmem:[#allocation2 + $0x94] sm:$0xf]
      %v2188 = vld [vmem:[#allocation2 + $0x98] sm:$0x1]
      %v2189 = vld [vmem:[#allocation2 + $0x9c] sm:$0xf]
      %v2190 = vld [vmem:[#allocation2 + $0xa0] sm:$0xf]
      %v2191 = vld [vmem:[#allocation2 + $0xa4] sm:$0x1]
      %v2192 = vld [vmem:[#allocation2 + $0xa8] sm:$0xf]
      %v2193 = vld [vmem:[#allocation2 + $0xac] sm:$0xf]
      %v2194 = vld [vmem:[#allocation2 + $0xb0] sm:$0x1]
      %v2195 = vld [vmem:[#allocation2 + $0xb4] sm:$0xf]
      %v2196 = vld [vmem:[#allocation2 + $0xb8] sm:$0xf]
      %v2197 = vld [vmem:[#allocation2 + $0xbc] sm:$0x1]
      %v2198 = vld [vmem:[#allocation2 + $0xc0] sm:$0xf]
      %v2199 = vld [vmem:[#allocation2 + $0xc4] sm:$0xf]
      %v2200 = vld [vmem:[#allocation2 + $0xc8] sm:$0x1]
      %v2201 = vld [vmem:[#allocation2 + $0xcc] sm:$0xf]
      %v2202 = vld [vmem:[#allocation2 + $0xd0] sm:$0xf]
      %v2203 = vld [vmem:[#allocation2 + $0xd4] sm:$0x1]
      %vm2204 = vsmask.f32 3328
      %vm2205 = vsmask.f32 7440
      %vm2206 = vmor %vm2204, %vm2205
      %v2208 = vshrl.u32 %v2150, 16
      %v2210 = vrot.slane %v2208, 4
      %v2211 = vshll.u32 %v2150, 16
      %v2213 = vrot.slane %v2211, 5
      %v2214 = vor.u32 %v2210, %v2213
      %v2215 = vrot.slane %v2214, 4
      %v2217 = vshll.u32 %v2151, 16
      %v2219 = vrot.slane %v2217, 5
      %v2220 = vsel %vm2206, %v2215, %v2219
      %v2221 = vshrl.u32 %v2151, 16
      %v2223 = vrot.slane %v2221, 4
      %v2224 = vor.u32 %v2223, %v2219
      %v2225 = vrot.slane %v2224, 4
      %v2227 = vshll.u32 %v2152, 16
      %v2229 = vrot.slane %v2227, 5
      %v2230 = vsel %vm2206, %v2225, %v2229
      %v2232 = vshrl.u32 %v2153, 16
      %v2234 = vrot.slane %v2232, 4
      %v2235 = vshll.u32 %v2153, 16
      %v2237 = vrot.slane %v2235, 5
      %v2238 = vor.u32 %v2234, %v2237
      %v2239 = vrot.slane %v2238, 4
      %v2241 = vshll.u32 %v2154, 16
      %v2243 = vrot.slane %v2241, 5
      %v2244 = vsel %vm2206, %v2239, %v2243
      %v2245 = vshrl.u32 %v2154, 16
      %v2247 = vrot.slane %v2245, 4
      %v2248 = vor.u32 %v2247, %v2243
      %v2249 = vrot.slane %v2248, 4
      %v2251 = vshll.u32 %v2155, 16
      %v2253 = vrot.slane %v2251, 5
      %v2254 = vsel %vm2206, %v2249, %v2253
      %v2256 = vshrl.u32 %v2156, 16
      %v2258 = vrot.slane %v2256, 4
      %v2259 = vshll.u32 %v2156, 16
      %v2261 = vrot.slane %v2259, 5
      %v2262 = vor.u32 %v2258, %v2261
      %v2263 = vrot.slane %v2262, 4
      %v2265 = vshll.u32 %v2157, 16
      %v2267 = vrot.slane %v2265, 5
      %v2268 = vsel %vm2206, %v2263, %v2267
      %v2269 = vshrl.u32 %v2157, 16
      %v2271 = vrot.slane %v2269, 4
      %v2272 = vor.u32 %v2271, %v2267
      %v2273 = vrot.slane %v2272, 4
      %v2275 = vshll.u32 %v2158, 16
      %v2277 = vrot.slane %v2275, 5
      %v2278 = vsel %vm2206, %v2273, %v2277
      %v2280 = vshrl.u32 %v2159, 16
      %v2282 = vrot.slane %v2280, 4
      %v2283 = vshll.u32 %v2159, 16
      %v2285 = vrot.slane %v2283, 5
      %v2286 = vor.u32 %v2282, %v2285
      %v2287 = vrot.slane %v2286, 4
      %v2289 = vshll.u32 %v2160, 16
      %v2291 = vrot.slane %v2289, 5
      %v2292 = vsel %vm2206, %v2287, %v2291
      %v2293 = vshrl.u32 %v2160, 16
      %v2295 = vrot.slane %v2293, 4
      %v2296 = vor.u32 %v2295, %v2291
      %v2297 = vrot.slane %v2296, 4
      %v2299 = vshll.u32 %v2161, 16
      %v2301 = vrot.slane %v2299, 5
      %v2302 = vsel %vm2206, %v2297, %v2301
      %v2304 = vshrl.u32 %v2162, 16
      %v2306 = vrot.slane %v2304, 4
      %v2307 = vshll.u32 %v2162, 16
      %v2309 = vrot.slane %v2307, 5
      %v2310 = vor.u32 %v2306, %v2309
      %v2311 = vrot.slane %v2310, 4
      %v2313 = vshll.u32 %v2163, 16
      %v2315 = vrot.slane %v2313, 5
      %v2316 = vsel %vm2206, %v2311, %v2315
      %v2317 = vshrl.u32 %v2163, 16
      %v2319 = vrot.slane %v2317, 4
      %v2320 = vor.u32 %v2319, %v2315
      %v2321 = vrot.slane %v2320, 4
      %v2323 = vshll.u32 %v2164, 16
      %v2325 = vrot.slane %v2323, 5
      %v2326 = vsel %vm2206, %v2321, %v2325
      %v2328 = vshrl.u32 %v2165, 16
      %v2330 = vrot.slane %v2328, 4
      %v2331 = vshll.u32 %v2165, 16
      %v2333 = vrot.slane %v2331, 5
      %v2334 = vor.u32 %v2330, %v2333
      %v2335 = vrot.slane %v2334, 4
      %v2337 = vshll.u32 %v2166, 16
      %v2339 = vrot.slane %v2337, 5
      %v2340 = vsel %vm2206, %v2335, %v2339
      %v2341 = vshrl.u32 %v2166, 16
      %v2343 = vrot.slane %v2341, 4
      %v2344 = vor.u32 %v2343, %v2339
      %v2345 = vrot.slane %v2344, 4
      %v2347 = vshll.u32 %v2167, 16
      %v2349 = vrot.slane %v2347, 5
      %v2350 = vsel %vm2206, %v2345, %v2349
      %v2352 = vshrl.u32 %v2168, 16
      %v2354 = vrot.slane %v2352, 4
      %v2355 = vshll.u32 %v2168, 16
      %v2357 = vrot.slane %v2355, 5
      %v2358 = vor.u32 %v2354, %v2357
      %v2359 = vrot.slane %v2358, 4
      %v2361 = vshll.u32 %v2169, 16
      %v2363 = vrot.slane %v2361, 5
      %v2364 = vsel %vm2206, %v2359, %v2363
      %v2365 = vshrl.u32 %v2169, 16
      %v2367 = vrot.slane %v2365, 4
      %v2368 = vor.u32 %v2367, %v2363
      %v2369 = vrot.slane %v2368, 4
      %v2371 = vshll.u32 %v2170, 16
      %v2373 = vrot.slane %v2371, 5
      %v2374 = vsel %vm2206, %v2369, %v2373
      %v2376 = vshrl.u32 %v2171, 16
      %v2378 = vrot.slane %v2376, 4
      %v2379 = vshll.u32 %v2171, 16
      %v2381 = vrot.slane %v2379, 5
      %v2382 = vor.u32 %v2378, %v2381
      %v2383 = vrot.slane %v2382, 4
      %v2385 = vshll.u32 %v2172, 16
      %v2387 = vrot.slane %v2385, 5
      %v2388 = vsel %vm2206, %v2383, %v2387
      %v2389 = vshrl.u32 %v2172, 16
      %v2391 = vrot.slane %v2389, 4
      %v2392 = vor.u32 %v2391, %v2387
      %v2393 = vrot.slane %v2392, 4
      %v2395 = vshll.u32 %v2173, 16
      %v2397 = vrot.slane %v2395, 5
      %v2398 = vsel %vm2206, %v2393, %v2397
      %v2400 = vshrl.u32 %v2174, 16
      %v2402 = vrot.slane %v2400, 4
      %v2403 = vshll.u32 %v2174, 16
      %v2405 = vrot.slane %v2403, 5
      %v2406 = vor.u32 %v2402, %v2405
      %v2407 = vrot.slane %v2406, 4
      %v2409 = vshll.u32 %v2175, 16
      %v2411 = vrot.slane %v2409, 5
      %v2412 = vsel %vm2206, %v2407, %v2411
      %v2413 = vshrl.u32 %v2175, 16
      %v2415 = vrot.slane %v2413, 4
      %v2416 = vor.u32 %v2415, %v2411
      %v2417 = vrot.slane %v2416, 4
      %v2419 = vshll.u32 %v2176, 16
      %v2421 = vrot.slane %v2419, 5
      %v2422 = vsel %vm2206, %v2417, %v2421
      %v2424 = vshrl.u32 %v2177, 16
      %v2426 = vrot.slane %v2424, 4
      %v2427 = vshll.u32 %v2177, 16
      %v2429 = vrot.slane %v2427, 5
      %v2430 = vor.u32 %v2426, %v2429
      %v2431 = vrot.slane %v2430, 4
      %v2433 = vshll.u32 %v2178, 16
      %v2435 = vrot.slane %v2433, 5
      %v2436 = vsel %vm2206, %v2431, %v2435
      %v2437 = vshrl.u32 %v2178, 16
      %v2439 = vrot.slane %v2437, 4
      %v2440 = vor.u32 %v2439, %v2435
      %v2441 = vrot.slane %v2440, 4
      %v2443 = vshll.u32 %v2179, 16
      %v2445 = vrot.slane %v2443, 5
      %v2446 = vsel %vm2206, %v2441, %v2445
      %v2448 = vshrl.u32 %v2180, 16
      %v2450 = vrot.slane %v2448, 4
      %v2451 = vshll.u32 %v2180, 16
      %v2453 = vrot.slane %v2451, 5
      %v2454 = vor.u32 %v2450, %v2453
      %v2455 = vrot.slane %v2454, 4
      %v2457 = vshll.u32 %v2181, 16
      %v2459 = vrot.slane %v2457, 5
      %v2460 = vsel %vm2206, %v2455, %v2459
      %v2461 = vshrl.u32 %v2181, 16
      %v2463 = vrot.slane %v2461, 4
      %v2464 = vor.u32 %v2463, %v2459
      %v2465 = vrot.slane %v2464, 4
      %v2467 = vshll.u32 %v2182, 16
      %v2469 = vrot.slane %v2467, 5
      %v2470 = vsel %vm2206, %v2465, %v2469
      %v2472 = vshrl.u32 %v2183, 16
      %v2474 = vrot.slane %v2472, 4
      %v2475 = vshll.u32 %v2183, 16
      %v2477 = vrot.slane %v2475, 5
      %v2478 = vor.u32 %v2474, %v2477
      %v2479 = vrot.slane %v2478, 4
      %v2481 = vshll.u32 %v2184, 16
      %v2483 = vrot.slane %v2481, 5
      %v2484 = vsel %vm2206, %v2479, %v2483
      %v2485 = vshrl.u32 %v2184, 16
      %v2487 = vrot.slane %v2485, 4
      %v2488 = vor.u32 %v2487, %v2483
      %v2489 = vrot.slane %v2488, 4
      %v2491 = vshll.u32 %v2185, 16
      %v2493 = vrot.slane %v2491, 5
      %v2494 = vsel %vm2206, %v2489, %v2493
      %v2496 = vshrl.u32 %v2186, 16
      %v2498 = vrot.slane %v2496, 4
      %v2499 = vshll.u32 %v2186, 16
      %v2501 = vrot.slane %v2499, 5
      %v2502 = vor.u32 %v2498, %v2501
      %v2503 = vrot.slane %v2502, 4
      %v2505 = vshll.u32 %v2187, 16
      %v2507 = vrot.slane %v2505, 5
      %v2508 = vsel %vm2206, %v2503, %v2507
      %v2509 = vshrl.u32 %v2187, 16
      %v2511 = vrot.slane %v2509, 4
      %v2512 = vor.u32 %v2511, %v2507
      %v2513 = vrot.slane %v2512, 4
      %v2515 = vshll.u32 %v2188, 16
      %v2517 = vrot.slane %v2515, 5
      %v2518 = vsel %vm2206, %v2513, %v2517
      %v2520 = vshrl.u32 %v2189, 16
      %v2522 = vrot.slane %v2520, 4
      %v2523 = vshll.u32 %v2189, 16
      %v2525 = vrot.slane %v2523, 5
      %v2526 = vor.u32 %v2522, %v2525
      %v2527 = vrot.slane %v2526, 4
      %v2529 = vshll.u32 %v2190, 16
      %v2531 = vrot.slane %v2529, 5
      %v2532 = vsel %vm2206, %v2527, %v2531
      %v2533 = vshrl.u32 %v2190, 16
      %v2535 = vrot.slane %v2533, 4
      %v2536 = vor.u32 %v2535, %v2531
      %v2537 = vrot.slane %v2536, 4
      %v2539 = vshll.u32 %v2191, 16
      %v2541 = vrot.slane %v2539, 5
      %v2542 = vsel %vm2206, %v2537, %v2541
      %v2544 = vshrl.u32 %v2192, 16
      %v2546 = vrot.slane %v2544, 4
      %v2547 = vshll.u32 %v2192, 16
      %v2549 = vrot.slane %v2547, 5
      %v2550 = vor.u32 %v2546, %v2549
      %v2551 = vrot.slane %v2550, 4
      %v2553 = vshll.u32 %v2193, 16
      %v2555 = vrot.slane %v2553, 5
      %v2556 = vsel %vm2206, %v2551, %v2555
      %v2557 = vshrl.u32 %v2193, 16
      %v2559 = vrot.slane %v2557, 4
      %v2560 = vor.u32 %v2559, %v2555
      %v2561 = vrot.slane %v2560, 4
      %v2563 = vshll.u32 %v2194, 16
      %v2565 = vrot.slane %v2563, 5
      %v2566 = vsel %vm2206, %v2561, %v2565
      %v2568 = vshrl.u32 %v2195, 16
      %v2570 = vrot.slane %v2568, 4
      %v2571 = vshll.u32 %v2195, 16
      %v2573 = vrot.slane %v2571, 5
      %v2574 = vor.u32 %v2570, %v2573
      %v2575 = vrot.slane %v2574, 4
      %v2577 = vshll.u32 %v2196, 16
      %v2579 = vrot.slane %v2577, 5
      %v2580 = vsel %vm2206, %v2575, %v2579
      %v2581 = vshrl.u32 %v2196, 16
      %v2583 = vrot.slane %v2581, 4
      %v2584 = vor.u32 %v2583, %v2579
      %v2585 = vrot.slane %v2584, 4
      %v2587 = vshll.u32 %v2197, 16
      %v2589 = vrot.slane %v2587, 5
      %v2590 = vsel %vm2206, %v2585, %v2589
      %s2591 = scalar_lea.vmem %s2, 4
      %v2592 = vld [vmem:[%s2591] sm:$0xf]
      %v2593 = vunpack.c.l.b16 %v2220
      %v2594 = vunpack.c.l.b16 %v2230
      %v2595 = vunpack.c.l.b16 %v2244
      %v2596 = vunpack.c.l.b16 %v2254
      %v2597 = vunpack.c.l.b16 %v2268
      %v2598 = vunpack.c.l.b16 %v2278
      %v2599 = vunpack.c.l.b16 %v2292
      %v2600 = vunpack.c.l.b16 %v2302
      %v2601 = vunpack.c.l.b16 %v2316
      %v2602 = vunpack.c.l.b16 %v2326
      %v2603 = vunpack.c.l.b16 %v2340
      %v2604 = vunpack.c.l.b16 %v2350
      %v2605 = vunpack.c.l.b16 %v2364
      %v2606 = vunpack.c.l.b16 %v2374
      %v2607 = vunpack.c.l.b16 %v2388
      %v2608 = vunpack.c.l.b16 %v2398
      %v2609 = vunpack.c.l.b16 %v2412
      %v2610 = vunpack.c.l.b16 %v2422
      %v2611 = vunpack.c.l.b16 %v2436
      %v2612 = vunpack.c.l.b16 %v2446
      %v2613 = vunpack.c.l.b16 %v2460
      %v2614 = vunpack.c.l.b16 %v2470
      %v2615 = vunpack.c.l.b16 %v2484
      %v2616 = vunpack.c.l.b16 %v2494
      %v2617 = vunpack.c.l.b16 %v2508
      %v2618 = vunpack.c.l.b16 %v2518
      %v2619 = vunpack.c.l.b16 %v2532
      %v2620 = vunpack.c.l.b16 %v2542
      %v2621 = vunpack.c.l.b16 %v2556
      %v2622 = vunpack.c.l.b16 %v2566
      %v2623 = vunpack.c.l.b16 %v2580
      %v2624 = vunpack.c.l.b16 %v2590
      %v2625 = vpack.c.b16 %v2594, %v2593
      %v2626 = vpack.c.b16 %v2596, %v2595
      %v2627 = vpack.c.b16 %v2598, %v2597
      %v2628 = vpack.c.b16 %v2600, %v2599
      %v2629 = vpack.c.b16 %v2602, %v2601
      %v2630 = vpack.c.b16 %v2604, %v2603
      %v2631 = vpack.c.b16 %v2606, %v2605
      %v2632 = vpack.c.b16 %v2608, %v2607
      %v2633 = vpack.c.b16 %v2610, %v2609
      %v2634 = vpack.c.b16 %v2612, %v2611
      %v2635 = vpack.c.b16 %v2614, %v2613
      %v2636 = vpack.c.b16 %v2616, %v2615
      %v2637 = vpack.c.b16 %v2618, %v2617
      %v2638 = vpack.c.b16 %v2620, %v2619
      %v2639 = vpack.c.b16 %v2622, %v2621
      %v2640 = vpack.c.b16 %v2624, %v2623
      %v2642 = vsel %vm1558, %v2625, 0
      %v2645 = vsel %vm1558, %v2626, 0
      %v2648 = vsel %vm1558, %v2627, 0
      %v2651 = vsel %vm1558, %v2628, 0
      %v2654 = vsel %vm1558, %v2629, 0
      %v2657 = vsel %vm1558, %v2630, 0
      %v2660 = vsel %vm1558, %v2631, 0
      %v2663 = vsel %vm1558, %v2632, 0
      %v2666 = vsel %vm1558, %v2633, 0
      %v2669 = vsel %vm1558, %v2634, 0
      %v2672 = vsel %vm1558, %v2635, 0
      %v2675 = vsel %vm1558, %v2636, 0
      %v2678 = vsel %vm1558, %v2637, 0
      %v2681 = vsel %vm1558, %v2638, 0
      %v2684 = vsel %vm1558, %v2639, 0
      %v2687 = vsel %vm1558, %v2640, 0
      %v2690 = vsel %vm1607, %v2592, 0
      %2692 = vmatprep.subr.bf16.mxu0 0
      %2693 = vmatpush1.bf16.msra.mxu0 %v2690
      %2694 = vmatprep.subr.bf16.mxu0 0
      %2695 = vmatpush1.bf16.msra.mxu0 0
      %2696 = vmatprep.subr.bf16.mxu0 0
      %2697 = vmatpush1.bf16.msra.mxu0 0
      %2698 = vmatprep.subr.bf16.mxu0 0
      %2699 = vmatpush1.bf16.msra.mxu0 0
      %2700 = vmatprep.subr.bf16.mxu0 0
      %2701 = vmatpush1.bf16.msra.mxu0 0
      %2702 = vmatprep.subr.bf16.mxu0 0
      %2703 = vmatpush1.bf16.msra.mxu0 0
      %2704 = vmatprep.subr.bf16.mxu0 0
      %2705 = vmatpush1.bf16.msra.mxu0 0
      %2706 = vmatprep.subr.bf16.mxu0 0
      %2707 = vmatpush1.bf16.msra.mxu0 0
      %2708 = vmatprep.subr.bf16.mxu0 0
      %2709 = vmatpush1.bf16.msra.mxu0 0
      %2710 = vmatprep.subr.bf16.mxu0 0
      %2711 = vmatpush1.bf16.msra.mxu0 0
      %2712 = vmatprep.subr.bf16.mxu0 0
      %2713 = vmatpush1.bf16.msra.mxu0 0
      %2714 = vmatprep.subr.bf16.mxu0 0
      %2715 = vmatpush1.bf16.msra.mxu0 0
      %2716 = vmatprep.subr.bf16.mxu0 0
      %2717 = vmatpush1.bf16.msra.mxu0 0
      %2718 = vmatprep.subr.bf16.mxu0 0
      %2719 = vmatpush1.bf16.msra.mxu0 0
      %2720 = vmatprep.subr.bf16.mxu0 0
      %2721 = vmatpush1.bf16.msra.mxu0 0
      %2722 = vmatprep.subr.bf16.mxu0 0
      %2723 = vmatpush1.bf16.msra.mxu0 0
      %2724 = vmatprep.mubr.bf16.mxu0 0
      %2725 = vmatmul.mubr.bf16.gmra.mrb[0].mxu0 %v2642
      %v2726 = vpop.f32.mrb[0].mxu0
      %v2727 = vadd.f32 0.0, %v2726
      %v2728 = vpop.f32.mrb[0].mxu0
      %v2729 = vpop.f32.mrb[0].mxu0
      %v2730 = vadd.f32 0.0, %v2729
      %v2731 = vpop.f32.mrb[0].mxu0
      %2732 = vmatprep.mubr.bf16.mxu0 0
      %2733 = vmatmul.mubr.bf16.gmra.mrb[0].mxu0 %v2645
      %v2734 = vpop.f32.mrb[0].mxu0
      %v2735 = vadd.f32 0.0, %v2734
      %v2736 = vpop.f32.mrb[0].mxu0
      %v2737 = vpop.f32.mrb[0].mxu0
      %v2738 = vadd.f32 0.0, %v2737
      %v2739 = vpop.f32.mrb[0].mxu0
      %2740 = vmatprep.mubr.bf16.mxu0 0
      %2741 = vmatmul.mubr.bf16.gmra.mrb[0].mxu0 %v2648
      %v2742 = vpop.f32.mrb[0].mxu0
      %v2743 = vadd.f32 0.0, %v2742
      %v2744 = vpop.f32.mrb[0].mxu0
      %v2745 = vpop.f32.mrb[0].mxu0
      %v2746 = vadd.f32 0.0, %v2745
      %v2747 = vpop.f32.mrb[0].mxu0
      %2748 = vmatprep.mubr.bf16.mxu0 0
      %2749 = vmatmul.mubr.bf16.gmra.mrb[0].mxu0 %v2651
      %v2750 = vpop.f32.mrb[0].mxu0
      %v2751 = vadd.f32 0.0, %v2750
      %v2752 = vpop.f32.mrb[0].mxu0
      %v2753 = vpop.f32.mrb[0].mxu0
      %v2754 = vadd.f32 0.0, %v2753
      %v2755 = vpop.f32.mrb[0].mxu0
      %2756 = vmatprep.mubr.bf16.mxu0 0
      %2757 = vmatmul.mubr.bf16.gmra.mrb[0].mxu0 %v2654
      %v2758 = vpop.f32.mrb[0].mxu0
      %v2759 = vadd.f32 0.0, %v2758
      %v2760 = vpop.f32.mrb[0].mxu0
      %v2761 = vpop.f32.mrb[0].mxu0
      %v2762 = vadd.f32 0.0, %v2761
      %v2763 = vpop.f32.mrb[0].mxu0
      %2764 = vmatprep.mubr.bf16.mxu0 0
      %2765 = vmatmul.mubr.bf16.gmra.mrb[0].mxu0 %v2657
      %v2766 = vpop.f32.mrb[0].mxu0
      %v2767 = vadd.f32 0.0, %v2766
      %v2768 = vpop.f32.mrb[0].mxu0
      %v2769 = vpop.f32.mrb[0].mxu0
      %v2770 = vadd.f32 0.0, %v2769
      %v2771 = vpop.f32.mrb[0].mxu0
      %2772 = vmatprep.mubr.bf16.mxu0 0
      %2773 = vmatmul.mubr.bf16.gmra.mrb[0].mxu0 %v2660
      %v2774 = vpop.f32.mrb[0].mxu0
      %v2775 = vadd.f32 0.0, %v2774
      %v2776 = vpop.f32.mrb[0].mxu0
      %v2777 = vpop.f32.mrb[0].mxu0
      %v2778 = vadd.f32 0.0, %v2777
      %v2779 = vpop.f32.mrb[0].mxu0
      %2780 = vmatprep.mubr.bf16.mxu0 0
      %2781 = vmatmul.mubr.bf16.gmra.mrb[0].mxu0 %v2663
      %v2782 = vpop.f32.mrb[0].mxu0
      %v2783 = vadd.f32 0.0, %v2782
      %v2784 = vpop.f32.mrb[0].mxu0
      %v2785 = vpop.f32.mrb[0].mxu0
      %v2786 = vadd.f32 0.0, %v2785
      %v2787 = vpop.f32.mrb[0].mxu0
      %2788 = vmatprep.mubr.bf16.mxu0 0
      %2789 = vmatmul.mubr.bf16.gmra.mrb[0].mxu0 %v2666
      %v2790 = vpop.f32.mrb[0].mxu0
      %v2791 = vadd.f32 0.0, %v2790
      %v2792 = vpop.f32.mrb[0].mxu0
      %v2793 = vpop.f32.mrb[0].mxu0
      %v2794 = vadd.f32 0.0, %v2793
      %v2795 = vpop.f32.mrb[0].mxu0
      %2796 = vmatprep.mubr.bf16.mxu0 0
      %2797 = vmatmul.mubr.bf16.gmra.mrb[0].mxu0 %v2669
      %v2798 = vpop.f32.mrb[0].mxu0
      %v2799 = vadd.f32 0.0, %v2798
      %v2800 = vpop.f32.mrb[0].mxu0
      %v2801 = vpop.f32.mrb[0].mxu0
      %v2802 = vadd.f32 0.0, %v2801
      %v2803 = vpop.f32.mrb[0].mxu0
      %2804 = vmatprep.mubr.bf16.mxu0 0
      %2805 = vmatmul.mubr.bf16.gmra.mrb[0].mxu0 %v2672
      %v2806 = vpop.f32.mrb[0].mxu0
      %v2807 = vadd.f32 0.0, %v2806
      %v2808 = vpop.f32.mrb[0].mxu0
      %v2809 = vpop.f32.mrb[0].mxu0
      %v2810 = vadd.f32 0.0, %v2809
      %v2811 = vpop.f32.mrb[0].mxu0
      %2812 = vmatprep.mubr.bf16.mxu0 0
      %2813 = vmatmul.mubr.bf16.gmra.mrb[0].mxu0 %v2675
      %v2814 = vpop.f32.mrb[0].mxu0
      %v2815 = vadd.f32 0.0, %v2814
      %v2816 = vpop.f32.mrb[0].mxu0
      %v2817 = vpop.f32.mrb[0].mxu0
      %v2818 = vadd.f32 0.0, %v2817
      %v2819 = vpop.f32.mrb[0].mxu0
      %2820 = vmatprep.mubr.bf16.mxu0 0
      %2821 = vmatmul.mubr.bf16.gmra.mrb[0].mxu0 %v2678
      %v2822 = vpop.f32.mrb[0].mxu0
      %v2823 = vadd.f32 0.0, %v2822
      %v2824 = vpop.f32.mrb[0].mxu0
      %v2825 = vpop.f32.mrb[0].mxu0
      %v2826 = vadd.f32 0.0, %v2825
      %v2827 = vpop.f32.mrb[0].mxu0
      %2828 = vmatprep.mubr.bf16.mxu0 0
      %2829 = vmatmul.mubr.bf16.gmra.mrb[0].mxu0 %v2681
      %v2830 = vpop.f32.mrb[0].mxu0
      %v2831 = vadd.f32 0.0, %v2830
      %v2832 = vpop.f32.mrb[0].mxu0
      %v2833 = vpop.f32.mrb[0].mxu0
      %v2834 = vadd.f32 0.0, %v2833
      %v2835 = vpop.f32.mrb[0].mxu0
      %2836 = vmatprep.mubr.bf16.mxu0 0
      %2837 = vmatmul.mubr.bf16.gmra.mrb[0].mxu0 %v2684
      %v2838 = vpop.f32.mrb[0].mxu0
      %v2839 = vadd.f32 0.0, %v2838
      %v2840 = vpop.f32.mrb[0].mxu0
      %v2841 = vpop.f32.mrb[0].mxu0
      %v2842 = vadd.f32 0.0, %v2841
      %v2843 = vpop.f32.mrb[0].mxu0
      %2844 = vmatprep.mubr.bf16.mxu0 0
      %2845 = vmatmul.mubr.bf16.gmra.mrb[0].mxu0 %v2687
      %v2846 = vpop.f32.mrb[0].mxu0
      %v2847 = vadd.f32 0.0, %v2846
      %v2848 = vpop.f32.mrb[0].mxu0
      %v2849 = vpop.f32.mrb[0].mxu0
      %v2850 = vadd.f32 0.0, %v2849
      %v2851 = vpop.f32.mrb[0].mxu0
      %2852 = vdwg.mxu0
      %v2853 = vadd.f32 %v2118, %v2727
      %v2854 = vadd.f32 %v2119, %v2730
      %v2855 = vadd.f32 %v2120, %v2735
      %v2856 = vadd.f32 %v2121, %v2738
      %v2857 = vadd.f32 %v2122, %v2743
      %v2858 = vadd.f32 %v2123, %v2746
      %v2859 = vadd.f32 %v2124, %v2751
      %v2860 = vadd.f32 %v2125, %v2754
      %v2861 = vadd.f32 %v2126, %v2759
      %v2862 = vadd.f32 %v2127, %v2762
      %v2863 = vadd.f32 %v2128, %v2767
      %v2864 = vadd.f32 %v2129, %v2770
      %v2865 = vadd.f32 %v2130, %v2775
      %v2866 = vadd.f32 %v2131, %v2778
      %v2867 = vadd.f32 %v2132, %v2783
      %v2868 = vadd.f32 %v2133, %v2786
      %v2869 = vadd.f32 %v2134, %v2791
      %v2870 = vadd.f32 %v2135, %v2794
      %v2871 = vadd.f32 %v2136, %v2799
      %v2872 = vadd.f32 %v2137, %v2802
      %v2873 = vadd.f32 %v2138, %v2807
      %v2874 = vadd.f32 %v2139, %v2810
      %v2875 = vadd.f32 %v2140, %v2815
      %v2876 = vadd.f32 %v2141, %v2818
      %v2877 = vadd.f32 %v2142, %v2823
      %v2878 = vadd.f32 %v2143, %v2826
      %v2879 = vadd.f32 %v2144, %v2831
      %v2880 = vadd.f32 %v2145, %v2834
      %v2881 = vadd.f32 %v2146, %v2839
      %v2882 = vadd.f32 %v2147, %v2842
      %v2883 = vadd.f32 %v2148, %v2847
      %v2884 = vadd.f32 %v2149, %v2850
      %v2886 = vshrl.u32 %v2198, 16
      %v2888 = vrot.slane %v2886, 4
      %v2889 = vshll.u32 %v2198, 16
      %v2891 = vrot.slane %v2889, 5
      %v2892 = vor.u32 %v2888, %v2891
      %v2893 = vrot.slane %v2892, 4
      %v2895 = vshll.u32 %v2199, 16
      %v2897 = vrot.slane %v2895, 5
      %v2898 = vsel %vm2206, %v2893, %v2897
      %v2899 = vshrl.u32 %v2199, 16
      %v2901 = vrot.slane %v2899, 4
      %v2902 = vor.u32 %v2901, %v2897
      %v2903 = vrot.slane %v2902, 4
      %v2905 = vshll.u32 %v2200, 16
      %v2907 = vrot.slane %v2905, 5
      %v2908 = vsel %vm2206, %v2903, %v2907
      %s2909 = scalar_lea.vmem %s2, 16
      %v2910 = vld [vmem:[%s2909] sm:$0xf]
      %v2911 = vunpack.c.l.b16 %v2898
      %v2912 = vunpack.c.l.b16 %v2908
      %v2913 = vpack.c.b16 %v2912, %v2911
      %v2915 = vsel %vm1558, %v2913, 0
      %v2918 = vsel %vm1607, %v2910, 0
      %2920 = vmatprep.subr.bf16.mxu0 0
      %2921 = vmatpush1.bf16.msra.mxu0 %v2918
      %2922 = vmatprep.subr.bf16.mxu0 0
      %2923 = vmatpush1.bf16.msra.mxu0 0
      %2924 = vmatprep.subr.bf16.mxu0 0
      %2925 = vmatpush1.bf16.msra.mxu0 0
      %2926 = vmatprep.subr.bf16.mxu0 0
      %2927 = vmatpush1.bf16.msra.mxu0 0
      %2928 = vmatprep.subr.bf16.mxu0 0
      %2929 = vmatpush1.bf16.msra.mxu0 0
      %2930 = vmatprep.subr.bf16.mxu0 0
      %2931 = vmatpush1.bf16.msra.mxu0 0
      %2932 = vmatprep.subr.bf16.mxu0 0
      %2933 = vmatpush1.bf16.msra.mxu0 0
      %2934 = vmatprep.subr.bf16.mxu0 0
      %2935 = vmatpush1.bf16.msra.mxu0 0
      %2936 = vmatprep.subr.bf16.mxu0 0
      %2937 = vmatpush1.bf16.msra.mxu0 0
      %2938 = vmatprep.subr.bf16.mxu0 0
      %2939 = vmatpush1.bf16.msra.mxu0 0
      %2940 = vmatprep.subr.bf16.mxu0 0
      %2941 = vmatpush1.bf16.msra.mxu0 0
      %2942 = vmatprep.subr.bf16.mxu0 0
      %2943 = vmatpush1.bf16.msra.mxu0 0
      %2944 = vmatprep.subr.bf16.mxu0 0
      %2945 = vmatpush1.bf16.msra.mxu0 0
      %2946 = vmatprep.subr.bf16.mxu0 0
      %2947 = vmatpush1.bf16.msra.mxu0 0
      %2948 = vmatprep.subr.bf16.mxu0 0
      %2949 = vmatpush1.bf16.msra.mxu0 0
      %2950 = vmatprep.subr.bf16.mxu0 0
      %2951 = vmatpush1.bf16.msra.mxu0 0
      %2952 = vmatprep.mubr.bf16.mxu0 0
      %2953 = vmatmul.mubr.bf16.gmra.mrb[0].mxu0 %v2645
      %v2954 = vpop.f32.mrb[0].mxu0
      %v2955 = vadd.f32 0.0, %v2954
      %v2956 = vpop.f32.mrb[0].mxu0
      %v2957 = vpop.f32.mrb[0].mxu0
      %v2958 = vadd.f32 0.0, %v2957
      %v2959 = vpop.f32.mrb[0].mxu0
      %2960 = vmatprep.mubr.bf16.mxu0 0
      %2961 = vmatmul.mubr.bf16.gmra.mrb[0].mxu0 %v2648
      %v2962 = vpop.f32.mrb[0].mxu0
      %v2963 = vadd.f32 0.0, %v2962
      %v2964 = vpop.f32.mrb[0].mxu0
      %v2965 = vpop.f32.mrb[0].mxu0
      %v2966 = vadd.f32 0.0, %v2965
      %v2967 = vpop.f32.mrb[0].mxu0
      %2968 = vmatprep.mubr.bf16.mxu0 0
      %2969 = vmatmul.mubr.bf16.gmra.mrb[0].mxu0 %v2651
      %v2970 = vpop.f32.mrb[0].mxu0
      %v2971 = vadd.f32 0.0, %v2970
      %v2972 = vpop.f32.mrb[0].mxu0
      %v2973 = vpop.f32.mrb[0].mxu0
      %v2974 = vadd.f32 0.0, %v2973
      %v2975 = vpop.f32.mrb[0].mxu0
      %2976 = vmatprep.mubr.bf16.mxu0 0
      %2977 = vmatmul.mubr.bf16.gmra.mrb[0].mxu0 %v2654
      %v2978 = vpop.f32.mrb[0].mxu0
      %v2979 = vadd.f32 0.0, %v2978
      %v2980 = vpop.f32.mrb[0].mxu0
      %v2981 = vpop.f32.mrb[0].mxu0
      %v2982 = vadd.f32 0.0, %v2981
      %v2983 = vpop.f32.mrb[0].mxu0
      %2984 = vmatprep.mubr.bf16.mxu0 0
      %2985 = vmatmul.mubr.bf16.gmra.mrb[0].mxu0 %v2657
      %v2986 = vpop.f32.mrb[0].mxu0
      %v2987 = vadd.f32 0.0, %v2986
      %v2988 = vpop.f32.mrb[0].mxu0
      %v2989 = vpop.f32.mrb[0].mxu0
      %v2990 = vadd.f32 0.0, %v2989
      %v2991 = vpop.f32.mrb[0].mxu0
      %2992 = vmatprep.mubr.bf16.mxu0 0
      %2993 = vmatmul.mubr.bf16.gmra.mrb[0].mxu0 %v2660
      %v2994 = vpop.f32.mrb[0].mxu0
      %v2995 = vadd.f32 0.0, %v2994
      %v2996 = vpop.f32.mrb[0].mxu0
      %v2997 = vpop.f32.mrb[0].mxu0
      %v2998 = vadd.f32 0.0, %v2997
      %v2999 = vpop.f32.mrb[0].mxu0
      %3000 = vmatprep.mubr.bf16.mxu0 0
      %3001 = vmatmul.mubr.bf16.gmra.mrb[0].mxu0 %v2663
      %v3002 = vpop.f32.mrb[0].mxu0
      %v3003 = vadd.f32 0.0, %v3002
      %v3004 = vpop.f32.mrb[0].mxu0
      %v3005 = vpop.f32.mrb[0].mxu0
      %v3006 = vadd.f32 0.0, %v3005
      %v3007 = vpop.f32.mrb[0].mxu0
      %3008 = vmatprep.mubr.bf16.mxu0 0
      %3009 = vmatmul.mubr.bf16.gmra.mrb[0].mxu0 %v2666
      %v3010 = vpop.f32.mrb[0].mxu0
      %v3011 = vadd.f32 0.0, %v3010
      %v3012 = vpop.f32.mrb[0].mxu0
      %v3013 = vpop.f32.mrb[0].mxu0
      %v3014 = vadd.f32 0.0, %v3013
      %v3015 = vpop.f32.mrb[0].mxu0
      %3016 = vmatprep.mubr.bf16.mxu0 0
      %3017 = vmatmul.mubr.bf16.gmra.mrb[0].mxu0 %v2669
      %v3018 = vpop.f32.mrb[0].mxu0
      %v3019 = vadd.f32 0.0, %v3018
      %v3020 = vpop.f32.mrb[0].mxu0
      %v3021 = vpop.f32.mrb[0].mxu0
      %v3022 = vadd.f32 0.0, %v3021
      %v3023 = vpop.f32.mrb[0].mxu0
      %3024 = vmatprep.mubr.bf16.mxu0 0
      %3025 = vmatmul.mubr.bf16.gmra.mrb[0].mxu0 %v2672
      %v3026 = vpop.f32.mrb[0].mxu0
      %v3027 = vadd.f32 0.0, %v3026
      %v3028 = vpop.f32.mrb[0].mxu0
      %v3029 = vpop.f32.mrb[0].mxu0
      %v3030 = vadd.f32 0.0, %v3029
      %v3031 = vpop.f32.mrb[0].mxu0
      %3032 = vmatprep.mubr.bf16.mxu0 0
      %3033 = vmatmul.mubr.bf16.gmra.mrb[0].mxu0 %v2675
      %v3034 = vpop.f32.mrb[0].mxu0
      %v3035 = vadd.f32 0.0, %v3034
      %v3036 = vpop.f32.mrb[0].mxu0
      %v3037 = vpop.f32.mrb[0].mxu0
      %v3038 = vadd.f32 0.0, %v3037
      %v3039 = vpop.f32.mrb[0].mxu0
      %3040 = vmatprep.mubr.bf16.mxu0 0
      %3041 = vmatmul.mubr.bf16.gmra.mrb[0].mxu0 %v2678
      %v3042 = vpop.f32.mrb[0].mxu0
      %v3043 = vadd.f32 0.0, %v3042
      %v3044 = vpop.f32.mrb[0].mxu0
      %v3045 = vpop.f32.mrb[0].mxu0
      %v3046 = vadd.f32 0.0, %v3045
      %v3047 = vpop.f32.mrb[0].mxu0
      %3048 = vmatprep.mubr.bf16.mxu0 0
      %3049 = vmatmul.mubr.bf16.gmra.mrb[0].mxu0 %v2681
      %v3050 = vpop.f32.mrb[0].mxu0
      %v3051 = vadd.f32 0.0, %v3050
      %v3052 = vpop.f32.mrb[0].mxu0
      %v3053 = vpop.f32.mrb[0].mxu0
      %v3054 = vadd.f32 0.0, %v3053
      %v3055 = vpop.f32.mrb[0].mxu0
      %3056 = vmatprep.mubr.bf16.mxu0 0
      %3057 = vmatmul.mubr.bf16.gmra.mrb[0].mxu0 %v2684
      %v3058 = vpop.f32.mrb[0].mxu0
      %v3059 = vadd.f32 0.0, %v3058
      %v3060 = vpop.f32.mrb[0].mxu0
      %v3061 = vpop.f32.mrb[0].mxu0
      %v3062 = vadd.f32 0.0, %v3061
      %v3063 = vpop.f32.mrb[0].mxu0
      %3064 = vmatprep.mubr.bf16.mxu0 0
      %3065 = vmatmul.mubr.bf16.gmra.mrb[0].mxu0 %v2687
      %v3066 = vpop.f32.mrb[0].mxu0
      %v3067 = vadd.f32 0.0, %v3066
      %v3068 = vpop.f32.mrb[0].mxu0
      %v3069 = vpop.f32.mrb[0].mxu0
      %v3070 = vadd.f32 0.0, %v3069
      %v3071 = vpop.f32.mrb[0].mxu0
      %3072 = vmatprep.mubr.bf16.mxu0 0
      %3073 = vmatmul.mubr.bf16.gmra.mrb[0].mxu0 %v2915
      %v3074 = vpop.f32.mrb[0].mxu0
      %v3075 = vadd.f32 0.0, %v3074
      %v3076 = vpop.f32.mrb[0].mxu0
      %v3077 = vpop.f32.mrb[0].mxu0
      %v3078 = vadd.f32 0.0, %v3077
      %v3079 = vpop.f32.mrb[0].mxu0
      %3080 = vdwg.mxu0
      %v3081 = vadd.f32 %v2853, %v2955
      %v3082 = vadd.f32 %v2854, %v2958
      %v3083 = vadd.f32 %v2855, %v2963
      %v3084 = vadd.f32 %v2856, %v2966
      %v3085 = vadd.f32 %v2857, %v2971
      %v3086 = vadd.f32 %v2858, %v2974
      %v3087 = vadd.f32 %v2859, %v2979
      %v3088 = vadd.f32 %v2860, %v2982
      %v3089 = vadd.f32 %v2861, %v2987
      %v3090 = vadd.f32 %v2862, %v2990
      %v3091 = vadd.f32 %v2863, %v2995
      %v3092 = vadd.f32 %v2864, %v2998
      %v3093 = vadd.f32 %v2865, %v3003
      %v3094 = vadd.f32 %v2866, %v3006
      %v3095 = vadd.f32 %v2867, %v3011
      %v3096 = vadd.f32 %v2868, %v3014
      %v3097 = vadd.f32 %v2869, %v3019
      %v3098 = vadd.f32 %v2870, %v3022
      %v3099 = vadd.f32 %v2871, %v3027
      %v3100 = vadd.f32 %v2872, %v3030
      %v3101 = vadd.f32 %v2873, %v3035
      %v3102 = vadd.f32 %v2874, %v3038
      %v3103 = vadd.f32 %v2875, %v3043
      %v3104 = vadd.f32 %v2876, %v3046
      %v3105 = vadd.f32 %v2877, %v3051
      %v3106 = vadd.f32 %v2878, %v3054
      %v3107 = vadd.f32 %v2879, %v3059
      %v3108 = vadd.f32 %v2880, %v3062
      %v3109 = vadd.f32 %v2881, %v3067
      %v3110 = vadd.f32 %v2882, %v3070
      %v3111 = vadd.f32 %v2883, %v3075
      %v3112 = vadd.f32 %v2884, %v3078
      %v3114 = vshrl.u32 %v2201, 16
      %v3116 = vrot.slane %v3114, 4
      %v3117 = vshll.u32 %v2201, 16
      %v3119 = vrot.slane %v3117, 5
      %v3120 = vor.u32 %v3116, %v3119
      %v3121 = vrot.slane %v3120, 4
      %v3123 = vshll.u32 %v2202, 16
      %v3125 = vrot.slane %v3123, 5
      %v3126 = vsel %vm2206, %v3121, %v3125
      %v3127 = vshrl.u32 %v2202, 16
      %v3129 = vrot.slane %v3127, 4
      %v3130 = vor.u32 %v3129, %v3125
      %v3131 = vrot.slane %v3130, 4
      %v3133 = vshll.u32 %v2203, 16
      %v3135 = vrot.slane %v3133, 5
      %v3136 = vsel %vm2206, %v3131, %v3135
      %s3137 = scalar_lea.vmem %s2, 28
      %v3138 = vld [vmem:[%s3137] sm:$0xf]
      %v3139 = vunpack.c.l.b16 %v3126
      %v3140 = vunpack.c.l.b16 %v3136
      %v3141 = vpack.c.b16 %v3140, %v3139
      %v3143 = vsel %vm1558, %v3141, 0
      %v3146 = vsel %vm1607, %v3138, 0
      %3148 = vmatprep.subr.bf16.mxu0 0
      %3149 = vmatpush1.bf16.msra.mxu0 %v3146
      %3150 = vmatprep.subr.bf16.mxu0 0
      %3151 = vmatpush1.bf16.msra.mxu0 0
      %3152 = vmatprep.subr.bf16.mxu0 0
      %3153 = vmatpush1.bf16.msra.mxu0 0
      %3154 = vmatprep.subr.bf16.mxu0 0
      %3155 = vmatpush1.bf16.msra.mxu0 0
      %3156 = vmatprep.subr.bf16.mxu0 0
      %3157 = vmatpush1.bf16.msra.mxu0 0
      %3158 = vmatprep.subr.bf16.mxu0 0
      %3159 = vmatpush1.bf16.msra.mxu0 0
      %3160 = vmatprep.subr.bf16.mxu0 0
      %3161 = vmatpush1.bf16.msra.mxu0 0
      %3162 = vmatprep.subr.bf16.mxu0 0
      %3163 = vmatpush1.bf16.msra.mxu0 0
      %3164 = vmatprep.subr.bf16.mxu0 0
      %3165 = vmatpush1.bf16.msra.mxu0 0
      %3166 = vmatprep.subr.bf16.mxu0 0
      %3167 = vmatpush1.bf16.msra.mxu0 0
      %3168 = vmatprep.subr.bf16.mxu0 0
      %3169 = vmatpush1.bf16.msra.mxu0 0
      %3170 = vmatprep.subr.bf16.mxu0 0
      %3171 = vmatpush1.bf16.msra.mxu0 0
      %3172 = vmatprep.subr.bf16.mxu0 0
      %3173 = vmatpush1.bf16.msra.mxu0 0
      %3174 = vmatprep.subr.bf16.mxu0 0
      %3175 = vmatpush1.bf16.msra.mxu0 0
      %3176 = vmatprep.subr.bf16.mxu0 0
      %3177 = vmatpush1.bf16.msra.mxu0 0
      %3178 = vmatprep.subr.bf16.mxu0 0
      %3179 = vmatpush1.bf16.msra.mxu0 0
      %3180 = vmatprep.mubr.bf16.mxu0 0
      %3181 = vmatmul.mubr.bf16.gmra.mrb[0].mxu0 %v2648
      %v3182 = vpop.f32.mrb[0].mxu0
      %v3183 = vadd.f32 0.0, %v3182
      %v3184 = vpop.f32.mrb[0].mxu0
      %v3185 = vpop.f32.mrb[0].mxu0
      %v3186 = vadd.f32 0.0, %v3185
      %v3187 = vpop.f32.mrb[0].mxu0
      %3188 = vmatprep.mubr.bf16.mxu0 0
      %3189 = vmatmul.mubr.bf16.gmra.mrb[0].mxu0 %v2651
      %v3190 = vpop.f32.mrb[0].mxu0
      %v3191 = vadd.f32 0.0, %v3190
      %v3192 = vpop.f32.mrb[0].mxu0
      %v3193 = vpop.f32.mrb[0].mxu0
      %v3194 = vadd.f32 0.0, %v3193
      %v3195 = vpop.f32.mrb[0].mxu0
      %3196 = vmatprep.mubr.bf16.mxu0 0
      %3197 = vmatmul.mubr.bf16.gmra.mrb[0].mxu0 %v2654
      %v3198 = vpop.f32.mrb[0].mxu0
      %v3199 = vadd.f32 0.0, %v3198
      %v3200 = vpop.f32.mrb[0].mxu0
      %v3201 = vpop.f32.mrb[0].mxu0
      %v3202 = vadd.f32 0.0, %v3201
      %v3203 = vpop.f32.mrb[0].mxu0
      %3204 = vmatprep.mubr.bf16.mxu0 0
      %3205 = vmatmul.mubr.bf16.gmra.mrb[0].mxu0 %v2657
      %v3206 = vpop.f32.mrb[0].mxu0
      %v3207 = vadd.f32 0.0, %v3206
      %v3208 = vpop.f32.mrb[0].mxu0
      %v3209 = vpop.f32.mrb[0].mxu0
      %v3210 = vadd.f32 0.0, %v3209
      %v3211 = vpop.f32.mrb[0].mxu0
      %3212 = vmatprep.mubr.bf16.mxu0 0
      %3213 = vmatmul.mubr.bf16.gmra.mrb[0].mxu0 %v2660
      %v3214 = vpop.f32.mrb[0].mxu0
      %v3215 = vadd.f32 0.0, %v3214
      %v3216 = vpop.f32.mrb[0].mxu0
      %v3217 = vpop.f32.mrb[0].mxu0
      %v3218 = vadd.f32 0.0, %v3217
      %v3219 = vpop.f32.mrb[0].mxu0
      %3220 = vmatprep.mubr.bf16.mxu0 0
      %3221 = vmatmul.mubr.bf16.gmra.mrb[0].mxu0 %v2663
      %v3222 = vpop.f32.mrb[0].mxu0
      %v3223 = vadd.f32 0.0, %v3222
      %v3224 = vpop.f32.mrb[0].mxu0
      %v3225 = vpop.f32.mrb[0].mxu0
      %v3226 = vadd.f32 0.0, %v3225
      %v3227 = vpop.f32.mrb[0].mxu0
      %3228 = vmatprep.mubr.bf16.mxu0 0
      %3229 = vmatmul.mubr.bf16.gmra.mrb[0].mxu0 %v2666
      %v3230 = vpop.f32.mrb[0].mxu0
      %v3231 = vadd.f32 0.0, %v3230
      %v3232 = vpop.f32.mrb[0].mxu0
      %v3233 = vpop.f32.mrb[0].mxu0
      %v3234 = vadd.f32 0.0, %v3233
      %v3235 = vpop.f32.mrb[0].mxu0
      %3236 = vmatprep.mubr.bf16.mxu0 0
      %3237 = vmatmul.mubr.bf16.gmra.mrb[0].mxu0 %v2669
      %v3238 = vpop.f32.mrb[0].mxu0
      %v3239 = vadd.f32 0.0, %v3238
      %v3240 = vpop.f32.mrb[0].mxu0
      %v3241 = vpop.f32.mrb[0].mxu0
      %v3242 = vadd.f32 0.0, %v3241
      %v3243 = vpop.f32.mrb[0].mxu0
      %3244 = vmatprep.mubr.bf16.mxu0 0
      %3245 = vmatmul.mubr.bf16.gmra.mrb[0].mxu0 %v2672
      %v3246 = vpop.f32.mrb[0].mxu0
      %v3247 = vadd.f32 0.0, %v3246
      %v3248 = vpop.f32.mrb[0].mxu0
      %v3249 = vpop.f32.mrb[0].mxu0
      %v3250 = vadd.f32 0.0, %v3249
      %v3251 = vpop.f32.mrb[0].mxu0
      %3252 = vmatprep.mubr.bf16.mxu0 0
      %3253 = vmatmul.mubr.bf16.gmra.mrb[0].mxu0 %v2675
      %v3254 = vpop.f32.mrb[0].mxu0
      %v3255 = vadd.f32 0.0, %v3254
      %v3256 = vpop.f32.mrb[0].mxu0
      %v3257 = vpop.f32.mrb[0].mxu0
      %v3258 = vadd.f32 0.0, %v3257
      %v3259 = vpop.f32.mrb[0].mxu0
      %3260 = vmatprep.mubr.bf16.mxu0 0
      %3261 = vmatmul.mubr.bf16.gmra.mrb[0].mxu0 %v2678
      %v3262 = vpop.f32.mrb[0].mxu0
      %v3263 = vadd.f32 0.0, %v3262
      %v3264 = vpop.f32.mrb[0].mxu0
      %v3265 = vpop.f32.mrb[0].mxu0
      %v3266 = vadd.f32 0.0, %v3265
      %v3267 = vpop.f32.mrb[0].mxu0
      %3268 = vmatprep.mubr.bf16.mxu0 0
      %3269 = vmatmul.mubr.bf16.gmra.mrb[0].mxu0 %v2681
      %v3270 = vpop.f32.mrb[0].mxu0
      %v3271 = vadd.f32 0.0, %v3270
      %v3272 = vpop.f32.mrb[0].mxu0
      %v3273 = vpop.f32.mrb[0].mxu0
      %v3274 = vadd.f32 0.0, %v3273
      %v3275 = vpop.f32.mrb[0].mxu0
      %3276 = vmatprep.mubr.bf16.mxu0 0
      %3277 = vmatmul.mubr.bf16.gmra.mrb[0].mxu0 %v2684
      %v3278 = vpop.f32.mrb[0].mxu0
      %v3279 = vadd.f32 0.0, %v3278
      %v3280 = vpop.f32.mrb[0].mxu0
      %v3281 = vpop.f32.mrb[0].mxu0
      %v3282 = vadd.f32 0.0, %v3281
      %v3283 = vpop.f32.mrb[0].mxu0
      %3284 = vmatprep.mubr.bf16.mxu0 0
      %3285 = vmatmul.mubr.bf16.gmra.mrb[0].mxu0 %v2687
      %v3286 = vpop.f32.mrb[0].mxu0
      %v3287 = vadd.f32 0.0, %v3286
      %v3288 = vpop.f32.mrb[0].mxu0
      %v3289 = vpop.f32.mrb[0].mxu0
      %v3290 = vadd.f32 0.0, %v3289
      %v3291 = vpop.f32.mrb[0].mxu0
      %3292 = vmatprep.mubr.bf16.mxu0 0
      %3293 = vmatmul.mubr.bf16.gmra.mrb[0].mxu0 %v2915
      %v3294 = vpop.f32.mrb[0].mxu0
      %v3295 = vadd.f32 0.0, %v3294
      %v3296 = vpop.f32.mrb[0].mxu0
      %v3297 = vpop.f32.mrb[0].mxu0
      %v3298 = vadd.f32 0.0, %v3297
      %v3299 = vpop.f32.mrb[0].mxu0
      %3300 = vmatprep.mubr.bf16.mxu0 0
      %3301 = vmatmul.mubr.bf16.gmra.mrb[0].mxu0 %v3143
      %v3302 = vpop.f32.mrb[0].mxu0
      %v3303 = vadd.f32 0.0, %v3302
      %v3304 = vpop.f32.mrb[0].mxu0
      %v3305 = vpop.f32.mrb[0].mxu0
      %v3306 = vadd.f32 0.0, %v3305
      %v3307 = vpop.f32.mrb[0].mxu0
      %3308 = vdwg.mxu0
      %v3309 = vadd.f32 %v3081, %v3183
      %v3310 = vadd.f32 %v3082, %v3186
      %v3311 = vadd.f32 %v3083, %v3191
      %v3312 = vadd.f32 %v3084, %v3194
      %v3313 = vadd.f32 %v3085, %v3199
      %v3314 = vadd.f32 %v3086, %v3202
      %v3315 = vadd.f32 %v3087, %v3207
      %v3316 = vadd.f32 %v3088, %v3210
      %v3317 = vadd.f32 %v3089, %v3215
      %v3318 = vadd.f32 %v3090, %v3218
      %v3319 = vadd.f32 %v3091, %v3223
      %v3320 = vadd.f32 %v3092, %v3226
      %v3321 = vadd.f32 %v3093, %v3231
      %v3322 = vadd.f32 %v3094, %v3234
      %v3323 = vadd.f32 %v3095, %v3239
      %v3324 = vadd.f32 %v3096, %v3242
      %v3325 = vadd.f32 %v3097, %v3247
      %v3326 = vadd.f32 %v3098, %v3250
      %v3327 = vadd.f32 %v3099, %v3255
      %v3328 = vadd.f32 %v3100, %v3258
      %v3329 = vadd.f32 %v3101, %v3263
      %v3330 = vadd.f32 %v3102, %v3266
      %v3331 = vadd.f32 %v3103, %v3271
      %v3332 = vadd.f32 %v3104, %v3274
      %v3333 = vadd.f32 %v3105, %v3279
      %v3334 = vadd.f32 %v3106, %v3282
      %v3335 = vadd.f32 %v3107, %v3287
      %v3336 = vadd.f32 %v3108, %v3290
      %v3337 = vadd.f32 %v3109, %v3295
      %v3338 = vadd.f32 %v3110, %v3298
      %v3339 = vadd.f32 %v3111, %v3303
      %v3340 = vadd.f32 %v3112, %v3306
      %v3341 = vld [vmem:[#allocation2] sm:$0xe]
      %v3342 = vld [vmem:[#allocation2 + $0xc] sm:$0xe]
      %v3343 = vld [vmem:[#allocation2 + $0x18] sm:$0xe]
      %v3344 = vld [vmem:[#allocation2 + $0x24] sm:$0xe]
      %v3345 = vld [vmem:[#allocation2 + $0x30] sm:$0xe]
      %v3346 = vld [vmem:[#allocation2 + $0x3c] sm:$0xe]
      %v3347 = vld [vmem:[#allocation2 + $0x48] sm:$0xe]
      %v3348 = vld [vmem:[#allocation2 + $0x54] sm:$0xe]
      %v3349 = vld [vmem:[#allocation2 + $0x60] sm:$0xe]
      %v3350 = vld [vmem:[#allocation2 + $0x6c] sm:$0xe]
      %v3351 = vld [vmem:[#allocation2 + $0x78] sm:$0xe]
      %v3352 = vld [vmem:[#allocation2 + $0x84] sm:$0xe]
      %v3353 = vld [vmem:[#allocation2 + $0x90] sm:$0xe]
      %v3354 = vld [vmem:[#allocation2 + $0x9c] sm:$0xe]
      %v3355 = vld [vmem:[#allocation2 + $0xa8] sm:$0xe]
      %v3356 = vld [vmem:[#allocation2 + $0xb4] sm:$0xe]
      %v3357 = vld [vmem:[#allocation2 + $0xc0] sm:$0xe]
      %v3358 = vld [vmem:[#allocation2 + $0xcc] sm:$0xe]
      %vm3407 = vcmask 1042432
      %vm3408 = vcmask 1046532
      %vm3409 = vmor %vm3407, %vm3408
      %v3410 = vrot.slane %v3341, 5
      %v3411 = vrot.slane %v3410, 4
      %v3412 = vrot.slane %v2151, 5
      %v3413 = vsel %vm3409, %v3411, %v3412
      %v3414 = vrot.slane %v3412, 4
      %v3415 = vrot.slane %v2152, 5
      %v3416 = vsel %vm3409, %v3414, %v3415
      %v3417 = vrot.slane %v3342, 5
      %v3418 = vrot.slane %v3417, 4
      %v3419 = vrot.slane %v2154, 5
      %v3420 = vsel %vm3409, %v3418, %v3419
      %v3421 = vrot.slane %v3419, 4
      %v3422 = vrot.slane %v2155, 5
      %v3423 = vsel %vm3409, %v3421, %v3422
      %v3424 = vrot.slane %v3343, 5
      %v3425 = vrot.slane %v3424, 4
      %v3426 = vrot.slane %v2157, 5
      %v3427 = vsel %vm3409, %v3425, %v3426
      %v3428 = vrot.slane %v3426, 4
      %v3429 = vrot.slane %v2158, 5
      %v3430 = vsel %vm3409, %v3428, %v3429
      %v3431 = vrot.slane %v3344, 5
      %v3432 = vrot.slane %v3431, 4
      %v3433 = vrot.slane %v2160, 5
      %v3434 = vsel %vm3409, %v3432, %v3433
      %v3435 = vrot.slane %v3433, 4
      %v3436 = vrot.slane %v2161, 5
      %v3437 = vsel %vm3409, %v3435, %v3436
      %v3438 = vrot.slane %v3345, 5
      %v3439 = vrot.slane %v3438, 4
      %v3440 = vrot.slane %v2163, 5
      %v3441 = vsel %vm3409, %v3439, %v3440
      %v3442 = vrot.slane %v3440, 4
      %v3443 = vrot.slane %v2164, 5
      %v3444 = vsel %vm3409, %v3442, %v3443
      %v3445 = vrot.slane %v3346, 5
      %v3446 = vrot.slane %v3445, 4
      %v3447 = vrot.slane %v2166, 5
      %v3448 = vsel %vm3409, %v3446, %v3447
      %v3449 = vrot.slane %v3447, 4
      %v3450 = vrot.slane %v2167, 5
      %v3451 = vsel %vm3409, %v3449, %v3450
      %v3452 = vrot.slane %v3347, 5
      %v3453 = vrot.slane %v3452, 4
      %v3454 = vrot.slane %v2169, 5
      %v3455 = vsel %vm3409, %v3453, %v3454
      %v3456 = vrot.slane %v3454, 4
      %v3457 = vrot.slane %v2170, 5
      %v3458 = vsel %vm3409, %v3456, %v3457
      %v3459 = vrot.slane %v3348, 5
      %v3460 = vrot.slane %v3459, 4
      %v3461 = vrot.slane %v2172, 5
      %v3462 = vsel %vm3409, %v3460, %v3461
      %v3463 = vrot.slane %v3461, 4
      %v3464 = vrot.slane %v2173, 5
      %v3465 = vsel %vm3409, %v3463, %v3464
      %v3466 = vrot.slane %v3349, 5
      %v3467 = vrot.slane %v3466, 4
      %v3468 = vrot.slane %v2175, 5
      %v3469 = vsel %vm3409, %v3467, %v3468
      %v3470 = vrot.slane %v3468, 4
      %v3471 = vrot.slane %v2176, 5
      %v3472 = vsel %vm3409, %v3470, %v3471
      %v3473 = vrot.slane %v3350, 5
      %v3474 = vrot.slane %v3473, 4
      %v3475 = vrot.slane %v2178, 5
      %v3476 = vsel %vm3409, %v3474, %v3475
      %v3477 = vrot.slane %v3475, 4
      %v3478 = vrot.slane %v2179, 5
      %v3479 = vsel %vm3409, %v3477, %v3478
      %v3480 = vrot.slane %v3351, 5
      %v3481 = vrot.slane %v3480, 4
      %v3482 = vrot.slane %v2181, 5
      %v3483 = vsel %vm3409, %v3481, %v3482
      %v3484 = vrot.slane %v3482, 4
      %v3485 = vrot.slane %v2182, 5
      %v3486 = vsel %vm3409, %v3484, %v3485
      %v3487 = vrot.slane %v3352, 5
      %v3488 = vrot.slane %v3487, 4
      %v3489 = vrot.slane %v2184, 5
      %v3490 = vsel %vm3409, %v3488, %v3489
      %v3491 = vrot.slane %v3489, 4
      %v3492 = vrot.slane %v2185, 5
      %v3493 = vsel %vm3409, %v3491, %v3492
      %v3494 = vrot.slane %v3353, 5
      %v3495 = vrot.slane %v3494, 4
      %v3496 = vrot.slane %v2187, 5
      %v3497 = vsel %vm3409, %v3495, %v3496
      %v3498 = vrot.slane %v3496, 4
      %v3499 = vrot.slane %v2188, 5
      %v3500 = vsel %vm3409, %v3498, %v3499
      %v3501 = vrot.slane %v3354, 5
      %v3502 = vrot.slane %v3501, 4
      %v3503 = vrot.slane %v2190, 5
      %v3504 = vsel %vm3409, %v3502, %v3503
      %v3505 = vrot.slane %v3503, 4
      %v3506 = vrot.slane %v2191, 5
      %v3507 = vsel %vm3409, %v3505, %v3506
      %v3508 = vrot.slane %v3355, 5
      %v3509 = vrot.slane %v3508, 4
      %v3510 = vrot.slane %v2193, 5
      %v3511 = vsel %vm3409, %v3509, %v3510
      %v3512 = vrot.slane %v3510, 4
      %v3513 = vrot.slane %v2194, 5
      %v3514 = vsel %vm3409, %v3512, %v3513
      %v3515 = vrot.slane %v3356, 5
      %v3516 = vrot.slane %v3515, 4
      %v3517 = vrot.slane %v2196, 5
      %v3518 = vsel %vm3409, %v3516, %v3517
      %v3519 = vrot.slane %v3517, 4
      %v3520 = vrot.slane %v2197, 5
      %v3521 = vsel %vm3409, %v3519, %v3520
      %s3522 = scalar_lea.vmem %s2, 8
      %v3523 = vld [vmem:[%s3522] sm:$0xf]
      %v3524 = vunpack.c.l.b16 %v3413
      %v3525 = vunpack.c.l.b16 %v3416
      %v3526 = vunpack.c.l.b16 %v3420
      %v3527 = vunpack.c.l.b16 %v3423
      %v3528 = vunpack.c.l.b16 %v3427
      %v3529 = vunpack.c.l.b16 %v3430
      %v3530 = vunpack.c.l.b16 %v3434
      %v3531 = vunpack.c.l.b16 %v3437
      %v3532 = vunpack.c.l.b16 %v3441
      %v3533 = vunpack.c.l.b16 %v3444
      %v3534 = vunpack.c.l.b16 %v3448
      %v3535 = vunpack.c.l.b16 %v3451
      %v3536 = vunpack.c.l.b16 %v3455
      %v3537 = vunpack.c.l.b16 %v3458
      %v3538 = vunpack.c.l.b16 %v3462
      %v3539 = vunpack.c.l.b16 %v3465
      %v3540 = vunpack.c.l.b16 %v3469
      %v3541 = vunpack.c.l.b16 %v3472
      %v3542 = vunpack.c.l.b16 %v3476
      %v3543 = vunpack.c.l.b16 %v3479
      %v3544 = vunpack.c.l.b16 %v3483
      %v3545 = vunpack.c.l.b16 %v3486
      %v3546 = vunpack.c.l.b16 %v3490
      %v3547 = vunpack.c.l.b16 %v3493
      %v3548 = vunpack.c.l.b16 %v3497
      %v3549 = vunpack.c.l.b16 %v3500
      %v3550 = vunpack.c.l.b16 %v3504
      %v3551 = vunpack.c.l.b16 %v3507
      %v3552 = vunpack.c.l.b16 %v3511
      %v3553 = vunpack.c.l.b16 %v3514
      %v3554 = vunpack.c.l.b16 %v3518
      %v3555 = vunpack.c.l.b16 %v3521
      %v3556 = vpack.c.b16 %v3525, %v3524
      %v3557 = vpack.c.b16 %v3527, %v3526
      %v3558 = vpack.c.b16 %v3529, %v3528
      %v3559 = vpack.c.b16 %v3531, %v3530
      %v3560 = vpack.c.b16 %v3533, %v3532
      %v3561 = vpack.c.b16 %v3535, %v3534
      %v3562 = vpack.c.b16 %v3537, %v3536
      %v3563 = vpack.c.b16 %v3539, %v3538
      %v3564 = vpack.c.b16 %v3541, %v3540
      %v3565 = vpack.c.b16 %v3543, %v3542
      %v3566 = vpack.c.b16 %v3545, %v3544
      %v3567 = vpack.c.b16 %v3547, %v3546
      %v3568 = vpack.c.b16 %v3549, %v3548
      %v3569 = vpack.c.b16 %v3551, %v3550
      %v3570 = vpack.c.b16 %v3553, %v3552
      %v3571 = vpack.c.b16 %v3555, %v3554
      %v3573 = vsel %vm1558, %v3556, 0
      %v3576 = vsel %vm1558, %v3557, 0
      %v3579 = vsel %vm1558, %v3558, 0
      %v3582 = vsel %vm1558, %v3559, 0
      %v3585 = vsel %vm1558, %v3560, 0
      %v3588 = vsel %vm1558, %v3561, 0
      %v3591 = vsel %vm1558, %v3562, 0
      %v3594 = vsel %vm1558, %v3563, 0
      %v3597 = vsel %vm1558, %v3564, 0
      %v3600 = vsel %vm1558, %v3565, 0
      %v3603 = vsel %vm1558, %v3566, 0
      %v3606 = vsel %vm1558, %v3567, 0
      %v3609 = vsel %vm1558, %v3568, 0
      %v3612 = vsel %vm1558, %v3569, 0
      %v3615 = vsel %vm1558, %v3570, 0
      %v3618 = vsel %vm1558, %v3571, 0
      %v3621 = vsel %vm1607, %v3523, 0
      %3623 = vmatprep.subr.bf16.mxu0 0
      %3624 = vmatpush1.bf16.msra.mxu0 %v3621
      %3625 = vmatprep.subr.bf16.mxu0 0
      %3626 = vmatpush1.bf16.msra.mxu0 0
      %3627 = vmatprep.subr.bf16.mxu0 0
      %3628 = vmatpush1.bf16.msra.mxu0 0
      %3629 = vmatprep.subr.bf16.mxu0 0
      %3630 = vmatpush1.bf16.msra.mxu0 0
      %3631 = vmatprep.subr.bf16.mxu0 0
      %3632 = vmatpush1.bf16.msra.mxu0 0
      %3633 = vmatprep.subr.bf16.mxu0 0
      %3634 = vmatpush1.bf16.msra.mxu0 0
      %3635 = vmatprep.subr.bf16.mxu0 0
      %3636 = vmatpush1.bf16.msra.mxu0 0
      %3637 = vmatprep.subr.bf16.mxu0 0
      %3638 = vmatpush1.bf16.msra.mxu0 0
      %3639 = vmatprep.subr.bf16.mxu0 0
      %3640 = vmatpush1.bf16.msra.mxu0 0
      %3641 = vmatprep.subr.bf16.mxu0 0
      %3642 = vmatpush1.bf16.msra.mxu0 0
      %3643 = vmatprep.subr.bf16.mxu0 0
      %3644 = vmatpush1.bf16.msra.mxu0 0
      %3645 = vmatprep.subr.bf16.mxu0 0
      %3646 = vmatpush1.bf16.msra.mxu0 0
      %3647 = vmatprep.subr.bf16.mxu0 0
      %3648 = vmatpush1.bf16.msra.mxu0 0
      %3649 = vmatprep.subr.bf16.mxu0 0
      %3650 = vmatpush1.bf16.msra.mxu0 0
      %3651 = vmatprep.subr.bf16.mxu0 0
      %3652 = vmatpush1.bf16.msra.mxu0 0
      %3653 = vmatprep.subr.bf16.mxu0 0
      %3654 = vmatpush1.bf16.msra.mxu0 0
      %3655 = vmatprep.mubr.bf16.mxu0 0
      %3656 = vmatmul.mubr.bf16.gmra.mrb[0].mxu0 %v3573
      %v3657 = vpop.f32.mrb[0].mxu0
      %v3658 = vadd.f32 0.0, %v3657
      %v3659 = vpop.f32.mrb[0].mxu0
      %v3660 = vpop.f32.mrb[0].mxu0
      %v3661 = vadd.f32 0.0, %v3660
      %v3662 = vpop.f32.mrb[0].mxu0
      %3663 = vmatprep.mubr.bf16.mxu0 0
      %3664 = vmatmul.mubr.bf16.gmra.mrb[0].mxu0 %v3576
      %v3665 = vpop.f32.mrb[0].mxu0
      %v3666 = vadd.f32 0.0, %v3665
      %v3667 = vpop.f32.mrb[0].mxu0
      %v3668 = vpop.f32.mrb[0].mxu0
      %v3669 = vadd.f32 0.0, %v3668
      %v3670 = vpop.f32.mrb[0].mxu0
      %3671 = vmatprep.mubr.bf16.mxu0 0
      %3672 = vmatmul.mubr.bf16.gmra.mrb[0].mxu0 %v3579
      %v3673 = vpop.f32.mrb[0].mxu0
      %v3674 = vadd.f32 0.0, %v3673
      %v3675 = vpop.f32.mrb[0].mxu0
      %v3676 = vpop.f32.mrb[0].mxu0
      %v3677 = vadd.f32 0.0, %v3676
      %v3678 = vpop.f32.mrb[0].mxu0
      %3679 = vmatprep.mubr.bf16.mxu0 0
      %3680 = vmatmul.mubr.bf16.gmra.mrb[0].mxu0 %v3582
      %v3681 = vpop.f32.mrb[0].mxu0
      %v3682 = vadd.f32 0.0, %v3681
      %v3683 = vpop.f32.mrb[0].mxu0
      %v3684 = vpop.f32.mrb[0].mxu0
      %v3685 = vadd.f32 0.0, %v3684
      %v3686 = vpop.f32.mrb[0].mxu0
      %3687 = vmatprep.mubr.bf16.mxu0 0
      %3688 = vmatmul.mubr.bf16.gmra.mrb[0].mxu0 %v3585
      %v3689 = vpop.f32.mrb[0].mxu0
      %v3690 = vadd.f32 0.0, %v3689
      %v3691 = vpop.f32.mrb[0].mxu0
      %v3692 = vpop.f32.mrb[0].mxu0
      %v3693 = vadd.f32 0.0, %v3692
      %v3694 = vpop.f32.mrb[0].mxu0
      %3695 = vmatprep.mubr.bf16.mxu0 0
      %3696 = vmatmul.mubr.bf16.gmra.mrb[0].mxu0 %v3588
      %v3697 = vpop.f32.mrb[0].mxu0
      %v3698 = vadd.f32 0.0, %v3697
      %v3699 = vpop.f32.mrb[0].mxu0
      %v3700 = vpop.f32.mrb[0].mxu0
      %v3701 = vadd.f32 0.0, %v3700
      %v3702 = vpop.f32.mrb[0].mxu0
      %3703 = vmatprep.mubr.bf16.mxu0 0
      %3704 = vmatmul.mubr.bf16.gmra.mrb[0].mxu0 %v3591
      %v3705 = vpop.f32.mrb[0].mxu0
      %v3706 = vadd.f32 0.0, %v3705
      %v3707 = vpop.f32.mrb[0].mxu0
      %v3708 = vpop.f32.mrb[0].mxu0
      %v3709 = vadd.f32 0.0, %v3708
      %v3710 = vpop.f32.mrb[0].mxu0
      %3711 = vmatprep.mubr.bf16.mxu0 0
      %3712 = vmatmul.mubr.bf16.gmra.mrb[0].mxu0 %v3594
      %v3713 = vpop.f32.mrb[0].mxu0
      %v3714 = vadd.f32 0.0, %v3713
      %v3715 = vpop.f32.mrb[0].mxu0
      %v3716 = vpop.f32.mrb[0].mxu0
      %v3717 = vadd.f32 0.0, %v3716
      %v3718 = vpop.f32.mrb[0].mxu0
      %3719 = vmatprep.mubr.bf16.mxu0 0
      %3720 = vmatmul.mubr.bf16.gmra.mrb[0].mxu0 %v3597
      %v3721 = vpop.f32.mrb[0].mxu0
      %v3722 = vadd.f32 0.0, %v3721
      %v3723 = vpop.f32.mrb[0].mxu0
      %v3724 = vpop.f32.mrb[0].mxu0
      %v3725 = vadd.f32 0.0, %v3724
      %v3726 = vpop.f32.mrb[0].mxu0
      %3727 = vmatprep.mubr.bf16.mxu0 0
      %3728 = vmatmul.mubr.bf16.gmra.mrb[0].mxu0 %v3600
      %v3729 = vpop.f32.mrb[0].mxu0
      %v3730 = vadd.f32 0.0, %v3729
      %v3731 = vpop.f32.mrb[0].mxu0
      %v3732 = vpop.f32.mrb[0].mxu0
      %v3733 = vadd.f32 0.0, %v3732
      %v3734 = vpop.f32.mrb[0].mxu0
      %3735 = vmatprep.mubr.bf16.mxu0 0
      %3736 = vmatmul.mubr.bf16.gmra.mrb[0].mxu0 %v3603
      %v3737 = vpop.f32.mrb[0].mxu0
      %v3738 = vadd.f32 0.0, %v3737
      %v3739 = vpop.f32.mrb[0].mxu0
      %v3740 = vpop.f32.mrb[0].mxu0
      %v3741 = vadd.f32 0.0, %v3740
      %v3742 = vpop.f32.mrb[0].mxu0
      %3743 = vmatprep.mubr.bf16.mxu0 0
      %3744 = vmatmul.mubr.bf16.gmra.mrb[0].mxu0 %v3606
      %v3745 = vpop.f32.mrb[0].mxu0
      %v3746 = vadd.f32 0.0, %v3745
      %v3747 = vpop.f32.mrb[0].mxu0
      %v3748 = vpop.f32.mrb[0].mxu0
      %v3749 = vadd.f32 0.0, %v3748
      %v3750 = vpop.f32.mrb[0].mxu0
      %3751 = vmatprep.mubr.bf16.mxu0 0
      %3752 = vmatmul.mubr.bf16.gmra.mrb[0].mxu0 %v3609
      %v3753 = vpop.f32.mrb[0].mxu0
      %v3754 = vadd.f32 0.0, %v3753
      %v3755 = vpop.f32.mrb[0].mxu0
      %v3756 = vpop.f32.mrb[0].mxu0
      %v3757 = vadd.f32 0.0, %v3756
      %v3758 = vpop.f32.mrb[0].mxu0
      %3759 = vmatprep.mubr.bf16.mxu0 0
      %3760 = vmatmul.mubr.bf16.gmra.mrb[0].mxu0 %v3612
      %v3761 = vpop.f32.mrb[0].mxu0
      %v3762 = vadd.f32 0.0, %v3761
      %v3763 = vpop.f32.mrb[0].mxu0
      %v3764 = vpop.f32.mrb[0].mxu0
      %v3765 = vadd.f32 0.0, %v3764
      %v3766 = vpop.f32.mrb[0].mxu0
      %3767 = vmatprep.mubr.bf16.mxu0 0
      %3768 = vmatmul.mubr.bf16.gmra.mrb[0].mxu0 %v3615
      %v3769 = vpop.f32.mrb[0].mxu0
      %v3770 = vadd.f32 0.0, %v3769
      %v3771 = vpop.f32.mrb[0].mxu0
      %v3772 = vpop.f32.mrb[0].mxu0
      %v3773 = vadd.f32 0.0, %v3772
      %v3774 = vpop.f32.mrb[0].mxu0
      %3775 = vmatprep.mubr.bf16.mxu0 0
      %3776 = vmatmul.mubr.bf16.gmra.mrb[0].mxu0 %v3618
      %v3777 = vpop.f32.mrb[0].mxu0
      %v3778 = vadd.f32 0.0, %v3777
      %v3779 = vpop.f32.mrb[0].mxu0
      %v3780 = vpop.f32.mrb[0].mxu0
      %v3781 = vadd.f32 0.0, %v3780
      %v3782 = vpop.f32.mrb[0].mxu0
      %3783 = vdwg.mxu0
      %v3784 = vadd.f32 %v3309, %v3658
      %v3785 = vadd.f32 %v3310, %v3661
      %v3786 = vadd.f32 %v3311, %v3666
      %v3787 = vadd.f32 %v3312, %v3669
      %v3788 = vadd.f32 %v3313, %v3674
      %v3789 = vadd.f32 %v3314, %v3677
      %v3790 = vadd.f32 %v3315, %v3682
      %v3791 = vadd.f32 %v3316, %v3685
      %v3792 = vadd.f32 %v3317, %v3690
      %v3793 = vadd.f32 %v3318, %v3693
      %v3794 = vadd.f32 %v3319, %v3698
      %v3795 = vadd.f32 %v3320, %v3701
      %v3796 = vadd.f32 %v3321, %v3706
      %v3797 = vadd.f32 %v3322, %v3709
      %v3798 = vadd.f32 %v3323, %v3714
      %v3799 = vadd.f32 %v3324, %v3717
      %v3800 = vadd.f32 %v3325, %v3722
      %v3801 = vadd.f32 %v3326, %v3725
      %v3802 = vadd.f32 %v3327, %v3730
      %v3803 = vadd.f32 %v3328, %v3733
      %v3804 = vadd.f32 %v3329, %v3738
      %v3805 = vadd.f32 %v3330, %v3741
      %v3806 = vadd.f32 %v3331, %v3746
      %v3807 = vadd.f32 %v3332, %v3749
      %v3808 = vadd.f32 %v3333, %v3754
      %v3809 = vadd.f32 %v3334, %v3757
      %v3810 = vadd.f32 %v3335, %v3762
      %v3811 = vadd.f32 %v3336, %v3765
      %v3812 = vadd.f32 %v3337, %v3770
      %v3813 = vadd.f32 %v3338, %v3773
      %v3814 = vadd.f32 %v3339, %v3778
      %v3815 = vadd.f32 %v3340, %v3781
      %v3819 = vrot.slane %v3357, 5
      %v3820 = vrot.slane %v3819, 4
      %v3821 = vrot.slane %v2199, 5
      %v3822 = vsel %vm3409, %v3820, %v3821
      %v3823 = vrot.slane %v3821, 4
      %v3824 = vrot.slane %v2200, 5
      %v3825 = vsel %vm3409, %v3823, %v3824
      %s3826 = scalar_lea.vmem %s2, 20
      %v3827 = vld [vmem:[%s3826] sm:$0xf]
      %v3828 = vunpack.c.l.b16 %v3822
      %v3829 = vunpack.c.l.b16 %v3825
      %v3830 = vpack.c.b16 %v3829, %v3828
      %v3832 = vsel %vm1558, %v3830, 0
      %v3835 = vsel %vm1607, %v3827, 0
      %3837 = vmatprep.subr.bf16.mxu0 0
      %3838 = vmatpush1.bf16.msra.mxu0 %v3835
      %3839 = vmatprep.subr.bf16.mxu0 0
      %3840 = vmatpush1.bf16.msra.mxu0 0
      %3841 = vmatprep.subr.bf16.mxu0 0
      %3842 = vmatpush1.bf16.msra.mxu0 0
      %3843 = vmatprep.subr.bf16.mxu0 0
      %3844 = vmatpush1.bf16.msra.mxu0 0
      %3845 = vmatprep.subr.bf16.mxu0 0
      %3846 = vmatpush1.bf16.msra.mxu0 0
      %3847 = vmatprep.subr.bf16.mxu0 0
      %3848 = vmatpush1.bf16.msra.mxu0 0
      %3849 = vmatprep.subr.bf16.mxu0 0
      %3850 = vmatpush1.bf16.msra.mxu0 0
      %3851 = vmatprep.subr.bf16.mxu0 0
      %3852 = vmatpush1.bf16.msra.mxu0 0
      %3853 = vmatprep.subr.bf16.mxu0 0
      %3854 = vmatpush1.bf16.msra.mxu0 0
      %3855 = vmatprep.subr.bf16.mxu0 0
      %3856 = vmatpush1.bf16.msra.mxu0 0
      %3857 = vmatprep.subr.bf16.mxu0 0
      %3858 = vmatpush1.bf16.msra.mxu0 0
      %3859 = vmatprep.subr.bf16.mxu0 0
      %3860 = vmatpush1.bf16.msra.mxu0 0
      %3861 = vmatprep.subr.bf16.mxu0 0
      %3862 = vmatpush1.bf16.msra.mxu0 0
      %3863 = vmatprep.subr.bf16.mxu0 0
      %3864 = vmatpush1.bf16.msra.mxu0 0
      %3865 = vmatprep.subr.bf16.mxu0 0
      %3866 = vmatpush1.bf16.msra.mxu0 0
      %3867 = vmatprep.subr.bf16.mxu0 0
      %3868 = vmatpush1.bf16.msra.mxu0 0
      %3869 = vmatprep.mubr.bf16.mxu0 0
      %3870 = vmatmul.mubr.bf16.gmra.mrb[0].mxu0 %v3576
      %v3871 = vpop.f32.mrb[0].mxu0
      %v3872 = vadd.f32 0.0, %v3871
      %v3873 = vpop.f32.mrb[0].mxu0
      %v3874 = vpop.f32.mrb[0].mxu0
      %v3875 = vadd.f32 0.0, %v3874
      %v3876 = vpop.f32.mrb[0].mxu0
      %3877 = vmatprep.mubr.bf16.mxu0 0
      %3878 = vmatmul.mubr.bf16.gmra.mrb[0].mxu0 %v3579
      %v3879 = vpop.f32.mrb[0].mxu0
      %v3880 = vadd.f32 0.0, %v3879
      %v3881 = vpop.f32.mrb[0].mxu0
      %v3882 = vpop.f32.mrb[0].mxu0
      %v3883 = vadd.f32 0.0, %v3882
      %v3884 = vpop.f32.mrb[0].mxu0
      %3885 = vmatprep.mubr.bf16.mxu0 0
      %3886 = vmatmul.mubr.bf16.gmra.mrb[0].mxu0 %v3582
      %v3887 = vpop.f32.mrb[0].mxu0
      %v3888 = vadd.f32 0.0, %v3887
      %v3889 = vpop.f32.mrb[0].mxu0
      %v3890 = vpop.f32.mrb[0].mxu0
      %v3891 = vadd.f32 0.0, %v3890
      %v3892 = vpop.f32.mrb[0].mxu0
      %3893 = vmatprep.mubr.bf16.mxu0 0
      %3894 = vmatmul.mubr.bf16.gmra.mrb[0].mxu0 %v3585
      %v3895 = vpop.f32.mrb[0].mxu0
      %v3896 = vadd.f32 0.0, %v3895
      %v3897 = vpop.f32.mrb[0].mxu0
      %v3898 = vpop.f32.mrb[0].mxu0
      %v3899 = vadd.f32 0.0, %v3898
      %v3900 = vpop.f32.mrb[0].mxu0
      %3901 = vmatprep.mubr.bf16.mxu0 0
      %3902 = vmatmul.mubr.bf16.gmra.mrb[0].mxu0 %v3588
      %v3903 = vpop.f32.mrb[0].mxu0
      %v3904 = vadd.f32 0.0, %v3903
      %v3905 = vpop.f32.mrb[0].mxu0
      %v3906 = vpop.f32.mrb[0].mxu0
      %v3907 = vadd.f32 0.0, %v3906
      %v3908 = vpop.f32.mrb[0].mxu0
      %3909 = vmatprep.mubr.bf16.mxu0 0
      %3910 = vmatmul.mubr.bf16.gmra.mrb[0].mxu0 %v3591
      %v3911 = vpop.f32.mrb[0].mxu0
      %v3912 = vadd.f32 0.0, %v3911
      %v3913 = vpop.f32.mrb[0].mxu0
      %v3914 = vpop.f32.mrb[0].mxu0
      %v3915 = vadd.f32 0.0, %v3914
      %v3916 = vpop.f32.mrb[0].mxu0
      %3917 = vmatprep.mubr.bf16.mxu0 0
      %3918 = vmatmul.mubr.bf16.gmra.mrb[0].mxu0 %v3594
      %v3919 = vpop.f32.mrb[0].mxu0
      %v3920 = vadd.f32 0.0, %v3919
      %v3921 = vpop.f32.mrb[0].mxu0
      %v3922 = vpop.f32.mrb[0].mxu0
      %v3923 = vadd.f32 0.0, %v3922
      %v3924 = vpop.f32.mrb[0].mxu0
      %3925 = vmatprep.mubr.bf16.mxu0 0
      %3926 = vmatmul.mubr.bf16.gmra.mrb[0].mxu0 %v3597
      %v3927 = vpop.f32.mrb[0].mxu0
      %v3928 = vadd.f32 0.0, %v3927
      %v3929 = vpop.f32.mrb[0].mxu0
      %v3930 = vpop.f32.mrb[0].mxu0
      %v3931 = vadd.f32 0.0, %v3930
      %v3932 = vpop.f32.mrb[0].mxu0
      %3933 = vmatprep.mubr.bf16.mxu0 0
      %3934 = vmatmul.mubr.bf16.gmra.mrb[0].mxu0 %v3600
      %v3935 = vpop.f32.mrb[0].mxu0
      %v3936 = vadd.f32 0.0, %v3935
      %v3937 = vpop.f32.mrb[0].mxu0
      %v3938 = vpop.f32.mrb[0].mxu0
      %v3939 = vadd.f32 0.0, %v3938
      %v3940 = vpop.f32.mrb[0].mxu0
      %3941 = vmatprep.mubr.bf16.mxu0 0
      %3942 = vmatmul.mubr.bf16.gmra.mrb[0].mxu0 %v3603
      %v3943 = vpop.f32.mrb[0].mxu0
      %v3944 = vadd.f32 0.0, %v3943
      %v3945 = vpop.f32.mrb[0].mxu0
      %v3946 = vpop.f32.mrb[0].mxu0
      %v3947 = vadd.f32 0.0, %v3946
      %v3948 = vpop.f32.mrb[0].mxu0
      %3949 = vmatprep.mubr.bf16.mxu0 0
      %3950 = vmatmul.mubr.bf16.gmra.mrb[0].mxu0 %v3606
      %v3951 = vpop.f32.mrb[0].mxu0
      %v3952 = vadd.f32 0.0, %v3951
      %v3953 = vpop.f32.mrb[0].mxu0
      %v3954 = vpop.f32.mrb[0].mxu0
      %v3955 = vadd.f32 0.0, %v3954
      %v3956 = vpop.f32.mrb[0].mxu0
      %3957 = vmatprep.mubr.bf16.mxu0 0
      %3958 = vmatmul.mubr.bf16.gmra.mrb[0].mxu0 %v3609
      %v3959 = vpop.f32.mrb[0].mxu0
      %v3960 = vadd.f32 0.0, %v3959
      %v3961 = vpop.f32.mrb[0].mxu0
      %v3962 = vpop.f32.mrb[0].mxu0
      %v3963 = vadd.f32 0.0, %v3962
      %v3964 = vpop.f32.mrb[0].mxu0
      %3965 = vmatprep.mubr.bf16.mxu0 0
      %3966 = vmatmul.mubr.bf16.gmra.mrb[0].mxu0 %v3612
      %v3967 = vpop.f32.mrb[0].mxu0
      %v3968 = vadd.f32 0.0, %v3967
      %v3969 = vpop.f32.mrb[0].mxu0
      %v3970 = vpop.f32.mrb[0].mxu0
      %v3971 = vadd.f32 0.0, %v3970
      %v3972 = vpop.f32.mrb[0].mxu0
      %3973 = vmatprep.mubr.bf16.mxu0 0
      %3974 = vmatmul.mubr.bf16.gmra.mrb[0].mxu0 %v3615
      %v3975 = vpop.f32.mrb[0].mxu0
      %v3976 = vadd.f32 0.0, %v3975
      %v3977 = vpop.f32.mrb[0].mxu0
      %v3978 = vpop.f32.mrb[0].mxu0
      %v3979 = vadd.f32 0.0, %v3978
      %v3980 = vpop.f32.mrb[0].mxu0
      %3981 = vmatprep.mubr.bf16.mxu0 0
      %3982 = vmatmul.mubr.bf16.gmra.mrb[0].mxu0 %v3618
      %v3983 = vpop.f32.mrb[0].mxu0
      %v3984 = vadd.f32 0.0, %v3983
      %v3985 = vpop.f32.mrb[0].mxu0
      %v3986 = vpop.f32.mrb[0].mxu0
      %v3987 = vadd.f32 0.0, %v3986
      %v3988 = vpop.f32.mrb[0].mxu0
      %3989 = vmatprep.mubr.bf16.mxu0 0
      %3990 = vmatmul.mubr.bf16.gmra.mrb[0].mxu0 %v3832
      %v3991 = vpop.f32.mrb[0].mxu0
      %v3992 = vadd.f32 0.0, %v3991
      %v3993 = vpop.f32.mrb[0].mxu0
      %v3994 = vpop.f32.mrb[0].mxu0
      %v3995 = vadd.f32 0.0, %v3994
      %v3996 = vpop.f32.mrb[0].mxu0
      %3997 = vdwg.mxu0
      %v3998 = vadd.f32 %v3784, %v3872
      %v3999 = vadd.f32 %v3785, %v3875
      %v4000 = vadd.f32 %v3786, %v3880
      %v4001 = vadd.f32 %v3787, %v3883
      %v4002 = vadd.f32 %v3788, %v3888
      %v4003 = vadd.f32 %v3789, %v3891
      %v4004 = vadd.f32 %v3790, %v3896
      %v4005 = vadd.f32 %v3791, %v3899
      %v4006 = vadd.f32 %v3792, %v3904
      %v4007 = vadd.f32 %v3793, %v3907
      %v4008 = vadd.f32 %v3794, %v3912
      %v4009 = vadd.f32 %v3795, %v3915
      %v4010 = vadd.f32 %v3796, %v3920
      %v4011 = vadd.f32 %v3797, %v3923
      %v4012 = vadd.f32 %v3798, %v3928
      %v4013 = vadd.f32 %v3799, %v3931
      %v4014 = vadd.f32 %v3800, %v3936
      %v4015 = vadd.f32 %v3801, %v3939
      %v4016 = vadd.f32 %v3802, %v3944
      %v4017 = vadd.f32 %v3803, %v3947
      %v4018 = vadd.f32 %v3804, %v3952
      %v4019 = vadd.f32 %v3805, %v3955
      %v4020 = vadd.f32 %v3806, %v3960
      %v4021 = vadd.f32 %v3807, %v3963
      %v4022 = vadd.f32 %v3808, %v3968
      %v4023 = vadd.f32 %v3809, %v3971
      %v4024 = vadd.f32 %v3810, %v3976
      %v4025 = vadd.f32 %v3811, %v3979
      %v4026 = vadd.f32 %v3812, %v3984
      %v4027 = vadd.f32 %v3813, %v3987
      %v4028 = vadd.f32 %v3814, %v3992
      %v4029 = vadd.f32 %v3815, %v3995
      %v4033 = vrot.slane %v3358, 5
      %v4034 = vrot.slane %v4033, 4
      %v4035 = vrot.slane %v2202, 5
      %v4036 = vsel %vm3409, %v4034, %v4035
      %v4037 = vrot.slane %v4035, 4
      %v4038 = vrot.slane %v2203, 5
      %v4039 = vsel %vm3409, %v4037, %v4038
      %s4040 = scalar_lea.vmem %s2, 32
      %v4041 = vld [vmem:[%s4040] sm:$0xf]
      %v4042 = vunpack.c.l.b16 %v4036
      %v4043 = vunpack.c.l.b16 %v4039
      %v4044 = vpack.c.b16 %v4043, %v4042
      %v4046 = vsel %vm1558, %v4044, 0
      %v4049 = vsel %vm1607, %v4041, 0
      %4051 = vmatprep.subr.bf16.mxu0 0
      %4052 = vmatpush1.bf16.msra.mxu0 %v4049
      %4053 = vmatprep.subr.bf16.mxu0 0
      %4054 = vmatpush1.bf16.msra.mxu0 0
      %4055 = vmatprep.subr.bf16.mxu0 0
      %4056 = vmatpush1.bf16.msra.mxu0 0
      %4057 = vmatprep.subr.bf16.mxu0 0
      %4058 = vmatpush1.bf16.msra.mxu0 0
      %4059 = vmatprep.subr.bf16.mxu0 0
      %4060 = vmatpush1.bf16.msra.mxu0 0
      %4061 = vmatprep.subr.bf16.mxu0 0
      %4062 = vmatpush1.bf16.msra.mxu0 0
      %4063 = vmatprep.subr.bf16.mxu0 0
      %4064 = vmatpush1.bf16.msra.mxu0 0
      %4065 = vmatprep.subr.bf16.mxu0 0
      %4066 = vmatpush1.bf16.msra.mxu0 0
      %4067 = vmatprep.subr.bf16.mxu0 0
      %4068 = vmatpush1.bf16.msra.mxu0 0
      %4069 = vmatprep.subr.bf16.mxu0 0
      %4070 = vmatpush1.bf16.msra.mxu0 0
      %4071 = vmatprep.subr.bf16.mxu0 0
      %4072 = vmatpush1.bf16.msra.mxu0 0
      %4073 = vmatprep.subr.bf16.mxu0 0
      %4074 = vmatpush1.bf16.msra.mxu0 0
      %4075 = vmatprep.subr.bf16.mxu0 0
      %4076 = vmatpush1.bf16.msra.mxu0 0
      %4077 = vmatprep.subr.bf16.mxu0 0
      %4078 = vmatpush1.bf16.msra.mxu0 0
      %4079 = vmatprep.subr.bf16.mxu0 0
      %4080 = vmatpush1.bf16.msra.mxu0 0
      %4081 = vmatprep.subr.bf16.mxu0 0
      %4082 = vmatpush1.bf16.msra.mxu0 0
      %4083 = vmatprep.mubr.bf16.mxu0 0
      %4084 = vmatmul.mubr.bf16.gmra.mrb[0].mxu0 %v3579
      %v4085 = vpop.f32.mrb[0].mxu0
      %v4086 = vadd.f32 0.0, %v4085
      %v4087 = vpop.f32.mrb[0].mxu0
      %v4088 = vpop.f32.mrb[0].mxu0
      %v4089 = vadd.f32 0.0, %v4088
      %v4090 = vpop.f32.mrb[0].mxu0
      %4091 = vmatprep.mubr.bf16.mxu0 0
      %4092 = vmatmul.mubr.bf16.gmra.mrb[0].mxu0 %v3582
      %v4093 = vpop.f32.mrb[0].mxu0
      %v4094 = vadd.f32 0.0, %v4093
      %v4095 = vpop.f32.mrb[0].mxu0
      %v4096 = vpop.f32.mrb[0].mxu0
      %v4097 = vadd.f32 0.0, %v4096
      %v4098 = vpop.f32.mrb[0].mxu0
      %4099 = vmatprep.mubr.bf16.mxu0 0
      %4100 = vmatmul.mubr.bf16.gmra.mrb[0].mxu0 %v3585
      %v4101 = vpop.f32.mrb[0].mxu0
      %v4102 = vadd.f32 0.0, %v4101
      %v4103 = vpop.f32.mrb[0].mxu0
      %v4104 = vpop.f32.mrb[0].mxu0
      %v4105 = vadd.f32 0.0, %v4104
      %v4106 = vpop.f32.mrb[0].mxu0
      %4107 = vmatprep.mubr.bf16.mxu0 0
      %4108 = vmatmul.mubr.bf16.gmra.mrb[0].mxu0 %v3588
      %v4109 = vpop.f32.mrb[0].mxu0
      %v4110 = vadd.f32 0.0, %v4109
      %v4111 = vpop.f32.mrb[0].mxu0
      %v4112 = vpop.f32.mrb[0].mxu0
      %v4113 = vadd.f32 0.0, %v4112
      %v4114 = vpop.f32.mrb[0].mxu0
      %4115 = vmatprep.mubr.bf16.mxu0 0
      %4116 = vmatmul.mubr.bf16.gmra.mrb[0].mxu0 %v3591
      %v4117 = vpop.f32.mrb[0].mxu0
      %v4118 = vadd.f32 0.0, %v4117
      %v4119 = vpop.f32.mrb[0].mxu0
      %v4120 = vpop.f32.mrb[0].mxu0
      %v4121 = vadd.f32 0.0, %v4120
      %v4122 = vpop.f32.mrb[0].mxu0
      %4123 = vmatprep.mubr.bf16.mxu0 0
      %4124 = vmatmul.mubr.bf16.gmra.mrb[0].mxu0 %v3594
      %v4125 = vpop.f32.mrb[0].mxu0
      %v4126 = vadd.f32 0.0, %v4125
      %v4127 = vpop.f32.mrb[0].mxu0
      %v4128 = vpop.f32.mrb[0].mxu0
      %v4129 = vadd.f32 0.0, %v4128
      %v4130 = vpop.f32.mrb[0].mxu0
      %4131 = vmatprep.mubr.bf16.mxu0 0
      %4132 = vmatmul.mubr.bf16.gmra.mrb[0].mxu0 %v3597
      %v4133 = vpop.f32.mrb[0].mxu0
      %v4134 = vadd.f32 0.0, %v4133
      %v4135 = vpop.f32.mrb[0].mxu0
      %v4136 = vpop.f32.mrb[0].mxu0
      %v4137 = vadd.f32 0.0, %v4136
      %v4138 = vpop.f32.mrb[0].mxu0
      %4139 = vmatprep.mubr.bf16.mxu0 0
      %4140 = vmatmul.mubr.bf16.gmra.mrb[0].mxu0 %v3600
      %v4141 = vpop.f32.mrb[0].mxu0
      %v4142 = vadd.f32 0.0, %v4141
      %v4143 = vpop.f32.mrb[0].mxu0
      %v4144 = vpop.f32.mrb[0].mxu0
      %v4145 = vadd.f32 0.0, %v4144
      %v4146 = vpop.f32.mrb[0].mxu0
      %4147 = vmatprep.mubr.bf16.mxu0 0
      %4148 = vmatmul.mubr.bf16.gmra.mrb[0].mxu0 %v3603
      %v4149 = vpop.f32.mrb[0].mxu0
      %v4150 = vadd.f32 0.0, %v4149
      %v4151 = vpop.f32.mrb[0].mxu0
      %v4152 = vpop.f32.mrb[0].mxu0
      %v4153 = vadd.f32 0.0, %v4152
      %v4154 = vpop.f32.mrb[0].mxu0
      %4155 = vmatprep.mubr.bf16.mxu0 0
      %4156 = vmatmul.mubr.bf16.gmra.mrb[0].mxu0 %v3606
      %v4157 = vpop.f32.mrb[0].mxu0
      %v4158 = vadd.f32 0.0, %v4157
      %v4159 = vpop.f32.mrb[0].mxu0
      %v4160 = vpop.f32.mrb[0].mxu0
      %v4161 = vadd.f32 0.0, %v4160
      %v4162 = vpop.f32.mrb[0].mxu0
      %4163 = vmatprep.mubr.bf16.mxu0 0
      %4164 = vmatmul.mubr.bf16.gmra.mrb[0].mxu0 %v3609
      %v4165 = vpop.f32.mrb[0].mxu0
      %v4166 = vadd.f32 0.0, %v4165
      %v4167 = vpop.f32.mrb[0].mxu0
      %v4168 = vpop.f32.mrb[0].mxu0
      %v4169 = vadd.f32 0.0, %v4168
      %v4170 = vpop.f32.mrb[0].mxu0
      %4171 = vmatprep.mubr.bf16.mxu0 0
      %4172 = vmatmul.mubr.bf16.gmra.mrb[0].mxu0 %v3612
      %v4173 = vpop.f32.mrb[0].mxu0
      %v4174 = vadd.f32 0.0, %v4173
      %v4175 = vpop.f32.mrb[0].mxu0
      %v4176 = vpop.f32.mrb[0].mxu0
      %v4177 = vadd.f32 0.0, %v4176
      %v4178 = vpop.f32.mrb[0].mxu0
      %4179 = vmatprep.mubr.bf16.mxu0 0
      %4180 = vmatmul.mubr.bf16.gmra.mrb[0].mxu0 %v3615
      %v4181 = vpop.f32.mrb[0].mxu0
      %v4182 = vadd.f32 0.0, %v4181
      %v4183 = vpop.f32.mrb[0].mxu0
      %v4184 = vpop.f32.mrb[0].mxu0
      %v4185 = vadd.f32 0.0, %v4184
      %v4186 = vpop.f32.mrb[0].mxu0
      %4187 = vmatprep.mubr.bf16.mxu0 0
      %4188 = vmatmul.mubr.bf16.gmra.mrb[0].mxu0 %v3618
      %v4189 = vpop.f32.mrb[0].mxu0
      %v4190 = vadd.f32 0.0, %v4189
      %v4191 = vpop.f32.mrb[0].mxu0
      %v4192 = vpop.f32.mrb[0].mxu0
      %v4193 = vadd.f32 0.0, %v4192
      %v4194 = vpop.f32.mrb[0].mxu0
      %4195 = vmatprep.mubr.bf16.mxu0 0
      %4196 = vmatmul.mubr.bf16.gmra.mrb[0].mxu0 %v3832
      %v4197 = vpop.f32.mrb[0].mxu0
      %v4198 = vadd.f32 0.0, %v4197
      %v4199 = vpop.f32.mrb[0].mxu0
      %v4200 = vpop.f32.mrb[0].mxu0
      %v4201 = vadd.f32 0.0, %v4200
      %v4202 = vpop.f32.mrb[0].mxu0
      %4203 = vmatprep.mubr.bf16.mxu0 0
      %4204 = vmatmul.mubr.bf16.gmra.mrb[0].mxu0 %v4046
      %v4205 = vpop.f32.mrb[0].mxu0
      %v4206 = vadd.f32 0.0, %v4205
      %v4207 = vpop.f32.mrb[0].mxu0
      %v4208 = vpop.f32.mrb[0].mxu0
      %v4209 = vadd.f32 0.0, %v4208
      %v4210 = vpop.f32.mrb[0].mxu0
      %4211 = vdwg.mxu0
      %v4212 = vadd.f32 %v3998, %v4086
      %v4213 = vadd.f32 %v3999, %v4089
      %v4214 = vadd.f32 %v4000, %v4094
      %v4215 = vadd.f32 %v4001, %v4097
      %v4216 = vadd.f32 %v4002, %v4102
      %v4217 = vadd.f32 %v4003, %v4105
      %v4218 = vadd.f32 %v4004, %v4110
      %v4219 = vadd.f32 %v4005, %v4113
      %v4220 = vadd.f32 %v4006, %v4118
      %v4221 = vadd.f32 %v4007, %v4121
      %v4222 = vadd.f32 %v4008, %v4126
      %v4223 = vadd.f32 %v4009, %v4129
      %v4224 = vadd.f32 %v4010, %v4134
      %v4225 = vadd.f32 %v4011, %v4137
      %v4226 = vadd.f32 %v4012, %v4142
      %v4227 = vadd.f32 %v4013, %v4145
      %v4228 = vadd.f32 %v4014, %v4150
      %v4229 = vadd.f32 %v4015, %v4153
      %v4230 = vadd.f32 %v4016, %v4158
      %v4231 = vadd.f32 %v4017, %v4161
      %v4232 = vadd.f32 %v4018, %v4166
      %v4233 = vadd.f32 %v4019, %v4169
      %v4234 = vadd.f32 %v4020, %v4174
      %v4235 = vadd.f32 %v4021, %v4177
      %v4236 = vadd.f32 %v4022, %v4182
      %v4237 = vadd.f32 %v4023, %v4185
      %v4238 = vadd.f32 %v4024, %v4190
      %v4239 = vadd.f32 %v4025, %v4193
      %v4240 = vadd.f32 %v4026, %v4198
      %v4241 = vadd.f32 %v4027, %v4201
      %v4242 = vadd.f32 %v4028, %v4206
      %v4243 = vadd.f32 %v4029, %v4209
      %v4244 = vld [vmem:[%s3] sm:$0x1]
      %v4246 = vlaneseq
      %v4247 = vshrl.u32 %v4246, 7
      %v4248 = vsub.s32 0, %v4247
      %v4249 = vrot.slane %v4244, %v4248
      %v4251 = vadd.f32 %v4212, %v4249
      %v4252 = vadd.f32 %v4213, %v4249
      %v4253 = vadd.f32 %v4214, %v4249
      %v4254 = vadd.f32 %v4215, %v4249
      %v4255 = vadd.f32 %v4216, %v4249
      %v4256 = vadd.f32 %v4217, %v4249
      %v4257 = vadd.f32 %v4218, %v4249
      %v4258 = vadd.f32 %v4219, %v4249
      %v4259 = vadd.f32 %v4220, %v4249
      %v4260 = vadd.f32 %v4221, %v4249
      %v4261 = vadd.f32 %v4222, %v4249
      %v4262 = vadd.f32 %v4223, %v4249
      %v4263 = vadd.f32 %v4224, %v4249
      %v4264 = vadd.f32 %v4225, %v4249
      %v4265 = vadd.f32 %v4226, %v4249
      %v4266 = vadd.f32 %v4227, %v4249
      %v4267 = vadd.f32 %v4228, %v4249
      %v4268 = vadd.f32 %v4229, %v4249
      %v4269 = vadd.f32 %v4230, %v4249
      %v4270 = vadd.f32 %v4231, %v4249
      %v4271 = vadd.f32 %v4232, %v4249
      %v4272 = vadd.f32 %v4233, %v4249
      %v4273 = vadd.f32 %v4234, %v4249
      %v4274 = vadd.f32 %v4235, %v4249
      %v4275 = vadd.f32 %v4236, %v4249
      %v4276 = vadd.f32 %v4237, %v4249
      %v4277 = vadd.f32 %v4238, %v4249
      %v4278 = vadd.f32 %v4239, %v4249
      %v4279 = vadd.f32 %v4240, %v4249
      %v4280 = vadd.f32 %v4241, %v4249
      %v4281 = vadd.f32 %v4242, %v4249
      %v4282 = vadd.f32 %v4243, %v4249
      %v4283 = vmax.f32 %v4251, 0.0
      %v4284 = vmax.f32 %v4252, 0.0
      %v4285 = vmax.f32 %v4253, 0.0
      %v4286 = vmax.f32 %v4254, 0.0
      %v4287 = vmax.f32 %v4255, 0.0
      %v4288 = vmax.f32 %v4256, 0.0
      %v4289 = vmax.f32 %v4257, 0.0
      %v4290 = vmax.f32 %v4258, 0.0
      %v4291 = vmax.f32 %v4259, 0.0
      %v4292 = vmax.f32 %v4260, 0.0
      %v4293 = vmax.f32 %v4261, 0.0
      %v4294 = vmax.f32 %v4262, 0.0
      %v4295 = vmax.f32 %v4263, 0.0
      %v4296 = vmax.f32 %v4264, 0.0
      %v4297 = vmax.f32 %v4265, 0.0
      %v4298 = vmax.f32 %v4266, 0.0
      %v4299 = vmax.f32 %v4267, 0.0
      %v4300 = vmax.f32 %v4268, 0.0
      %v4301 = vmax.f32 %v4269, 0.0
      %v4302 = vmax.f32 %v4270, 0.0
      %v4303 = vmax.f32 %v4271, 0.0
      %v4304 = vmax.f32 %v4272, 0.0
      %v4305 = vmax.f32 %v4273, 0.0
      %v4306 = vmax.f32 %v4274, 0.0
      %v4307 = vmax.f32 %v4275, 0.0
      %v4308 = vmax.f32 %v4276, 0.0
      %v4309 = vmax.f32 %v4277, 0.0
      %v4310 = vmax.f32 %v4278, 0.0
      %v4311 = vmax.f32 %v4279, 0.0
      %v4312 = vmax.f32 %v4280, 0.0
      %v4313 = vmax.f32 %v4281, 0.0
      %v4314 = vmax.f32 %v4282, 0.0
      %v4315 = vpack.c.bf16 %v4284, %v4283
      %v4316 = vpack.c.bf16 %v4286, %v4285
      %v4317 = vpack.c.bf16 %v4288, %v4287
      %v4318 = vpack.c.bf16 %v4290, %v4289
      %v4319 = vpack.c.bf16 %v4292, %v4291
      %v4320 = vpack.c.bf16 %v4294, %v4293
      %v4321 = vpack.c.bf16 %v4296, %v4295
      %v4322 = vpack.c.bf16 %v4298, %v4297
      %v4323 = vpack.c.bf16 %v4300, %v4299
      %v4324 = vpack.c.bf16 %v4302, %v4301
      %v4325 = vpack.c.bf16 %v4304, %v4303
      %v4326 = vpack.c.bf16 %v4306, %v4305
      %v4327 = vpack.c.bf16 %v4308, %v4307
      %v4328 = vpack.c.bf16 %v4310, %v4309
      %v4329 = vpack.c.bf16 %v4312, %v4311
      %v4330 = vpack.c.bf16 %v4314, %v4313
      %s4331 = scalar_lea.vmem [#allocation3], 24
      %4332 = vst [vmem:[%s4331 + $0x8] sm:$0xff] %v4315
      %4333 = vst [vmem:[%s4331 + $0x20] sm:$0xff] %v4316
      %4334 = vst [vmem:[%s4331 + $0x38] sm:$0xff] %v4317
      %4335 = vst [vmem:[%s4331 + $0x50] sm:$0xff] %v4318
      %4336 = vst [vmem:[%s4331 + $0x68] sm:$0xff] %v4319
      %4337 = vst [vmem:[%s4331 + $0x80] sm:$0xff] %v4320
      %4338 = vst [vmem:[%s4331 + $0x98] sm:$0xff] %v4321
      %4339 = vst [vmem:[%s4331 + $0xb0] sm:$0xff] %v4322
      %4340 = vst [vmem:[%s4331 + $0xc8] sm:$0xff] %v4323
      %4341 = vst [vmem:[%s4331 + $0xe0] sm:$0xff] %v4324
      %4342 = vst [vmem:[%s4331 + $0xf8] sm:$0xff] %v4325
      %4343 = vst [vmem:[%s4331 + $0x110] sm:$0xff] %v4326
      %4344 = vst [vmem:[%s4331 + $0x128] sm:$0xff] %v4327
      %4345 = vst [vmem:[%s4331 + $0x140] sm:$0xff] %v4328
      %4346 = vst [vmem:[%s4331 + $0x158] sm:$0xff] %v4329
      %4347 = vst [vmem:[%s4331 + $0x170] sm:$0xff] %v4330
      %vm4348 = vcmask 1040384
      %vm4349 = vmand %vm4348, %vm283
      %v4350 = vld [vmem:[%s4331] sm:$0x1]
      %v4351 = vsel %vm4349, 0, %v4350
      %4352 = vst [vmem:[%s4331] sm:$0x1] %v4351
      %v4353 = vld [vmem:[%s4331 + $0x18] sm:$0x1]
      %v4354 = vsel %vm4349, 0, %v4353
      %4355 = vst [vmem:[%s4331 + $0x18] sm:$0x1] %v4354
      %v4356 = vld [vmem:[%s4331 + $0x30] sm:$0x1]
      %v4357 = vsel %vm4349, 0, %v4356
      %4358 = vst [vmem:[%s4331 + $0x30] sm:$0x1] %v4357
      %v4359 = vld [vmem:[%s4331 + $0x48] sm:$0x1]
      %v4360 = vsel %vm4349, 0, %v4359
      %4361 = vst [vmem:[%s4331 + $0x48] sm:$0x1] %v4360
      %v4362 = vld [vmem:[%s4331 + $0x60] sm:$0x1]
      %v4363 = vsel %vm4349, 0, %v4362
      %4364 = vst [vmem:[%s4331 + $0x60] sm:$0x1] %v4363
      %v4365 = vld [vmem:[%s4331 + $0x78] sm:$0x1]
      %v4366 = vsel %vm4349, 0, %v4365
      %4367 = vst [vmem:[%s4331 + $0x78] sm:$0x1] %v4366
      %v4368 = vld [vmem:[%s4331 + $0x90] sm:$0x1]
      %v4369 = vsel %vm4349, 0, %v4368
      %4370 = vst [vmem:[%s4331 + $0x90] sm:$0x1] %v4369
      %v4371 = vld [vmem:[%s4331 + $0xa8] sm:$0x1]
      %v4372 = vsel %vm4349, 0, %v4371
      %4373 = vst [vmem:[%s4331 + $0xa8] sm:$0x1] %v4372
      %v4374 = vld [vmem:[%s4331 + $0xc0] sm:$0x1]
      %v4375 = vsel %vm4349, 0, %v4374
      %4376 = vst [vmem:[%s4331 + $0xc0] sm:$0x1] %v4375
      %v4377 = vld [vmem:[%s4331 + $0xd8] sm:$0x1]
      %v4378 = vsel %vm4349, 0, %v4377
      %4379 = vst [vmem:[%s4331 + $0xd8] sm:$0x1] %v4378
      %v4380 = vld [vmem:[%s4331 + $0xf0] sm:$0x1]
      %v4381 = vsel %vm4349, 0, %v4380
      %4382 = vst [vmem:[%s4331 + $0xf0] sm:$0x1] %v4381
      %v4383 = vld [vmem:[%s4331 + $0x108] sm:$0x1]
      %v4384 = vsel %vm4349, 0, %v4383
      %4385 = vst [vmem:[%s4331 + $0x108] sm:$0x1] %v4384
      %v4386 = vld [vmem:[%s4331 + $0x120] sm:$0x1]
      %v4387 = vsel %vm4349, 0, %v4386
      %4388 = vst [vmem:[%s4331 + $0x120] sm:$0x1] %v4387
      %v4389 = vld [vmem:[%s4331 + $0x138] sm:$0x1]
      %v4390 = vsel %vm4349, 0, %v4389
      %4391 = vst [vmem:[%s4331 + $0x138] sm:$0x1] %v4390
      %v4392 = vld [vmem:[%s4331 + $0x150] sm:$0x1]
      %v4393 = vsel %vm4349, 0, %v4392
      %4394 = vst [vmem:[%s4331 + $0x150] sm:$0x1] %v4393
      %v4395 = vld [vmem:[%s4331 + $0x168] sm:$0x1]
      %v4396 = vsel %vm4349, 0, %v4395
      %4397 = vst [vmem:[%s4331 + $0x168] sm:$0x1] %v4396
      %v4399 = vshrl.u32 %v4315, 16
      %v4401 = vrot.slane %v4399, 7
      %v4402 = vshll.u32 %v4315, 16
      %v4404 = vor.u32 %v4401, %v4402
      %v4406 = vshrl.u32 %v4316, 16
      %v4408 = vrot.slane %v4406, 7
      %v4409 = vshll.u32 %v4316, 16
      %v4411 = vor.u32 %v4408, %v4409
      %v4413 = vshrl.u32 %v4317, 16
      %v4415 = vrot.slane %v4413, 7
      %v4416 = vshll.u32 %v4317, 16
      %v4418 = vor.u32 %v4415, %v4416
      %v4420 = vshrl.u32 %v4318, 16
      %v4422 = vrot.slane %v4420, 7
      %v4423 = vshll.u32 %v4318, 16
      %v4425 = vor.u32 %v4422, %v4423
      %v4427 = vshrl.u32 %v4319, 16
      %v4429 = vrot.slane %v4427, 7
      %v4430 = vshll.u32 %v4319, 16
      %v4432 = vor.u32 %v4429, %v4430
      %v4434 = vshrl.u32 %v4320, 16
      %v4436 = vrot.slane %v4434, 7
      %v4437 = vshll.u32 %v4320, 16
      %v4439 = vor.u32 %v4436, %v4437
      %v4441 = vshrl.u32 %v4321, 16
      %v4443 = vrot.slane %v4441, 7
      %v4444 = vshll.u32 %v4321, 16
      %v4446 = vor.u32 %v4443, %v4444
      %v4448 = vshrl.u32 %v4322, 16
      %v4450 = vrot.slane %v4448, 7
      %v4451 = vshll.u32 %v4322, 16
      %v4453 = vor.u32 %v4450, %v4451
      %v4455 = vshrl.u32 %v4323, 16
      %v4457 = vrot.slane %v4455, 7
      %v4458 = vshll.u32 %v4323, 16
      %v4460 = vor.u32 %v4457, %v4458
      %v4462 = vshrl.u32 %v4324, 16
      %v4464 = vrot.slane %v4462, 7
      %v4465 = vshll.u32 %v4324, 16
      %v4467 = vor.u32 %v4464, %v4465
      %v4469 = vshrl.u32 %v4325, 16
      %v4471 = vrot.slane %v4469, 7
      %v4472 = vshll.u32 %v4325, 16
      %v4474 = vor.u32 %v4471, %v4472
      %v4476 = vshrl.u32 %v4326, 16
      %v4478 = vrot.slane %v4476, 7
      %v4479 = vshll.u32 %v4326, 16
      %v4481 = vor.u32 %v4478, %v4479
      %v4483 = vshrl.u32 %v4327, 16
      %v4485 = vrot.slane %v4483, 7
      %v4486 = vshll.u32 %v4327, 16
      %v4488 = vor.u32 %v4485, %v4486
      %v4490 = vshrl.u32 %v4328, 16
      %v4492 = vrot.slane %v4490, 7
      %v4493 = vshll.u32 %v4328, 16
      %v4495 = vor.u32 %v4492, %v4493
      %v4497 = vshrl.u32 %v4329, 16
      %v4499 = vrot.slane %v4497, 7
      %v4500 = vshll.u32 %v4329, 16
      %v4502 = vor.u32 %v4499, %v4500
      %v4504 = vshrl.u32 %v4330, 16
      %v4506 = vrot.slane %v4504, 7
      %v4507 = vshll.u32 %v4330, 16
      %v4509 = vor.u32 %v4506, %v4507
      %vm4526 = vcmask 1047552
      %vm4527 = vmand %vm4526, %vm339
      %v4528 = vld [vmem:[%s4331] sm:$0xff]
      %v4529 = vsel %vm4527, %v4404, %v4528
      %4530 = vst [vmem:[%s4331] sm:$0xff] %v4529
      %v4531 = vld [vmem:[%s4331 + $0x18] sm:$0xff]
      %v4532 = vsel %vm4527, %v4411, %v4531
      %4533 = vst [vmem:[%s4331 + $0x18] sm:$0xff] %v4532
      %v4534 = vld [vmem:[%s4331 + $0x30] sm:$0xff]
      %v4535 = vsel %vm4527, %v4418, %v4534
      %4536 = vst [vmem:[%s4331 + $0x30] sm:$0xff] %v4535
      %v4537 = vld [vmem:[%s4331 + $0x48] sm:$0xff]
      %v4538 = vsel %vm4527, %v4425, %v4537
      %4539 = vst [vmem:[%s4331 + $0x48] sm:$0xff] %v4538
      %v4540 = vld [vmem:[%s4331 + $0x60] sm:$0xff]
      %v4541 = vsel %vm4527, %v4432, %v4540
      %4542 = vst [vmem:[%s4331 + $0x60] sm:$0xff] %v4541
      %v4543 = vld [vmem:[%s4331 + $0x78] sm:$0xff]
      %v4544 = vsel %vm4527, %v4439, %v4543
      %4545 = vst [vmem:[%s4331 + $0x78] sm:$0xff] %v4544
      %v4546 = vld [vmem:[%s4331 + $0x90] sm:$0xff]
      %v4547 = vsel %vm4527, %v4446, %v4546
      %4548 = vst [vmem:[%s4331 + $0x90] sm:$0xff] %v4547
      %v4549 = vld [vmem:[%s4331 + $0xa8] sm:$0xff]
      %v4550 = vsel %vm4527, %v4453, %v4549
      %4551 = vst [vmem:[%s4331 + $0xa8] sm:$0xff] %v4550
      %v4552 = vld [vmem:[%s4331 + $0xc0] sm:$0xff]
      %v4553 = vsel %vm4527, %v4460, %v4552
      %4554 = vst [vmem:[%s4331 + $0xc0] sm:$0xff] %v4553
      %v4555 = vld [vmem:[%s4331 + $0xd8] sm:$0xff]
      %v4556 = vsel %vm4527, %v4467, %v4555
      %4557 = vst [vmem:[%s4331 + $0xd8] sm:$0xff] %v4556
      %v4558 = vld [vmem:[%s4331 + $0xf0] sm:$0xff]
      %v4559 = vsel %vm4527, %v4474, %v4558
      %4560 = vst [vmem:[%s4331 + $0xf0] sm:$0xff] %v4559
      %v4561 = vld [vmem:[%s4331 + $0x108] sm:$0xff]
      %v4562 = vsel %vm4527, %v4481, %v4561
      %4563 = vst [vmem:[%s4331 + $0x108] sm:$0xff] %v4562
      %v4564 = vld [vmem:[%s4331 + $0x120] sm:$0xff]
      %v4565 = vsel %vm4527, %v4488, %v4564
      %4566 = vst [vmem:[%s4331 + $0x120] sm:$0xff] %v4565
      %v4567 = vld [vmem:[%s4331 + $0x138] sm:$0xff]
      %v4568 = vsel %vm4527, %v4495, %v4567
      %4569 = vst [vmem:[%s4331 + $0x138] sm:$0xff] %v4568
      %v4570 = vld [vmem:[%s4331 + $0x150] sm:$0xff]
      %v4571 = vsel %vm4527, %v4502, %v4570
      %4572 = vst [vmem:[%s4331 + $0x150] sm:$0xff] %v4571
      %v4573 = vld [vmem:[%s4331 + $0x168] sm:$0xff]
      %v4574 = vsel %vm4527, %v4509, %v4573
      %4575 = vst [vmem:[%s4331 + $0x168] sm:$0xff] %v4574
      %v4576 = vrot.slane %v4402, 1
      %v4577 = vor.u32 %v4399, %v4576
      %v4578 = vrot.slane %v4409, 1
      %v4579 = vor.u32 %v4406, %v4578
      %v4580 = vrot.slane %v4416, 1
      %v4581 = vor.u32 %v4413, %v4580
      %v4582 = vrot.slane %v4423, 1
      %v4583 = vor.u32 %v4420, %v4582
      %v4584 = vrot.slane %v4430, 1
      %v4585 = vor.u32 %v4427, %v4584
      %v4586 = vrot.slane %v4437, 1
      %v4587 = vor.u32 %v4434, %v4586
      %v4588 = vrot.slane %v4444, 1
      %v4589 = vor.u32 %v4441, %v4588
      %v4590 = vrot.slane %v4451, 1
      %v4591 = vor.u32 %v4448, %v4590
      %v4592 = vrot.slane %v4458, 1
      %v4593 = vor.u32 %v4455, %v4592
      %v4594 = vrot.slane %v4465, 1
      %v4595 = vor.u32 %v4462, %v4594
      %v4596 = vrot.slane %v4472, 1
      %v4597 = vor.u32 %v4469, %v4596
      %v4598 = vrot.slane %v4479, 1
      %v4599 = vor.u32 %v4476, %v4598
      %v4600 = vrot.slane %v4486, 1
      %v4601 = vor.u32 %v4483, %v4600
      %v4602 = vrot.slane %v4493, 1
      %v4603 = vor.u32 %v4490, %v4602
      %v4604 = vrot.slane %v4500, 1
      %v4605 = vor.u32 %v4497, %v4604
      %v4606 = vrot.slane %v4507, 1
      %v4607 = vor.u32 %v4504, %v4606
      %vm4624 = vsmask.f32 7424
      %vm4625 = vmand %vm4526, %vm4624
      %v4626 = vld [vmem:[%s4331 + $0x10] sm:$0xff]
      %v4627 = vsel %vm4625, %v4577, %v4626
      %4628 = vst [vmem:[%s4331 + $0x10] sm:$0xff] %v4627
      %v4629 = vld [vmem:[%s4331 + $0x28] sm:$0xff]
      %v4630 = vsel %vm4625, %v4579, %v4629
      %4631 = vst [vmem:[%s4331 + $0x28] sm:$0xff] %v4630
      %v4632 = vld [vmem:[%s4331 + $0x40] sm:$0xff]
      %v4633 = vsel %vm4625, %v4581, %v4632
      %4634 = vst [vmem:[%s4331 + $0x40] sm:$0xff] %v4633
      %v4635 = vld [vmem:[%s4331 + $0x58] sm:$0xff]
      %v4636 = vsel %vm4625, %v4583, %v4635
      %4637 = vst [vmem:[%s4331 + $0x58] sm:$0xff] %v4636
      %v4638 = vld [vmem:[%s4331 + $0x70] sm:$0xff]
      %v4639 = vsel %vm4625, %v4585, %v4638
      %4640 = vst [vmem:[%s4331 + $0x70] sm:$0xff] %v4639
      %v4641 = vld [vmem:[%s4331 + $0x88] sm:$0xff]
      %v4642 = vsel %vm4625, %v4587, %v4641
      %4643 = vst [vmem:[%s4331 + $0x88] sm:$0xff] %v4642
      %v4644 = vld [vmem:[%s4331 + $0xa0] sm:$0xff]
      %v4645 = vsel %vm4625, %v4589, %v4644
      %4646 = vst [vmem:[%s4331 + $0xa0] sm:$0xff] %v4645
      %v4647 = vld [vmem:[%s4331 + $0xb8] sm:$0xff]
      %v4648 = vsel %vm4625, %v4591, %v4647
      %4649 = vst [vmem:[%s4331 + $0xb8] sm:$0xff] %v4648
      %v4650 = vld [vmem:[%s4331 + $0xd0] sm:$0xff]
      %v4651 = vsel %vm4625, %v4593, %v4650
      %4652 = vst [vmem:[%s4331 + $0xd0] sm:$0xff] %v4651
      %v4653 = vld [vmem:[%s4331 + $0xe8] sm:$0xff]
      %v4654 = vsel %vm4625, %v4595, %v4653
      %4655 = vst [vmem:[%s4331 + $0xe8] sm:$0xff] %v4654
      %v4656 = vld [vmem:[%s4331 + $0x100] sm:$0xff]
      %v4657 = vsel %vm4625, %v4597, %v4656
      %4658 = vst [vmem:[%s4331 + $0x100] sm:$0xff] %v4657
      %v4659 = vld [vmem:[%s4331 + $0x118] sm:$0xff]
      %v4660 = vsel %vm4625, %v4599, %v4659
      %4661 = vst [vmem:[%s4331 + $0x118] sm:$0xff] %v4660
      %v4662 = vld [vmem:[%s4331 + $0x130] sm:$0xff]
      %v4663 = vsel %vm4625, %v4601, %v4662
      %4664 = vst [vmem:[%s4331 + $0x130] sm:$0xff] %v4663
      %v4665 = vld [vmem:[%s4331 + $0x148] sm:$0xff]
      %v4666 = vsel %vm4625, %v4603, %v4665
      %4667 = vst [vmem:[%s4331 + $0x148] sm:$0xff] %v4666
      %v4668 = vld [vmem:[%s4331 + $0x160] sm:$0xff]
      %v4669 = vsel %vm4625, %v4605, %v4668
      %4670 = vst [vmem:[%s4331 + $0x160] sm:$0xff] %v4669
      %v4671 = vld [vmem:[%s4331 + $0x178] sm:$0xff]
      %v4672 = vsel %vm4625, %v4607, %v4671
      %4673 = vst [vmem:[%s4331 + $0x178] sm:$0xff] %v4672
      %vm4674 = vcmask 1047559
      %vm4675 = vsmask.f32 7966
      %vm4676 = vmand %vm4674, %vm4675
      %v4677 = vld [vmem:[%s4331 + $0x10] sm:$0x80]
      %v4678 = vsel %vm4676, 0, %v4677
      %4679 = vst [vmem:[%s4331 + $0x10] sm:$0x80] %v4678
      %v4680 = vld [vmem:[%s4331 + $0x28] sm:$0x80]
      %v4681 = vsel %vm4676, 0, %v4680
      %4682 = vst [vmem:[%s4331 + $0x28] sm:$0x80] %v4681
      %v4683 = vld [vmem:[%s4331 + $0x40] sm:$0x80]
      %v4684 = vsel %vm4676, 0, %v4683
      %4685 = vst [vmem:[%s4331 + $0x40] sm:$0x80] %v4684
      %v4686 = vld [vmem:[%s4331 + $0x58] sm:$0x80]
      %v4687 = vsel %vm4676, 0, %v4686
      %4688 = vst [vmem:[%s4331 + $0x58] sm:$0x80] %v4687
      %v4689 = vld [vmem:[%s4331 + $0x70] sm:$0x80]
      %v4690 = vsel %vm4676, 0, %v4689
      %4691 = vst [vmem:[%s4331 + $0x70] sm:$0x80] %v4690
      %v4692 = vld [vmem:[%s4331 + $0x88] sm:$0x80]
      %v4693 = vsel %vm4676, 0, %v4692
      %4694 = vst [vmem:[%s4331 + $0x88] sm:$0x80] %v4693
      %v4695 = vld [vmem:[%s4331 + $0xa0] sm:$0x80]
      %v4696 = vsel %vm4676, 0, %v4695
      %4697 = vst [vmem:[%s4331 + $0xa0] sm:$0x80] %v4696
      %v4698 = vld [vmem:[%s4331 + $0xb8] sm:$0x80]
      %v4699 = vsel %vm4676, 0, %v4698
      %4700 = vst [vmem:[%s4331 + $0xb8] sm:$0x80] %v4699
      %v4701 = vld [vmem:[%s4331 + $0xd0] sm:$0x80]
      %v4702 = vsel %vm4676, 0, %v4701
      %4703 = vst [vmem:[%s4331 + $0xd0] sm:$0x80] %v4702
      %v4704 = vld [vmem:[%s4331 + $0xe8] sm:$0x80]
      %v4705 = vsel %vm4676, 0, %v4704
      %4706 = vst [vmem:[%s4331 + $0xe8] sm:$0x80] %v4705
      %v4707 = vld [vmem:[%s4331 + $0x100] sm:$0x80]
      %v4708 = vsel %vm4676, 0, %v4707
      %4709 = vst [vmem:[%s4331 + $0x100] sm:$0x80] %v4708
      %v4710 = vld [vmem:[%s4331 + $0x118] sm:$0x80]
      %v4711 = vsel %vm4676, 0, %v4710
      %4712 = vst [vmem:[%s4331 + $0x118] sm:$0x80] %v4711
      %v4713 = vld [vmem:[%s4331 + $0x130] sm:$0x80]
      %v4714 = vsel %vm4676, 0, %v4713
      %4715 = vst [vmem:[%s4331 + $0x130] sm:$0x80] %v4714
      %v4716 = vld [vmem:[%s4331 + $0x148] sm:$0x80]
      %v4717 = vsel %vm4676, 0, %v4716
      %4718 = vst [vmem:[%s4331 + $0x148] sm:$0x80] %v4717
      %v4719 = vld [vmem:[%s4331 + $0x160] sm:$0x80]
      %v4720 = vsel %vm4676, 0, %v4719
      %4721 = vst [vmem:[%s4331 + $0x160] sm:$0x80] %v4720
      %v4722 = vld [vmem:[%s4331 + $0x178] sm:$0x80]
      %v4723 = vsel %vm4676, 0, %v4722
      %4724 = vst [vmem:[%s4331 + $0x178] sm:$0x80] %v4723
      %v4725 = vld [vmem:[#allocation3] sm:$0xff]
      %v4726 = vld [vmem:[#allocation3 + $0x8] sm:$0xff]
      %v4727 = vld [vmem:[#allocation3 + $0x10] sm:$0xff]
      %v4728 = vld [vmem:[#allocation3 + $0x18] sm:$0xff]
      %v4729 = vld [vmem:[#allocation3 + $0x20] sm:$0xff]
      %v4730 = vld [vmem:[#allocation3 + $0x28] sm:$0xff]
      %v4731 = vld [vmem:[#allocation3 + $0x30] sm:$0xff]
      %v4732 = vld [vmem:[#allocation3 + $0x38] sm:$0xff]
      %v4733 = vld [vmem:[#allocation3 + $0x40] sm:$0xff]
      %v4734 = vld [vmem:[#allocation3 + $0x48] sm:$0xff]
      %v4735 = vld [vmem:[#allocation3 + $0x50] sm:$0xff]
      %v4736 = vld [vmem:[#allocation3 + $0x58] sm:$0xff]
      %v4737 = vld [vmem:[#allocation3 + $0x60] sm:$0xff]
      %v4738 = vld [vmem:[#allocation3 + $0x68] sm:$0xff]
      %v4739 = vld [vmem:[#allocation3 + $0x70] sm:$0xff]
      %v4740 = vld [vmem:[#allocation3 + $0x78] sm:$0xff]
      %v4741 = vld [vmem:[#allocation3 + $0x80] sm:$0xff]
      %v4742 = vld [vmem:[#allocation3 + $0x88] sm:$0xff]
      %v4743 = vld [vmem:[#allocation3 + $0x90] sm:$0xff]
      %v4744 = vld [vmem:[#allocation3 + $0x98] sm:$0xff]
      %v4745 = vld [vmem:[#allocation3 + $0xa0] sm:$0xff]
      %v4746 = vld [vmem:[#allocation3 + $0xa8] sm:$0xff]
      %v4747 = vld [vmem:[#allocation3 + $0xb0] sm:$0xff]
      %v4748 = vld [vmem:[#allocation3 + $0xb8] sm:$0xff]
      %v4749 = vld [vmem:[#allocation3 + $0xc0] sm:$0xff]
      %v4750 = vld [vmem:[#allocation3 + $0xc8] sm:$0xff]
      %v4751 = vld [vmem:[#allocation3 + $0xd0] sm:$0xff]
      %v4752 = vld [vmem:[#allocation3 + $0xd8] sm:$0xff]
      %v4753 = vld [vmem:[#allocation3 + $0xe0] sm:$0xff]
      %v4754 = vld [vmem:[#allocation3 + $0xe8] sm:$0xff]
      %v4755 = vld [vmem:[#allocation3 + $0xf0] sm:$0xff]
      %v4756 = vld [vmem:[#allocation3 + $0xf8] sm:$0xff]
      %v4757 = vld [vmem:[#allocation3 + $0x100] sm:$0xff]
      %v4758 = vld [vmem:[#allocation3 + $0x108] sm:$0xff]
      %v4759 = vld [vmem:[#allocation3 + $0x110] sm:$0xff]
      %v4760 = vld [vmem:[#allocation3 + $0x118] sm:$0xff]
      %v4761 = vld [vmem:[#allocation3 + $0x120] sm:$0xff]
      %v4762 = vld [vmem:[#allocation3 + $0x128] sm:$0xff]
      %v4763 = vld [vmem:[#allocation3 + $0x130] sm:$0xff]
      %v4764 = vld [vmem:[#allocation3 + $0x138] sm:$0xff]
      %v4765 = vld [vmem:[#allocation3 + $0x140] sm:$0xff]
      %v4766 = vld [vmem:[#allocation3 + $0x148] sm:$0xff]
      %v4767 = vld [vmem:[#allocation3 + $0x150] sm:$0xff]
      %v4768 = vld [vmem:[#allocation3 + $0x158] sm:$0xff]
      %v4769 = vld [vmem:[#allocation3 + $0x160] sm:$0xff]
      %v4770 = vld [vmem:[#allocation3 + $0x168] sm:$0xff]
      %v4771 = vld [vmem:[#allocation3 + $0x170] sm:$0xff]
      %v4772 = vld [vmem:[#allocation3 + $0x178] sm:$0xff]
      %v4773 = vld [vmem:[%s4] sm:$0xf]
      %v4774 = vld [vmem:[%s4 + $0x4] sm:$0xf]
      %v4775 = vld [vmem:[%s4 + $0x8] sm:$0xf]
      %v4776 = vld [vmem:[%s4 + $0xc] sm:$0xf]
      %v4777 = vld [vmem:[%s4 + $0x10] sm:$0xf]
      %v4778 = vld [vmem:[%s4 + $0x14] sm:$0xf]
      %v4779 = vld [vmem:[%s4 + $0x18] sm:$0xf]
      %v4780 = vld [vmem:[%s4 + $0x1c] sm:$0xf]
      %v4781 = vld [vmem:[%s4 + $0x20] sm:$0xf]
      %v4782 = vld [vmem:[%s4 + $0x24] sm:$0xf]
      %v4783 = vld [vmem:[%s4 + $0x28] sm:$0xf]
      %v4784 = vld [vmem:[%s4 + $0x2c] sm:$0xf]
      %v4785 = vld [vmem:[%s4 + $0x30] sm:$0xf]
      %v4786 = vld [vmem:[%s4 + $0x34] sm:$0xf]
      %v4787 = vld [vmem:[%s4 + $0x38] sm:$0xf]
      %v4788 = vld [vmem:[%s4 + $0x3c] sm:$0xf]
      %v4789 = vld [vmem:[%s4 + $0x40] sm:$0xf]
      %v4790 = vld [vmem:[%s4 + $0x44] sm:$0xf]
      %v4791 = vld [vmem:[%s4 + $0x48] sm:$0xf]
      %v4792 = vld [vmem:[%s4 + $0x4c] sm:$0xf]
      %v4793 = vld [vmem:[%s4 + $0x50] sm:$0xf]
      %v4794 = vld [vmem:[%s4 + $0x54] sm:$0xf]
      %v4795 = vld [vmem:[%s4 + $0x58] sm:$0xf]
      %v4796 = vld [vmem:[%s4 + $0x5c] sm:$0xf]
      %v4797 = vld [vmem:[%s4 + $0x60] sm:$0xf]
      %v4798 = vld [vmem:[%s4 + $0x64] sm:$0xf]
      %v4799 = vld [vmem:[%s4 + $0x68] sm:$0xf]
      %v4800 = vld [vmem:[%s4 + $0x6c] sm:$0xf]
      %v4801 = vld [vmem:[%s4 + $0x70] sm:$0xf]
      %v4802 = vld [vmem:[%s4 + $0x74] sm:$0xf]
      %v4803 = vld [vmem:[%s4 + $0x78] sm:$0xf]
      %v4804 = vld [vmem:[%s4 + $0x7c] sm:$0xf]
      %v4805 = vld [vmem:[%s4 + $0x80] sm:$0xf]
      %v4806 = vld [vmem:[%s4 + $0x84] sm:$0xf]
      %v4807 = vld [vmem:[%s4 + $0x88] sm:$0xf]
      %v4808 = vld [vmem:[%s4 + $0x8c] sm:$0xf]
      %v4809 = vld [vmem:[%s4 + $0x90] sm:$0xf]
      %v4810 = vld [vmem:[%s4 + $0x94] sm:$0xf]
      %v4811 = vld [vmem:[%s4 + $0x98] sm:$0xf]
      %v4812 = vld [vmem:[%s4 + $0x9c] sm:$0xf]
      %v4813 = vld [vmem:[%s4 + $0xa0] sm:$0xf]
      %v4814 = vld [vmem:[%s4 + $0xa4] sm:$0xf]
      %v4815 = vld [vmem:[%s4 + $0xa8] sm:$0xf]
      %v4816 = vld [vmem:[%s4 + $0xac] sm:$0xf]
      %v4817 = vld [vmem:[%s4 + $0xb0] sm:$0xf]
      %v4818 = vld [vmem:[%s4 + $0xb4] sm:$0xf]
      %v4819 = vld [vmem:[%s4 + $0xb8] sm:$0xf]
      %v4820 = vld [vmem:[%s4 + $0xbc] sm:$0xf]
      %v4821 = vld [vmem:[%s4331] sm:$0xff]
      %v4822 = vld [vmem:[%s4331 + $0x8] sm:$0xff]
      %v4823 = vld [vmem:[%s4331 + $0x10] sm:$0xff]
      %v4824 = vld [vmem:[%s4331 + $0x18] sm:$0xff]
      %v4825 = vld [vmem:[%s4331 + $0x20] sm:$0xff]
      %v4826 = vld [vmem:[%s4331 + $0x28] sm:$0xff]
      %v4827 = vld [vmem:[%s4331 + $0x30] sm:$0xff]
      %v4828 = vld [vmem:[%s4331 + $0x38] sm:$0xff]
      %v4829 = vld [vmem:[%s4331 + $0x40] sm:$0xff]
      %v4830 = vld [vmem:[%s4331 + $0x48] sm:$0xff]
      %v4831 = vld [vmem:[%s4331 + $0x50] sm:$0xff]
      %v4832 = vld [vmem:[%s4331 + $0x58] sm:$0xff]
      %v4833 = vld [vmem:[%s4331 + $0x60] sm:$0xff]
      %v4834 = vld [vmem:[%s4331 + $0x68] sm:$0xff]
      %v4835 = vld [vmem:[%s4331 + $0x70] sm:$0xff]
      %v4836 = vld [vmem:[%s4331 + $0x78] sm:$0xff]
      %v4837 = vld [vmem:[%s4331 + $0x80] sm:$0xff]
      %v4838 = vld [vmem:[%s4331 + $0x88] sm:$0xff]
      %v4839 = vld [vmem:[%s4331 + $0x90] sm:$0xff]
      %v4840 = vld [vmem:[%s4331 + $0x98] sm:$0xff]
      %v4841 = vld [vmem:[%s4331 + $0xa0] sm:$0xff]
      %v4842 = vld [vmem:[%s4331 + $0xa8] sm:$0xff]
      %v4843 = vld [vmem:[%s4331 + $0xb0] sm:$0xff]
      %v4844 = vld [vmem:[%s4331 + $0xb8] sm:$0xff]
      %v4845 = vld [vmem:[%s4331 + $0xc0] sm:$0xff]
      %v4846 = vld [vmem:[%s4331 + $0xc8] sm:$0xff]
      %v4847 = vld [vmem:[%s4331 + $0xd0] sm:$0xff]
      %v4848 = vld [vmem:[%s4331 + $0xd8] sm:$0xff]
      %v4849 = vld [vmem:[%s4331 + $0xe0] sm:$0xff]
      %v4850 = vld [vmem:[%s4331 + $0xe8] sm:$0xff]
      %v4851 = vld [vmem:[%s4331 + $0xf0] sm:$0xff]
      %v4852 = vld [vmem:[%s4331 + $0xf8] sm:$0xff]
      %v4853 = vld [vmem:[%s4331 + $0x100] sm:$0xff]
      %v4854 = vld [vmem:[%s4331 + $0x108] sm:$0xff]
      %v4855 = vld [vmem:[%s4331 + $0x110] sm:$0xff]
      %v4856 = vld [vmem:[%s4331 + $0x118] sm:$0xff]
      %v4857 = vld [vmem:[%s4331 + $0x120] sm:$0xff]
      %v4858 = vld [vmem:[%s4331 + $0x128] sm:$0xff]
      %v4859 = vld [vmem:[%s4331 + $0x130] sm:$0xff]
      %v4860 = vld [vmem:[%s4331 + $0x138] sm:$0xff]
      %v4861 = vld [vmem:[%s4331 + $0x140] sm:$0xff]
      %v4862 = vld [vmem:[%s4331 + $0x148] sm:$0xff]
      %v4863 = vld [vmem:[%s4331 + $0x150] sm:$0xff]
      %v4864 = vld [vmem:[%s4331 + $0x158] sm:$0xff]
      %v4865 = vld [vmem:[%s4331 + $0x160] sm:$0xff]
      %v4866 = vld [vmem:[%s4331 + $0x168] sm:$0xff]
      %v4867 = vld [vmem:[%s4331 + $0x170] sm:$0xff]
      %v4868 = vld [vmem:[%s4331 + $0x178] sm:$0xff]
      %s4869 = scalar_lea.vmem %s4, 192
      %v4870 = vld [vmem:[%s4869] sm:$0xf]
      %v4871 = vld [vmem:[%s4869 + $0x4] sm:$0xf]
      %v4872 = vld [vmem:[%s4869 + $0x8] sm:$0xf]
      %v4873 = vld [vmem:[%s4869 + $0xc] sm:$0xf]
      %v4874 = vld [vmem:[%s4869 + $0x10] sm:$0xf]
      %v4875 = vld [vmem:[%s4869 + $0x14] sm:$0xf]
      %v4876 = vld [vmem:[%s4869 + $0x18] sm:$0xf]
      %v4877 = vld [vmem:[%s4869 + $0x1c] sm:$0xf]
      %v4878 = vld [vmem:[%s4869 + $0x20] sm:$0xf]
      %v4879 = vld [vmem:[%s4869 + $0x24] sm:$0xf]
      %v4880 = vld [vmem:[%s4869 + $0x28] sm:$0xf]
      %v4881 = vld [vmem:[%s4869 + $0x2c] sm:$0xf]
      %v4882 = vld [vmem:[%s4869 + $0x30] sm:$0xf]
      %v4883 = vld [vmem:[%s4869 + $0x34] sm:$0xf]
      %v4884 = vld [vmem:[%s4869 + $0x38] sm:$0xf]
      %v4885 = vld [vmem:[%s4869 + $0x3c] sm:$0xf]
      %v4886 = vld [vmem:[%s4869 + $0x40] sm:$0xf]
      %v4887 = vld [vmem:[%s4869 + $0x44] sm:$0xf]
      %v4888 = vld [vmem:[%s4869 + $0x48] sm:$0xf]
      %v4889 = vld [vmem:[%s4869 + $0x4c] sm:$0xf]
      %v4890 = vld [vmem:[%s4869 + $0x50] sm:$0xf]
      %v4891 = vld [vmem:[%s4869 + $0x54] sm:$0xf]
      %v4892 = vld [vmem:[%s4869 + $0x58] sm:$0xf]
      %v4893 = vld [vmem:[%s4869 + $0x5c] sm:$0xf]
      %v4894 = vld [vmem:[%s4869 + $0x60] sm:$0xf]
      %v4895 = vld [vmem:[%s4869 + $0x64] sm:$0xf]
      %v4896 = vld [vmem:[%s4869 + $0x68] sm:$0xf]
      %v4897 = vld [vmem:[%s4869 + $0x6c] sm:$0xf]
      %v4898 = vld [vmem:[%s4869 + $0x70] sm:$0xf]
      %v4899 = vld [vmem:[%s4869 + $0x74] sm:$0xf]
      %v4900 = vld [vmem:[%s4869 + $0x78] sm:$0xf]
      %v4901 = vld [vmem:[%s4869 + $0x7c] sm:$0xf]
      %v4902 = vld [vmem:[%s4869 + $0x80] sm:$0xf]
      %v4903 = vld [vmem:[%s4869 + $0x84] sm:$0xf]
      %v4904 = vld [vmem:[%s4869 + $0x88] sm:$0xf]
      %v4905 = vld [vmem:[%s4869 + $0x8c] sm:$0xf]
      %v4906 = vld [vmem:[%s4869 + $0x90] sm:$0xf]
      %v4907 = vld [vmem:[%s4869 + $0x94] sm:$0xf]
      %v4908 = vld [vmem:[%s4869 + $0x98] sm:$0xf]
      %v4909 = vld [vmem:[%s4869 + $0x9c] sm:$0xf]
      %v4910 = vld [vmem:[%s4869 + $0xa0] sm:$0xf]
      %v4911 = vld [vmem:[%s4869 + $0xa4] sm:$0xf]
      %v4912 = vld [vmem:[%s4869 + $0xa8] sm:$0xf]
      %v4913 = vld [vmem:[%s4869 + $0xac] sm:$0xf]
      %v4914 = vld [vmem:[%s4869 + $0xb0] sm:$0xf]
      %v4915 = vld [vmem:[%s4869 + $0xb4] sm:$0xf]
      %v4916 = vld [vmem:[%s4869 + $0xb8] sm:$0xf]
      %v4917 = vld [vmem:[%s4869 + $0xbc] sm:$0xf]
      %v4966 = vunpack.c.l.b16 %v4870
      %v4967 = vunpack.c.l.b16 %v4871
      %v4968 = vunpack.c.l.b16 %v4872
      %v4969 = vunpack.c.l.b16 %v4873
      %v4970 = vunpack.c.l.b16 %v4874
      %v4971 = vunpack.c.l.b16 %v4875
      %v4972 = vunpack.c.l.b16 %v4876
      %v4973 = vunpack.c.l.b16 %v4877
      %v4974 = vunpack.c.l.b16 %v4878
      %v4975 = vunpack.c.l.b16 %v4879
      %v4976 = vunpack.c.l.b16 %v4880
      %v4977 = vunpack.c.l.b16 %v4881
      %v4978 = vunpack.c.l.b16 %v4882
      %v4979 = vunpack.c.l.b16 %v4883
      %v4980 = vunpack.c.l.b16 %v4884
      %v4981 = vunpack.c.l.b16 %v4885
      %v4982 = vunpack.c.l.b16 %v4886
      %v4983 = vunpack.c.l.b16 %v4887
      %v4984 = vunpack.c.l.b16 %v4888
      %v4985 = vunpack.c.l.b16 %v4889
      %v4986 = vunpack.c.l.b16 %v4890
      %v4987 = vunpack.c.l.b16 %v4891
      %v4988 = vunpack.c.l.b16 %v4892
      %v4989 = vunpack.c.l.b16 %v4893
      %v4990 = vunpack.c.l.b16 %v4894
      %v4991 = vunpack.c.l.b16 %v4895
      %v4992 = vunpack.c.l.b16 %v4896
      %v4993 = vunpack.c.l.b16 %v4897
      %v4994 = vunpack.c.l.b16 %v4898
      %v4995 = vunpack.c.l.b16 %v4899
      %v4996 = vunpack.c.l.b16 %v4900
      %v4997 = vunpack.c.l.b16 %v4901
      %v4998 = vunpack.c.l.b16 %v4902
      %v4999 = vunpack.c.l.b16 %v4903
      %v5000 = vunpack.c.l.b16 %v4904
      %v5001 = vunpack.c.l.b16 %v4905
      %v5002 = vunpack.c.l.b16 %v4906
      %v5003 = vunpack.c.l.b16 %v4907
      %v5004 = vunpack.c.l.b16 %v4908
      %v5005 = vunpack.c.l.b16 %v4909
      %v5006 = vunpack.c.l.b16 %v4910
      %v5007 = vunpack.c.l.b16 %v4911
      %v5008 = vunpack.c.l.b16 %v4912
      %v5009 = vunpack.c.l.b16 %v4913
      %v5010 = vunpack.c.l.b16 %v4914
      %v5011 = vunpack.c.l.b16 %v4915
      %v5012 = vunpack.c.l.b16 %v4916
      %v5013 = vunpack.c.l.b16 %v4917
      %v5014 = vpack.c.b16 %v4967, %v4966
      %v5015 = vpack.c.b16 %v4969, %v4968
      %v5016 = vpack.c.b16 %v4971, %v4970
      %v5017 = vpack.c.b16 %v4973, %v4972
      %v5018 = vpack.c.b16 %v4975, %v4974
      %v5019 = vpack.c.b16 %v4977, %v4976
      %v5020 = vpack.c.b16 %v4979, %v4978
      %v5021 = vpack.c.b16 %v4981, %v4980
      %v5022 = vpack.c.b16 %v4983, %v4982
      %v5023 = vpack.c.b16 %v4985, %v4984
      %v5024 = vpack.c.b16 %v4987, %v4986
      %v5025 = vpack.c.b16 %v4989, %v4988
      %v5026 = vpack.c.b16 %v4991, %v4990
      %v5027 = vpack.c.b16 %v4993, %v4992
      %v5028 = vpack.c.b16 %v4995, %v4994
      %v5029 = vpack.c.b16 %v4997, %v4996
      %v5030 = vpack.c.b16 %v4999, %v4998
      %v5031 = vpack.c.b16 %v5001, %v5000
      %v5032 = vpack.c.b16 %v5003, %v5002
      %v5033 = vpack.c.b16 %v5005, %v5004
      %v5034 = vpack.c.b16 %v5007, %v5006
      %v5035 = vpack.c.b16 %v5009, %v5008
      %v5036 = vpack.c.b16 %v5011, %v5010
      %v5037 = vpack.c.b16 %v5013, %v5012
      %5062 = vmatprep.subr.bf16.mxu0 0
      %5063 = vmatpush1.bf16.msra.mxu0 %v5014
      %5064 = vmatprep.subr.bf16.mxu0 0
      %5065 = vmatpush1.bf16.msra.mxu0 %v5015
      %5066 = vmatprep.subr.bf16.mxu0 0
      %5067 = vmatpush1.bf16.msra.mxu0 %v5016
      %5068 = vmatprep.subr.bf16.mxu0 0
      %5069 = vmatpush1.bf16.msra.mxu0 %v5017
      %5070 = vmatprep.subr.bf16.mxu0 0
      %5071 = vmatpush1.bf16.msra.mxu0 %v5018
      %5072 = vmatprep.subr.bf16.mxu0 0
      %5073 = vmatpush1.bf16.msra.mxu0 %v5019
      %5074 = vmatprep.subr.bf16.mxu0 0
      %5075 = vmatpush1.bf16.msra.mxu0 %v5020
      %5076 = vmatprep.subr.bf16.mxu0 0
      %5077 = vmatpush1.bf16.msra.mxu0 %v5021
      %5078 = vmatprep.subr.bf16.mxu0 0
      %5079 = vmatpush1.bf16.msra.mxu0 %v5022
      %5080 = vmatprep.subr.bf16.mxu0 0
      %5081 = vmatpush1.bf16.msra.mxu0 %v5023
      %5082 = vmatprep.subr.bf16.mxu0 0
      %5083 = vmatpush1.bf16.msra.mxu0 %v5024
      %5084 = vmatprep.subr.bf16.mxu0 0
      %5085 = vmatpush1.bf16.msra.mxu0 %v5025
      %5086 = vmatprep.subr.bf16.mxu0 0
      %5087 = vmatpush1.bf16.msra.mxu0 %v5026
      %5088 = vmatprep.subr.bf16.mxu0 0
      %5089 = vmatpush1.bf16.msra.mxu0 %v5027
      %5090 = vmatprep.subr.bf16.mxu0 0
      %5091 = vmatpush1.bf16.msra.mxu0 %v5028
      %5092 = vmatprep.subr.bf16.mxu0 0
      %5093 = vmatpush1.bf16.msra.mxu0 %v5029
      %5094 = vmatprep.mubr.bf16.mxu0 %v4822
      %5095 = vmatmul.mubr.bf16.gmra.mrb[0].mxu0 %v4821
      %v5096 = vpop.f32.mrb[0].mxu0
      %v5097 = vadd.f32 0.0, %v5096
      %v5098 = vpop.f32.mrb[0].mxu0
      %v5099 = vpop.f32.mrb[0].mxu0
      %v5100 = vadd.f32 0.0, %v5099
      %v5101 = vpop.f32.mrb[0].mxu0
      %5102 = vmatprep.mubr.bf16.mxu0 %v4825
      %5103 = vmatmul.mubr.bf16.gmra.mrb[0].mxu0 %v4824
      %v5104 = vpop.f32.mrb[0].mxu0
      %v5105 = vadd.f32 0.0, %v5104
      %v5106 = vpop.f32.mrb[0].mxu0
      %v5107 = vpop.f32.mrb[0].mxu0
      %v5108 = vadd.f32 0.0, %v5107
      %v5109 = vpop.f32.mrb[0].mxu0
      %5110 = vmatprep.mubr.bf16.mxu0 %v4828
      %5111 = vmatmul.mubr.bf16.gmra.mrb[0].mxu0 %v4827
      %v5112 = vpop.f32.mrb[0].mxu0
      %v5113 = vadd.f32 0.0, %v5112
      %v5114 = vpop.f32.mrb[0].mxu0
      %v5115 = vpop.f32.mrb[0].mxu0
      %v5116 = vadd.f32 0.0, %v5115
      %v5117 = vpop.f32.mrb[0].mxu0
      %5118 = vmatprep.mubr.bf16.mxu0 %v4831
      %5119 = vmatmul.mubr.bf16.gmra.mrb[0].mxu0 %v4830
      %v5120 = vpop.f32.mrb[0].mxu0
      %v5121 = vadd.f32 0.0, %v5120
      %v5122 = vpop.f32.mrb[0].mxu0
      %v5123 = vpop.f32.mrb[0].mxu0
      %v5124 = vadd.f32 0.0, %v5123
      %v5125 = vpop.f32.mrb[0].mxu0
      %5126 = vmatprep.mubr.bf16.mxu0 %v4834
      %5127 = vmatmul.mubr.bf16.gmra.mrb[0].mxu0 %v4833
      %v5128 = vpop.f32.mrb[0].mxu0
      %v5129 = vadd.f32 0.0, %v5128
      %v5130 = vpop.f32.mrb[0].mxu0
      %v5131 = vpop.f32.mrb[0].mxu0
      %v5132 = vadd.f32 0.0, %v5131
      %v5133 = vpop.f32.mrb[0].mxu0
      %5134 = vmatprep.mubr.bf16.mxu0 %v4837
      %5135 = vmatmul.mubr.bf16.gmra.mrb[0].mxu0 %v4836
      %v5136 = vpop.f32.mrb[0].mxu0
      %v5137 = vadd.f32 0.0, %v5136
      %v5138 = vpop.f32.mrb[0].mxu0
      %v5139 = vpop.f32.mrb[0].mxu0
      %v5140 = vadd.f32 0.0, %v5139
      %v5141 = vpop.f32.mrb[0].mxu0
      %5142 = vmatprep.mubr.bf16.mxu0 %v4840
      %5143 = vmatmul.mubr.bf16.gmra.mrb[0].mxu0 %v4839
      %v5144 = vpop.f32.mrb[0].mxu0
      %v5145 = vadd.f32 0.0, %v5144
      %v5146 = vpop.f32.mrb[0].mxu0
      %v5147 = vpop.f32.mrb[0].mxu0
      %v5148 = vadd.f32 0.0, %v5147
      %v5149 = vpop.f32.mrb[0].mxu0
      %5150 = vmatprep.mubr.bf16.mxu0 %v4843
      %5151 = vmatmul.mubr.bf16.gmra.mrb[0].mxu0 %v4842
      %v5152 = vpop.f32.mrb[0].mxu0
      %v5153 = vadd.f32 0.0, %v5152
      %v5154 = vpop.f32.mrb[0].mxu0
      %v5155 = vpop.f32.mrb[0].mxu0
      %v5156 = vadd.f32 0.0, %v5155
      %v5157 = vpop.f32.mrb[0].mxu0
      %5158 = vmatprep.mubr.bf16.mxu0 %v4846
      %5159 = vmatmul.mubr.bf16.gmra.mrb[0].mxu0 %v4845
      %v5160 = vpop.f32.mrb[0].mxu0
      %v5161 = vadd.f32 0.0, %v5160
      %v5162 = vpop.f32.mrb[0].mxu0
      %v5163 = vpop.f32.mrb[0].mxu0
      %v5164 = vadd.f32 0.0, %v5163
      %v5165 = vpop.f32.mrb[0].mxu0
      %5166 = vmatprep.mubr.bf16.mxu0 %v4849
      %5167 = vmatmul.mubr.bf16.gmra.mrb[0].mxu0 %v4848
      %v5168 = vpop.f32.mrb[0].mxu0
      %v5169 = vadd.f32 0.0, %v5168
      %v5170 = vpop.f32.mrb[0].mxu0
      %v5171 = vpop.f32.mrb[0].mxu0
      %v5172 = vadd.f32 0.0, %v5171
      %v5173 = vpop.f32.mrb[0].mxu0
      %5174 = vmatprep.mubr.bf16.mxu0 %v4852
      %5175 = vmatmul.mubr.bf16.gmra.mrb[0].mxu0 %v4851
      %v5176 = vpop.f32.mrb[0].mxu0
      %v5177 = vadd.f32 0.0, %v5176
      %v5178 = vpop.f32.mrb[0].mxu0
      %v5179 = vpop.f32.mrb[0].mxu0
      %v5180 = vadd.f32 0.0, %v5179
      %v5181 = vpop.f32.mrb[0].mxu0
      %5182 = vmatprep.mubr.bf16.mxu0 %v4855
      %5183 = vmatmul.mubr.bf16.gmra.mrb[0].mxu0 %v4854
      %v5184 = vpop.f32.mrb[0].mxu0
      %v5185 = vadd.f32 0.0, %v5184
      %v5186 = vpop.f32.mrb[0].mxu0
      %v5187 = vpop.f32.mrb[0].mxu0
      %v5188 = vadd.f32 0.0, %v5187
      %v5189 = vpop.f32.mrb[0].mxu0
      %5190 = vmatprep.mubr.bf16.mxu0 %v4858
      %5191 = vmatmul.mubr.bf16.gmra.mrb[0].mxu0 %v4857
      %v5192 = vpop.f32.mrb[0].mxu0
      %v5193 = vadd.f32 0.0, %v5192
      %v5194 = vpop.f32.mrb[0].mxu0
      %v5195 = vpop.f32.mrb[0].mxu0
      %v5196 = vadd.f32 0.0, %v5195
      %v5197 = vpop.f32.mrb[0].mxu0
      %5198 = vmatprep.mubr.bf16.mxu0 %v4861
      %5199 = vmatmul.mubr.bf16.gmra.mrb[0].mxu0 %v4860
      %v5200 = vpop.f32.mrb[0].mxu0
      %v5201 = vadd.f32 0.0, %v5200
      %v5202 = vpop.f32.mrb[0].mxu0
      %v5203 = vpop.f32.mrb[0].mxu0
      %v5204 = vadd.f32 0.0, %v5203
      %v5205 = vpop.f32.mrb[0].mxu0
      %5206 = vmatprep.mubr.bf16.mxu0 %v4864
      %5207 = vmatmul.mubr.bf16.gmra.mrb[0].mxu0 %v4863
      %v5208 = vpop.f32.mrb[0].mxu0
      %v5209 = vadd.f32 0.0, %v5208
      %v5210 = vpop.f32.mrb[0].mxu0
      %v5211 = vpop.f32.mrb[0].mxu0
      %v5212 = vadd.f32 0.0, %v5211
      %v5213 = vpop.f32.mrb[0].mxu0
      %5214 = vmatprep.mubr.bf16.mxu0 %v4867
      %5215 = vmatmul.mubr.bf16.gmra.mrb[0].mxu0 %v4866
      %v5216 = vpop.f32.mrb[0].mxu0
      %v5217 = vadd.f32 0.0, %v5216
      %v5218 = vpop.f32.mrb[0].mxu0
      %v5219 = vpop.f32.mrb[0].mxu0
      %v5220 = vadd.f32 0.0, %v5219
      %v5221 = vpop.f32.mrb[0].mxu0
      %5222 = vdwg.mxu0
      %5223 = vmatprep.subr.bf16.mxu0 0
      %5224 = vmatpush1.bf16.msra.mxu0 %v5030
      %5225 = vmatprep.subr.bf16.mxu0 0
      %5226 = vmatpush1.bf16.msra.mxu0 %v5031
      %5227 = vmatprep.subr.bf16.mxu0 0
      %5228 = vmatpush1.bf16.msra.mxu0 %v5032
      %5229 = vmatprep.subr.bf16.mxu0 0
      %5230 = vmatpush1.bf16.msra.mxu0 %v5033
      %5231 = vmatprep.subr.bf16.mxu0 0
      %5232 = vmatpush1.bf16.msra.mxu0 %v5034
      %5233 = vmatprep.subr.bf16.mxu0 0
      %5234 = vmatpush1.bf16.msra.mxu0 %v5035
      %5235 = vmatprep.subr.bf16.mxu0 0
      %5236 = vmatpush1.bf16.msra.mxu0 %v5036
      %5237 = vmatprep.subr.bf16.mxu0 0
      %5238 = vmatpush1.bf16.msra.mxu0 %v5037
      %5239 = vmatprep.subr.bf16.mxu0 0
      %5240 = vmatpush1.bf16.msra.mxu0 0
      %5241 = vmatprep.subr.bf16.mxu0 0
      %5242 = vmatpush1.bf16.msra.mxu0 0
      %5243 = vmatprep.subr.bf16.mxu0 0
      %5244 = vmatpush1.bf16.msra.mxu0 0
      %5245 = vmatprep.subr.bf16.mxu0 0
      %5246 = vmatpush1.bf16.msra.mxu0 0
      %5247 = vmatprep.subr.bf16.mxu0 0
      %5248 = vmatpush1.bf16.msra.mxu0 0
      %5249 = vmatprep.subr.bf16.mxu0 0
      %5250 = vmatpush1.bf16.msra.mxu0 0
      %5251 = vmatprep.subr.bf16.mxu0 0
      %5252 = vmatpush1.bf16.msra.mxu0 0
      %5253 = vmatprep.subr.bf16.mxu0 0
      %5254 = vmatpush1.bf16.msra.mxu0 0
      %5255 = vmatprep.mubr.bf16.mxu0 0
      %5256 = vmatmul.mubr.bf16.gmra.mrb[0].mxu0 %v4823
      %v5257 = vpop.f32.mrb[0].mxu0
      %v5258 = vadd.f32 %v5097, %v5257
      %v5259 = vpop.f32.mrb[0].mxu0
      %v5260 = vpop.f32.mrb[0].mxu0
      %v5261 = vadd.f32 %v5100, %v5260
      %v5262 = vpop.f32.mrb[0].mxu0
      %5263 = vmatprep.mubr.bf16.mxu0 0
      %5264 = vmatmul.mubr.bf16.gmra.mrb[0].mxu0 %v4826
      %v5265 = vpop.f32.mrb[0].mxu0
      %v5266 = vadd.f32 %v5105, %v5265
      %v5267 = vpop.f32.mrb[0].mxu0
      %v5268 = vpop.f32.mrb[0].mxu0
      %v5269 = vadd.f32 %v5108, %v5268
      %v5270 = vpop.f32.mrb[0].mxu0
      %5271 = vmatprep.mubr.bf16.mxu0 0
      %5272 = vmatmul.mubr.bf16.gmra.mrb[0].mxu0 %v4829
      %v5273 = vpop.f32.mrb[0].mxu0
      %v5274 = vadd.f32 %v5113, %v5273
      %v5275 = vpop.f32.mrb[0].mxu0
      %v5276 = vpop.f32.mrb[0].mxu0
      %v5277 = vadd.f32 %v5116, %v5276
      %v5278 = vpop.f32.mrb[0].mxu0
      %5279 = vmatprep.mubr.bf16.mxu0 0
      %5280 = vmatmul.mubr.bf16.gmra.mrb[0].mxu0 %v4832
      %v5281 = vpop.f32.mrb[0].mxu0
      %v5282 = vadd.f32 %v5121, %v5281
      %v5283 = vpop.f32.mrb[0].mxu0
      %v5284 = vpop.f32.mrb[0].mxu0
      %v5285 = vadd.f32 %v5124, %v5284
      %v5286 = vpop.f32.mrb[0].mxu0
      %5287 = vmatprep.mubr.bf16.mxu0 0
      %5288 = vmatmul.mubr.bf16.gmra.mrb[0].mxu0 %v4835
      %v5289 = vpop.f32.mrb[0].mxu0
      %v5290 = vadd.f32 %v5129, %v5289
      %v5291 = vpop.f32.mrb[0].mxu0
      %v5292 = vpop.f32.mrb[0].mxu0
      %v5293 = vadd.f32 %v5132, %v5292
      %v5294 = vpop.f32.mrb[0].mxu0
      %5295 = vmatprep.mubr.bf16.mxu0 0
      %5296 = vmatmul.mubr.bf16.gmra.mrb[0].mxu0 %v4838
      %v5297 = vpop.f32.mrb[0].mxu0
      %v5298 = vadd.f32 %v5137, %v5297
      %v5299 = vpop.f32.mrb[0].mxu0
      %v5300 = vpop.f32.mrb[0].mxu0
      %v5301 = vadd.f32 %v5140, %v5300
      %v5302 = vpop.f32.mrb[0].mxu0
      %5303 = vmatprep.mubr.bf16.mxu0 0
      %5304 = vmatmul.mubr.bf16.gmra.mrb[0].mxu0 %v4841
      %v5305 = vpop.f32.mrb[0].mxu0
      %v5306 = vadd.f32 %v5145, %v5305
      %v5307 = vpop.f32.mrb[0].mxu0
      %v5308 = vpop.f32.mrb[0].mxu0
      %v5309 = vadd.f32 %v5148, %v5308
      %v5310 = vpop.f32.mrb[0].mxu0
      %5311 = vmatprep.mubr.bf16.mxu0 0
      %5312 = vmatmul.mubr.bf16.gmra.mrb[0].mxu0 %v4844
      %v5313 = vpop.f32.mrb[0].mxu0
      %v5314 = vadd.f32 %v5153, %v5313
      %v5315 = vpop.f32.mrb[0].mxu0
      %v5316 = vpop.f32.mrb[0].mxu0
      %v5317 = vadd.f32 %v5156, %v5316
      %v5318 = vpop.f32.mrb[0].mxu0
      %5319 = vmatprep.mubr.bf16.mxu0 0
      %5320 = vmatmul.mubr.bf16.gmra.mrb[0].mxu0 %v4847
      %v5321 = vpop.f32.mrb[0].mxu0
      %v5322 = vadd.f32 %v5161, %v5321
      %v5323 = vpop.f32.mrb[0].mxu0
      %v5324 = vpop.f32.mrb[0].mxu0
      %v5325 = vadd.f32 %v5164, %v5324
      %v5326 = vpop.f32.mrb[0].mxu0
      %5327 = vmatprep.mubr.bf16.mxu0 0
      %5328 = vmatmul.mubr.bf16.gmra.mrb[0].mxu0 %v4850
      %v5329 = vpop.f32.mrb[0].mxu0
      %v5330 = vadd.f32 %v5169, %v5329
      %v5331 = vpop.f32.mrb[0].mxu0
      %v5332 = vpop.f32.mrb[0].mxu0
      %v5333 = vadd.f32 %v5172, %v5332
      %v5334 = vpop.f32.mrb[0].mxu0
      %5335 = vmatprep.mubr.bf16.mxu0 0
      %5336 = vmatmul.mubr.bf16.gmra.mrb[0].mxu0 %v4853
      %v5337 = vpop.f32.mrb[0].mxu0
      %v5338 = vadd.f32 %v5177, %v5337
      %v5339 = vpop.f32.mrb[0].mxu0
      %v5340 = vpop.f32.mrb[0].mxu0
      %v5341 = vadd.f32 %v5180, %v5340
      %v5342 = vpop.f32.mrb[0].mxu0
      %5343 = vmatprep.mubr.bf16.mxu0 0
      %5344 = vmatmul.mubr.bf16.gmra.mrb[0].mxu0 %v4856
      %v5345 = vpop.f32.mrb[0].mxu0
      %v5346 = vadd.f32 %v5185, %v5345
      %v5347 = vpop.f32.mrb[0].mxu0
      %v5348 = vpop.f32.mrb[0].mxu0
      %v5349 = vadd.f32 %v5188, %v5348
      %v5350 = vpop.f32.mrb[0].mxu0
      %5351 = vmatprep.mubr.bf16.mxu0 0
      %5352 = vmatmul.mubr.bf16.gmra.mrb[0].mxu0 %v4859
      %v5353 = vpop.f32.mrb[0].mxu0
      %v5354 = vadd.f32 %v5193, %v5353
      %v5355 = vpop.f32.mrb[0].mxu0
      %v5356 = vpop.f32.mrb[0].mxu0
      %v5357 = vadd.f32 %v5196, %v5356
      %v5358 = vpop.f32.mrb[0].mxu0
      %5359 = vmatprep.mubr.bf16.mxu0 0
      %5360 = vmatmul.mubr.bf16.gmra.mrb[0].mxu0 %v4862
      %v5361 = vpop.f32.mrb[0].mxu0
      %v5362 = vadd.f32 %v5201, %v5361
      %v5363 = vpop.f32.mrb[0].mxu0
      %v5364 = vpop.f32.mrb[0].mxu0
      %v5365 = vadd.f32 %v5204, %v5364
      %v5366 = vpop.f32.mrb[0].mxu0
      %5367 = vmatprep.mubr.bf16.mxu0 0
      %5368 = vmatmul.mubr.bf16.gmra.mrb[0].mxu0 %v4865
      %v5369 = vpop.f32.mrb[0].mxu0
      %v5370 = vadd.f32 %v5209, %v5369
      %v5371 = vpop.f32.mrb[0].mxu0
      %v5372 = vpop.f32.mrb[0].mxu0
      %v5373 = vadd.f32 %v5212, %v5372
      %v5374 = vpop.f32.mrb[0].mxu0
      %5375 = vmatprep.mubr.bf16.mxu0 0
      %5376 = vmatmul.mubr.bf16.gmra.mrb[0].mxu0 %v4868
      %v5377 = vpop.f32.mrb[0].mxu0
      %v5378 = vadd.f32 %v5217, %v5377
      %v5379 = vpop.f32.mrb[0].mxu0
      %v5380 = vpop.f32.mrb[0].mxu0
      %v5381 = vadd.f32 %v5220, %v5380
      %v5382 = vpop.f32.mrb[0].mxu0
      %5383 = vdwg.mxu0
      %v5432 = vunpack.c.l.b16 %v4773
      %v5433 = vunpack.c.l.b16 %v4774
      %v5434 = vunpack.c.l.b16 %v4775
      %v5435 = vunpack.c.l.b16 %v4776
      %v5436 = vunpack.c.l.b16 %v4777
      %v5437 = vunpack.c.l.b16 %v4778
      %v5438 = vunpack.c.l.b16 %v4779
      %v5439 = vunpack.c.l.b16 %v4780
      %v5440 = vunpack.c.l.b16 %v4781
      %v5441 = vunpack.c.l.b16 %v4782
      %v5442 = vunpack.c.l.b16 %v4783
      %v5443 = vunpack.c.l.b16 %v4784
      %v5444 = vunpack.c.l.b16 %v4785
      %v5445 = vunpack.c.l.b16 %v4786
      %v5446 = vunpack.c.l.b16 %v4787
      %v5447 = vunpack.c.l.b16 %v4788
      %v5448 = vunpack.c.l.b16 %v4789
      %v5449 = vunpack.c.l.b16 %v4790
      %v5450 = vunpack.c.l.b16 %v4791
      %v5451 = vunpack.c.l.b16 %v4792
      %v5452 = vunpack.c.l.b16 %v4793
      %v5453 = vunpack.c.l.b16 %v4794
      %v5454 = vunpack.c.l.b16 %v4795
      %v5455 = vunpack.c.l.b16 %v4796
      %v5456 = vunpack.c.l.b16 %v4797
      %v5457 = vunpack.c.l.b16 %v4798
      %v5458 = vunpack.c.l.b16 %v4799
      %v5459 = vunpack.c.l.b16 %v4800
      %v5460 = vunpack.c.l.b16 %v4801
      %v5461 = vunpack.c.l.b16 %v4802
      %v5462 = vunpack.c.l.b16 %v4803
      %v5463 = vunpack.c.l.b16 %v4804
      %v5464 = vunpack.c.l.b16 %v4805
      %v5465 = vunpack.c.l.b16 %v4806
      %v5466 = vunpack.c.l.b16 %v4807
      %v5467 = vunpack.c.l.b16 %v4808
      %v5468 = vunpack.c.l.b16 %v4809
      %v5469 = vunpack.c.l.b16 %v4810
      %v5470 = vunpack.c.l.b16 %v4811
      %v5471 = vunpack.c.l.b16 %v4812
      %v5472 = vunpack.c.l.b16 %v4813
      %v5473 = vunpack.c.l.b16 %v4814
      %v5474 = vunpack.c.l.b16 %v4815
      %v5475 = vunpack.c.l.b16 %v4816
      %v5476 = vunpack.c.l.b16 %v4817
      %v5477 = vunpack.c.l.b16 %v4818
      %v5478 = vunpack.c.l.b16 %v4819
      %v5479 = vunpack.c.l.b16 %v4820
      %v5480 = vpack.c.b16 %v5433, %v5432
      %v5481 = vpack.c.b16 %v5435, %v5434
      %v5482 = vpack.c.b16 %v5437, %v5436
      %v5483 = vpack.c.b16 %v5439, %v5438
      %v5484 = vpack.c.b16 %v5441, %v5440
      %v5485 = vpack.c.b16 %v5443, %v5442
      %v5486 = vpack.c.b16 %v5445, %v5444
      %v5487 = vpack.c.b16 %v5447, %v5446
      %v5488 = vpack.c.b16 %v5449, %v5448
      %v5489 = vpack.c.b16 %v5451, %v5450
      %v5490 = vpack.c.b16 %v5453, %v5452
      %v5491 = vpack.c.b16 %v5455, %v5454
      %v5492 = vpack.c.b16 %v5457, %v5456
      %v5493 = vpack.c.b16 %v5459, %v5458
      %v5494 = vpack.c.b16 %v5461, %v5460
      %v5495 = vpack.c.b16 %v5463, %v5462
      %v5496 = vpack.c.b16 %v5465, %v5464
      %v5497 = vpack.c.b16 %v5467, %v5466
      %v5498 = vpack.c.b16 %v5469, %v5468
      %v5499 = vpack.c.b16 %v5471, %v5470
      %v5500 = vpack.c.b16 %v5473, %v5472
      %v5501 = vpack.c.b16 %v5475, %v5474
      %v5502 = vpack.c.b16 %v5477, %v5476
      %v5503 = vpack.c.b16 %v5479, %v5478
      %5528 = vmatprep.subr.bf16.mxu0 0
      %5529 = vmatpush1.bf16.msra.mxu0 %v5480
      %5530 = vmatprep.subr.bf16.mxu0 0
      %5531 = vmatpush1.bf16.msra.mxu0 %v5481
      %5532 = vmatprep.subr.bf16.mxu0 0
      %5533 = vmatpush1.bf16.msra.mxu0 %v5482
      %5534 = vmatprep.subr.bf16.mxu0 0
      %5535 = vmatpush1.bf16.msra.mxu0 %v5483
      %5536 = vmatprep.subr.bf16.mxu0 0
      %5537 = vmatpush1.bf16.msra.mxu0 %v5484
      %5538 = vmatprep.subr.bf16.mxu0 0
      %5539 = vmatpush1.bf16.msra.mxu0 %v5485
      %5540 = vmatprep.subr.bf16.mxu0 0
      %5541 = vmatpush1.bf16.msra.mxu0 %v5486
      %5542 = vmatprep.subr.bf16.mxu0 0
      %5543 = vmatpush1.bf16.msra.mxu0 %v5487
      %5544 = vmatprep.subr.bf16.mxu0 0
      %5545 = vmatpush1.bf16.msra.mxu0 %v5488
      %5546 = vmatprep.subr.bf16.mxu0 0
      %5547 = vmatpush1.bf16.msra.mxu0 %v5489
      %5548 = vmatprep.subr.bf16.mxu0 0
      %5549 = vmatpush1.bf16.msra.mxu0 %v5490
      %5550 = vmatprep.subr.bf16.mxu0 0
      %5551 = vmatpush1.bf16.msra.mxu0 %v5491
      %5552 = vmatprep.subr.bf16.mxu0 0
      %5553 = vmatpush1.bf16.msra.mxu0 %v5492
      %5554 = vmatprep.subr.bf16.mxu0 0
      %5555 = vmatpush1.bf16.msra.mxu0 %v5493
      %5556 = vmatprep.subr.bf16.mxu0 0
      %5557 = vmatpush1.bf16.msra.mxu0 %v5494
      %5558 = vmatprep.subr.bf16.mxu0 0
      %5559 = vmatpush1.bf16.msra.mxu0 %v5495
      %5560 = vmatprep.mubr.bf16.mxu0 %v4726
      %5561 = vmatmul.mubr.bf16.gmra.mrb[0].mxu0 %v4725
      %v5562 = vpop.f32.mrb[0].mxu0
      %v5563 = vadd.f32 %v5258, %v5562
      %v5564 = vpop.f32.mrb[0].mxu0
      %v5565 = vpop.f32.mrb[0].mxu0
      %v5566 = vadd.f32 %v5261, %v5565
      %v5567 = vpop.f32.mrb[0].mxu0
      %5568 = vmatprep.mubr.bf16.mxu0 %v4729
      %5569 = vmatmul.mubr.bf16.gmra.mrb[0].mxu0 %v4728
      %v5570 = vpop.f32.mrb[0].mxu0
      %v5571 = vadd.f32 %v5266, %v5570
      %v5572 = vpop.f32.mrb[0].mxu0
      %v5573 = vpop.f32.mrb[0].mxu0
      %v5574 = vadd.f32 %v5269, %v5573
      %v5575 = vpop.f32.mrb[0].mxu0
      %5576 = vmatprep.mubr.bf16.mxu0 %v4732
      %5577 = vmatmul.mubr.bf16.gmra.mrb[0].mxu0 %v4731
      %v5578 = vpop.f32.mrb[0].mxu0
      %v5579 = vadd.f32 %v5274, %v5578
      %v5580 = vpop.f32.mrb[0].mxu0
      %v5581 = vpop.f32.mrb[0].mxu0
      %v5582 = vadd.f32 %v5277, %v5581
      %v5583 = vpop.f32.mrb[0].mxu0
      %5584 = vmatprep.mubr.bf16.mxu0 %v4735
      %5585 = vmatmul.mubr.bf16.gmra.mrb[0].mxu0 %v4734
      %v5586 = vpop.f32.mrb[0].mxu0
      %v5587 = vadd.f32 %v5282, %v5586
      %v5588 = vpop.f32.mrb[0].mxu0
      %v5589 = vpop.f32.mrb[0].mxu0
      %v5590 = vadd.f32 %v5285, %v5589
      %v5591 = vpop.f32.mrb[0].mxu0
      %5592 = vmatprep.mubr.bf16.mxu0 %v4738
      %5593 = vmatmul.mubr.bf16.gmra.mrb[0].mxu0 %v4737
      %v5594 = vpop.f32.mrb[0].mxu0
      %v5595 = vadd.f32 %v5290, %v5594
      %v5596 = vpop.f32.mrb[0].mxu0
      %v5597 = vpop.f32.mrb[0].mxu0
      %v5598 = vadd.f32 %v5293, %v5597
      %v5599 = vpop.f32.mrb[0].mxu0
      %5600 = vmatprep.mubr.bf16.mxu0 %v4741
      %5601 = vmatmul.mubr.bf16.gmra.mrb[0].mxu0 %v4740
      %v5602 = vpop.f32.mrb[0].mxu0
      %v5603 = vadd.f32 %v5298, %v5602
      %v5604 = vpop.f32.mrb[0].mxu0
      %v5605 = vpop.f32.mrb[0].mxu0
      %v5606 = vadd.f32 %v5301, %v5605
      %v5607 = vpop.f32.mrb[0].mxu0
      %5608 = vmatprep.mubr.bf16.mxu0 %v4744
      %5609 = vmatmul.mubr.bf16.gmra.mrb[0].mxu0 %v4743
      %v5610 = vpop.f32.mrb[0].mxu0
      %v5611 = vadd.f32 %v5306, %v5610
      %v5612 = vpop.f32.mrb[0].mxu0
      %v5613 = vpop.f32.mrb[0].mxu0
      %v5614 = vadd.f32 %v5309, %v5613
      %v5615 = vpop.f32.mrb[0].mxu0
      %5616 = vmatprep.mubr.bf16.mxu0 %v4747
      %5617 = vmatmul.mubr.bf16.gmra.mrb[0].mxu0 %v4746
      %v5618 = vpop.f32.mrb[0].mxu0
      %v5619 = vadd.f32 %v5314, %v5618
      %v5620 = vpop.f32.mrb[0].mxu0
      %v5621 = vpop.f32.mrb[0].mxu0
      %v5622 = vadd.f32 %v5317, %v5621
      %v5623 = vpop.f32.mrb[0].mxu0
      %5624 = vmatprep.mubr.bf16.mxu0 %v4750
      %5625 = vmatmul.mubr.bf16.gmra.mrb[0].mxu0 %v4749
      %v5626 = vpop.f32.mrb[0].mxu0
      %v5627 = vadd.f32 %v5322, %v5626
      %v5628 = vpop.f32.mrb[0].mxu0
      %v5629 = vpop.f32.mrb[0].mxu0
      %v5630 = vadd.f32 %v5325, %v5629
      %v5631 = vpop.f32.mrb[0].mxu0
      %5632 = vmatprep.mubr.bf16.mxu0 %v4753
      %5633 = vmatmul.mubr.bf16.gmra.mrb[0].mxu0 %v4752
      %v5634 = vpop.f32.mrb[0].mxu0
      %v5635 = vadd.f32 %v5330, %v5634
      %v5636 = vpop.f32.mrb[0].mxu0
      %v5637 = vpop.f32.mrb[0].mxu0
      %v5638 = vadd.f32 %v5333, %v5637
      %v5639 = vpop.f32.mrb[0].mxu0
      %5640 = vmatprep.mubr.bf16.mxu0 %v4756
      %5641 = vmatmul.mubr.bf16.gmra.mrb[0].mxu0 %v4755
      %v5642 = vpop.f32.mrb[0].mxu0
      %v5643 = vadd.f32 %v5338, %v5642
      %v5644 = vpop.f32.mrb[0].mxu0
      %v5645 = vpop.f32.mrb[0].mxu0
      %v5646 = vadd.f32 %v5341, %v5645
      %v5647 = vpop.f32.mrb[0].mxu0
      %5648 = vmatprep.mubr.bf16.mxu0 %v4759
      %5649 = vmatmul.mubr.bf16.gmra.mrb[0].mxu0 %v4758
      %v5650 = vpop.f32.mrb[0].mxu0
      %v5651 = vadd.f32 %v5346, %v5650
      %v5652 = vpop.f32.mrb[0].mxu0
      %v5653 = vpop.f32.mrb[0].mxu0
      %v5654 = vadd.f32 %v5349, %v5653
      %v5655 = vpop.f32.mrb[0].mxu0
      %5656 = vmatprep.mubr.bf16.mxu0 %v4762
      %5657 = vmatmul.mubr.bf16.gmra.mrb[0].mxu0 %v4761
      %v5658 = vpop.f32.mrb[0].mxu0
      %v5659 = vadd.f32 %v5354, %v5658
      %v5660 = vpop.f32.mrb[0].mxu0
      %v5661 = vpop.f32.mrb[0].mxu0
      %v5662 = vadd.f32 %v5357, %v5661
      %v5663 = vpop.f32.mrb[0].mxu0
      %5664 = vmatprep.mubr.bf16.mxu0 %v4765
      %5665 = vmatmul.mubr.bf16.gmra.mrb[0].mxu0 %v4764
      %v5666 = vpop.f32.mrb[0].mxu0
      %v5667 = vadd.f32 %v5362, %v5666
      %v5668 = vpop.f32.mrb[0].mxu0
      %v5669 = vpop.f32.mrb[0].mxu0
      %v5670 = vadd.f32 %v5365, %v5669
      %v5671 = vpop.f32.mrb[0].mxu0
      %5672 = vmatprep.mubr.bf16.mxu0 %v4768
      %5673 = vmatmul.mubr.bf16.gmra.mrb[0].mxu0 %v4767
      %v5674 = vpop.f32.mrb[0].mxu0
      %v5675 = vadd.f32 %v5370, %v5674
      %v5676 = vpop.f32.mrb[0].mxu0
      %v5677 = vpop.f32.mrb[0].mxu0
      %v5678 = vadd.f32 %v5373, %v5677
      %v5679 = vpop.f32.mrb[0].mxu0
      %5680 = vmatprep.mubr.bf16.mxu0 %v4771
      %5681 = vmatmul.mubr.bf16.gmra.mrb[0].mxu0 %v4770
      %v5682 = vpop.f32.mrb[0].mxu0
      %v5683 = vadd.f32 %v5378, %v5682
      %v5684 = vpop.f32.mrb[0].mxu0
      %v5685 = vpop.f32.mrb[0].mxu0
      %v5686 = vadd.f32 %v5381, %v5685
      %v5687 = vpop.f32.mrb[0].mxu0
      %5688 = vdwg.mxu0
      %5689 = vmatprep.subr.bf16.mxu0 0
      %5690 = vmatpush1.bf16.msra.mxu0 %v5496
      %5691 = vmatprep.subr.bf16.mxu0 0
      %5692 = vmatpush1.bf16.msra.mxu0 %v5497
      %5693 = vmatprep.subr.bf16.mxu0 0
      %5694 = vmatpush1.bf16.msra.mxu0 %v5498
      %5695 = vmatprep.subr.bf16.mxu0 0
      %5696 = vmatpush1.bf16.msra.mxu0 %v5499
      %5697 = vmatprep.subr.bf16.mxu0 0
      %5698 = vmatpush1.bf16.msra.mxu0 %v5500
      %5699 = vmatprep.subr.bf16.mxu0 0
      %5700 = vmatpush1.bf16.msra.mxu0 %v5501
      %5701 = vmatprep.subr.bf16.mxu0 0
      %5702 = vmatpush1.bf16.msra.mxu0 %v5502
      %5703 = vmatprep.subr.bf16.mxu0 0
      %5704 = vmatpush1.bf16.msra.mxu0 %v5503
      %5705 = vmatprep.subr.bf16.mxu0 0
      %5706 = vmatpush1.bf16.msra.mxu0 0
      %5707 = vmatprep.subr.bf16.mxu0 0
      %5708 = vmatpush1.bf16.msra.mxu0 0
      %5709 = vmatprep.subr.bf16.mxu0 0
      %5710 = vmatpush1.bf16.msra.mxu0 0
      %5711 = vmatprep.subr.bf16.mxu0 0
      %5712 = vmatpush1.bf16.msra.mxu0 0
      %5713 = vmatprep.subr.bf16.mxu0 0
      %5714 = vmatpush1.bf16.msra.mxu0 0
      %5715 = vmatprep.subr.bf16.mxu0 0
      %5716 = vmatpush1.bf16.msra.mxu0 0
      %5717 = vmatprep.subr.bf16.mxu0 0
      %5718 = vmatpush1.bf16.msra.mxu0 0
      %5719 = vmatprep.subr.bf16.mxu0 0
      %5720 = vmatpush1.bf16.msra.mxu0 0
      %5721 = vmatprep.mubr.bf16.mxu0 0
      %5722 = vmatmul.mubr.bf16.gmra.mrb[0].mxu0 %v4727
      %v5723 = vpop.f32.mrb[0].mxu0
      %v5724 = vadd.f32 %v5563, %v5723
      %v5725 = vpop.f32.mrb[0].mxu0
      %v5726 = vpop.f32.mrb[0].mxu0
      %v5727 = vadd.f32 %v5566, %v5726
      %v5728 = vpop.f32.mrb[0].mxu0
      %5729 = vmatprep.mubr.bf16.mxu0 0
      %5730 = vmatmul.mubr.bf16.gmra.mrb[0].mxu0 %v4730
      %v5731 = vpop.f32.mrb[0].mxu0
      %v5732 = vadd.f32 %v5571, %v5731
      %v5733 = vpop.f32.mrb[0].mxu0
      %v5734 = vpop.f32.mrb[0].mxu0
      %v5735 = vadd.f32 %v5574, %v5734
      %v5736 = vpop.f32.mrb[0].mxu0
      %5737 = vmatprep.mubr.bf16.mxu0 0
      %5738 = vmatmul.mubr.bf16.gmra.mrb[0].mxu0 %v4733
      %v5739 = vpop.f32.mrb[0].mxu0
      %v5740 = vadd.f32 %v5579, %v5739
      %v5741 = vpop.f32.mrb[0].mxu0
      %v5742 = vpop.f32.mrb[0].mxu0
      %v5743 = vadd.f32 %v5582, %v5742
      %v5744 = vpop.f32.mrb[0].mxu0
      %5745 = vmatprep.mubr.bf16.mxu0 0
      %5746 = vmatmul.mubr.bf16.gmra.mrb[0].mxu0 %v4736
      %v5747 = vpop.f32.mrb[0].mxu0
      %v5748 = vadd.f32 %v5587, %v5747
      %v5749 = vpop.f32.mrb[0].mxu0
      %v5750 = vpop.f32.mrb[0].mxu0
      %v5751 = vadd.f32 %v5590, %v5750
      %v5752 = vpop.f32.mrb[0].mxu0
      %5753 = vmatprep.mubr.bf16.mxu0 0
      %5754 = vmatmul.mubr.bf16.gmra.mrb[0].mxu0 %v4739
      %v5755 = vpop.f32.mrb[0].mxu0
      %v5756 = vadd.f32 %v5595, %v5755
      %v5757 = vpop.f32.mrb[0].mxu0
      %v5758 = vpop.f32.mrb[0].mxu0
      %v5759 = vadd.f32 %v5598, %v5758
      %v5760 = vpop.f32.mrb[0].mxu0
      %5761 = vmatprep.mubr.bf16.mxu0 0
      %5762 = vmatmul.mubr.bf16.gmra.mrb[0].mxu0 %v4742
      %v5763 = vpop.f32.mrb[0].mxu0
      %v5764 = vadd.f32 %v5603, %v5763
      %v5765 = vpop.f32.mrb[0].mxu0
      %v5766 = vpop.f32.mrb[0].mxu0
      %v5767 = vadd.f32 %v5606, %v5766
      %v5768 = vpop.f32.mrb[0].mxu0
      %5769 = vmatprep.mubr.bf16.mxu0 0
      %5770 = vmatmul.mubr.bf16.gmra.mrb[0].mxu0 %v4745
      %v5771 = vpop.f32.mrb[0].mxu0
      %v5772 = vadd.f32 %v5611, %v5771
      %v5773 = vpop.f32.mrb[0].mxu0
      %v5774 = vpop.f32.mrb[0].mxu0
      %v5775 = vadd.f32 %v5614, %v5774
      %v5776 = vpop.f32.mrb[0].mxu0
      %5777 = vmatprep.mubr.bf16.mxu0 0
      %5778 = vmatmul.mubr.bf16.gmra.mrb[0].mxu0 %v4748
      %v5779 = vpop.f32.mrb[0].mxu0
      %v5780 = vadd.f32 %v5619, %v5779
      %v5781 = vpop.f32.mrb[0].mxu0
      %v5782 = vpop.f32.mrb[0].mxu0
      %v5783 = vadd.f32 %v5622, %v5782
      %v5784 = vpop.f32.mrb[0].mxu0
      %5785 = vmatprep.mubr.bf16.mxu0 0
      %5786 = vmatmul.mubr.bf16.gmra.mrb[0].mxu0 %v4751
      %v5787 = vpop.f32.mrb[0].mxu0
      %v5788 = vadd.f32 %v5627, %v5787
      %v5789 = vpop.f32.mrb[0].mxu0
      %v5790 = vpop.f32.mrb[0].mxu0
      %v5791 = vadd.f32 %v5630, %v5790
      %v5792 = vpop.f32.mrb[0].mxu0
      %5793 = vmatprep.mubr.bf16.mxu0 0
      %5794 = vmatmul.mubr.bf16.gmra.mrb[0].mxu0 %v4754
      %v5795 = vpop.f32.mrb[0].mxu0
      %v5796 = vadd.f32 %v5635, %v5795
      %v5797 = vpop.f32.mrb[0].mxu0
      %v5798 = vpop.f32.mrb[0].mxu0
      %v5799 = vadd.f32 %v5638, %v5798
      %v5800 = vpop.f32.mrb[0].mxu0
      %5801 = vmatprep.mubr.bf16.mxu0 0
      %5802 = vmatmul.mubr.bf16.gmra.mrb[0].mxu0 %v4757
      %v5803 = vpop.f32.mrb[0].mxu0
      %v5804 = vadd.f32 %v5643, %v5803
      %v5805 = vpop.f32.mrb[0].mxu0
      %v5806 = vpop.f32.mrb[0].mxu0
      %v5807 = vadd.f32 %v5646, %v5806
      %v5808 = vpop.f32.mrb[0].mxu0
      %5809 = vmatprep.mubr.bf16.mxu0 0
      %5810 = vmatmul.mubr.bf16.gmra.mrb[0].mxu0 %v4760
      %v5811 = vpop.f32.mrb[0].mxu0
      %v5812 = vadd.f32 %v5651, %v5811
      %v5813 = vpop.f32.mrb[0].mxu0
      %v5814 = vpop.f32.mrb[0].mxu0
      %v5815 = vadd.f32 %v5654, %v5814
      %v5816 = vpop.f32.mrb[0].mxu0
      %5817 = vmatprep.mubr.bf16.mxu0 0
      %5818 = vmatmul.mubr.bf16.gmra.mrb[0].mxu0 %v4763
      %v5819 = vpop.f32.mrb[0].mxu0
      %v5820 = vadd.f32 %v5659, %v5819
      %v5821 = vpop.f32.mrb[0].mxu0
      %v5822 = vpop.f32.mrb[0].mxu0
      %v5823 = vadd.f32 %v5662, %v5822
      %v5824 = vpop.f32.mrb[0].mxu0
      %5825 = vmatprep.mubr.bf16.mxu0 0
      %5826 = vmatmul.mubr.bf16.gmra.mrb[0].mxu0 %v4766
      %v5827 = vpop.f32.mrb[0].mxu0
      %v5828 = vadd.f32 %v5667, %v5827
      %v5829 = vpop.f32.mrb[0].mxu0
      %v5830 = vpop.f32.mrb[0].mxu0
      %v5831 = vadd.f32 %v5670, %v5830
      %v5832 = vpop.f32.mrb[0].mxu0
      %5833 = vmatprep.mubr.bf16.mxu0 0
      %5834 = vmatmul.mubr.bf16.gmra.mrb[0].mxu0 %v4769
      %v5835 = vpop.f32.mrb[0].mxu0
      %v5836 = vadd.f32 %v5675, %v5835
      %v5837 = vpop.f32.mrb[0].mxu0
      %v5838 = vpop.f32.mrb[0].mxu0
      %v5839 = vadd.f32 %v5678, %v5838
      %v5840 = vpop.f32.mrb[0].mxu0
      %5841 = vmatprep.mubr.bf16.mxu0 0
      %5842 = vmatmul.mubr.bf16.gmra.mrb[0].mxu0 %v4772
      %v5843 = vpop.f32.mrb[0].mxu0
      %v5844 = vadd.f32 %v5683, %v5843
      %v5845 = vpop.f32.mrb[0].mxu0
      %v5846 = vpop.f32.mrb[0].mxu0
      %v5847 = vadd.f32 %v5686, %v5846
      %v5848 = vpop.f32.mrb[0].mxu0
      %5849 = vdwg.mxu0
      %s5850 = scalar_lea.vmem [#allocation3], 48
      %v5851 = vld [vmem:[%s5850] sm:$0xff]
      %v5852 = vld [vmem:[%s5850 + $0x8] sm:$0xff]
      %v5853 = vld [vmem:[%s5850 + $0x10] sm:$0xff]
      %v5854 = vld [vmem:[%s5850 + $0x18] sm:$0xff]
      %v5855 = vld [vmem:[%s5850 + $0x20] sm:$0xff]
      %v5856 = vld [vmem:[%s5850 + $0x28] sm:$0xff]
      %v5857 = vld [vmem:[%s5850 + $0x30] sm:$0xff]
      %v5858 = vld [vmem:[%s5850 + $0x38] sm:$0xff]
      %v5859 = vld [vmem:[%s5850 + $0x40] sm:$0xff]
      %v5860 = vld [vmem:[%s5850 + $0x48] sm:$0xff]
      %v5861 = vld [vmem:[%s5850 + $0x50] sm:$0xff]
      %v5862 = vld [vmem:[%s5850 + $0x58] sm:$0xff]
      %v5863 = vld [vmem:[%s5850 + $0x60] sm:$0xff]
      %v5864 = vld [vmem:[%s5850 + $0x68] sm:$0xff]
      %v5865 = vld [vmem:[%s5850 + $0x70] sm:$0xff]
      %v5866 = vld [vmem:[%s5850 + $0x78] sm:$0xff]
      %v5867 = vld [vmem:[%s5850 + $0x80] sm:$0xff]
      %v5868 = vld [vmem:[%s5850 + $0x88] sm:$0xff]
      %v5869 = vld [vmem:[%s5850 + $0x90] sm:$0xff]
      %v5870 = vld [vmem:[%s5850 + $0x98] sm:$0xff]
      %v5871 = vld [vmem:[%s5850 + $0xa0] sm:$0xff]
      %v5872 = vld [vmem:[%s5850 + $0xa8] sm:$0xff]
      %v5873 = vld [vmem:[%s5850 + $0xb0] sm:$0xff]
      %v5874 = vld [vmem:[%s5850 + $0xb8] sm:$0xff]
      %v5875 = vld [vmem:[%s5850 + $0xc0] sm:$0xff]
      %v5876 = vld [vmem:[%s5850 + $0xc8] sm:$0xff]
      %v5877 = vld [vmem:[%s5850 + $0xd0] sm:$0xff]
      %v5878 = vld [vmem:[%s5850 + $0xd8] sm:$0xff]
      %v5879 = vld [vmem:[%s5850 + $0xe0] sm:$0xff]
      %v5880 = vld [vmem:[%s5850 + $0xe8] sm:$0xff]
      %v5881 = vld [vmem:[%s5850 + $0xf0] sm:$0xff]
      %v5882 = vld [vmem:[%s5850 + $0xf8] sm:$0xff]
      %v5883 = vld [vmem:[%s5850 + $0x100] sm:$0xff]
      %v5884 = vld [vmem:[%s5850 + $0x108] sm:$0xff]
      %v5885 = vld [vmem:[%s5850 + $0x110] sm:$0xff]
      %v5886 = vld [vmem:[%s5850 + $0x118] sm:$0xff]
      %v5887 = vld [vmem:[%s5850 + $0x120] sm:$0xff]
      %v5888 = vld [vmem:[%s5850 + $0x128] sm:$0xff]
      %v5889 = vld [vmem:[%s5850 + $0x130] sm:$0xff]
      %v5890 = vld [vmem:[%s5850 + $0x138] sm:$0xff]
      %v5891 = vld [vmem:[%s5850 + $0x140] sm:$0xff]
      %v5892 = vld [vmem:[%s5850 + $0x148] sm:$0xff]
      %v5893 = vld [vmem:[%s5850 + $0x150] sm:$0xff]
      %v5894 = vld [vmem:[%s5850 + $0x158] sm:$0xff]
      %v5895 = vld [vmem:[%s5850 + $0x160] sm:$0xff]
      %v5896 = vld [vmem:[%s5850 + $0x168] sm:$0xff]
      %v5897 = vld [vmem:[%s5850 + $0x170] sm:$0xff]
      %v5898 = vld [vmem:[%s5850 + $0x178] sm:$0xff]
      %s5899 = scalar_lea.vmem %s4, 384
      %v5900 = vld [vmem:[%s5899] sm:$0xf]
      %v5901 = vld [vmem:[%s5899 + $0x4] sm:$0xf]
      %v5902 = vld [vmem:[%s5899 + $0x8] sm:$0xf]
      %v5903 = vld [vmem:[%s5899 + $0xc] sm:$0xf]
      %v5904 = vld [vmem:[%s5899 + $0x10] sm:$0xf]
      %v5905 = vld [vmem:[%s5899 + $0x14] sm:$0xf]
      %v5906 = vld [vmem:[%s5899 + $0x18] sm:$0xf]
      %v5907 = vld [vmem:[%s5899 + $0x1c] sm:$0xf]
      %v5908 = vld [vmem:[%s5899 + $0x20] sm:$0xf]
      %v5909 = vld [vmem:[%s5899 + $0x24] sm:$0xf]
      %v5910 = vld [vmem:[%s5899 + $0x28] sm:$0xf]
      %v5911 = vld [vmem:[%s5899 + $0x2c] sm:$0xf]
      %v5912 = vld [vmem:[%s5899 + $0x30] sm:$0xf]
      %v5913 = vld [vmem:[%s5899 + $0x34] sm:$0xf]
      %v5914 = vld [vmem:[%s5899 + $0x38] sm:$0xf]
      %v5915 = vld [vmem:[%s5899 + $0x3c] sm:$0xf]
      %v5916 = vld [vmem:[%s5899 + $0x40] sm:$0xf]
      %v5917 = vld [vmem:[%s5899 + $0x44] sm:$0xf]
      %v5918 = vld [vmem:[%s5899 + $0x48] sm:$0xf]
      %v5919 = vld [vmem:[%s5899 + $0x4c] sm:$0xf]
      %v5920 = vld [vmem:[%s5899 + $0x50] sm:$0xf]
      %v5921 = vld [vmem:[%s5899 + $0x54] sm:$0xf]
      %v5922 = vld [vmem:[%s5899 + $0x58] sm:$0xf]
      %v5923 = vld [vmem:[%s5899 + $0x5c] sm:$0xf]
      %v5924 = vld [vmem:[%s5899 + $0x60] sm:$0xf]
      %v5925 = vld [vmem:[%s5899 + $0x64] sm:$0xf]
      %v5926 = vld [vmem:[%s5899 + $0x68] sm:$0xf]
      %v5927 = vld [vmem:[%s5899 + $0x6c] sm:$0xf]
      %v5928 = vld [vmem:[%s5899 + $0x70] sm:$0xf]
      %v5929 = vld [vmem:[%s5899 + $0x74] sm:$0xf]
      %v5930 = vld [vmem:[%s5899 + $0x78] sm:$0xf]
      %v5931 = vld [vmem:[%s5899 + $0x7c] sm:$0xf]
      %v5932 = vld [vmem:[%s5899 + $0x80] sm:$0xf]
      %v5933 = vld [vmem:[%s5899 + $0x84] sm:$0xf]
      %v5934 = vld [vmem:[%s5899 + $0x88] sm:$0xf]
      %v5935 = vld [vmem:[%s5899 + $0x8c] sm:$0xf]
      %v5936 = vld [vmem:[%s5899 + $0x90] sm:$0xf]
      %v5937 = vld [vmem:[%s5899 + $0x94] sm:$0xf]
      %v5938 = vld [vmem:[%s5899 + $0x98] sm:$0xf]
      %v5939 = vld [vmem:[%s5899 + $0x9c] sm:$0xf]
      %v5940 = vld [vmem:[%s5899 + $0xa0] sm:$0xf]
      %v5941 = vld [vmem:[%s5899 + $0xa4] sm:$0xf]
      %v5942 = vld [vmem:[%s5899 + $0xa8] sm:$0xf]
      %v5943 = vld [vmem:[%s5899 + $0xac] sm:$0xf]
      %v5944 = vld [vmem:[%s5899 + $0xb0] sm:$0xf]
      %v5945 = vld [vmem:[%s5899 + $0xb4] sm:$0xf]
      %v5946 = vld [vmem:[%s5899 + $0xb8] sm:$0xf]
      %v5947 = vld [vmem:[%s5899 + $0xbc] sm:$0xf]
      %v5996 = vunpack.c.l.b16 %v5900
      %v5997 = vunpack.c.l.b16 %v5901
      %v5998 = vunpack.c.l.b16 %v5902
      %v5999 = vunpack.c.l.b16 %v5903
      %v6000 = vunpack.c.l.b16 %v5904
      %v6001 = vunpack.c.l.b16 %v5905
      %v6002 = vunpack.c.l.b16 %v5906
      %v6003 = vunpack.c.l.b16 %v5907
      %v6004 = vunpack.c.l.b16 %v5908
      %v6005 = vunpack.c.l.b16 %v5909
      %v6006 = vunpack.c.l.b16 %v5910
      %v6007 = vunpack.c.l.b16 %v5911
      %v6008 = vunpack.c.l.b16 %v5912
      %v6009 = vunpack.c.l.b16 %v5913
      %v6010 = vunpack.c.l.b16 %v5914
      %v6011 = vunpack.c.l.b16 %v5915
      %v6012 = vunpack.c.l.b16 %v5916
      %v6013 = vunpack.c.l.b16 %v5917
      %v6014 = vunpack.c.l.b16 %v5918
      %v6015 = vunpack.c.l.b16 %v5919
      %v6016 = vunpack.c.l.b16 %v5920
      %v6017 = vunpack.c.l.b16 %v5921
      %v6018 = vunpack.c.l.b16 %v5922
      %v6019 = vunpack.c.l.b16 %v5923
      %v6020 = vunpack.c.l.b16 %v5924
      %v6021 = vunpack.c.l.b16 %v5925
      %v6022 = vunpack.c.l.b16 %v5926
      %v6023 = vunpack.c.l.b16 %v5927
      %v6024 = vunpack.c.l.b16 %v5928
      %v6025 = vunpack.c.l.b16 %v5929
      %v6026 = vunpack.c.l.b16 %v5930
      %v6027 = vunpack.c.l.b16 %v5931
      %v6028 = vunpack.c.l.b16 %v5932
      %v6029 = vunpack.c.l.b16 %v5933
      %v6030 = vunpack.c.l.b16 %v5934
      %v6031 = vunpack.c.l.b16 %v5935
      %v6032 = vunpack.c.l.b16 %v5936
      %v6033 = vunpack.c.l.b16 %v5937
      %v6034 = vunpack.c.l.b16 %v5938
      %v6035 = vunpack.c.l.b16 %v5939
      %v6036 = vunpack.c.l.b16 %v5940
      %v6037 = vunpack.c.l.b16 %v5941
      %v6038 = vunpack.c.l.b16 %v5942
      %v6039 = vunpack.c.l.b16 %v5943
      %v6040 = vunpack.c.l.b16 %v5944
      %v6041 = vunpack.c.l.b16 %v5945
      %v6042 = vunpack.c.l.b16 %v5946
      %v6043 = vunpack.c.l.b16 %v5947
      %v6044 = vpack.c.b16 %v5997, %v5996
      %v6045 = vpack.c.b16 %v5999, %v5998
      %v6046 = vpack.c.b16 %v6001, %v6000
      %v6047 = vpack.c.b16 %v6003, %v6002
      %v6048 = vpack.c.b16 %v6005, %v6004
      %v6049 = vpack.c.b16 %v6007, %v6006
      %v6050 = vpack.c.b16 %v6009, %v6008
      %v6051 = vpack.c.b16 %v6011, %v6010
      %v6052 = vpack.c.b16 %v6013, %v6012
      %v6053 = vpack.c.b16 %v6015, %v6014
      %v6054 = vpack.c.b16 %v6017, %v6016
      %v6055 = vpack.c.b16 %v6019, %v6018
      %v6056 = vpack.c.b16 %v6021, %v6020
      %v6057 = vpack.c.b16 %v6023, %v6022
      %v6058 = vpack.c.b16 %v6025, %v6024
      %v6059 = vpack.c.b16 %v6027, %v6026
      %v6060 = vpack.c.b16 %v6029, %v6028
      %v6061 = vpack.c.b16 %v6031, %v6030
      %v6062 = vpack.c.b16 %v6033, %v6032
      %v6063 = vpack.c.b16 %v6035, %v6034
      %v6064 = vpack.c.b16 %v6037, %v6036
      %v6065 = vpack.c.b16 %v6039, %v6038
      %v6066 = vpack.c.b16 %v6041, %v6040
      %v6067 = vpack.c.b16 %v6043, %v6042
      %6092 = vmatprep.subr.bf16.mxu0 0
      %6093 = vmatpush1.bf16.msra.mxu0 %v6044
      %6094 = vmatprep.subr.bf16.mxu0 0
      %6095 = vmatpush1.bf16.msra.mxu0 %v6045
      %6096 = vmatprep.subr.bf16.mxu0 0
      %6097 = vmatpush1.bf16.msra.mxu0 %v6046
      %6098 = vmatprep.subr.bf16.mxu0 0
      %6099 = vmatpush1.bf16.msra.mxu0 %v6047
      %6100 = vmatprep.subr.bf16.mxu0 0
      %6101 = vmatpush1.bf16.msra.mxu0 %v6048
      %6102 = vmatprep.subr.bf16.mxu0 0
      %6103 = vmatpush1.bf16.msra.mxu0 %v6049
      %6104 = vmatprep.subr.bf16.mxu0 0
      %6105 = vmatpush1.bf16.msra.mxu0 %v6050
      %6106 = vmatprep.subr.bf16.mxu0 0
      %6107 = vmatpush1.bf16.msra.mxu0 %v6051
      %6108 = vmatprep.subr.bf16.mxu0 0
      %6109 = vmatpush1.bf16.msra.mxu0 %v6052
      %6110 = vmatprep.subr.bf16.mxu0 0
      %6111 = vmatpush1.bf16.msra.mxu0 %v6053
      %6112 = vmatprep.subr.bf16.mxu0 0
      %6113 = vmatpush1.bf16.msra.mxu0 %v6054
      %6114 = vmatprep.subr.bf16.mxu0 0
      %6115 = vmatpush1.bf16.msra.mxu0 %v6055
      %6116 = vmatprep.subr.bf16.mxu0 0
      %6117 = vmatpush1.bf16.msra.mxu0 %v6056
      %6118 = vmatprep.subr.bf16.mxu0 0
      %6119 = vmatpush1.bf16.msra.mxu0 %v6057
      %6120 = vmatprep.subr.bf16.mxu0 0
      %6121 = vmatpush1.bf16.msra.mxu0 %v6058
      %6122 = vmatprep.subr.bf16.mxu0 0
      %6123 = vmatpush1.bf16.msra.mxu0 %v6059
      %6124 = vmatprep.mubr.bf16.mxu0 %v5852
      %6125 = vmatmul.mubr.bf16.gmra.mrb[0].mxu0 %v5851
      %v6126 = vpop.f32.mrb[0].mxu0
      %v6127 = vadd.f32 0.0, %v6126
      %v6128 = vpop.f32.mrb[0].mxu0
      %v6129 = vpop.f32.mrb[0].mxu0
      %v6130 = vadd.f32 0.0, %v6129
      %v6131 = vpop.f32.mrb[0].mxu0
      %6132 = vmatprep.mubr.bf16.mxu0 %v5855
      %6133 = vmatmul.mubr.bf16.gmra.mrb[0].mxu0 %v5854
      %v6134 = vpop.f32.mrb[0].mxu0
      %v6135 = vadd.f32 0.0, %v6134
      %v6136 = vpop.f32.mrb[0].mxu0
      %v6137 = vpop.f32.mrb[0].mxu0
      %v6138 = vadd.f32 0.0, %v6137
      %v6139 = vpop.f32.mrb[0].mxu0
      %6140 = vmatprep.mubr.bf16.mxu0 %v5858
      %6141 = vmatmul.mubr.bf16.gmra.mrb[0].mxu0 %v5857
      %v6142 = vpop.f32.mrb[0].mxu0
      %v6143 = vadd.f32 0.0, %v6142
      %v6144 = vpop.f32.mrb[0].mxu0
      %v6145 = vpop.f32.mrb[0].mxu0
      %v6146 = vadd.f32 0.0, %v6145
      %v6147 = vpop.f32.mrb[0].mxu0
      %6148 = vmatprep.mubr.bf16.mxu0 %v5861
      %6149 = vmatmul.mubr.bf16.gmra.mrb[0].mxu0 %v5860
      %v6150 = vpop.f32.mrb[0].mxu0
      %v6151 = vadd.f32 0.0, %v6150
      %v6152 = vpop.f32.mrb[0].mxu0
      %v6153 = vpop.f32.mrb[0].mxu0
      %v6154 = vadd.f32 0.0, %v6153
      %v6155 = vpop.f32.mrb[0].mxu0
      %6156 = vmatprep.mubr.bf16.mxu0 %v5864
      %6157 = vmatmul.mubr.bf16.gmra.mrb[0].mxu0 %v5863
      %v6158 = vpop.f32.mrb[0].mxu0
      %v6159 = vadd.f32 0.0, %v6158
      %v6160 = vpop.f32.mrb[0].mxu0
      %v6161 = vpop.f32.mrb[0].mxu0
      %v6162 = vadd.f32 0.0, %v6161
      %v6163 = vpop.f32.mrb[0].mxu0
      %6164 = vmatprep.mubr.bf16.mxu0 %v5867
      %6165 = vmatmul.mubr.bf16.gmra.mrb[0].mxu0 %v5866
      %v6166 = vpop.f32.mrb[0].mxu0
      %v6167 = vadd.f32 0.0, %v6166
      %v6168 = vpop.f32.mrb[0].mxu0
      %v6169 = vpop.f32.mrb[0].mxu0
      %v6170 = vadd.f32 0.0, %v6169
      %v6171 = vpop.f32.mrb[0].mxu0
      %6172 = vmatprep.mubr.bf16.mxu0 %v5870
      %6173 = vmatmul.mubr.bf16.gmra.mrb[0].mxu0 %v5869
      %v6174 = vpop.f32.mrb[0].mxu0
      %v6175 = vadd.f32 0.0, %v6174
      %v6176 = vpop.f32.mrb[0].mxu0
      %v6177 = vpop.f32.mrb[0].mxu0
      %v6178 = vadd.f32 0.0, %v6177
      %v6179 = vpop.f32.mrb[0].mxu0
      %6180 = vmatprep.mubr.bf16.mxu0 %v5873
      %6181 = vmatmul.mubr.bf16.gmra.mrb[0].mxu0 %v5872
      %v6182 = vpop.f32.mrb[0].mxu0
      %v6183 = vadd.f32 0.0, %v6182
      %v6184 = vpop.f32.mrb[0].mxu0
      %v6185 = vpop.f32.mrb[0].mxu0
      %v6186 = vadd.f32 0.0, %v6185
      %v6187 = vpop.f32.mrb[0].mxu0
      %6188 = vmatprep.mubr.bf16.mxu0 %v5876
      %6189 = vmatmul.mubr.bf16.gmra.mrb[0].mxu0 %v5875
      %v6190 = vpop.f32.mrb[0].mxu0
      %v6191 = vadd.f32 0.0, %v6190
      %v6192 = vpop.f32.mrb[0].mxu0
      %v6193 = vpop.f32.mrb[0].mxu0
      %v6194 = vadd.f32 0.0, %v6193
      %v6195 = vpop.f32.mrb[0].mxu0
      %6196 = vmatprep.mubr.bf16.mxu0 %v5879
      %6197 = vmatmul.mubr.bf16.gmra.mrb[0].mxu0 %v5878
      %v6198 = vpop.f32.mrb[0].mxu0
      %v6199 = vadd.f32 0.0, %v6198
      %v6200 = vpop.f32.mrb[0].mxu0
      %v6201 = vpop.f32.mrb[0].mxu0
      %v6202 = vadd.f32 0.0, %v6201
      %v6203 = vpop.f32.mrb[0].mxu0
      %6204 = vmatprep.mubr.bf16.mxu0 %v5882
      %6205 = vmatmul.mubr.bf16.gmra.mrb[0].mxu0 %v5881
      %v6206 = vpop.f32.mrb[0].mxu0
      %v6207 = vadd.f32 0.0, %v6206
      %v6208 = vpop.f32.mrb[0].mxu0
      %v6209 = vpop.f32.mrb[0].mxu0
      %v6210 = vadd.f32 0.0, %v6209
      %v6211 = vpop.f32.mrb[0].mxu0
      %6212 = vmatprep.mubr.bf16.mxu0 %v5885
      %6213 = vmatmul.mubr.bf16.gmra.mrb[0].mxu0 %v5884
      %v6214 = vpop.f32.mrb[0].mxu0
      %v6215 = vadd.f32 0.0, %v6214
      %v6216 = vpop.f32.mrb[0].mxu0
      %v6217 = vpop.f32.mrb[0].mxu0
      %v6218 = vadd.f32 0.0, %v6217
      %v6219 = vpop.f32.mrb[0].mxu0
      %6220 = vmatprep.mubr.bf16.mxu0 %v5888
      %6221 = vmatmul.mubr.bf16.gmra.mrb[0].mxu0 %v5887
      %v6222 = vpop.f32.mrb[0].mxu0
      %v6223 = vadd.f32 0.0, %v6222
      %v6224 = vpop.f32.mrb[0].mxu0
      %v6225 = vpop.f32.mrb[0].mxu0
      %v6226 = vadd.f32 0.0, %v6225
      %v6227 = vpop.f32.mrb[0].mxu0
      %6228 = vmatprep.mubr.bf16.mxu0 %v5891
      %6229 = vmatmul.mubr.bf16.gmra.mrb[0].mxu0 %v5890
      %v6230 = vpop.f32.mrb[0].mxu0
      %v6231 = vadd.f32 0.0, %v6230
      %v6232 = vpop.f32.mrb[0].mxu0
      %v6233 = vpop.f32.mrb[0].mxu0
      %v6234 = vadd.f32 0.0, %v6233
      %v6235 = vpop.f32.mrb[0].mxu0
      %6236 = vmatprep.mubr.bf16.mxu0 %v5894
      %6237 = vmatmul.mubr.bf16.gmra.mrb[0].mxu0 %v5893
      %v6238 = vpop.f32.mrb[0].mxu0
      %v6239 = vadd.f32 0.0, %v6238
      %v6240 = vpop.f32.mrb[0].mxu0
      %v6241 = vpop.f32.mrb[0].mxu0
      %v6242 = vadd.f32 0.0, %v6241
      %v6243 = vpop.f32.mrb[0].mxu0
      %6244 = vmatprep.mubr.bf16.mxu0 %v5897
      %6245 = vmatmul.mubr.bf16.gmra.mrb[0].mxu0 %v5896
      %v6246 = vpop.f32.mrb[0].mxu0
      %v6247 = vadd.f32 0.0, %v6246
      %v6248 = vpop.f32.mrb[0].mxu0
      %v6249 = vpop.f32.mrb[0].mxu0
      %v6250 = vadd.f32 0.0, %v6249
      %v6251 = vpop.f32.mrb[0].mxu0
      %6252 = vdwg.mxu0
      %6253 = vmatprep.subr.bf16.mxu0 0
      %6254 = vmatpush1.bf16.msra.mxu0 %v6060
      %6255 = vmatprep.subr.bf16.mxu0 0
      %6256 = vmatpush1.bf16.msra.mxu0 %v6061
      %6257 = vmatprep.subr.bf16.mxu0 0
      %6258 = vmatpush1.bf16.msra.mxu0 %v6062
      %6259 = vmatprep.subr.bf16.mxu0 0
      %6260 = vmatpush1.bf16.msra.mxu0 %v6063
      %6261 = vmatprep.subr.bf16.mxu0 0
      %6262 = vmatpush1.bf16.msra.mxu0 %v6064
      %6263 = vmatprep.subr.bf16.mxu0 0
      %6264 = vmatpush1.bf16.msra.mxu0 %v6065
      %6265 = vmatprep.subr.bf16.mxu0 0
      %6266 = vmatpush1.bf16.msra.mxu0 %v6066
      %6267 = vmatprep.subr.bf16.mxu0 0
      %6268 = vmatpush1.bf16.msra.mxu0 %v6067
      %6269 = vmatprep.subr.bf16.mxu0 0
      %6270 = vmatpush1.bf16.msra.mxu0 0
      %6271 = vmatprep.subr.bf16.mxu0 0
      %6272 = vmatpush1.bf16.msra.mxu0 0
      %6273 = vmatprep.subr.bf16.mxu0 0
      %6274 = vmatpush1.bf16.msra.mxu0 0
      %6275 = vmatprep.subr.bf16.mxu0 0
      %6276 = vmatpush1.bf16.msra.mxu0 0
      %6277 = vmatprep.subr.bf16.mxu0 0
      %6278 = vmatpush1.bf16.msra.mxu0 0
      %6279 = vmatprep.subr.bf16.mxu0 0
      %6280 = vmatpush1.bf16.msra.mxu0 0
      %6281 = vmatprep.subr.bf16.mxu0 0
      %6282 = vmatpush1.bf16.msra.mxu0 0
      %6283 = vmatprep.subr.bf16.mxu0 0
      %6284 = vmatpush1.bf16.msra.mxu0 0
      %6285 = vmatprep.mubr.bf16.mxu0 0
      %6286 = vmatmul.mubr.bf16.gmra.mrb[0].mxu0 %v5853
      %v6287 = vpop.f32.mrb[0].mxu0
      %v6288 = vadd.f32 %v6127, %v6287
      %v6289 = vpop.f32.mrb[0].mxu0
      %v6290 = vpop.f32.mrb[0].mxu0
      %v6291 = vadd.f32 %v6130, %v6290
      %v6292 = vpop.f32.mrb[0].mxu0
      %6293 = vmatprep.mubr.bf16.mxu0 0
      %6294 = vmatmul.mubr.bf16.gmra.mrb[0].mxu0 %v5856
      %v6295 = vpop.f32.mrb[0].mxu0
      %v6296 = vadd.f32 %v6135, %v6295
      %v6297 = vpop.f32.mrb[0].mxu0
      %v6298 = vpop.f32.mrb[0].mxu0
      %v6299 = vadd.f32 %v6138, %v6298
      %v6300 = vpop.f32.mrb[0].mxu0
      %6301 = vmatprep.mubr.bf16.mxu0 0
      %6302 = vmatmul.mubr.bf16.gmra.mrb[0].mxu0 %v5859
      %v6303 = vpop.f32.mrb[0].mxu0
      %v6304 = vadd.f32 %v6143, %v6303
      %v6305 = vpop.f32.mrb[0].mxu0
      %v6306 = vpop.f32.mrb[0].mxu0
      %v6307 = vadd.f32 %v6146, %v6306
      %v6308 = vpop.f32.mrb[0].mxu0
      %6309 = vmatprep.mubr.bf16.mxu0 0
      %6310 = vmatmul.mubr.bf16.gmra.mrb[0].mxu0 %v5862
      %v6311 = vpop.f32.mrb[0].mxu0
      %v6312 = vadd.f32 %v6151, %v6311
      %v6313 = vpop.f32.mrb[0].mxu0
      %v6314 = vpop.f32.mrb[0].mxu0
      %v6315 = vadd.f32 %v6154, %v6314
      %v6316 = vpop.f32.mrb[0].mxu0
      %6317 = vmatprep.mubr.bf16.mxu0 0
      %6318 = vmatmul.mubr.bf16.gmra.mrb[0].mxu0 %v5865
      %v6319 = vpop.f32.mrb[0].mxu0
      %v6320 = vadd.f32 %v6159, %v6319
      %v6321 = vpop.f32.mrb[0].mxu0
      %v6322 = vpop.f32.mrb[0].mxu0
      %v6323 = vadd.f32 %v6162, %v6322
      %v6324 = vpop.f32.mrb[0].mxu0
      %6325 = vmatprep.mubr.bf16.mxu0 0
      %6326 = vmatmul.mubr.bf16.gmra.mrb[0].mxu0 %v5868
      %v6327 = vpop.f32.mrb[0].mxu0
      %v6328 = vadd.f32 %v6167, %v6327
      %v6329 = vpop.f32.mrb[0].mxu0
      %v6330 = vpop.f32.mrb[0].mxu0
      %v6331 = vadd.f32 %v6170, %v6330
      %v6332 = vpop.f32.mrb[0].mxu0
      %6333 = vmatprep.mubr.bf16.mxu0 0
      %6334 = vmatmul.mubr.bf16.gmra.mrb[0].mxu0 %v5871
      %v6335 = vpop.f32.mrb[0].mxu0
      %v6336 = vadd.f32 %v6175, %v6335
      %v6337 = vpop.f32.mrb[0].mxu0
      %v6338 = vpop.f32.mrb[0].mxu0
      %v6339 = vadd.f32 %v6178, %v6338
      %v6340 = vpop.f32.mrb[0].mxu0
      %6341 = vmatprep.mubr.bf16.mxu0 0
      %6342 = vmatmul.mubr.bf16.gmra.mrb[0].mxu0 %v5874
      %v6343 = vpop.f32.mrb[0].mxu0
      %v6344 = vadd.f32 %v6183, %v6343
      %v6345 = vpop.f32.mrb[0].mxu0
      %v6346 = vpop.f32.mrb[0].mxu0
      %v6347 = vadd.f32 %v6186, %v6346
      %v6348 = vpop.f32.mrb[0].mxu0
      %6349 = vmatprep.mubr.bf16.mxu0 0
      %6350 = vmatmul.mubr.bf16.gmra.mrb[0].mxu0 %v5877
      %v6351 = vpop.f32.mrb[0].mxu0
      %v6352 = vadd.f32 %v6191, %v6351
      %v6353 = vpop.f32.mrb[0].mxu0
      %v6354 = vpop.f32.mrb[0].mxu0
      %v6355 = vadd.f32 %v6194, %v6354
      %v6356 = vpop.f32.mrb[0].mxu0
      %6357 = vmatprep.mubr.bf16.mxu0 0
      %6358 = vmatmul.mubr.bf16.gmra.mrb[0].mxu0 %v5880
      %v6359 = vpop.f32.mrb[0].mxu0
      %v6360 = vadd.f32 %v6199, %v6359
      %v6361 = vpop.f32.mrb[0].mxu0
      %v6362 = vpop.f32.mrb[0].mxu0
      %v6363 = vadd.f32 %v6202, %v6362
      %v6364 = vpop.f32.mrb[0].mxu0
      %6365 = vmatprep.mubr.bf16.mxu0 0
      %6366 = vmatmul.mubr.bf16.gmra.mrb[0].mxu0 %v5883
      %v6367 = vpop.f32.mrb[0].mxu0
      %v6368 = vadd.f32 %v6207, %v6367
      %v6369 = vpop.f32.mrb[0].mxu0
      %v6370 = vpop.f32.mrb[0].mxu0
      %v6371 = vadd.f32 %v6210, %v6370
      %v6372 = vpop.f32.mrb[0].mxu0
      %6373 = vmatprep.mubr.bf16.mxu0 0
      %6374 = vmatmul.mubr.bf16.gmra.mrb[0].mxu0 %v5886
      %v6375 = vpop.f32.mrb[0].mxu0
      %v6376 = vadd.f32 %v6215, %v6375
      %v6377 = vpop.f32.mrb[0].mxu0
      %v6378 = vpop.f32.mrb[0].mxu0
      %v6379 = vadd.f32 %v6218, %v6378
      %v6380 = vpop.f32.mrb[0].mxu0
      %6381 = vmatprep.mubr.bf16.mxu0 0
      %6382 = vmatmul.mubr.bf16.gmra.mrb[0].mxu0 %v5889
      %v6383 = vpop.f32.mrb[0].mxu0
      %v6384 = vadd.f32 %v6223, %v6383
      %v6385 = vpop.f32.mrb[0].mxu0
      %v6386 = vpop.f32.mrb[0].mxu0
      %v6387 = vadd.f32 %v6226, %v6386
      %v6388 = vpop.f32.mrb[0].mxu0
      %6389 = vmatprep.mubr.bf16.mxu0 0
      %6390 = vmatmul.mubr.bf16.gmra.mrb[0].mxu0 %v5892
      %v6391 = vpop.f32.mrb[0].mxu0
      %v6392 = vadd.f32 %v6231, %v6391
      %v6393 = vpop.f32.mrb[0].mxu0
      %v6394 = vpop.f32.mrb[0].mxu0
      %v6395 = vadd.f32 %v6234, %v6394
      %v6396 = vpop.f32.mrb[0].mxu0
      %6397 = vmatprep.mubr.bf16.mxu0 0
      %6398 = vmatmul.mubr.bf16.gmra.mrb[0].mxu0 %v5895
      %v6399 = vpop.f32.mrb[0].mxu0
      %v6400 = vadd.f32 %v6239, %v6399
      %v6401 = vpop.f32.mrb[0].mxu0
      %v6402 = vpop.f32.mrb[0].mxu0
      %v6403 = vadd.f32 %v6242, %v6402
      %v6404 = vpop.f32.mrb[0].mxu0
      %6405 = vmatprep.mubr.bf16.mxu0 0
      %6406 = vmatmul.mubr.bf16.gmra.mrb[0].mxu0 %v5898
      %v6407 = vpop.f32.mrb[0].mxu0
      %v6408 = vadd.f32 %v6247, %v6407
      %v6409 = vpop.f32.mrb[0].mxu0
      %v6410 = vpop.f32.mrb[0].mxu0
      %v6411 = vadd.f32 %v6250, %v6410
      %v6412 = vpop.f32.mrb[0].mxu0
      %6413 = vdwg.mxu0
      %v6414 = vadd.f32 %v5724, %v6288
      %v6415 = vadd.f32 %v5727, %v6291
      %v6416 = vadd.f32 %v5732, %v6296
      %v6417 = vadd.f32 %v5735, %v6299
      %v6418 = vadd.f32 %v5740, %v6304
      %v6419 = vadd.f32 %v5743, %v6307
      %v6420 = vadd.f32 %v5748, %v6312
      %v6421 = vadd.f32 %v5751, %v6315
      %v6422 = vadd.f32 %v5756, %v6320
      %v6423 = vadd.f32 %v5759, %v6323
      %v6424 = vadd.f32 %v5764, %v6328
      %v6425 = vadd.f32 %v5767, %v6331
      %v6426 = vadd.f32 %v5772, %v6336
      %v6427 = vadd.f32 %v5775, %v6339
      %v6428 = vadd.f32 %v5780, %v6344
      %v6429 = vadd.f32 %v5783, %v6347
      %v6430 = vadd.f32 %v5788, %v6352
      %v6431 = vadd.f32 %v5791, %v6355
      %v6432 = vadd.f32 %v5796, %v6360
      %v6433 = vadd.f32 %v5799, %v6363
      %v6434 = vadd.f32 %v5804, %v6368
      %v6435 = vadd.f32 %v5807, %v6371
      %v6436 = vadd.f32 %v5812, %v6376
      %v6437 = vadd.f32 %v5815, %v6379
      %v6438 = vadd.f32 %v5820, %v6384
      %v6439 = vadd.f32 %v5823, %v6387
      %v6440 = vadd.f32 %v5828, %v6392
      %v6441 = vadd.f32 %v5831, %v6395
      %v6442 = vadd.f32 %v5836, %v6400
      %v6443 = vadd.f32 %v5839, %v6403
      %v6444 = vadd.f32 %v5844, %v6408
      %v6445 = vadd.f32 %v5847, %v6411
      %v6446 = vld [vmem:[%s5] sm:$0x1]
      %v6448 = vlaneseq
      %v6449 = vshrl.u32 %v6448, 7
      %v6450 = vsub.s32 0, %v6449
      %v6451 = vrot.slane %v6446, %v6450
      %v6453 = vadd.f32 %v6414, %v6451
      %v6454 = vadd.f32 %v6415, %v6451
      %v6455 = vadd.f32 %v6416, %v6451
      %v6456 = vadd.f32 %v6417, %v6451
      %v6457 = vadd.f32 %v6418, %v6451
      %v6458 = vadd.f32 %v6419, %v6451
      %v6459 = vadd.f32 %v6420, %v6451
      %v6460 = vadd.f32 %v6421, %v6451
      %v6461 = vadd.f32 %v6422, %v6451
      %v6462 = vadd.f32 %v6423, %v6451
      %v6463 = vadd.f32 %v6424, %v6451
      %v6464 = vadd.f32 %v6425, %v6451
      %v6465 = vadd.f32 %v6426, %v6451
      %v6466 = vadd.f32 %v6427, %v6451
      %v6467 = vadd.f32 %v6428, %v6451
      %v6468 = vadd.f32 %v6429, %v6451
      %v6469 = vadd.f32 %v6430, %v6451
      %v6470 = vadd.f32 %v6431, %v6451
      %v6471 = vadd.f32 %v6432, %v6451
      %v6472 = vadd.f32 %v6433, %v6451
      %v6473 = vadd.f32 %v6434, %v6451
      %v6474 = vadd.f32 %v6435, %v6451
      %v6475 = vadd.f32 %v6436, %v6451
      %v6476 = vadd.f32 %v6437, %v6451
      %v6477 = vadd.f32 %v6438, %v6451
      %v6478 = vadd.f32 %v6439, %v6451
      %v6479 = vadd.f32 %v6440, %v6451
      %v6480 = vadd.f32 %v6441, %v6451
      %v6481 = vadd.f32 %v6442, %v6451
      %v6482 = vadd.f32 %v6443, %v6451
      %v6483 = vadd.f32 %v6444, %v6451
      %v6484 = vadd.f32 %v6445, %v6451
      %v6485 = vmax.f32 %v6453, 0.0
      %v6486 = vmax.f32 %v6454, 0.0
      %v6487 = vmax.f32 %v6455, 0.0
      %v6488 = vmax.f32 %v6456, 0.0
      %v6489 = vmax.f32 %v6457, 0.0
      %v6490 = vmax.f32 %v6458, 0.0
      %v6491 = vmax.f32 %v6459, 0.0
      %v6492 = vmax.f32 %v6460, 0.0
      %v6493 = vmax.f32 %v6461, 0.0
      %v6494 = vmax.f32 %v6462, 0.0
      %v6495 = vmax.f32 %v6463, 0.0
      %v6496 = vmax.f32 %v6464, 0.0
      %v6497 = vmax.f32 %v6465, 0.0
      %v6498 = vmax.f32 %v6466, 0.0
      %v6499 = vmax.f32 %v6467, 0.0
      %v6500 = vmax.f32 %v6468, 0.0
      %v6501 = vmax.f32 %v6469, 0.0
      %v6502 = vmax.f32 %v6470, 0.0
      %v6503 = vmax.f32 %v6471, 0.0
      %v6504 = vmax.f32 %v6472, 0.0
      %v6505 = vmax.f32 %v6473, 0.0
      %v6506 = vmax.f32 %v6474, 0.0
      %v6507 = vmax.f32 %v6475, 0.0
      %v6508 = vmax.f32 %v6476, 0.0
      %v6509 = vmax.f32 %v6477, 0.0
      %v6510 = vmax.f32 %v6478, 0.0
      %v6511 = vmax.f32 %v6479, 0.0
      %v6512 = vmax.f32 %v6480, 0.0
      %v6513 = vmax.f32 %v6481, 0.0
      %v6514 = vmax.f32 %v6482, 0.0
      %v6515 = vmax.f32 %v6483, 0.0
      %v6516 = vmax.f32 %v6484, 0.0
      %v6517 = vpack.c.bf16 %v6486, %v6485
      %v6518 = vpack.c.bf16 %v6488, %v6487
      %v6519 = vpack.c.bf16 %v6490, %v6489
      %v6520 = vpack.c.bf16 %v6492, %v6491
      %v6521 = vpack.c.bf16 %v6494, %v6493
      %v6522 = vpack.c.bf16 %v6496, %v6495
      %v6523 = vpack.c.bf16 %v6498, %v6497
      %v6524 = vpack.c.bf16 %v6500, %v6499
      %v6525 = vpack.c.bf16 %v6502, %v6501
      %v6526 = vpack.c.bf16 %v6504, %v6503
      %v6527 = vpack.c.bf16 %v6506, %v6505
      %v6528 = vpack.c.bf16 %v6508, %v6507
      %v6529 = vpack.c.bf16 %v6510, %v6509
      %v6530 = vpack.c.bf16 %v6512, %v6511
      %v6531 = vpack.c.bf16 %v6514, %v6513
      %v6532 = vpack.c.bf16 %v6516, %v6515
      %v6549 = vunpack.c.l.b16 %v6517
      %v6550 = vunpack.c.h.b16 %v6517
      %v6551 = vunpack.c.l.b16 %v6518
      %v6552 = vunpack.c.h.b16 %v6518
      %v6553 = vunpack.c.l.b16 %v6519
      %v6554 = vunpack.c.h.b16 %v6519
      %v6555 = vunpack.c.l.b16 %v6520
      %v6556 = vunpack.c.h.b16 %v6520
      %v6557 = vunpack.c.l.b16 %v6521
      %v6558 = vunpack.c.h.b16 %v6521
      %v6559 = vunpack.c.l.b16 %v6522
      %v6560 = vunpack.c.h.b16 %v6522
      %v6561 = vunpack.c.l.b16 %v6523
      %v6562 = vunpack.c.h.b16 %v6523
      %v6563 = vunpack.c.l.b16 %v6524
      %v6564 = vunpack.c.h.b16 %v6524
      %v6565 = vunpack.c.l.b16 %v6525
      %v6566 = vunpack.c.h.b16 %v6525
      %v6567 = vunpack.c.l.b16 %v6526
      %v6568 = vunpack.c.h.b16 %v6526
      %v6569 = vunpack.c.l.b16 %v6527
      %v6570 = vunpack.c.h.b16 %v6527
      %v6571 = vunpack.c.l.b16 %v6528
      %v6572 = vunpack.c.h.b16 %v6528
      %v6573 = vunpack.c.l.b16 %v6529
      %v6574 = vunpack.c.h.b16 %v6529
      %v6575 = vunpack.c.l.b16 %v6530
      %v6576 = vunpack.c.h.b16 %v6530
      %v6577 = vunpack.c.l.b16 %v6531
      %v6578 = vunpack.c.h.b16 %v6531
      %v6579 = vunpack.c.l.b16 %v6532
      %v6580 = vunpack.c.h.b16 %v6532
      %v6581 = vpack.c.b16 %v6549, %v6549
      %v6582 = vpack.c.b16 %v6550, %v6550
      %v6583 = vpack.c.b16 %v6551, %v6551
      %v6584 = vpack.c.b16 %v6552, %v6552
      %v6585 = vpack.c.b16 %v6553, %v6553
      %v6586 = vpack.c.b16 %v6554, %v6554
      %v6587 = vpack.c.b16 %v6555, %v6555
      %v6588 = vpack.c.b16 %v6556, %v6556
      %v6589 = vpack.c.b16 %v6557, %v6557
      %v6590 = vpack.c.b16 %v6558, %v6558
      %v6591 = vpack.c.b16 %v6559, %v6559
      %v6592 = vpack.c.b16 %v6560, %v6560
      %v6593 = vpack.c.b16 %v6561, %v6561
      %v6594 = vpack.c.b16 %v6562, %v6562
      %v6595 = vpack.c.b16 %v6563, %v6563
      %v6596 = vpack.c.b16 %v6564, %v6564
      %v6597 = vpack.c.b16 %v6565, %v6565
      %v6598 = vpack.c.b16 %v6566, %v6566
      %v6599 = vpack.c.b16 %v6567, %v6567
      %v6600 = vpack.c.b16 %v6568, %v6568
      %v6601 = vpack.c.b16 %v6569, %v6569
      %v6602 = vpack.c.b16 %v6570, %v6570
      %v6603 = vpack.c.b16 %v6571, %v6571
      %v6604 = vpack.c.b16 %v6572, %v6572
      %v6605 = vpack.c.b16 %v6573, %v6573
      %v6606 = vpack.c.b16 %v6574, %v6574
      %v6607 = vpack.c.b16 %v6575, %v6575
      %v6608 = vpack.c.b16 %v6576, %v6576
      %v6609 = vpack.c.b16 %v6577, %v6577
      %v6610 = vpack.c.b16 %v6578, %v6578
      %v6611 = vpack.c.b16 %v6579, %v6579
      %v6612 = vpack.c.b16 %v6580, %v6580
      %6645 = vst [vmem:[%s271] sm:$0xf] %v6581
      %6646 = vst [vmem:[%s271 + $0x4] sm:$0xf] %v6582
      %6647 = vst [vmem:[%s271 + $0x8] sm:$0xf] %v6583
      %6648 = vst [vmem:[%s271 + $0xc] sm:$0xf] %v6584
      %6649 = vst [vmem:[%s271 + $0x10] sm:$0xf] %v6585
      %6650 = vst [vmem:[%s271 + $0x14] sm:$0xf] %v6586
      %6651 = vst [vmem:[%s271 + $0x18] sm:$0xf] %v6587
      %6652 = vst [vmem:[%s271 + $0x1c] sm:$0xf] %v6588
      %6653 = vst [vmem:[%s271 + $0x20] sm:$0xf] %v6589
      %6654 = vst [vmem:[%s271 + $0x24] sm:$0xf] %v6590
      %6655 = vst [vmem:[%s271 + $0x28] sm:$0xf] %v6591
      %6656 = vst [vmem:[%s271 + $0x2c] sm:$0xf] %v6592
      %6657 = vst [vmem:[%s271 + $0x30] sm:$0xf] %v6593
      %6658 = vst [vmem:[%s271 + $0x34] sm:$0xf] %v6594
      %6659 = vst [vmem:[%s271 + $0x38] sm:$0xf] %v6595
      %6660 = vst [vmem:[%s271 + $0x3c] sm:$0xf] %v6596
      %6661 = vst [vmem:[%s271 + $0x40] sm:$0xf] %v6597
      %6662 = vst [vmem:[%s271 + $0x44] sm:$0xf] %v6598
      %6663 = vst [vmem:[%s271 + $0x48] sm:$0xf] %v6599
      %6664 = vst [vmem:[%s271 + $0x4c] sm:$0xf] %v6600
      %6665 = vst [vmem:[%s271 + $0x50] sm:$0xf] %v6601
      %6666 = vst [vmem:[%s271 + $0x54] sm:$0xf] %v6602
      %6667 = vst [vmem:[%s271 + $0x58] sm:$0xf] %v6603
      %6668 = vst [vmem:[%s271 + $0x5c] sm:$0xf] %v6604
      %6669 = vst [vmem:[%s271 + $0x60] sm:$0xf] %v6605
      %6670 = vst [vmem:[%s271 + $0x64] sm:$0xf] %v6606
      %6671 = vst [vmem:[%s271 + $0x68] sm:$0xf] %v6607
      %6672 = vst [vmem:[%s271 + $0x6c] sm:$0xf] %v6608
      %6673 = vst [vmem:[%s271 + $0x70] sm:$0xf] %v6609
      %6674 = vst [vmem:[%s271 + $0x74] sm:$0xf] %v6610
      %6675 = vst [vmem:[%s271 + $0x78] sm:$0xf] %v6611
      %6676 = vst [vmem:[%s271 + $0x7c] sm:$0xf] %v6612
      %p6677 = scmp.lt.s32.totalorder %s17, 1
      %s6678 = scalar_select %p6677, %s17, 1
      %s6679 = smul.addr %s6678, 32
      %s6680 = smul.addr %s6679, 4
      %s6681 = scalar_lea.vmem %s6, %s6680
      // Predicated region
      $region45: #{up_forward.1} parent=43 // pred_check
        %p6682 = pneg %p171
      $region46: #{up_forward.1} parent=43 // pred_check_branch
        %6684 = sbr.rel (%p6682) target = $region48
      $region47: #{up_forward.1} parent=43 // pred_region
        _
      $region48: #{up_forward.1} parent=43 // pred_fallthru
        _
    $region44: #{up_forward.1} parent=5 // pred_fallthru
      _
    %p6685 = scmp.le.s32.totalorder 2, %s12
    // Predicated region
    $region49: #{up_forward.1} parent=5 // pred_check
      %p6686 = pneg %p6685
    $region50: #{up_forward.1} parent=5 // pred_check_branch
      %6688 = sbr.rel (%p6686) target = $region52
    $region51: #{up_forward.1} parent=5 // pred_region
      %s6689 = ssub.s32 %s12, 2
      // Predicated region
      $region53: #{up_forward.1} parent=51 // pred_check
        %p6690 = pneg %p177
      $region54: #{up_forward.1} parent=51 // pred_check_branch
        %6692 = sbr.rel (%p6690) target = $region56
      $region55: #{up_forward.1} parent=51 // pred_region
        %p6693 = scmp.lt.s32.totalorder %s18, 1
        %s6694 = scalar_select %p6693, %s18, 1
        %s6695 = smul.addr %s6694, 32
        %s6696 = smul.addr %s6695, 4
        %s6697 = scalar_lea.vmem %s6, %s6696
      $region56: #{up_forward.1} parent=51 // pred_fallthru
        _
    $region52: #{up_forward.1} parent=5 // pred_fallthru
      _
  $region6: #{up_forward.1} parent=0 // loop_footer
    %s16 = sadd.s32 1, %s12
  $region7: #{up_forward.1} parent=0 // loop_footer_branch
    %11 = sbr.rel target = $region3
  $region8: #{up_forward.1} parent=0 // loop_exit
    _

</llo_original>
